<compile_context>
chip_gen: v5e
topology: v5e:2x2
jax: 0.10.0
libtpu: 0.0.40
codegen_flags: <defaults>
</compile_context>

<pallas_src>
import functools

import jax
import jax.numpy as jnp
from jax.experimental import pallas as pl
from jax.experimental.pallas import tpu as pltpu

# MXU operand dtype: bf16 halves weight/patch traffic and hits the fast MXU
# path on v6e/v7x; accumulation is always f32 (preferred_element_type) and all
# elementwise math (bias, ReLU, pooling max) stays f32 (v5e has no bf16 VPU).
# Set to jnp.float32 to recover exact f32 matmul numerics.
_MXU_DTYPE = jnp.bfloat16


# --------------------------------------------------------------------------
# Pallas kernels
# --------------------------------------------------------------------------
def _conv_block_kernel(x_ref, w1_ref, b1_ref, w2_ref, b2_ref, o_ref,
                       pad1_ref, pad2_ref, *, H, W, Cin, Cmid, Cout):
    """Fused conv block for one batch element.

       x_ref  : (1, H, W, Cin)          f32 input tile
       w1_ref : (9*Cin, Cmid)           bf16 conv1 taps flattened as (ky,kx,cin)
       b1_ref : (1, Cmid)               f32
       w2_ref : (9*Cmid, Cout)          bf16
       b2_ref : (1, Cout)               f32
       o_ref  : (1, H//2, W, Cout)      f32 vertically-pooled conv2 output
       pad1_ref, pad2_ref               VMEM halo scratch (H+2, W+2, C)
    """
    Hh = H // 2

    def conv3x3_bias_relu(pad_ref, c_in, w_ref, b_ref):
        # im2col: 9 shifted (H, W, c_in) windows concatenated on the lane axis
        # -> one MXU matmul with K = 9*c_in instead of 9 tiny per-tap matmuls.
        cols = []
        for dy in range(3):
            for dx in range(3):
                cols.append(pad_ref[dy:dy + H, dx:dx + W, :])
        patches = jnp.concatenate(cols, axis=-1)            # (H, W, 9*c_in)
        patches = patches.reshape(H * W, 9 * c_in).astype(w_ref.dtype)
        acc = jnp.dot(patches, w_ref[...],
                      preferred_element_type=jnp.float32)   # (H*W, c_out) f32
        return jnp.maximum(acc + b_ref[...], 0.0)           # bias + ReLU (f32)

    # ---- conv1: zero halo handled entirely in VMEM (no HBM-side jnp.pad)
    pad1_ref[...] = jnp.zeros_like(pad1_ref)
    pad1_ref[1:H + 1, 1:W + 1, :] = x_ref[0]
    h1 = conv3x3_bias_relu(pad1_ref, Cin, w1_ref, b1_ref)    # (H*W, Cmid)

    # ---- conv2
    pad2_ref[...] = jnp.zeros_like(pad2_ref)
    pad2_ref[1:H + 1, 1:W + 1, :] = h1.reshape(H, W, Cmid)
    h2 = conv3x3_bias_relu(pad2_ref, Cmid, w2_ref, b2_ref)   # (H*W, Cout)

    # ---- vertical half of the 2x2 / stride-2 max pool (leading-dim ops only)
    v = h2.reshape(H, W, Cout).reshape(Hh, 2, W, Cout)
    o_ref[0] = jnp.maximum(v[:, 0], v[:, 1])                 # (Hh, W, Cout)


def _matmul_bias_kernel(x_ref, w_ref, b_ref, o_ref):
    """1x1 conv tile: (TM, Cin) @ (Cin, Cout) + bias."""
    o_ref[...] = (
        jnp.dot(x_ref[...].astype(w_ref.dtype), w_ref[...],
                preferred_element_type=jnp.float32)
        + b_ref[...]
    )


# --------------------------------------------------------------------------
# Pallas wrappers
# --------------------------------------------------------------------------
def conv_block(x, block_params):
    """x: (N,H,W,Cin) -> conv3x3+ReLU -> conv3x3+ReLU -> 2x2 max pool."""
    (w1, b1), (w2, b2) = block_params
    N, H, W, Cin = x.shape
    Cmid, Cout = w1.shape[-1], w2.shape[-1]
    Hh, Wh = H // 2, W // 2

    w1f = w1.reshape(9 * Cin, Cmid).astype(_MXU_DTYPE)
    w2f = w2.reshape(9 * Cmid, Cout).astype(_MXU_DTYPE)
    b1f = b1.reshape(1, Cmid).astype(jnp.float32)
    b2f = b2.reshape(1, Cout).astype(jnp.float32)

    # TODO(synk): for large images, tile H across the grid with a 2-row halo
    # (v7x 64 MiB VMEM); whole-image blocks are fine at these small shapes.
    kernel = functools.partial(_conv_block_kernel, H=H, W=W,
                               Cin=Cin, Cmid=Cmid, Cout=Cout)
    y = pl.pallas_call(
        kernel,
        out_shape=jax.ShapeDtypeStruct((N, Hh, W, Cout), jnp.float32),
        grid=(N,),
        in_specs=[
            pl.BlockSpec((1, H, W, Cin), lambda n: (n, 0, 0, 0)),
            pl.BlockSpec((9 * Cin, Cmid), lambda n: (0, 0)),
            pl.BlockSpec((1, Cmid), lambda n: (0, 0)),
            pl.BlockSpec((9 * Cmid, Cout), lambda n: (0, 0)),
            pl.BlockSpec((1, Cout), lambda n: (0, 0)),
        ],
        out_specs=pl.BlockSpec((1, Hh, W, Cout), lambda n: (n, 0, 0, 0)),
        scratch_shapes=[
            pltpu.VMEM((H + 2, W + 2, Cin), jnp.float32),
            pltpu.VMEM((H + 2, W + 2, Cmid), jnp.float32),
        ],
        compiler_params=pltpu.CompilerParams(dimension_semantics=("parallel",)),
    )(x.astype(jnp.float32), w1f, b1f, w2f, b2f)

    # Horizontal half of the 2x2 max pool: max over adjacent column pairs on a
    # half-sized tensor.  TODO(synk): could move in-kernel with a strided ref
    # read; kept here on a trivially-safe lowering path.
    y = y.reshape(N, Hh, Wh, 2, Cout)
    return jnp.maximum(y[:, :, :, 0, :], y[:, :, :, 1, :])


def _pick_row_tile(m):
    for t in (1024, 512, 256, 128, 64, 32, 16, 8):
        if m % t == 0:
            return t
    return m


def conv1x1(x, w, b):
    """x: (N,H,W,Cin); w: (1,1,Cin,Cout); b: (Cout,) -> (N,H,W,Cout)."""
    N, H, W, Cin = x.shape
    Cout = w.shape[-1]
    M = N * H * W
    TM = _pick_row_tile(M)
    x2 = x.reshape(M, Cin)
    y2 = pl.pallas_call(
        _matmul_bias_kernel,
        out_shape=jax.ShapeDtypeStruct((M, Cout), jnp.float32),
        grid=(M // TM,),
        in_specs=[
            pl.BlockSpec((TM, Cin), lambda i: (i, 0)),
            pl.BlockSpec((Cin, Cout), lambda i: (0, 0)),
            pl.BlockSpec((1, Cout), lambda i: (0, 0)),
        ],
        out_specs=pl.BlockSpec((TM, Cout), lambda i: (i, 0)),
        compiler_params=pltpu.CompilerParams(dimension_semantics=("parallel",)),
    )(x2, w.reshape(Cin, Cout).astype(_MXU_DTYPE),
      b.reshape(1, Cout).astype(jnp.float32))
    return y2.reshape(N, H, W, Cout)


# --------------------------------------------------------------------------
# Plain-JAX glue
# --------------------------------------------------------------------------
def bilinear_resize(x, out_h, out_w):
    """Half-pixel-center bilinear resize (== F.interpolate align_corners=False)."""
    N, H, W, C = x.shape
    if (H, W) == (out_h, out_w):
        return x

    def coords(in_size, out_size):
        o = jnp.arange(out_size, dtype=jnp.float32)
        src = (o + 0.5) * (in_size / out_size) - 0.5
        src = jnp.clip(src, 0.0, in_size - 1.0)
        lo = jnp.floor(src).astype(jnp.int32)
        hi = jnp.minimum(lo + 1, in_size - 1)
        frac = src - lo.astype(jnp.float32)
        return lo, hi, frac

    lo_h, hi_h, fh = coords(H, out_h)
    lo_w, hi_w, fw = coords(W, out_w)
    xh = (x[:, lo_h, :, :] * (1.0 - fh)[None, :, None, None]
          + x[:, hi_h, :, :] * fh[None, :, None, None])
    out = (xh[:, :, lo_w, :] * (1.0 - fw)[None, None, :, None]
           + xh[:, :, hi_w, :] * fw[None, None, :, None])
    return out


def unet_forward(x_nchw, params):
    x = jnp.transpose(x_nchw, (0, 2, 3, 1)).astype(jnp.float32)   # NCHW -> NHWC
    feats = []
    for p in params["encoder"]:
        x = conv_block(x, p)
        feats.append(x)
    for k, p in enumerate(params["decoder"]):
        _, h, w, _ = x.shape
        x = bilinear_resize(x, 2 * h, 2 * w)          # F.interpolate(scale_factor=2)
        skip = feats[-(k + 1)]
        # TODO(synk): reference forward has mismatched spatial sizes here; resize skip.
        if skip.shape[1:3] != x.shape[1:3]:
            skip = bilinear_resize(skip, x.shape[1], x.shape[2])
        # TODO(synk): split-K over the concat (two matmuls into one accumulator)
        # would avoid materializing this intermediate; kept in XLA at toy sizes.
        x = jnp.concatenate([x, skip], axis=-1)
        x = conv_block(x, p)
    wf, bf = params["final"]
    y = conv1x1(x, wf, bf)
    return jnp.transpose(y, (0, 3, 1, 2))             # NHWC -> NCHW


# --------------------------------------------------------------------------
# Deterministic parameter init (shapes follow the module's __init__)
# --------------------------------------------------------------------------
def init_params(key, in_channels=1, c=8, depth=3):
    keys = list(jax.random.split(key, 8 * (2 * depth + 1)))
    kit = iter(keys)

    def conv_p(cin, cout, ksz=3):
        fan_in = cin * ksz * ksz
        w = jax.random.normal(next(kit), (ksz, ksz, cin, cout), jnp.float32) * (fan_in ** -0.5)
        b = jax.random.normal(next(kit), (cout,), jnp.float32) * 0.01
        return w, b

    encoder, enc_out = [], []
    for i in range(depth):
        cin = in_channels if i == 0 else c * 2 ** (i - 1)
        cout = c * 2 ** i
        encoder.append((conv_p(cin, cout), conv_p(cout, cout)))
        enc_out.append(cout)

    decoder = []
    x_ch = enc_out[-1]
    for k in range(depth):                  # mirrors: for i in range(depth, 0, -1)
        i = depth - k
        skip_ch = enc_out[depth - 1 - k]
        cin = x_ch + skip_ch                # TODO(synk): __init__ says c*2**i; use actual concat width
        cout = c * 2 ** (i - 1)
        decoder.append((conv_p(cin, cout), conv_p(cout, cout)))
        x_ch = cout

    # final_conv: Conv2d(c, out_channels, 1) where out_channels is shadowed -> equals c
    final = conv_p(c, c, ksz=1)
    return {"encoder": encoder, "decoder": decoder, "final": final}


# --------------------------------------------------------------------------
if __name__ == "__main__":
    key = jax.random.PRNGKey(0)
    k_params, k_x = jax.random.split(key)

    C_BASE, DEPTH, IN_CH = 8, 3, 1
    params = init_params(k_params, in_channels=IN_CH, c=C_BASE, depth=DEPTH)

    x = jax.random.normal(k_x, (2, IN_CH, 16, 16), jnp.float32)   # NCHW like PyTorch

    fwd = jax.jit(unet_forward)
    y = jax.block_until_ready(fwd(x, params))

    # decoder blocks pool after each upsample, so spatial stays at H/2**depth;
    # final_conv maps c -> c channels.
    assert y.shape == (2, C_BASE, 16 // 2 ** DEPTH, 16 // 2 ** DEPTH), y.shape
    assert bool(jnp.all(jnp.isfinite(y)))
    print("KERNEL_OK")
</pallas_src>

<mosaic_0001>
module attributes {stable_mosaic.version = 11 : i64} {
  func.func @_conv_block_kernel(%arg0: i32, %arg1: memref<1x16x16x1xf32, #tpu.memory_space<vmem>>, %arg2: memref<9x8xbf16, #tpu.memory_space<vmem>>, %arg3: memref<1x8xf32, #tpu.memory_space<vmem>>, %arg4: memref<72x8xbf16, #tpu.memory_space<vmem>>, %arg5: memref<1x8xf32, #tpu.memory_space<vmem>>, %arg6: memref<1x8x16x8xf32, #tpu.memory_space<vmem>>, %arg7: memref<18x18x1xf32, #tpu.memory_space<vmem>>, %arg8: memref<18x18x8xf32, #tpu.memory_space<vmem>>) attributes {dimension_semantics = [#tpu.dimension_semantics<parallel>], iteration_bounds = array<i64: 2>, scalar_prefetch = 0 : i64, scratch_operands = 2 : i64, tpu.core_type = #tpu.core_type<tc>, window_params = [{transform_indices = @transform_0, window_bounds = array<i64: 1, 16, 16, 1>}, {pipeline_mode = #tpu.pipeline_mode<synchronous>, transform_indices = @transform_1, window_bounds = array<i64: 9, 8>}, {pipeline_mode = #tpu.pipeline_mode<synchronous>, transform_indices = @transform_2, window_bounds = array<i64: 1, 8>}, {pipeline_mode = #tpu.pipeline_mode<synchronous>, transform_indices = @transform_3, window_bounds = array<i64: 72, 8>}, {pipeline_mode = #tpu.pipeline_mode<synchronous>, transform_indices = @transform_4, window_bounds = array<i64: 1, 8>}, {transform_indices = @transform_5, window_bounds = array<i64: 1, 8, 16, 8>}]} {
    %cst = arith.constant 0.000000e+00 : f32
    %0 = vector.broadcast %cst : f32 to vector<18x18x1xf32>
    %c0 = arith.constant 0 : index
    %c0_0 = arith.constant 0 : index
    %c0_1 = arith.constant 0 : index
    %1 = vector.load %arg7[%c0, %c0_0, %c0_1] : memref<18x18x1xf32, #tpu.memory_space<vmem>>, vector<18x18x1xf32>
    tpu.vector_store %arg7[%c0, %c0_0, %c0_1], %0 {strides = array<i32>} : memref<18x18x1xf32, #tpu.memory_space<vmem>>, vector<18x18x1xf32>,
    %c0_2 = arith.constant 0 : index
    %c0_3 = arith.constant 0 : index
    %c0_4 = arith.constant 0 : index
    %c0_5 = arith.constant 0 : index
    %2 = vector.load %arg1[%c0_2, %c0_3, %c0_4, %c0_5] : memref<1x16x16x1xf32, #tpu.memory_space<vmem>>, vector<1x16x16x1xf32>
    %3 = vector.shape_cast %2 : vector<1x16x16x1xf32> to vector<16x16x1xf32>
    %c1 = arith.constant 1 : index
    %c1_6 = arith.constant 1 : index
    %c0_7 = arith.constant 0 : index
    %4 = vector.load %arg7[%c1, %c1_6, %c0_7] : memref<18x18x1xf32, #tpu.memory_space<vmem>>, vector<16x16x1xf32>
    tpu.vector_store %arg7[%c1, %c1_6, %c0_7], %3 {strides = array<i32>} : memref<18x18x1xf32, #tpu.memory_space<vmem>>, vector<16x16x1xf32>,
    %c0_8 = arith.constant 0 : index
    %c0_9 = arith.constant 0 : index
    %c0_10 = arith.constant 0 : index
    %5 = vector.load %arg7[%c0_8, %c0_9, %c0_10] : memref<18x18x1xf32, #tpu.memory_space<vmem>>, vector<16x16x1xf32>
    %c0_11 = arith.constant 0 : index
    %c1_12 = arith.constant 1 : index
    %c0_13 = arith.constant 0 : index
    %6 = vector.load %arg7[%c0_11, %c1_12, %c0_13] : memref<18x18x1xf32, #tpu.memory_space<vmem>>, vector<16x16x1xf32>
    %c0_14 = arith.constant 0 : index
    %c2 = arith.constant 2 : index
    %c0_15 = arith.constant 0 : index
    %7 = vector.load %arg7[%c0_14, %c2, %c0_15] : memref<18x18x1xf32, #tpu.memory_space<vmem>>, vector<16x16x1xf32>
    %c1_16 = arith.constant 1 : index
    %c0_17 = arith.constant 0 : index
    %c0_18 = arith.constant 0 : index
    %8 = vector.load %arg7[%c1_16, %c0_17, %c0_18] : memref<18x18x1xf32, #tpu.memory_space<vmem>>, vector<16x16x1xf32>
    %c1_19 = arith.constant 1 : index
    %c1_20 = arith.constant 1 : index
    %c0_21 = arith.constant 0 : index
    %9 = vector.load %arg7[%c1_19, %c1_20, %c0_21] : memref<18x18x1xf32, #tpu.memory_space<vmem>>, vector<16x16x1xf32>
    %c1_22 = arith.constant 1 : index
    %c2_23 = arith.constant 2 : index
    %c0_24 = arith.constant 0 : index
    %10 = vector.load %arg7[%c1_22, %c2_23, %c0_24] : memref<18x18x1xf32, #tpu.memory_space<vmem>>, vector<16x16x1xf32>
    %c2_25 = arith.constant 2 : index
    %c0_26 = arith.constant 0 : index
    %c0_27 = arith.constant 0 : index
    %11 = vector.load %arg7[%c2_25, %c0_26, %c0_27] : memref<18x18x1xf32, #tpu.memory_space<vmem>>, vector<16x16x1xf32>
    %c2_28 = arith.constant 2 : index
    %c1_29 = arith.constant 1 : index
    %c0_30 = arith.constant 0 : index
    %12 = vector.load %arg7[%c2_28, %c1_29, %c0_30] : memref<18x18x1xf32, #tpu.memory_space<vmem>>, vector<16x16x1xf32>
    %c2_31 = arith.constant 2 : index
    %c2_32 = arith.constant 2 : index
    %c0_33 = arith.constant 0 : index
    %13 = vector.load %arg7[%c2_31, %c2_32, %c0_33] : memref<18x18x1xf32, #tpu.memory_space<vmem>>, vector<16x16x1xf32>
    %14 = tpu.concatenate %5, %6, %7, %8, %9, %10, %11, %12, %13 in 2 : vector<16x16x1xf32>, vector<16x16x1xf32>, vector<16x16x1xf32>, vector<16x16x1xf32>, vector<16x16x1xf32>, vector<16x16x1xf32>, vector<16x16x1xf32>, vector<16x16x1xf32>, vector<16x16x1xf32> -> vector<16x16x9xf32>
    %15 = vector.shape_cast %14 : vector<16x16x9xf32> to vector<256x9xf32>
    %16 = arith.truncf %15 : vector<256x9xf32> to vector<256x9xbf16>
    %c0_34 = arith.constant 0 : index
    %c0_35 = arith.constant 0 : index
    %17 = vector.load %arg2[%c0_34, %c0_35] : memref<9x8xbf16, #tpu.memory_space<vmem>>, vector<9x8xbf16>
    %cst_36 = arith.constant dense<0.000000e+00> : vector<256x8xf32>
    %18 = tpu.matmul %16, %17, %cst_36 {dimension_numbers = #tpu.dot_dimension_numbers<[1], [0], [0], [1], [0, 0, 1, 1], [], []>} : vector<256x9xbf16>, vector<9x8xbf16>, vector<256x8xf32> -> vector<256x8xf32>
    %c0_37 = arith.constant 0 : index
    %c0_38 = arith.constant 0 : index
    %19 = vector.load %arg3[%c0_37, %c0_38] : memref<1x8xf32, #tpu.memory_space<vmem>>, vector<1x8xf32>
    %20 = vector.broadcast %19 : vector<1x8xf32> to vector<256x8xf32>
    %21 = arith.addf %18, %20 : vector<256x8xf32>
    %cst_39 = arith.constant 0.000000e+00 : f32
    %22 = vector.broadcast %cst_39 : f32 to vector<256x8xf32>
    %23 = arith.maximumf %21, %22 : vector<256x8xf32>
    %cst_40 = arith.constant 0.000000e+00 : f32
    %24 = vector.broadcast %cst_40 : f32 to vector<18x18x8xf32>
    %c0_41 = arith.constant 0 : index
    %c0_42 = arith.constant 0 : index
    %c0_43 = arith.constant 0 : index
    %25 = vector.load %arg8[%c0_41, %c0_42, %c0_43] : memref<18x18x8xf32, #tpu.memory_space<vmem>>, vector<18x18x8xf32>
    tpu.vector_store %arg8[%c0_41, %c0_42, %c0_43], %24 {strides = array<i32>} : memref<18x18x8xf32, #tpu.memory_space<vmem>>, vector<18x18x8xf32>,
    %26 = vector.shape_cast %23 : vector<256x8xf32> to vector<16x16x8xf32>
    %c1_44 = arith.constant 1 : index
    %c1_45 = arith.constant 1 : index
    %c0_46 = arith.constant 0 : index
    %27 = vector.load %arg8[%c1_44, %c1_45, %c0_46] : memref<18x18x8xf32, #tpu.memory_space<vmem>>, vector<16x16x8xf32>
    tpu.vector_store %arg8[%c1_44, %c1_45, %c0_46], %26 {strides = array<i32>} : memref<18x18x8xf32, #tpu.memory_space<vmem>>, vector<16x16x8xf32>,
    %c0_47 = arith.constant 0 : index
    %c0_48 = arith.constant 0 : index
    %c0_49 = arith.constant 0 : index
    %28 = vector.load %arg8[%c0_47, %c0_48, %c0_49] : memref<18x18x8xf32, #tpu.memory_space<vmem>>, vector<16x16x8xf32>
    %c0_50 = arith.constant 0 : index
    %c1_51 = arith.constant 1 : index
    %c0_52 = arith.constant 0 : index
    %29 = vector.load %arg8[%c0_50, %c1_51, %c0_52] : memref<18x18x8xf32, #tpu.memory_space<vmem>>, vector<16x16x8xf32>
    %c0_53 = arith.constant 0 : index
    %c2_54 = arith.constant 2 : index
    %c0_55 = arith.constant 0 : index
    %30 = vector.load %arg8[%c0_53, %c2_54, %c0_55] : memref<18x18x8xf32, #tpu.memory_space<vmem>>, vector<16x16x8xf32>
    %c1_56 = arith.constant 1 : index
    %c0_57 = arith.constant 0 : index
    %c0_58 = arith.constant 0 : index
    %31 = vector.load %arg8[%c1_56, %c0_57, %c0_58] : memref<18x18x8xf32, #tpu.memory_space<vmem>>, vector<16x16x8xf32>
    %c1_59 = arith.constant 1 : index
    %c1_60 = arith.constant 1 : index
    %c0_61 = arith.constant 0 : index
    %32 = vector.load %arg8[%c1_59, %c1_60, %c0_61] : memref<18x18x8xf32, #tpu.memory_space<vmem>>, vector<16x16x8xf32>
    %c1_62 = arith.constant 1 : index
    %c2_63 = arith.constant 2 : index
    %c0_64 = arith.constant 0 : index
    %33 = vector.load %arg8[%c1_62, %c2_63, %c0_64] : memref<18x18x8xf32, #tpu.memory_space<vmem>>, vector<16x16x8xf32>
    %c2_65 = arith.constant 2 : index
    %c0_66 = arith.constant 0 : index
    %c0_67 = arith.constant 0 : index
    %34 = vector.load %arg8[%c2_65, %c0_66, %c0_67] : memref<18x18x8xf32, #tpu.memory_space<vmem>>, vector<16x16x8xf32>
    %c2_68 = arith.constant 2 : index
    %c1_69 = arith.constant 1 : index
    %c0_70 = arith.constant 0 : index
    %35 = vector.load %arg8[%c2_68, %c1_69, %c0_70] : memref<18x18x8xf32, #tpu.memory_space<vmem>>, vector<16x16x8xf32>
    %c2_71 = arith.constant 2 : index
    %c2_72 = arith.constant 2 : index
    %c0_73 = arith.constant 0 : index
    %36 = vector.load %arg8[%c2_71, %c2_72, %c0_73] : memref<18x18x8xf32, #tpu.memory_space<vmem>>, vector<16x16x8xf32>
    %37 = tpu.concatenate %28, %29, %30, %31, %32, %33, %34, %35, %36 in 2 : vector<16x16x8xf32>, vector<16x16x8xf32>, vector<16x16x8xf32>, vector<16x16x8xf32>, vector<16x16x8xf32>, vector<16x16x8xf32>, vector<16x16x8xf32>, vector<16x16x8xf32>, vector<16x16x8xf32> -> vector<16x16x72xf32>
    %38 = vector.shape_cast %37 : vector<16x16x72xf32> to vector<256x72xf32>
    %39 = arith.truncf %38 : vector<256x72xf32> to vector<256x72xbf16>
    %c0_74 = arith.constant 0 : index
    %c0_75 = arith.constant 0 : index
    %40 = vector.load %arg4[%c0_74, %c0_75] : memref<72x8xbf16, #tpu.memory_space<vmem>>, vector<72x8xbf16>
    %cst_76 = arith.constant dense<0.000000e+00> : vector<256x8xf32>
    %41 = tpu.matmul %39, %40, %cst_76 {dimension_numbers = #tpu.dot_dimension_numbers<[1], [0], [0], [1], [0, 0, 1, 1], [], []>} : vector<256x72xbf16>, vector<72x8xbf16>, vector<256x8xf32> -> vector<256x8xf32>
    %c0_77 = arith.constant 0 : index
    %c0_78 = arith.constant 0 : index
    %42 = vector.load %arg5[%c0_77, %c0_78] : memref<1x8xf32, #tpu.memory_space<vmem>>, vector<1x8xf32>
    %43 = vector.broadcast %42 : vector<1x8xf32> to vector<256x8xf32>
    %44 = arith.addf %41, %43 : vector<256x8xf32>
    %cst_79 = arith.constant 0.000000e+00 : f32
    %45 = vector.broadcast %cst_79 : f32 to vector<256x8xf32>
    %46 = arith.maximumf %44, %45 : vector<256x8xf32>
    %47 = vector.shape_cast %46 : vector<256x8xf32> to vector<16x16x8xf32>
    %48 = vector.shape_cast %47 : vector<16x16x8xf32> to vector<8x2x16x8xf32>
    %49 = vector.extract_strided_slice %48 {offsets = [0, 0, 0, 0], sizes = [8, 1, 16, 8], strides = [1, 1, 1, 1]} : vector<8x2x16x8xf32> to vector<8x1x16x8xf32>
    %50 = vector.shape_cast %49 : vector<8x1x16x8xf32> to vector<8x16x8xf32>
    %51 = vector.extract_strided_slice %48 {offsets = [0, 1, 0, 0], sizes = [8, 1, 16, 8], strides = [1, 1, 1, 1]} : vector<8x2x16x8xf32> to vector<8x1x16x8xf32>
    %52 = vector.shape_cast %51 : vector<8x1x16x8xf32> to vector<8x16x8xf32>
    %53 = arith.maximumf %50, %52 : vector<8x16x8xf32>
    %c0_80 = arith.constant 0 : index
    %c0_81 = arith.constant 0 : index
    %c0_82 = arith.constant 0 : index
    %c0_83 = arith.constant 0 : index
    %54 = vector.load %arg6[%c0_80, %c0_81, %c0_82, %c0_83] : memref<1x8x16x8xf32, #tpu.memory_space<vmem>>, vector<1x8x16x8xf32>
    %55 = vector.shape_cast %54 : vector<1x8x16x8xf32> to vector<8x16x8xf32>
    %56 = vector.shape_cast %53 : vector<8x16x8xf32> to vector<1x8x16x8xf32>
    tpu.vector_store %arg6[%c0_80, %c0_81, %c0_82, %c0_83], %56 {strides = array<i32>} : memref<1x8x16x8xf32, #tpu.memory_space<vmem>>, vector<1x8x16x8xf32>,
    return
  }
  func.func @transform_0(%arg0: i32) -> (i32, i32, i32, i32) {
    %c0_i32 = arith.constant 0 : i32
    %c0_i32_0 = arith.constant 0 : i32
    %c0_i32_1 = arith.constant 0 : i32
    %c0_i32_2 = arith.constant 0 : i32
    return %arg0, %c0_i32, %c0_i32_0, %c0_i32_1 : i32, i32, i32, i32
  }
  func.func @transform_1(%arg0: i32) -> (i32, i32) {
    %c0_i32 = arith.constant 0 : i32
    %c0_i32_0 = arith.constant 0 : i32
    %c0_i32_1 = arith.constant 0 : i32
    return %c0_i32, %c0_i32_0 : i32, i32
  }
  func.func @transform_2(%arg0: i32) -> (i32, i32) {
    %c0_i32 = arith.constant 0 : i32
    %c0_i32_0 = arith.constant 0 : i32
    %c0_i32_1 = arith.constant 0 : i32
    return %c0_i32, %c0_i32_0 : i32, i32
  }
  func.func @transform_3(%arg0: i32) -> (i32, i32) {
    %c0_i32 = arith.constant 0 : i32
    %c0_i32_0 = arith.constant 0 : i32
    %c0_i32_1 = arith.constant 0 : i32
    return %c0_i32, %c0_i32_0 : i32, i32
  }
  func.func @transform_4(%arg0: i32) -> (i32, i32) {
    %c0_i32 = arith.constant 0 : i32
    %c0_i32_0 = arith.constant 0 : i32
    %c0_i32_1 = arith.constant 0 : i32
    return %c0_i32, %c0_i32_0 : i32, i32
  }
  func.func @transform_5(%arg0: i32) -> (i32, i32, i32, i32) {
    %c0_i32 = arith.constant 0 : i32
    %c0_i32_0 = arith.constant 0 : i32
    %c0_i32_1 = arith.constant 0 : i32
    %c0_i32_2 = arith.constant 0 : i32
    return %arg0, %c0_i32, %c0_i32_0, %c0_i32_1 : i32, i32, i32, i32
  }
}

module attributes {stable_mosaic.version = 11 : i64} {
  func.func @_conv_block_kernel(%arg0: i32, %arg1: memref<1x8x8x8xf32, #tpu.memory_space<vmem>>, %arg2: memref<72x16xbf16, #tpu.memory_space<vmem>>, %arg3: memref<1x16xf32, #tpu.memory_space<vmem>>, %arg4: memref<144x16xbf16, #tpu.memory_space<vmem>>, %arg5: memref<1x16xf32, #tpu.memory_space<vmem>>, %arg6: memref<1x4x8x16xf32, #tpu.memory_space<vmem>>, %arg7: memref<10x10x8xf32, #tpu.memory_space<vmem>>, %arg8: memref<10x10x16xf32, #tpu.memory_space<vmem>>) attributes {dimension_semantics = [#tpu.dimension_semantics<parallel>], iteration_bounds = array<i64: 2>, scalar_prefetch = 0 : i64, scratch_operands = 2 : i64, tpu.core_type = #tpu.core_type<tc>, window_params = [{transform_indices = @transform_0, window_bounds = array<i64: 1, 8, 8, 8>}, {pipeline_mode = #tpu.pipeline_mode<synchronous>, transform_indices = @transform_1, window_bounds = array<i64: 72, 16>}, {pipeline_mode = #tpu.pipeline_mode<synchronous>, transform_indices = @transform_2, window_bounds = array<i64: 1, 16>}, {pipeline_mode = #tpu.pipeline_mode<synchronous>, transform_indices = @transform_3, window_bounds = array<i64: 144, 16>}, {pipeline_mode = #tpu.pipeline_mode<synchronous>, transform_indices = @transform_4, window_bounds = array<i64: 1, 16>}, {transform_indices = @transform_5, window_bounds = array<i64: 1, 4, 8, 16>}]} {
    %cst = arith.constant 0.000000e+00 : f32
    %0 = vector.broadcast %cst : f32 to vector<10x10x8xf32>
    %c0 = arith.constant 0 : index
    %c0_0 = arith.constant 0 : index
    %c0_1 = arith.constant 0 : index
    %1 = vector.load %arg7[%c0, %c0_0, %c0_1] : memref<10x10x8xf32, #tpu.memory_space<vmem>>, vector<10x10x8xf32>
    tpu.vector_store %arg7[%c0, %c0_0, %c0_1], %0 {strides = array<i32>} : memref<10x10x8xf32, #tpu.memory_space<vmem>>, vector<10x10x8xf32>,
    %c0_2 = arith.constant 0 : index
    %c0_3 = arith.constant 0 : index
    %c0_4 = arith.constant 0 : index
    %c0_5 = arith.constant 0 : index
    %2 = vector.load %arg1[%c0_2, %c0_3, %c0_4, %c0_5] : memref<1x8x8x8xf32, #tpu.memory_space<vmem>>, vector<1x8x8x8xf32>
    %3 = vector.shape_cast %2 : vector<1x8x8x8xf32> to vector<8x8x8xf32>
    %c1 = arith.constant 1 : index
    %c1_6 = arith.constant 1 : index
    %c0_7 = arith.constant 0 : index
    %4 = vector.load %arg7[%c1, %c1_6, %c0_7] : memref<10x10x8xf32, #tpu.memory_space<vmem>>, vector<8x8x8xf32>
    tpu.vector_store %arg7[%c1, %c1_6, %c0_7], %3 {strides = array<i32>} : memref<10x10x8xf32, #tpu.memory_space<vmem>>, vector<8x8x8xf32>,
    %c0_8 = arith.constant 0 : index
    %c0_9 = arith.constant 0 : index
    %c0_10 = arith.constant 0 : index
    %5 = vector.load %arg7[%c0_8, %c0_9, %c0_10] : memref<10x10x8xf32, #tpu.memory_space<vmem>>, vector<8x8x8xf32>
    %c0_11 = arith.constant 0 : index
    %c1_12 = arith.constant 1 : index
    %c0_13 = arith.constant 0 : index
    %6 = vector.load %arg7[%c0_11, %c1_12, %c0_13] : memref<10x10x8xf32, #tpu.memory_space<vmem>>, vector<8x8x8xf32>
    %c0_14 = arith.constant 0 : index
    %c2 = arith.constant 2 : index
    %c0_15 = arith.constant 0 : index
    %7 = vector.load %arg7[%c0_14, %c2, %c0_15] : memref<10x10x8xf32, #tpu.memory_space<vmem>>, vector<8x8x8xf32>
    %c1_16 = arith.constant 1 : index
    %c0_17 = arith.constant 0 : index
    %c0_18 = arith.constant 0 : index
    %8 = vector.load %arg7[%c1_16, %c0_17, %c0_18] : memref<10x10x8xf32, #tpu.memory_space<vmem>>, vector<8x8x8xf32>
    %c1_19 = arith.constant 1 : index
    %c1_20 = arith.constant 1 : index
    %c0_21 = arith.constant 0 : index
    %9 = vector.load %arg7[%c1_19, %c1_20, %c0_21] : memref<10x10x8xf32, #tpu.memory_space<vmem>>, vector<8x8x8xf32>
    %c1_22 = arith.constant 1 : index
    %c2_23 = arith.constant 2 : index
    %c0_24 = arith.constant 0 : index
    %10 = vector.load %arg7[%c1_22, %c2_23, %c0_24] : memref<10x10x8xf32, #tpu.memory_space<vmem>>, vector<8x8x8xf32>
    %c2_25 = arith.constant 2 : index
    %c0_26 = arith.constant 0 : index
    %c0_27 = arith.constant 0 : index
    %11 = vector.load %arg7[%c2_25, %c0_26, %c0_27] : memref<10x10x8xf32, #tpu.memory_space<vmem>>, vector<8x8x8xf32>
    %c2_28 = arith.constant 2 : index
    %c1_29 = arith.constant 1 : index
    %c0_30 = arith.constant 0 : index
    %12 = vector.load %arg7[%c2_28, %c1_29, %c0_30] : memref<10x10x8xf32, #tpu.memory_space<vmem>>, vector<8x8x8xf32>
    %c2_31 = arith.constant 2 : index
    %c2_32 = arith.constant 2 : index
    %c0_33 = arith.constant 0 : index
    %13 = vector.load %arg7[%c2_31, %c2_32, %c0_33] : memref<10x10x8xf32, #tpu.memory_space<vmem>>, vector<8x8x8xf32>
    %14 = tpu.concatenate %5, %6, %7, %8, %9, %10, %11, %12, %13 in 2 : vector<8x8x8xf32>, vector<8x8x8xf32>, vector<8x8x8xf32>, vector<8x8x8xf32>, vector<8x8x8xf32>, vector<8x8x8xf32>, vector<8x8x8xf32>, vector<8x8x8xf32>, vector<8x8x8xf32> -> vector<8x8x72xf32>
    %15 = vector.shape_cast %14 : vector<8x8x72xf32> to vector<64x72xf32>
    %16 = arith.truncf %15 : vector<64x72xf32> to vector<64x72xbf16>
    %c0_34 = arith.constant 0 : index
    %c0_35 = arith.constant 0 : index
    %17 = vector.load %arg2[%c0_34, %c0_35] : memref<72x16xbf16, #tpu.memory_space<vmem>>, vector<72x16xbf16>
    %cst_36 = arith.constant dense<0.000000e+00> : vector<64x16xf32>
    %18 = tpu.matmul %16, %17, %cst_36 {dimension_numbers = #tpu.dot_dimension_numbers<[1], [0], [0], [1], [0, 0, 1, 1], [], []>} : vector<64x72xbf16>, vector<72x16xbf16>, vector<64x16xf32> -> vector<64x16xf32>
    %c0_37 = arith.constant 0 : index
    %c0_38 = arith.constant 0 : index
    %19 = vector.load %arg3[%c0_37, %c0_38] : memref<1x16xf32, #tpu.memory_space<vmem>>, vector<1x16xf32>
    %20 = vector.broadcast %19 : vector<1x16xf32> to vector<64x16xf32>
    %21 = arith.addf %18, %20 : vector<64x16xf32>
    %cst_39 = arith.constant 0.000000e+00 : f32
    %22 = vector.broadcast %cst_39 : f32 to vector<64x16xf32>
    %23 = arith.maximumf %21, %22 : vector<64x16xf32>
    %cst_40 = arith.constant 0.000000e+00 : f32
    %24 = vector.broadcast %cst_40 : f32 to vector<10x10x16xf32>
    %c0_41 = arith.constant 0 : index
    %c0_42 = arith.constant 0 : index
    %c0_43 = arith.constant 0 : index
    %25 = vector.load %arg8[%c0_41, %c0_42, %c0_43] : memref<10x10x16xf32, #tpu.memory_space<vmem>>, vector<10x10x16xf32>
    tpu.vector_store %arg8[%c0_41, %c0_42, %c0_43], %24 {strides = array<i32>} : memref<10x10x16xf32, #tpu.memory_space<vmem>>, vector<10x10x16xf32>,
    %26 = vector.shape_cast %23 : vector<64x16xf32> to vector<8x8x16xf32>
    %c1_44 = arith.constant 1 : index
    %c1_45 = arith.constant 1 : index
    %c0_46 = arith.constant 0 : index
    %27 = vector.load %arg8[%c1_44, %c1_45, %c0_46] : memref<10x10x16xf32, #tpu.memory_space<vmem>>, vector<8x8x16xf32>
    tpu.vector_store %arg8[%c1_44, %c1_45, %c0_46], %26 {strides = array<i32>} : memref<10x10x16xf32, #tpu.memory_space<vmem>>, vector<8x8x16xf32>,
    %c0_47 = arith.constant 0 : index
    %c0_48 = arith.constant 0 : index
    %c0_49 = arith.constant 0 : index
    %28 = vector.load %arg8[%c0_47, %c0_48, %c0_49] : memref<10x10x16xf32, #tpu.memory_space<vmem>>, vector<8x8x16xf32>
    %c0_50 = arith.constant 0 : index
    %c1_51 = arith.constant 1 : index
    %c0_52 = arith.constant 0 : index
    %29 = vector.load %arg8[%c0_50, %c1_51, %c0_52] : memref<10x10x16xf32, #tpu.memory_space<vmem>>, vector<8x8x16xf32>
    %c0_53 = arith.constant 0 : index
    %c2_54 = arith.constant 2 : index
    %c0_55 = arith.constant 0 : index
    %30 = vector.load %arg8[%c0_53, %c2_54, %c0_55] : memref<10x10x16xf32, #tpu.memory_space<vmem>>, vector<8x8x16xf32>
    %c1_56 = arith.constant 1 : index
    %c0_57 = arith.constant 0 : index
    %c0_58 = arith.constant 0 : index
    %31 = vector.load %arg8[%c1_56, %c0_57, %c0_58] : memref<10x10x16xf32, #tpu.memory_space<vmem>>, vector<8x8x16xf32>
    %c1_59 = arith.constant 1 : index
    %c1_60 = arith.constant 1 : index
    %c0_61 = arith.constant 0 : index
    %32 = vector.load %arg8[%c1_59, %c1_60, %c0_61] : memref<10x10x16xf32, #tpu.memory_space<vmem>>, vector<8x8x16xf32>
    %c1_62 = arith.constant 1 : index
    %c2_63 = arith.constant 2 : index
    %c0_64 = arith.constant 0 : index
    %33 = vector.load %arg8[%c1_62, %c2_63, %c0_64] : memref<10x10x16xf32, #tpu.memory_space<vmem>>, vector<8x8x16xf32>
    %c2_65 = arith.constant 2 : index
    %c0_66 = arith.constant 0 : index
    %c0_67 = arith.constant 0 : index
    %34 = vector.load %arg8[%c2_65, %c0_66, %c0_67] : memref<10x10x16xf32, #tpu.memory_space<vmem>>, vector<8x8x16xf32>
    %c2_68 = arith.constant 2 : index
    %c1_69 = arith.constant 1 : index
    %c0_70 = arith.constant 0 : index
    %35 = vector.load %arg8[%c2_68, %c1_69, %c0_70] : memref<10x10x16xf32, #tpu.memory_space<vmem>>, vector<8x8x16xf32>
    %c2_71 = arith.constant 2 : index
    %c2_72 = arith.constant 2 : index
    %c0_73 = arith.constant 0 : index
    %36 = vector.load %arg8[%c2_71, %c2_72, %c0_73] : memref<10x10x16xf32, #tpu.memory_space<vmem>>, vector<8x8x16xf32>
    %37 = tpu.concatenate %28, %29, %30, %31, %32, %33, %34, %35, %36 in 2 : vector<8x8x16xf32>, vector<8x8x16xf32>, vector<8x8x16xf32>, vector<8x8x16xf32>, vector<8x8x16xf32>, vector<8x8x16xf32>, vector<8x8x16xf32>, vector<8x8x16xf32>, vector<8x8x16xf32> -> vector<8x8x144xf32>
    %38 = vector.shape_cast %37 : vector<8x8x144xf32> to vector<64x144xf32>
    %39 = arith.truncf %38 : vector<64x144xf32> to vector<64x144xbf16>
    %c0_74 = arith.constant 0 : index
    %c0_75 = arith.constant 0 : index
    %40 = vector.load %arg4[%c0_74, %c0_75] : memref<144x16xbf16, #tpu.memory_space<vmem>>, vector<144x16xbf16>
    %cst_76 = arith.constant dense<0.000000e+00> : vector<64x16xf32>
    %41 = tpu.matmul %39, %40, %cst_76 {dimension_numbers = #tpu.dot_dimension_numbers<[1], [0], [0], [1], [0, 0, 1, 1], [], []>} : vector<64x144xbf16>, vector<144x16xbf16>, vector<64x16xf32> -> vector<64x16xf32>
    %c0_77 = arith.constant 0 : index
    %c0_78 = arith.constant 0 : index
    %42 = vector.load %arg5[%c0_77, %c0_78] : memref<1x16xf32, #tpu.memory_space<vmem>>, vector<1x16xf32>
    %43 = vector.broadcast %42 : vector<1x16xf32> to vector<64x16xf32>
    %44 = arith.addf %41, %43 : vector<64x16xf32>
    %cst_79 = arith.constant 0.000000e+00 : f32
    %45 = vector.broadcast %cst_79 : f32 to vector<64x16xf32>
    %46 = arith.maximumf %44, %45 : vector<64x16xf32>
    %47 = vector.shape_cast %46 : vector<64x16xf32> to vector<8x8x16xf32>
    %48 = vector.shape_cast %47 : vector<8x8x16xf32> to vector<4x2x8x16xf32>
    %49 = vector.extract_strided_slice %48 {offsets = [0, 0, 0, 0], sizes = [4, 1, 8, 16], strides = [1, 1, 1, 1]} : vector<4x2x8x16xf32> to vector<4x1x8x16xf32>
    %50 = vector.shape_cast %49 : vector<4x1x8x16xf32> to vector<4x8x16xf32>
    %51 = vector.extract_strided_slice %48 {offsets = [0, 1, 0, 0], sizes = [4, 1, 8, 16], strides = [1, 1, 1, 1]} : vector<4x2x8x16xf32> to vector<4x1x8x16xf32>
    %52 = vector.shape_cast %51 : vector<4x1x8x16xf32> to vector<4x8x16xf32>
    %53 = arith.maximumf %50, %52 : vector<4x8x16xf32>
    %c0_80 = arith.constant 0 : index
    %c0_81 = arith.constant 0 : index
    %c0_82 = arith.constant 0 : index
    %c0_83 = arith.constant 0 : index
    %54 = vector.load %arg6[%c0_80, %c0_81, %c0_82, %c0_83] : memref<1x4x8x16xf32, #tpu.memory_space<vmem>>, vector<1x4x8x16xf32>
    %55 = vector.shape_cast %54 : vector<1x4x8x16xf32> to vector<4x8x16xf32>
    %56 = vector.shape_cast %53 : vector<4x8x16xf32> to vector<1x4x8x16xf32>
    tpu.vector_store %arg6[%c0_80, %c0_81, %c0_82, %c0_83], %56 {strides = array<i32>} : memref<1x4x8x16xf32, #tpu.memory_space<vmem>>, vector<1x4x8x16xf32>,
    return
  }
  func.func @transform_0(%arg0: i32) -> (i32, i32, i32, i32) {
    %c0_i32 = arith.constant 0 : i32
    %c0_i32_0 = arith.constant 0 : i32
    %c0_i32_1 = arith.constant 0 : i32
    %c0_i32_2 = arith.constant 0 : i32
    return %arg0, %c0_i32, %c0_i32_0, %c0_i32_1 : i32, i32, i32, i32
  }
  func.func @transform_1(%arg0: i32) -> (i32, i32) {
    %c0_i32 = arith.constant 0 : i32
    %c0_i32_0 = arith.constant 0 : i32
    %c0_i32_1 = arith.constant 0 : i32
    return %c0_i32, %c0_i32_0 : i32, i32
  }
  func.func @transform_2(%arg0: i32) -> (i32, i32) {
    %c0_i32 = arith.constant 0 : i32
    %c0_i32_0 = arith.constant 0 : i32
    %c0_i32_1 = arith.constant 0 : i32
    return %c0_i32, %c0_i32_0 : i32, i32
  }
  func.func @transform_3(%arg0: i32) -> (i32, i32) {
    %c0_i32 = arith.constant 0 : i32
    %c0_i32_0 = arith.constant 0 : i32
    %c0_i32_1 = arith.constant 0 : i32
    return %c0_i32, %c0_i32_0 : i32, i32
  }
  func.func @transform_4(%arg0: i32) -> (i32, i32) {
    %c0_i32 = arith.constant 0 : i32
    %c0_i32_0 = arith.constant 0 : i32
    %c0_i32_1 = arith.constant 0 : i32
    return %c0_i32, %c0_i32_0 : i32, i32
  }
  func.func @transform_5(%arg0: i32) -> (i32, i32, i32, i32) {
    %c0_i32 = arith.constant 0 : i32
    %c0_i32_0 = arith.constant 0 : i32
    %c0_i32_1 = arith.constant 0 : i32
    %c0_i32_2 = arith.constant 0 : i32
    return %arg0, %c0_i32, %c0_i32_0, %c0_i32_1 : i32, i32, i32, i32
  }
}

module attributes {stable_mosaic.version = 11 : i64} {
  func.func @_conv_block_kernel(%arg0: i32, %arg1: memref<1x4x4x16xf32, #tpu.memory_space<vmem>>, %arg2: memref<144x32xbf16, #tpu.memory_space<vmem>>, %arg3: memref<1x32xf32, #tpu.memory_space<vmem>>, %arg4: memref<288x32xbf16, #tpu.memory_space<vmem>>, %arg5: memref<1x32xf32, #tpu.memory_space<vmem>>, %arg6: memref<1x2x4x32xf32, #tpu.memory_space<vmem>>, %arg7: memref<6x6x16xf32, #tpu.memory_space<vmem>>, %arg8: memref<6x6x32xf32, #tpu.memory_space<vmem>>) attributes {dimension_semantics = [#tpu.dimension_semantics<parallel>], iteration_bounds = array<i64: 2>, scalar_prefetch = 0 : i64, scratch_operands = 2 : i64, tpu.core_type = #tpu.core_type<tc>, window_params = [{transform_indices = @transform_0, window_bounds = array<i64: 1, 4, 4, 16>}, {pipeline_mode = #tpu.pipeline_mode<synchronous>, transform_indices = @transform_1, window_bounds = array<i64: 144, 32>}, {pipeline_mode = #tpu.pipeline_mode<synchronous>, transform_indices = @transform_2, window_bounds = array<i64: 1, 32>}, {pipeline_mode = #tpu.pipeline_mode<synchronous>, transform_indices = @transform_3, window_bounds = array<i64: 288, 32>}, {pipeline_mode = #tpu.pipeline_mode<synchronous>, transform_indices = @transform_4, window_bounds = array<i64: 1, 32>}, {transform_indices = @transform_5, window_bounds = array<i64: 1, 2, 4, 32>}]} {
    %cst = arith.constant 0.000000e+00 : f32
    %0 = vector.broadcast %cst : f32 to vector<6x6x16xf32>
    %c0 = arith.constant 0 : index
    %c0_0 = arith.constant 0 : index
    %c0_1 = arith.constant 0 : index
    %1 = vector.load %arg7[%c0, %c0_0, %c0_1] : memref<6x6x16xf32, #tpu.memory_space<vmem>>, vector<6x6x16xf32>
    tpu.vector_store %arg7[%c0, %c0_0, %c0_1], %0 {strides = array<i32>} : memref<6x6x16xf32, #tpu.memory_space<vmem>>, vector<6x6x16xf32>,
    %c0_2 = arith.constant 0 : index
    %c0_3 = arith.constant 0 : index
    %c0_4 = arith.constant 0 : index
    %c0_5 = arith.constant 0 : index
    %2 = vector.load %arg1[%c0_2, %c0_3, %c0_4, %c0_5] : memref<1x4x4x16xf32, #tpu.memory_space<vmem>>, vector<1x4x4x16xf32>
    %3 = vector.shape_cast %2 : vector<1x4x4x16xf32> to vector<4x4x16xf32>
    %c1 = arith.constant 1 : index
    %c1_6 = arith.constant 1 : index
    %c0_7 = arith.constant 0 : index
    %4 = vector.load %arg7[%c1, %c1_6, %c0_7] : memref<6x6x16xf32, #tpu.memory_space<vmem>>, vector<4x4x16xf32>
    tpu.vector_store %arg7[%c1, %c1_6, %c0_7], %3 {strides = array<i32>} : memref<6x6x16xf32, #tpu.memory_space<vmem>>, vector<4x4x16xf32>,
    %c0_8 = arith.constant 0 : index
    %c0_9 = arith.constant 0 : index
    %c0_10 = arith.constant 0 : index
    %5 = vector.load %arg7[%c0_8, %c0_9, %c0_10] : memref<6x6x16xf32, #tpu.memory_space<vmem>>, vector<4x4x16xf32>
    %c0_11 = arith.constant 0 : index
    %c1_12 = arith.constant 1 : index
    %c0_13 = arith.constant 0 : index
    %6 = vector.load %arg7[%c0_11, %c1_12, %c0_13] : memref<6x6x16xf32, #tpu.memory_space<vmem>>, vector<4x4x16xf32>
    %c0_14 = arith.constant 0 : index
    %c2 = arith.constant 2 : index
    %c0_15 = arith.constant 0 : index
    %7 = vector.load %arg7[%c0_14, %c2, %c0_15] : memref<6x6x16xf32, #tpu.memory_space<vmem>>, vector<4x4x16xf32>
    %c1_16 = arith.constant 1 : index
    %c0_17 = arith.constant 0 : index
    %c0_18 = arith.constant 0 : index
    %8 = vector.load %arg7[%c1_16, %c0_17, %c0_18] : memref<6x6x16xf32, #tpu.memory_space<vmem>>, vector<4x4x16xf32>
    %c1_19 = arith.constant 1 : index
    %c1_20 = arith.constant 1 : index
    %c0_21 = arith.constant 0 : index
    %9 = vector.load %arg7[%c1_19, %c1_20, %c0_21] : memref<6x6x16xf32, #tpu.memory_space<vmem>>, vector<4x4x16xf32>
    %c1_22 = arith.constant 1 : index
    %c2_23 = arith.constant 2 : index
    %c0_24 = arith.constant 0 : index
    %10 = vector.load %arg7[%c1_22, %c2_23, %c0_24] : memref<6x6x16xf32, #tpu.memory_space<vmem>>, vector<4x4x16xf32>
    %c2_25 = arith.constant 2 : index
    %c0_26 = arith.constant 0 : index
    %c0_27 = arith.constant 0 : index
    %11 = vector.load %arg7[%c2_25, %c0_26, %c0_27] : memref<6x6x16xf32, #tpu.memory_space<vmem>>, vector<4x4x16xf32>
    %c2_28 = arith.constant 2 : index
    %c1_29 = arith.constant 1 : index
    %c0_30 = arith.constant 0 : index
    %12 = vector.load %arg7[%c2_28, %c1_29, %c0_30] : memref<6x6x16xf32, #tpu.memory_space<vmem>>, vector<4x4x16xf32>
    %c2_31 = arith.constant 2 : index
    %c2_32 = arith.constant 2 : index
    %c0_33 = arith.constant 0 : index
    %13 = vector.load %arg7[%c2_31, %c2_32, %c0_33] : memref<6x6x16xf32, #tpu.memory_space<vmem>>, vector<4x4x16xf32>
    %14 = tpu.concatenate %5, %6, %7, %8, %9, %10, %11, %12, %13 in 2 : vector<4x4x16xf32>, vector<4x4x16xf32>, vector<4x4x16xf32>, vector<4x4x16xf32>, vector<4x4x16xf32>, vector<4x4x16xf32>, vector<4x4x16xf32>, vector<4x4x16xf32>, vector<4x4x16xf32> -> vector<4x4x144xf32>
    %15 = vector.shape_cast %14 : vector<4x4x144xf32> to vector<16x144xf32>
    %16 = arith.truncf %15 : vector<16x144xf32> to vector<16x144xbf16>
    %c0_34 = arith.constant 0 : index
    %c0_35 = arith.constant 0 : index
    %17 = vector.load %arg2[%c0_34, %c0_35] : memref<144x32xbf16, #tpu.memory_space<vmem>>, vector<144x32xbf16>
    %cst_36 = arith.constant dense<0.000000e+00> : vector<16x32xf32>
    %18 = tpu.matmul %16, %17, %cst_36 {dimension_numbers = #tpu.dot_dimension_numbers<[1], [0], [0], [1], [0, 0, 1, 1], [], []>} : vector<16x144xbf16>, vector<144x32xbf16>, vector<16x32xf32> -> vector<16x32xf32>
    %c0_37 = arith.constant 0 : index
    %c0_38 = arith.constant 0 : index
    %19 = vector.load %arg3[%c0_37, %c0_38] : memref<1x32xf32, #tpu.memory_space<vmem>>, vector<1x32xf32>
    %20 = vector.broadcast %19 : vector<1x32xf32> to vector<16x32xf32>
    %21 = arith.addf %18, %20 : vector<16x32xf32>
    %cst_39 = arith.constant 0.000000e+00 : f32
    %22 = vector.broadcast %cst_39 : f32 to vector<16x32xf32>
    %23 = arith.maximumf %21, %22 : vector<16x32xf32>
    %cst_40 = arith.constant 0.000000e+00 : f32
    %24 = vector.broadcast %cst_40 : f32 to vector<6x6x32xf32>
    %c0_41 = arith.constant 0 : index
    %c0_42 = arith.constant 0 : index
    %c0_43 = arith.constant 0 : index
    %25 = vector.load %arg8[%c0_41, %c0_42, %c0_43] : memref<6x6x32xf32, #tpu.memory_space<vmem>>, vector<6x6x32xf32>
    tpu.vector_store %arg8[%c0_41, %c0_42, %c0_43], %24 {strides = array<i32>} : memref<6x6x32xf32, #tpu.memory_space<vmem>>, vector<6x6x32xf32>,
    %26 = vector.shape_cast %23 : vector<16x32xf32> to vector<4x4x32xf32>
    %c1_44 = arith.constant 1 : index
    %c1_45 = arith.constant 1 : index
    %c0_46 = arith.constant 0 : index
    %27 = vector.load %arg8[%c1_44, %c1_45, %c0_46] : memref<6x6x32xf32, #tpu.memory_space<vmem>>, vector<4x4x32xf32>
    tpu.vector_store %arg8[%c1_44, %c1_45, %c0_46], %26 {strides = array<i32>} : memref<6x6x32xf32, #tpu.memory_space<vmem>>, vector<4x4x32xf32>,
    %c0_47 = arith.constant 0 : index
    %c0_48 = arith.constant 0 : index
    %c0_49 = arith.constant 0 : index
    %28 = vector.load %arg8[%c0_47, %c0_48, %c0_49] : memref<6x6x32xf32, #tpu.memory_space<vmem>>, vector<4x4x32xf32>
    %c0_50 = arith.constant 0 : index
    %c1_51 = arith.constant 1 : index
    %c0_52 = arith.constant 0 : index
    %29 = vector.load %arg8[%c0_50, %c1_51, %c0_52] : memref<6x6x32xf32, #tpu.memory_space<vmem>>, vector<4x4x32xf32>
    %c0_53 = arith.constant 0 : index
    %c2_54 = arith.constant 2 : index
    %c0_55 = arith.constant 0 : index
    %30 = vector.load %arg8[%c0_53, %c2_54, %c0_55] : memref<6x6x32xf32, #tpu.memory_space<vmem>>, vector<4x4x32xf32>
    %c1_56 = arith.constant 1 : index
    %c0_57 = arith.constant 0 : index
    %c0_58 = arith.constant 0 : index
    %31 = vector.load %arg8[%c1_56, %c0_57, %c0_58] : memref<6x6x32xf32, #tpu.memory_space<vmem>>, vector<4x4x32xf32>
    %c1_59 = arith.constant 1 : index
    %c1_60 = arith.constant 1 : index
    %c0_61 = arith.constant 0 : index
    %32 = vector.load %arg8[%c1_59, %c1_60, %c0_61] : memref<6x6x32xf32, #tpu.memory_space<vmem>>, vector<4x4x32xf32>
    %c1_62 = arith.constant 1 : index
    %c2_63 = arith.constant 2 : index
    %c0_64 = arith.constant 0 : index
    %33 = vector.load %arg8[%c1_62, %c2_63, %c0_64] : memref<6x6x32xf32, #tpu.memory_space<vmem>>, vector<4x4x32xf32>
    %c2_65 = arith.constant 2 : index
    %c0_66 = arith.constant 0 : index
    %c0_67 = arith.constant 0 : index
    %34 = vector.load %arg8[%c2_65, %c0_66, %c0_67] : memref<6x6x32xf32, #tpu.memory_space<vmem>>, vector<4x4x32xf32>
    %c2_68 = arith.constant 2 : index
    %c1_69 = arith.constant 1 : index
    %c0_70 = arith.constant 0 : index
    %35 = vector.load %arg8[%c2_68, %c1_69, %c0_70] : memref<6x6x32xf32, #tpu.memory_space<vmem>>, vector<4x4x32xf32>
    %c2_71 = arith.constant 2 : index
    %c2_72 = arith.constant 2 : index
    %c0_73 = arith.constant 0 : index
    %36 = vector.load %arg8[%c2_71, %c2_72, %c0_73] : memref<6x6x32xf32, #tpu.memory_space<vmem>>, vector<4x4x32xf32>
    %37 = tpu.concatenate %28, %29, %30, %31, %32, %33, %34, %35, %36 in 2 : vector<4x4x32xf32>, vector<4x4x32xf32>, vector<4x4x32xf32>, vector<4x4x32xf32>, vector<4x4x32xf32>, vector<4x4x32xf32>, vector<4x4x32xf32>, vector<4x4x32xf32>, vector<4x4x32xf32> -> vector<4x4x288xf32>
    %38 = vector.shape_cast %37 : vector<4x4x288xf32> to vector<16x288xf32>
    %39 = arith.truncf %38 : vector<16x288xf32> to vector<16x288xbf16>
    %c0_74 = arith.constant 0 : index
    %c0_75 = arith.constant 0 : index
    %40 = vector.load %arg4[%c0_74, %c0_75] : memref<288x32xbf16, #tpu.memory_space<vmem>>, vector<288x32xbf16>
    %cst_76 = arith.constant dense<0.000000e+00> : vector<16x32xf32>
    %41 = tpu.matmul %39, %40, %cst_76 {dimension_numbers = #tpu.dot_dimension_numbers<[1], [0], [0], [1], [0, 0, 1, 1], [], []>} : vector<16x288xbf16>, vector<288x32xbf16>, vector<16x32xf32> -> vector<16x32xf32>
    %c0_77 = arith.constant 0 : index
    %c0_78 = arith.constant 0 : index
    %42 = vector.load %arg5[%c0_77, %c0_78] : memref<1x32xf32, #tpu.memory_space<vmem>>, vector<1x32xf32>
    %43 = vector.broadcast %42 : vector<1x32xf32> to vector<16x32xf32>
    %44 = arith.addf %41, %43 : vector<16x32xf32>
    %cst_79 = arith.constant 0.000000e+00 : f32
    %45 = vector.broadcast %cst_79 : f32 to vector<16x32xf32>
    %46 = arith.maximumf %44, %45 : vector<16x32xf32>
    %47 = vector.shape_cast %46 : vector<16x32xf32> to vector<4x4x32xf32>
    %48 = vector.shape_cast %47 : vector<4x4x32xf32> to vector<2x2x4x32xf32>
    %49 = vector.extract_strided_slice %48 {offsets = [0, 0, 0, 0], sizes = [2, 1, 4, 32], strides = [1, 1, 1, 1]} : vector<2x2x4x32xf32> to vector<2x1x4x32xf32>
    %50 = vector.shape_cast %49 : vector<2x1x4x32xf32> to vector<2x4x32xf32>
    %51 = vector.extract_strided_slice %48 {offsets = [0, 1, 0, 0], sizes = [2, 1, 4, 32], strides = [1, 1, 1, 1]} : vector<2x2x4x32xf32> to vector<2x1x4x32xf32>
    %52 = vector.shape_cast %51 : vector<2x1x4x32xf32> to vector<2x4x32xf32>
    %53 = arith.maximumf %50, %52 : vector<2x4x32xf32>
    %c0_80 = arith.constant 0 : index
    %c0_81 = arith.constant 0 : index
    %c0_82 = arith.constant 0 : index
    %c0_83 = arith.constant 0 : index
    %54 = vector.load %arg6[%c0_80, %c0_81, %c0_82, %c0_83] : memref<1x2x4x32xf32, #tpu.memory_space<vmem>>, vector<1x2x4x32xf32>
    %55 = vector.shape_cast %54 : vector<1x2x4x32xf32> to vector<2x4x32xf32>
    %56 = vector.shape_cast %53 : vector<2x4x32xf32> to vector<1x2x4x32xf32>
    tpu.vector_store %arg6[%c0_80, %c0_81, %c0_82, %c0_83], %56 {strides = array<i32>} : memref<1x2x4x32xf32, #tpu.memory_space<vmem>>, vector<1x2x4x32xf32>,
    return
  }
  func.func @transform_0(%arg0: i32) -> (i32, i32, i32, i32) {
    %c0_i32 = arith.constant 0 : i32
    %c0_i32_0 = arith.constant 0 : i32
    %c0_i32_1 = arith.constant 0 : i32
    %c0_i32_2 = arith.constant 0 : i32
    return %arg0, %c0_i32, %c0_i32_0, %c0_i32_1 : i32, i32, i32, i32
  }
  func.func @transform_1(%arg0: i32) -> (i32, i32) {
    %c0_i32 = arith.constant 0 : i32
    %c0_i32_0 = arith.constant 0 : i32
    %c0_i32_1 = arith.constant 0 : i32
    return %c0_i32, %c0_i32_0 : i32, i32
  }
  func.func @transform_2(%arg0: i32) -> (i32, i32) {
    %c0_i32 = arith.constant 0 : i32
    %c0_i32_0 = arith.constant 0 : i32
    %c0_i32_1 = arith.constant 0 : i32
    return %c0_i32, %c0_i32_0 : i32, i32
  }
  func.func @transform_3(%arg0: i32) -> (i32, i32) {
    %c0_i32 = arith.constant 0 : i32
    %c0_i32_0 = arith.constant 0 : i32
    %c0_i32_1 = arith.constant 0 : i32
    return %c0_i32, %c0_i32_0 : i32, i32
  }
  func.func @transform_4(%arg0: i32) -> (i32, i32) {
    %c0_i32 = arith.constant 0 : i32
    %c0_i32_0 = arith.constant 0 : i32
    %c0_i32_1 = arith.constant 0 : i32
    return %c0_i32, %c0_i32_0 : i32, i32
  }
  func.func @transform_5(%arg0: i32) -> (i32, i32, i32, i32) {
    %c0_i32 = arith.constant 0 : i32
    %c0_i32_0 = arith.constant 0 : i32
    %c0_i32_1 = arith.constant 0 : i32
    %c0_i32_2 = arith.constant 0 : i32
    return %arg0, %c0_i32, %c0_i32_0, %c0_i32_1 : i32, i32, i32, i32
  }
}

module attributes {stable_mosaic.version = 11 : i64} {
  func.func @_conv_block_kernel(%arg0: i32, %arg1: memref<1x4x4x64xf32, #tpu.memory_space<vmem>>, %arg2: memref<576x32xbf16, #tpu.memory_space<vmem>>, %arg3: memref<1x32xf32, #tpu.memory_space<vmem>>, %arg4: memref<288x32xbf16, #tpu.memory_space<vmem>>, %arg5: memref<1x32xf32, #tpu.memory_space<vmem>>, %arg6: memref<1x2x4x32xf32, #tpu.memory_space<vmem>>, %arg7: memref<6x6x64xf32, #tpu.memory_space<vmem>>, %arg8: memref<6x6x32xf32, #tpu.memory_space<vmem>>) attributes {dimension_semantics = [#tpu.dimension_semantics<parallel>], iteration_bounds = array<i64: 2>, scalar_prefetch = 0 : i64, scratch_operands = 2 : i64, tpu.core_type = #tpu.core_type<tc>, window_params = [{transform_indices = @transform_0, window_bounds = array<i64: 1, 4, 4, 64>}, {pipeline_mode = #tpu.pipeline_mode<synchronous>, transform_indices = @transform_1, window_bounds = array<i64: 576, 32>}, {pipeline_mode = #tpu.pipeline_mode<synchronous>, transform_indices = @transform_2, window_bounds = array<i64: 1, 32>}, {pipeline_mode = #tpu.pipeline_mode<synchronous>, transform_indices = @transform_3, window_bounds = array<i64: 288, 32>}, {pipeline_mode = #tpu.pipeline_mode<synchronous>, transform_indices = @transform_4, window_bounds = array<i64: 1, 32>}, {transform_indices = @transform_5, window_bounds = array<i64: 1, 2, 4, 32>}]} {
    %cst = arith.constant 0.000000e+00 : f32
    %0 = vector.broadcast %cst : f32 to vector<6x6x64xf32>
    %c0 = arith.constant 0 : index
    %c0_0 = arith.constant 0 : index
    %c0_1 = arith.constant 0 : index
    %1 = vector.load %arg7[%c0, %c0_0, %c0_1] : memref<6x6x64xf32, #tpu.memory_space<vmem>>, vector<6x6x64xf32>
    tpu.vector_store %arg7[%c0, %c0_0, %c0_1], %0 {strides = array<i32>} : memref<6x6x64xf32, #tpu.memory_space<vmem>>, vector<6x6x64xf32>,
    %c0_2 = arith.constant 0 : index
    %c0_3 = arith.constant 0 : index
    %c0_4 = arith.constant 0 : index
    %c0_5 = arith.constant 0 : index
    %2 = vector.load %arg1[%c0_2, %c0_3, %c0_4, %c0_5] : memref<1x4x4x64xf32, #tpu.memory_space<vmem>>, vector<1x4x4x64xf32>
    %3 = vector.shape_cast %2 : vector<1x4x4x64xf32> to vector<4x4x64xf32>
    %c1 = arith.constant 1 : index
    %c1_6 = arith.constant 1 : index
    %c0_7 = arith.constant 0 : index
    %4 = vector.load %arg7[%c1, %c1_6, %c0_7] : memref<6x6x64xf32, #tpu.memory_space<vmem>>, vector<4x4x64xf32>
    tpu.vector_store %arg7[%c1, %c1_6, %c0_7], %3 {strides = array<i32>} : memref<6x6x64xf32, #tpu.memory_space<vmem>>, vector<4x4x64xf32>,
    %c0_8 = arith.constant 0 : index
    %c0_9 = arith.constant 0 : index
    %c0_10 = arith.constant 0 : index
    %5 = vector.load %arg7[%c0_8, %c0_9, %c0_10] : memref<6x6x64xf32, #tpu.memory_space<vmem>>, vector<4x4x64xf32>
    %c0_11 = arith.constant 0 : index
    %c1_12 = arith.constant 1 : index
    %c0_13 = arith.constant 0 : index
    %6 = vector.load %arg7[%c0_11, %c1_12, %c0_13] : memref<6x6x64xf32, #tpu.memory_space<vmem>>, vector<4x4x64xf32>
    %c0_14 = arith.constant 0 : index
    %c2 = arith.constant 2 : index
    %c0_15 = arith.constant 0 : index
    %7 = vector.load %arg7[%c0_14, %c2, %c0_15] : memref<6x6x64xf32, #tpu.memory_space<vmem>>, vector<4x4x64xf32>
    %c1_16 = arith.constant 1 : index
    %c0_17 = arith.constant 0 : index
    %c0_18 = arith.constant 0 : index
    %8 = vector.load %arg7[%c1_16, %c0_17, %c0_18] : memref<6x6x64xf32, #tpu.memory_space<vmem>>, vector<4x4x64xf32>
    %c1_19 = arith.constant 1 : index
    %c1_20 = arith.constant 1 : index
    %c0_21 = arith.constant 0 : index
    %9 = vector.load %arg7[%c1_19, %c1_20, %c0_21] : memref<6x6x64xf32, #tpu.memory_space<vmem>>, vector<4x4x64xf32>
    %c1_22 = arith.constant 1 : index
    %c2_23 = arith.constant 2 : index
    %c0_24 = arith.constant 0 : index
    %10 = vector.load %arg7[%c1_22, %c2_23, %c0_24] : memref<6x6x64xf32, #tpu.memory_space<vmem>>, vector<4x4x64xf32>
    %c2_25 = arith.constant 2 : index
    %c0_26 = arith.constant 0 : index
    %c0_27 = arith.constant 0 : index
    %11 = vector.load %arg7[%c2_25, %c0_26, %c0_27] : memref<6x6x64xf32, #tpu.memory_space<vmem>>, vector<4x4x64xf32>
    %c2_28 = arith.constant 2 : index
    %c1_29 = arith.constant 1 : index
    %c0_30 = arith.constant 0 : index
    %12 = vector.load %arg7[%c2_28, %c1_29, %c0_30] : memref<6x6x64xf32, #tpu.memory_space<vmem>>, vector<4x4x64xf32>
    %c2_31 = arith.constant 2 : index
    %c2_32 = arith.constant 2 : index
    %c0_33 = arith.constant 0 : index
    %13 = vector.load %arg7[%c2_31, %c2_32, %c0_33] : memref<6x6x64xf32, #tpu.memory_space<vmem>>, vector<4x4x64xf32>
    %14 = tpu.concatenate %5, %6, %7, %8, %9, %10, %11, %12, %13 in 2 : vector<4x4x64xf32>, vector<4x4x64xf32>, vector<4x4x64xf32>, vector<4x4x64xf32>, vector<4x4x64xf32>, vector<4x4x64xf32>, vector<4x4x64xf32>, vector<4x4x64xf32>, vector<4x4x64xf32> -> vector<4x4x576xf32>
    %15 = vector.shape_cast %14 : vector<4x4x576xf32> to vector<16x576xf32>
    %16 = arith.truncf %15 : vector<16x576xf32> to vector<16x576xbf16>
    %c0_34 = arith.constant 0 : index
    %c0_35 = arith.constant 0 : index
    %17 = vector.load %arg2[%c0_34, %c0_35] : memref<576x32xbf16, #tpu.memory_space<vmem>>, vector<576x32xbf16>
    %cst_36 = arith.constant dense<0.000000e+00> : vector<16x32xf32>
    %18 = tpu.matmul %16, %17, %cst_36 {dimension_numbers = #tpu.dot_dimension_numbers<[1], [0], [0], [1], [0, 0, 1, 1], [], []>} : vector<16x576xbf16>, vector<576x32xbf16>, vector<16x32xf32> -> vector<16x32xf32>
    %c0_37 = arith.constant 0 : index
    %c0_38 = arith.constant 0 : index
    %19 = vector.load %arg3[%c0_37, %c0_38] : memref<1x32xf32, #tpu.memory_space<vmem>>, vector<1x32xf32>
    %20 = vector.broadcast %19 : vector<1x32xf32> to vector<16x32xf32>
    %21 = arith.addf %18, %20 : vector<16x32xf32>
    %cst_39 = arith.constant 0.000000e+00 : f32
    %22 = vector.broadcast %cst_39 : f32 to vector<16x32xf32>
    %23 = arith.maximumf %21, %22 : vector<16x32xf32>
    %cst_40 = arith.constant 0.000000e+00 : f32
    %24 = vector.broadcast %cst_40 : f32 to vector<6x6x32xf32>
    %c0_41 = arith.constant 0 : index
    %c0_42 = arith.constant 0 : index
    %c0_43 = arith.constant 0 : index
    %25 = vector.load %arg8[%c0_41, %c0_42, %c0_43] : memref<6x6x32xf32, #tpu.memory_space<vmem>>, vector<6x6x32xf32>
    tpu.vector_store %arg8[%c0_41, %c0_42, %c0_43], %24 {strides = array<i32>} : memref<6x6x32xf32, #tpu.memory_space<vmem>>, vector<6x6x32xf32>,
    %26 = vector.shape_cast %23 : vector<16x32xf32> to vector<4x4x32xf32>
    %c1_44 = arith.constant 1 : index
    %c1_45 = arith.constant 1 : index
    %c0_46 = arith.constant 0 : index
    %27 = vector.load %arg8[%c1_44, %c1_45, %c0_46] : memref<6x6x32xf32, #tpu.memory_space<vmem>>, vector<4x4x32xf32>
    tpu.vector_store %arg8[%c1_44, %c1_45, %c0_46], %26 {strides = array<i32>} : memref<6x6x32xf32, #tpu.memory_space<vmem>>, vector<4x4x32xf32>,
    %c0_47 = arith.constant 0 : index
    %c0_48 = arith.constant 0 : index
    %c0_49 = arith.constant 0 : index
    %28 = vector.load %arg8[%c0_47, %c0_48, %c0_49] : memref<6x6x32xf32, #tpu.memory_space<vmem>>, vector<4x4x32xf32>
    %c0_50 = arith.constant 0 : index
    %c1_51 = arith.constant 1 : index
    %c0_52 = arith.constant 0 : index
    %29 = vector.load %arg8[%c0_50, %c1_51, %c0_52] : memref<6x6x32xf32, #tpu.memory_space<vmem>>, vector<4x4x32xf32>
    %c0_53 = arith.constant 0 : index
    %c2_54 = arith.constant 2 : index
    %c0_55 = arith.constant 0 : index
    %30 = vector.load %arg8[%c0_53, %c2_54, %c0_55] : memref<6x6x32xf32, #tpu.memory_space<vmem>>, vector<4x4x32xf32>
    %c1_56 = arith.constant 1 : index
    %c0_57 = arith.constant 0 : index
    %c0_58 = arith.constant 0 : index
    %31 = vector.load %arg8[%c1_56, %c0_57, %c0_58] : memref<6x6x32xf32, #tpu.memory_space<vmem>>, vector<4x4x32xf32>
    %c1_59 = arith.constant 1 : index
    %c1_60 = arith.constant 1 : index
    %c0_61 = arith.constant 0 : index
    %32 = vector.load %arg8[%c1_59, %c1_60, %c0_61] : memref<6x6x32xf32, #tpu.memory_space<vmem>>, vector<4x4x32xf32>
    %c1_62 = arith.constant 1 : index
    %c2_63 = arith.constant 2 : index
    %c0_64 = arith.constant 0 : index
    %33 = vector.load %arg8[%c1_62, %c2_63, %c0_64] : memref<6x6x32xf32, #tpu.memory_space<vmem>>, vector<4x4x32xf32>
    %c2_65 = arith.constant 2 : index
    %c0_66 = arith.constant 0 : index
    %c0_67 = arith.constant 0 : index
    %34 = vector.load %arg8[%c2_65, %c0_66, %c0_67] : memref<6x6x32xf32, #tpu.memory_space<vmem>>, vector<4x4x32xf32>
    %c2_68 = arith.constant 2 : index
    %c1_69 = arith.constant 1 : index
    %c0_70 = arith.constant 0 : index
    %35 = vector.load %arg8[%c2_68, %c1_69, %c0_70] : memref<6x6x32xf32, #tpu.memory_space<vmem>>, vector<4x4x32xf32>
    %c2_71 = arith.constant 2 : index
    %c2_72 = arith.constant 2 : index
    %c0_73 = arith.constant 0 : index
    %36 = vector.load %arg8[%c2_71, %c2_72, %c0_73] : memref<6x6x32xf32, #tpu.memory_space<vmem>>, vector<4x4x32xf32>
    %37 = tpu.concatenate %28, %29, %30, %31, %32, %33, %34, %35, %36 in 2 : vector<4x4x32xf32>, vector<4x4x32xf32>, vector<4x4x32xf32>, vector<4x4x32xf32>, vector<4x4x32xf32>, vector<4x4x32xf32>, vector<4x4x32xf32>, vector<4x4x32xf32>, vector<4x4x32xf32> -> vector<4x4x288xf32>
    %38 = vector.shape_cast %37 : vector<4x4x288xf32> to vector<16x288xf32>
    %39 = arith.truncf %38 : vector<16x288xf32> to vector<16x288xbf16>
    %c0_74 = arith.constant 0 : index
    %c0_75 = arith.constant 0 : index
    %40 = vector.load %arg4[%c0_74, %c0_75] : memref<288x32xbf16, #tpu.memory_space<vmem>>, vector<288x32xbf16>
    %cst_76 = arith.constant dense<0.000000e+00> : vector<16x32xf32>
    %41 = tpu.matmul %39, %40, %cst_76 {dimension_numbers = #tpu.dot_dimension_numbers<[1], [0], [0], [1], [0, 0, 1, 1], [], []>} : vector<16x288xbf16>, vector<288x32xbf16>, vector<16x32xf32> -> vector<16x32xf32>
    %c0_77 = arith.constant 0 : index
    %c0_78 = arith.constant 0 : index
    %42 = vector.load %arg5[%c0_77, %c0_78] : memref<1x32xf32, #tpu.memory_space<vmem>>, vector<1x32xf32>
    %43 = vector.broadcast %42 : vector<1x32xf32> to vector<16x32xf32>
    %44 = arith.addf %41, %43 : vector<16x32xf32>
    %cst_79 = arith.constant 0.000000e+00 : f32
    %45 = vector.broadcast %cst_79 : f32 to vector<16x32xf32>
    %46 = arith.maximumf %44, %45 : vector<16x32xf32>
    %47 = vector.shape_cast %46 : vector<16x32xf32> to vector<4x4x32xf32>
    %48 = vector.shape_cast %47 : vector<4x4x32xf32> to vector<2x2x4x32xf32>
    %49 = vector.extract_strided_slice %48 {offsets = [0, 0, 0, 0], sizes = [2, 1, 4, 32], strides = [1, 1, 1, 1]} : vector<2x2x4x32xf32> to vector<2x1x4x32xf32>
    %50 = vector.shape_cast %49 : vector<2x1x4x32xf32> to vector<2x4x32xf32>
    %51 = vector.extract_strided_slice %48 {offsets = [0, 1, 0, 0], sizes = [2, 1, 4, 32], strides = [1, 1, 1, 1]} : vector<2x2x4x32xf32> to vector<2x1x4x32xf32>
    %52 = vector.shape_cast %51 : vector<2x1x4x32xf32> to vector<2x4x32xf32>
    %53 = arith.maximumf %50, %52 : vector<2x4x32xf32>
    %c0_80 = arith.constant 0 : index
    %c0_81 = arith.constant 0 : index
    %c0_82 = arith.constant 0 : index
    %c0_83 = arith.constant 0 : index
    %54 = vector.load %arg6[%c0_80, %c0_81, %c0_82, %c0_83] : memref<1x2x4x32xf32, #tpu.memory_space<vmem>>, vector<1x2x4x32xf32>
    %55 = vector.shape_cast %54 : vector<1x2x4x32xf32> to vector<2x4x32xf32>
    %56 = vector.shape_cast %53 : vector<2x4x32xf32> to vector<1x2x4x32xf32>
    tpu.vector_store %arg6[%c0_80, %c0_81, %c0_82, %c0_83], %56 {strides = array<i32>} : memref<1x2x4x32xf32, #tpu.memory_space<vmem>>, vector<1x2x4x32xf32>,
    return
  }
  func.func @transform_0(%arg0: i32) -> (i32, i32, i32, i32) {
    %c0_i32 = arith.constant 0 : i32
    %c0_i32_0 = arith.constant 0 : i32
    %c0_i32_1 = arith.constant 0 : i32
    %c0_i32_2 = arith.constant 0 : i32
    return %arg0, %c0_i32, %c0_i32_0, %c0_i32_1 : i32, i32, i32, i32
  }
  func.func @transform_1(%arg0: i32) -> (i32, i32) {
    %c0_i32 = arith.constant 0 : i32
    %c0_i32_0 = arith.constant 0 : i32
    %c0_i32_1 = arith.constant 0 : i32
    return %c0_i32, %c0_i32_0 : i32, i32
  }
  func.func @transform_2(%arg0: i32) -> (i32, i32) {
    %c0_i32 = arith.constant 0 : i32
    %c0_i32_0 = arith.constant 0 : i32
    %c0_i32_1 = arith.constant 0 : i32
    return %c0_i32, %c0_i32_0 : i32, i32
  }
  func.func @transform_3(%arg0: i32) -> (i32, i32) {
    %c0_i32 = arith.constant 0 : i32
    %c0_i32_0 = arith.constant 0 : i32
    %c0_i32_1 = arith.constant 0 : i32
    return %c0_i32, %c0_i32_0 : i32, i32
  }
  func.func @transform_4(%arg0: i32) -> (i32, i32) {
    %c0_i32 = arith.constant 0 : i32
    %c0_i32_0 = arith.constant 0 : i32
    %c0_i32_1 = arith.constant 0 : i32
    return %c0_i32, %c0_i32_0 : i32, i32
  }
  func.func @transform_5(%arg0: i32) -> (i32, i32, i32, i32) {
    %c0_i32 = arith.constant 0 : i32
    %c0_i32_0 = arith.constant 0 : i32
    %c0_i32_1 = arith.constant 0 : i32
    %c0_i32_2 = arith.constant 0 : i32
    return %arg0, %c0_i32, %c0_i32_0, %c0_i32_1 : i32, i32, i32, i32
  }
}

module attributes {stable_mosaic.version = 11 : i64} {
  func.func @_conv_block_kernel(%arg0: i32, %arg1: memref<1x4x4x48xf32, #tpu.memory_space<vmem>>, %arg2: memref<432x16xbf16, #tpu.memory_space<vmem>>, %arg3: memref<1x16xf32, #tpu.memory_space<vmem>>, %arg4: memref<144x16xbf16, #tpu.memory_space<vmem>>, %arg5: memref<1x16xf32, #tpu.memory_space<vmem>>, %arg6: memref<1x2x4x16xf32, #tpu.memory_space<vmem>>, %arg7: memref<6x6x48xf32, #tpu.memory_space<vmem>>, %arg8: memref<6x6x16xf32, #tpu.memory_space<vmem>>) attributes {dimension_semantics = [#tpu.dimension_semantics<parallel>], iteration_bounds = array<i64: 2>, scalar_prefetch = 0 : i64, scratch_operands = 2 : i64, tpu.core_type = #tpu.core_type<tc>, window_params = [{transform_indices = @transform_0, window_bounds = array<i64: 1, 4, 4, 48>}, {pipeline_mode = #tpu.pipeline_mode<synchronous>, transform_indices = @transform_1, window_bounds = array<i64: 432, 16>}, {pipeline_mode = #tpu.pipeline_mode<synchronous>, transform_indices = @transform_2, window_bounds = array<i64: 1, 16>}, {pipeline_mode = #tpu.pipeline_mode<synchronous>, transform_indices = @transform_3, window_bounds = array<i64: 144, 16>}, {pipeline_mode = #tpu.pipeline_mode<synchronous>, transform_indices = @transform_4, window_bounds = array<i64: 1, 16>}, {transform_indices = @transform_5, window_bounds = array<i64: 1, 2, 4, 16>}]} {
    %cst = arith.constant 0.000000e+00 : f32
    %0 = vector.broadcast %cst : f32 to vector<6x6x48xf32>
    %c0 = arith.constant 0 : index
    %c0_0 = arith.constant 0 : index
    %c0_1 = arith.constant 0 : index
    %1 = vector.load %arg7[%c0, %c0_0, %c0_1] : memref<6x6x48xf32, #tpu.memory_space<vmem>>, vector<6x6x48xf32>
    tpu.vector_store %arg7[%c0, %c0_0, %c0_1], %0 {strides = array<i32>} : memref<6x6x48xf32, #tpu.memory_space<vmem>>, vector<6x6x48xf32>,
    %c0_2 = arith.constant 0 : index
    %c0_3 = arith.constant 0 : index
    %c0_4 = arith.constant 0 : index
    %c0_5 = arith.constant 0 : index
    %2 = vector.load %arg1[%c0_2, %c0_3, %c0_4, %c0_5] : memref<1x4x4x48xf32, #tpu.memory_space<vmem>>, vector<1x4x4x48xf32>
    %3 = vector.shape_cast %2 : vector<1x4x4x48xf32> to vector<4x4x48xf32>
    %c1 = arith.constant 1 : index
    %c1_6 = arith.constant 1 : index
    %c0_7 = arith.constant 0 : index
    %4 = vector.load %arg7[%c1, %c1_6, %c0_7] : memref<6x6x48xf32, #tpu.memory_space<vmem>>, vector<4x4x48xf32>
    tpu.vector_store %arg7[%c1, %c1_6, %c0_7], %3 {strides = array<i32>} : memref<6x6x48xf32, #tpu.memory_space<vmem>>, vector<4x4x48xf32>,
    %c0_8 = arith.constant 0 : index
    %c0_9 = arith.constant 0 : index
    %c0_10 = arith.constant 0 : index
    %5 = vector.load %arg7[%c0_8, %c0_9, %c0_10] : memref<6x6x48xf32, #tpu.memory_space<vmem>>, vector<4x4x48xf32>
    %c0_11 = arith.constant 0 : index
    %c1_12 = arith.constant 1 : index
    %c0_13 = arith.constant 0 : index
    %6 = vector.load %arg7[%c0_11, %c1_12, %c0_13] : memref<6x6x48xf32, #tpu.memory_space<vmem>>, vector<4x4x48xf32>
    %c0_14 = arith.constant 0 : index
    %c2 = arith.constant 2 : index
    %c0_15 = arith.constant 0 : index
    %7 = vector.load %arg7[%c0_14, %c2, %c0_15] : memref<6x6x48xf32, #tpu.memory_space<vmem>>, vector<4x4x48xf32>
    %c1_16 = arith.constant 1 : index
    %c0_17 = arith.constant 0 : index
    %c0_18 = arith.constant 0 : index
    %8 = vector.load %arg7[%c1_16, %c0_17, %c0_18] : memref<6x6x48xf32, #tpu.memory_space<vmem>>, vector<4x4x48xf32>
    %c1_19 = arith.constant 1 : index
    %c1_20 = arith.constant 1 : index
    %c0_21 = arith.constant 0 : index
    %9 = vector.load %arg7[%c1_19, %c1_20, %c0_21] : memref<6x6x48xf32, #tpu.memory_space<vmem>>, vector<4x4x48xf32>
    %c1_22 = arith.constant 1 : index
    %c2_23 = arith.constant 2 : index
    %c0_24 = arith.constant 0 : index
    %10 = vector.load %arg7[%c1_22, %c2_23, %c0_24] : memref<6x6x48xf32, #tpu.memory_space<vmem>>, vector<4x4x48xf32>
    %c2_25 = arith.constant 2 : index
    %c0_26 = arith.constant 0 : index
    %c0_27 = arith.constant 0 : index
    %11 = vector.load %arg7[%c2_25, %c0_26, %c0_27] : memref<6x6x48xf32, #tpu.memory_space<vmem>>, vector<4x4x48xf32>
    %c2_28 = arith.constant 2 : index
    %c1_29 = arith.constant 1 : index
    %c0_30 = arith.constant 0 : index
    %12 = vector.load %arg7[%c2_28, %c1_29, %c0_30] : memref<6x6x48xf32, #tpu.memory_space<vmem>>, vector<4x4x48xf32>
    %c2_31 = arith.constant 2 : index
    %c2_32 = arith.constant 2 : index
    %c0_33 = arith.constant 0 : index
    %13 = vector.load %arg7[%c2_31, %c2_32, %c0_33] : memref<6x6x48xf32, #tpu.memory_space<vmem>>, vector<4x4x48xf32>
    %14 = tpu.concatenate %5, %6, %7, %8, %9, %10, %11, %12, %13 in 2 : vector<4x4x48xf32>, vector<4x4x48xf32>, vector<4x4x48xf32>, vector<4x4x48xf32>, vector<4x4x48xf32>, vector<4x4x48xf32>, vector<4x4x48xf32>, vector<4x4x48xf32>, vector<4x4x48xf32> -> vector<4x4x432xf32>
    %15 = vector.shape_cast %14 : vector<4x4x432xf32> to vector<16x432xf32>
    %16 = arith.truncf %15 : vector<16x432xf32> to vector<16x432xbf16>
    %c0_34 = arith.constant 0 : index
    %c0_35 = arith.constant 0 : index
    %17 = vector.load %arg2[%c0_34, %c0_35] : memref<432x16xbf16, #tpu.memory_space<vmem>>, vector<432x16xbf16>
    %cst_36 = arith.constant dense<0.000000e+00> : vector<16x16xf32>
    %18 = tpu.matmul %16, %17, %cst_36 {dimension_numbers = #tpu.dot_dimension_numbers<[1], [0], [0], [1], [0, 0, 1, 1], [], []>} : vector<16x432xbf16>, vector<432x16xbf16>, vector<16x16xf32> -> vector<16x16xf32>
    %c0_37 = arith.constant 0 : index
    %c0_38 = arith.constant 0 : index
    %19 = vector.load %arg3[%c0_37, %c0_38] : memref<1x16xf32, #tpu.memory_space<vmem>>, vector<1x16xf32>
    %20 = vector.broadcast %19 : vector<1x16xf32> to vector<16x16xf32>
    %21 = arith.addf %18, %20 : vector<16x16xf32>
    %cst_39 = arith.constant 0.000000e+00 : f32
    %22 = vector.broadcast %cst_39 : f32 to vector<16x16xf32>
    %23 = arith.maximumf %21, %22 : vector<16x16xf32>
    %cst_40 = arith.constant 0.000000e+00 : f32
    %24 = vector.broadcast %cst_40 : f32 to vector<6x6x16xf32>
    %c0_41 = arith.constant 0 : index
    %c0_42 = arith.constant 0 : index
    %c0_43 = arith.constant 0 : index
    %25 = vector.load %arg8[%c0_41, %c0_42, %c0_43] : memref<6x6x16xf32, #tpu.memory_space<vmem>>, vector<6x6x16xf32>
    tpu.vector_store %arg8[%c0_41, %c0_42, %c0_43], %24 {strides = array<i32>} : memref<6x6x16xf32, #tpu.memory_space<vmem>>, vector<6x6x16xf32>,
    %26 = vector.shape_cast %23 : vector<16x16xf32> to vector<4x4x16xf32>
    %c1_44 = arith.constant 1 : index
    %c1_45 = arith.constant 1 : index
    %c0_46 = arith.constant 0 : index
    %27 = vector.load %arg8[%c1_44, %c1_45, %c0_46] : memref<6x6x16xf32, #tpu.memory_space<vmem>>, vector<4x4x16xf32>
    tpu.vector_store %arg8[%c1_44, %c1_45, %c0_46], %26 {strides = array<i32>} : memref<6x6x16xf32, #tpu.memory_space<vmem>>, vector<4x4x16xf32>,
    %c0_47 = arith.constant 0 : index
    %c0_48 = arith.constant 0 : index
    %c0_49 = arith.constant 0 : index
    %28 = vector.load %arg8[%c0_47, %c0_48, %c0_49] : memref<6x6x16xf32, #tpu.memory_space<vmem>>, vector<4x4x16xf32>
    %c0_50 = arith.constant 0 : index
    %c1_51 = arith.constant 1 : index
    %c0_52 = arith.constant 0 : index
    %29 = vector.load %arg8[%c0_50, %c1_51, %c0_52] : memref<6x6x16xf32, #tpu.memory_space<vmem>>, vector<4x4x16xf32>
    %c0_53 = arith.constant 0 : index
    %c2_54 = arith.constant 2 : index
    %c0_55 = arith.constant 0 : index
    %30 = vector.load %arg8[%c0_53, %c2_54, %c0_55] : memref<6x6x16xf32, #tpu.memory_space<vmem>>, vector<4x4x16xf32>
    %c1_56 = arith.constant 1 : index
    %c0_57 = arith.constant 0 : index
    %c0_58 = arith.constant 0 : index
    %31 = vector.load %arg8[%c1_56, %c0_57, %c0_58] : memref<6x6x16xf32, #tpu.memory_space<vmem>>, vector<4x4x16xf32>
    %c1_59 = arith.constant 1 : index
    %c1_60 = arith.constant 1 : index
    %c0_61 = arith.constant 0 : index
    %32 = vector.load %arg8[%c1_59, %c1_60, %c0_61] : memref<6x6x16xf32, #tpu.memory_space<vmem>>, vector<4x4x16xf32>
    %c1_62 = arith.constant 1 : index
    %c2_63 = arith.constant 2 : index
    %c0_64 = arith.constant 0 : index
    %33 = vector.load %arg8[%c1_62, %c2_63, %c0_64] : memref<6x6x16xf32, #tpu.memory_space<vmem>>, vector<4x4x16xf32>
    %c2_65 = arith.constant 2 : index
    %c0_66 = arith.constant 0 : index
    %c0_67 = arith.constant 0 : index
    %34 = vector.load %arg8[%c2_65, %c0_66, %c0_67] : memref<6x6x16xf32, #tpu.memory_space<vmem>>, vector<4x4x16xf32>
    %c2_68 = arith.constant 2 : index
    %c1_69 = arith.constant 1 : index
    %c0_70 = arith.constant 0 : index
    %35 = vector.load %arg8[%c2_68, %c1_69, %c0_70] : memref<6x6x16xf32, #tpu.memory_space<vmem>>, vector<4x4x16xf32>
    %c2_71 = arith.constant 2 : index
    %c2_72 = arith.constant 2 : index
    %c0_73 = arith.constant 0 : index
    %36 = vector.load %arg8[%c2_71, %c2_72, %c0_73] : memref<6x6x16xf32, #tpu.memory_space<vmem>>, vector<4x4x16xf32>
    %37 = tpu.concatenate %28, %29, %30, %31, %32, %33, %34, %35, %36 in 2 : vector<4x4x16xf32>, vector<4x4x16xf32>, vector<4x4x16xf32>, vector<4x4x16xf32>, vector<4x4x16xf32>, vector<4x4x16xf32>, vector<4x4x16xf32>, vector<4x4x16xf32>, vector<4x4x16xf32> -> vector<4x4x144xf32>
    %38 = vector.shape_cast %37 : vector<4x4x144xf32> to vector<16x144xf32>
    %39 = arith.truncf %38 : vector<16x144xf32> to vector<16x144xbf16>
    %c0_74 = arith.constant 0 : index
    %c0_75 = arith.constant 0 : index
    %40 = vector.load %arg4[%c0_74, %c0_75] : memref<144x16xbf16, #tpu.memory_space<vmem>>, vector<144x16xbf16>
    %cst_76 = arith.constant dense<0.000000e+00> : vector<16x16xf32>
    %41 = tpu.matmul %39, %40, %cst_76 {dimension_numbers = #tpu.dot_dimension_numbers<[1], [0], [0], [1], [0, 0, 1, 1], [], []>} : vector<16x144xbf16>, vector<144x16xbf16>, vector<16x16xf32> -> vector<16x16xf32>
    %c0_77 = arith.constant 0 : index
    %c0_78 = arith.constant 0 : index
    %42 = vector.load %arg5[%c0_77, %c0_78] : memref<1x16xf32, #tpu.memory_space<vmem>>, vector<1x16xf32>
    %43 = vector.broadcast %42 : vector<1x16xf32> to vector<16x16xf32>
    %44 = arith.addf %41, %43 : vector<16x16xf32>
    %cst_79 = arith.constant 0.000000e+00 : f32
    %45 = vector.broadcast %cst_79 : f32 to vector<16x16xf32>
    %46 = arith.maximumf %44, %45 : vector<16x16xf32>
    %47 = vector.shape_cast %46 : vector<16x16xf32> to vector<4x4x16xf32>
    %48 = vector.shape_cast %47 : vector<4x4x16xf32> to vector<2x2x4x16xf32>
    %49 = vector.extract_strided_slice %48 {offsets = [0, 0, 0, 0], sizes = [2, 1, 4, 16], strides = [1, 1, 1, 1]} : vector<2x2x4x16xf32> to vector<2x1x4x16xf32>
    %50 = vector.shape_cast %49 : vector<2x1x4x16xf32> to vector<2x4x16xf32>
    %51 = vector.extract_strided_slice %48 {offsets = [0, 1, 0, 0], sizes = [2, 1, 4, 16], strides = [1, 1, 1, 1]} : vector<2x2x4x16xf32> to vector<2x1x4x16xf32>
    %52 = vector.shape_cast %51 : vector<2x1x4x16xf32> to vector<2x4x16xf32>
    %53 = arith.maximumf %50, %52 : vector<2x4x16xf32>
    %c0_80 = arith.constant 0 : index
    %c0_81 = arith.constant 0 : index
    %c0_82 = arith.constant 0 : index
    %c0_83 = arith.constant 0 : index
    %54 = vector.load %arg6[%c0_80, %c0_81, %c0_82, %c0_83] : memref<1x2x4x16xf32, #tpu.memory_space<vmem>>, vector<1x2x4x16xf32>
    %55 = vector.shape_cast %54 : vector<1x2x4x16xf32> to vector<2x4x16xf32>
    %56 = vector.shape_cast %53 : vector<2x4x16xf32> to vector<1x2x4x16xf32>
    tpu.vector_store %arg6[%c0_80, %c0_81, %c0_82, %c0_83], %56 {strides = array<i32>} : memref<1x2x4x16xf32, #tpu.memory_space<vmem>>, vector<1x2x4x16xf32>,
    return
  }
  func.func @transform_0(%arg0: i32) -> (i32, i32, i32, i32) {
    %c0_i32 = arith.constant 0 : i32
    %c0_i32_0 = arith.constant 0 : i32
    %c0_i32_1 = arith.constant 0 : i32
    %c0_i32_2 = arith.constant 0 : i32
    return %arg0, %c0_i32, %c0_i32_0, %c0_i32_1 : i32, i32, i32, i32
  }
  func.func @transform_1(%arg0: i32) -> (i32, i32) {
    %c0_i32 = arith.constant 0 : i32
    %c0_i32_0 = arith.constant 0 : i32
    %c0_i32_1 = arith.constant 0 : i32
    return %c0_i32, %c0_i32_0 : i32, i32
  }
  func.func @transform_2(%arg0: i32) -> (i32, i32) {
    %c0_i32 = arith.constant 0 : i32
    %c0_i32_0 = arith.constant 0 : i32
    %c0_i32_1 = arith.constant 0 : i32
    return %c0_i32, %c0_i32_0 : i32, i32
  }
  func.func @transform_3(%arg0: i32) -> (i32, i32) {
    %c0_i32 = arith.constant 0 : i32
    %c0_i32_0 = arith.constant 0 : i32
    %c0_i32_1 = arith.constant 0 : i32
    return %c0_i32, %c0_i32_0 : i32, i32
  }
  func.func @transform_4(%arg0: i32) -> (i32, i32) {
    %c0_i32 = arith.constant 0 : i32
    %c0_i32_0 = arith.constant 0 : i32
    %c0_i32_1 = arith.constant 0 : i32
    return %c0_i32, %c0_i32_0 : i32, i32
  }
  func.func @transform_5(%arg0: i32) -> (i32, i32, i32, i32) {
    %c0_i32 = arith.constant 0 : i32
    %c0_i32_0 = arith.constant 0 : i32
    %c0_i32_1 = arith.constant 0 : i32
    %c0_i32_2 = arith.constant 0 : i32
    return %arg0, %c0_i32, %c0_i32_0, %c0_i32_1 : i32, i32, i32, i32
  }
}

module attributes {stable_mosaic.version = 11 : i64} {
  func.func @_matmul_bias_kernel(%arg0: i32, %arg1: memref<8x8xf32, #tpu.memory_space<vmem>>, %arg2: memref<8x8xbf16, #tpu.memory_space<vmem>>, %arg3: memref<1x8xf32, #tpu.memory_space<vmem>>, %arg4: memref<8x8xf32, #tpu.memory_space<vmem>>) attributes {dimension_semantics = [#tpu.dimension_semantics<parallel>], iteration_bounds = array<i64: 1>, scalar_prefetch = 0 : i64, scratch_operands = 0 : i64, tpu.core_type = #tpu.core_type<tc>, window_params = [{transform_indices = @transform_0, window_bounds = array<i64: 8, 8>}, {pipeline_mode = #tpu.pipeline_mode<synchronous>, transform_indices = @transform_1, window_bounds = array<i64: 8, 8>}, {pipeline_mode = #tpu.pipeline_mode<synchronous>, transform_indices = @transform_2, window_bounds = array<i64: 1, 8>}, {transform_indices = @transform_3, window_bounds = array<i64: 8, 8>}]} {
    %c0 = arith.constant 0 : index
    %c0_0 = arith.constant 0 : index
    %0 = vector.load %arg1[%c0, %c0_0] : memref<8x8xf32, #tpu.memory_space<vmem>>, vector<8x8xf32>
    %1 = arith.truncf %0 : vector<8x8xf32> to vector<8x8xbf16>
    %c0_1 = arith.constant 0 : index
    %c0_2 = arith.constant 0 : index
    %2 = vector.load %arg2[%c0_1, %c0_2] : memref<8x8xbf16, #tpu.memory_space<vmem>>, vector<8x8xbf16>
    %cst = arith.constant dense<0.000000e+00> : vector<8x8xf32>
    %3 = tpu.matmul %1, %2, %cst {dimension_numbers = #tpu.dot_dimension_numbers<[1], [0], [0], [1], [0, 0, 1, 1], [], []>} : vector<8x8xbf16>, vector<8x8xbf16>, vector<8x8xf32> -> vector<8x8xf32>
    %c0_3 = arith.constant 0 : index
    %c0_4 = arith.constant 0 : index
    %4 = vector.load %arg3[%c0_3, %c0_4] : memref<1x8xf32, #tpu.memory_space<vmem>>, vector<1x8xf32>
    %5 = vector.broadcast %4 : vector<1x8xf32> to vector<8x8xf32>
    %6 = arith.addf %3, %5 : vector<8x8xf32>
    %c0_5 = arith.constant 0 : index
    %c0_6 = arith.constant 0 : index
    %7 = vector.load %arg4[%c0_5, %c0_6] : memref<8x8xf32, #tpu.memory_space<vmem>>, vector<8x8xf32>
    tpu.vector_store %arg4[%c0_5, %c0_6], %6 {strides = array<i32>} : memref<8x8xf32, #tpu.memory_space<vmem>>, vector<8x8xf32>,
    return
  }
  func.func @transform_0(%arg0: i32) -> (i32, i32) {
    %c0_i32 = arith.constant 0 : i32
    %c0_i32_0 = arith.constant 0 : i32
    return %arg0, %c0_i32 : i32, i32
  }
  func.func @transform_1(%arg0: i32) -> (i32, i32) {
    %c0_i32 = arith.constant 0 : i32
    %c0_i32_0 = arith.constant 0 : i32
    %c0_i32_1 = arith.constant 0 : i32
    return %c0_i32, %c0_i32_0 : i32, i32
  }
  func.func @transform_2(%arg0: i32) -> (i32, i32) {
    %c0_i32 = arith.constant 0 : i32
    %c0_i32_0 = arith.constant 0 : i32
    %c0_i32_1 = arith.constant 0 : i32
    return %c0_i32, %c0_i32_0 : i32, i32
  }
  func.func @transform_3(%arg0: i32) -> (i32, i32) {
    %c0_i32 = arith.constant 0 : i32
    %c0_i32_0 = arith.constant 0 : i32
    return %arg0, %c0_i32 : i32, i32
  }
}

module attributes {stable_mosaic.version = 11 : i64} {
  func.func @_conv_block_kernel(%arg0: i32, %arg1: memref<1x4x4x24xf32, #tpu.memory_space<vmem>>, %arg2: memref<216x8xbf16, #tpu.memory_space<vmem>>, %arg3: memref<1x8xf32, #tpu.memory_space<vmem>>, %arg4: memref<72x8xbf16, #tpu.memory_space<vmem>>, %arg5: memref<1x8xf32, #tpu.memory_space<vmem>>, %arg6: memref<1x2x4x8xf32, #tpu.memory_space<vmem>>, %arg7: memref<6x6x24xf32, #tpu.memory_space<vmem>>, %arg8: memref<6x6x8xf32, #tpu.memory_space<vmem>>) attributes {dimension_semantics = [#tpu.dimension_semantics<parallel>], iteration_bounds = array<i64: 2>, scalar_prefetch = 0 : i64, scratch_operands = 2 : i64, tpu.core_type = #tpu.core_type<tc>, window_params = [{transform_indices = @transform_0, window_bounds = array<i64: 1, 4, 4, 24>}, {pipeline_mode = #tpu.pipeline_mode<synchronous>, transform_indices = @transform_1, window_bounds = array<i64: 216, 8>}, {pipeline_mode = #tpu.pipeline_mode<synchronous>, transform_indices = @transform_2, window_bounds = array<i64: 1, 8>}, {pipeline_mode = #tpu.pipeline_mode<synchronous>, transform_indices = @transform_3, window_bounds = array<i64: 72, 8>}, {pipeline_mode = #tpu.pipeline_mode<synchronous>, transform_indices = @transform_4, window_bounds = array<i64: 1, 8>}, {transform_indices = @transform_5, window_bounds = array<i64: 1, 2, 4, 8>}]} {
    %cst = arith.constant 0.000000e+00 : f32
    %0 = vector.broadcast %cst : f32 to vector<6x6x24xf32>
    %c0 = arith.constant 0 : index
    %c0_0 = arith.constant 0 : index
    %c0_1 = arith.constant 0 : index
    %1 = vector.load %arg7[%c0, %c0_0, %c0_1] : memref<6x6x24xf32, #tpu.memory_space<vmem>>, vector<6x6x24xf32>
    tpu.vector_store %arg7[%c0, %c0_0, %c0_1], %0 {strides = array<i32>} : memref<6x6x24xf32, #tpu.memory_space<vmem>>, vector<6x6x24xf32>,
    %c0_2 = arith.constant 0 : index
    %c0_3 = arith.constant 0 : index
    %c0_4 = arith.constant 0 : index
    %c0_5 = arith.constant 0 : index
    %2 = vector.load %arg1[%c0_2, %c0_3, %c0_4, %c0_5] : memref<1x4x4x24xf32, #tpu.memory_space<vmem>>, vector<1x4x4x24xf32>
    %3 = vector.shape_cast %2 : vector<1x4x4x24xf32> to vector<4x4x24xf32>
    %c1 = arith.constant 1 : index
    %c1_6 = arith.constant 1 : index
    %c0_7 = arith.constant 0 : index
    %4 = vector.load %arg7[%c1, %c1_6, %c0_7] : memref<6x6x24xf32, #tpu.memory_space<vmem>>, vector<4x4x24xf32>
    tpu.vector_store %arg7[%c1, %c1_6, %c0_7], %3 {strides = array<i32>} : memref<6x6x24xf32, #tpu.memory_space<vmem>>, vector<4x4x24xf32>,
    %c0_8 = arith.constant 0 : index
    %c0_9 = arith.constant 0 : index
    %c0_10 = arith.constant 0 : index
    %5 = vector.load %arg7[%c0_8, %c0_9, %c0_10] : memref<6x6x24xf32, #tpu.memory_space<vmem>>, vector<4x4x24xf32>
    %c0_11 = arith.constant 0 : index
    %c1_12 = arith.constant 1 : index
    %c0_13 = arith.constant 0 : index
    %6 = vector.load %arg7[%c0_11, %c1_12, %c0_13] : memref<6x6x24xf32, #tpu.memory_space<vmem>>, vector<4x4x24xf32>
    %c0_14 = arith.constant 0 : index
    %c2 = arith.constant 2 : index
    %c0_15 = arith.constant 0 : index
    %7 = vector.load %arg7[%c0_14, %c2, %c0_15] : memref<6x6x24xf32, #tpu.memory_space<vmem>>, vector<4x4x24xf32>
    %c1_16 = arith.constant 1 : index
    %c0_17 = arith.constant 0 : index
    %c0_18 = arith.constant 0 : index
    %8 = vector.load %arg7[%c1_16, %c0_17, %c0_18] : memref<6x6x24xf32, #tpu.memory_space<vmem>>, vector<4x4x24xf32>
    %c1_19 = arith.constant 1 : index
    %c1_20 = arith.constant 1 : index
    %c0_21 = arith.constant 0 : index
    %9 = vector.load %arg7[%c1_19, %c1_20, %c0_21] : memref<6x6x24xf32, #tpu.memory_space<vmem>>, vector<4x4x24xf32>
    %c1_22 = arith.constant 1 : index
    %c2_23 = arith.constant 2 : index
    %c0_24 = arith.constant 0 : index
    %10 = vector.load %arg7[%c1_22, %c2_23, %c0_24] : memref<6x6x24xf32, #tpu.memory_space<vmem>>, vector<4x4x24xf32>
    %c2_25 = arith.constant 2 : index
    %c0_26 = arith.constant 0 : index
    %c0_27 = arith.constant 0 : index
    %11 = vector.load %arg7[%c2_25, %c0_26, %c0_27] : memref<6x6x24xf32, #tpu.memory_space<vmem>>, vector<4x4x24xf32>
    %c2_28 = arith.constant 2 : index
    %c1_29 = arith.constant 1 : index
    %c0_30 = arith.constant 0 : index
    %12 = vector.load %arg7[%c2_28, %c1_29, %c0_30] : memref<6x6x24xf32, #tpu.memory_space<vmem>>, vector<4x4x24xf32>
    %c2_31 = arith.constant 2 : index
    %c2_32 = arith.constant 2 : index
    %c0_33 = arith.constant 0 : index
    %13 = vector.load %arg7[%c2_31, %c2_32, %c0_33] : memref<6x6x24xf32, #tpu.memory_space<vmem>>, vector<4x4x24xf32>
    %14 = tpu.concatenate %5, %6, %7, %8, %9, %10, %11, %12, %13 in 2 : vector<4x4x24xf32>, vector<4x4x24xf32>, vector<4x4x24xf32>, vector<4x4x24xf32>, vector<4x4x24xf32>, vector<4x4x24xf32>, vector<4x4x24xf32>, vector<4x4x24xf32>, vector<4x4x24xf32> -> vector<4x4x216xf32>
    %15 = vector.shape_cast %14 : vector<4x4x216xf32> to vector<16x216xf32>
    %16 = arith.truncf %15 : vector<16x216xf32> to vector<16x216xbf16>
    %c0_34 = arith.constant 0 : index
    %c0_35 = arith.constant 0 : index
    %17 = vector.load %arg2[%c0_34, %c0_35] : memref<216x8xbf16, #tpu.memory_space<vmem>>, vector<216x8xbf16>
    %cst_36 = arith.constant dense<0.000000e+00> : vector<16x8xf32>
    %18 = tpu.matmul %16, %17, %cst_36 {dimension_numbers = #tpu.dot_dimension_numbers<[1], [0], [0], [1], [0, 0, 1, 1], [], []>} : vector<16x216xbf16>, vector<216x8xbf16>, vector<16x8xf32> -> vector<16x8xf32>
    %c0_37 = arith.constant 0 : index
    %c0_38 = arith.constant 0 : index
    %19 = vector.load %arg3[%c0_37, %c0_38] : memref<1x8xf32, #tpu.memory_space<vmem>>, vector<1x8xf32>
    %20 = vector.broadcast %19 : vector<1x8xf32> to vector<16x8xf32>
    %21 = arith.addf %18, %20 : vector<16x8xf32>
    %cst_39 = arith.constant 0.000000e+00 : f32
    %22 = vector.broadcast %cst_39 : f32 to vector<16x8xf32>
    %23 = arith.maximumf %21, %22 : vector<16x8xf32>
    %cst_40 = arith.constant 0.000000e+00 : f32
    %24 = vector.broadcast %cst_40 : f32 to vector<6x6x8xf32>
    %c0_41 = arith.constant 0 : index
    %c0_42 = arith.constant 0 : index
    %c0_43 = arith.constant 0 : index
    %25 = vector.load %arg8[%c0_41, %c0_42, %c0_43] : memref<6x6x8xf32, #tpu.memory_space<vmem>>, vector<6x6x8xf32>
    tpu.vector_store %arg8[%c0_41, %c0_42, %c0_43], %24 {strides = array<i32>} : memref<6x6x8xf32, #tpu.memory_space<vmem>>, vector<6x6x8xf32>,
    %26 = vector.shape_cast %23 : vector<16x8xf32> to vector<4x4x8xf32>
    %c1_44 = arith.constant 1 : index
    %c1_45 = arith.constant 1 : index
    %c0_46 = arith.constant 0 : index
    %27 = vector.load %arg8[%c1_44, %c1_45, %c0_46] : memref<6x6x8xf32, #tpu.memory_space<vmem>>, vector<4x4x8xf32>
    tpu.vector_store %arg8[%c1_44, %c1_45, %c0_46], %26 {strides = array<i32>} : memref<6x6x8xf32, #tpu.memory_space<vmem>>, vector<4x4x8xf32>,
    %c0_47 = arith.constant 0 : index
    %c0_48 = arith.constant 0 : index
    %c0_49 = arith.constant 0 : index
    %28 = vector.load %arg8[%c0_47, %c0_48, %c0_49] : memref<6x6x8xf32, #tpu.memory_space<vmem>>, vector<4x4x8xf32>
    %c0_50 = arith.constant 0 : index
    %c1_51 = arith.constant 1 : index
    %c0_52 = arith.constant 0 : index
    %29 = vector.load %arg8[%c0_50, %c1_51, %c0_52] : memref<6x6x8xf32, #tpu.memory_space<vmem>>, vector<4x4x8xf32>
    %c0_53 = arith.constant 0 : index
    %c2_54 = arith.constant 2 : index
    %c0_55 = arith.constant 0 : index
    %30 = vector.load %arg8[%c0_53, %c2_54, %c0_55] : memref<6x6x8xf32, #tpu.memory_space<vmem>>, vector<4x4x8xf32>
    %c1_56 = arith.constant 1 : index
    %c0_57 = arith.constant 0 : index
    %c0_58 = arith.constant 0 : index
    %31 = vector.load %arg8[%c1_56, %c0_57, %c0_58] : memref<6x6x8xf32, #tpu.memory_space<vmem>>, vector<4x4x8xf32>
    %c1_59 = arith.constant 1 : index
    %c1_60 = arith.constant 1 : index
    %c0_61 = arith.constant 0 : index
    %32 = vector.load %arg8[%c1_59, %c1_60, %c0_61] : memref<6x6x8xf32, #tpu.memory_space<vmem>>, vector<4x4x8xf32>
    %c1_62 = arith.constant 1 : index
    %c2_63 = arith.constant 2 : index
    %c0_64 = arith.constant 0 : index
    %33 = vector.load %arg8[%c1_62, %c2_63, %c0_64] : memref<6x6x8xf32, #tpu.memory_space<vmem>>, vector<4x4x8xf32>
    %c2_65 = arith.constant 2 : index
    %c0_66 = arith.constant 0 : index
    %c0_67 = arith.constant 0 : index
    %34 = vector.load %arg8[%c2_65, %c0_66, %c0_67] : memref<6x6x8xf32, #tpu.memory_space<vmem>>, vector<4x4x8xf32>
    %c2_68 = arith.constant 2 : index
    %c1_69 = arith.constant 1 : index
    %c0_70 = arith.constant 0 : index
    %35 = vector.load %arg8[%c2_68, %c1_69, %c0_70] : memref<6x6x8xf32, #tpu.memory_space<vmem>>, vector<4x4x8xf32>
    %c2_71 = arith.constant 2 : index
    %c2_72 = arith.constant 2 : index
    %c0_73 = arith.constant 0 : index
    %36 = vector.load %arg8[%c2_71, %c2_72, %c0_73] : memref<6x6x8xf32, #tpu.memory_space<vmem>>, vector<4x4x8xf32>
    %37 = tpu.concatenate %28, %29, %30, %31, %32, %33, %34, %35, %36 in 2 : vector<4x4x8xf32>, vector<4x4x8xf32>, vector<4x4x8xf32>, vector<4x4x8xf32>, vector<4x4x8xf32>, vector<4x4x8xf32>, vector<4x4x8xf32>, vector<4x4x8xf32>, vector<4x4x8xf32> -> vector<4x4x72xf32>
    %38 = vector.shape_cast %37 : vector<4x4x72xf32> to vector<16x72xf32>
    %39 = arith.truncf %38 : vector<16x72xf32> to vector<16x72xbf16>
    %c0_74 = arith.constant 0 : index
    %c0_75 = arith.constant 0 : index
    %40 = vector.load %arg4[%c0_74, %c0_75] : memref<72x8xbf16, #tpu.memory_space<vmem>>, vector<72x8xbf16>
    %cst_76 = arith.constant dense<0.000000e+00> : vector<16x8xf32>
    %41 = tpu.matmul %39, %40, %cst_76 {dimension_numbers = #tpu.dot_dimension_numbers<[1], [0], [0], [1], [0, 0, 1, 1], [], []>} : vector<16x72xbf16>, vector<72x8xbf16>, vector<16x8xf32> -> vector<16x8xf32>
    %c0_77 = arith.constant 0 : index
    %c0_78 = arith.constant 0 : index
    %42 = vector.load %arg5[%c0_77, %c0_78] : memref<1x8xf32, #tpu.memory_space<vmem>>, vector<1x8xf32>
    %43 = vector.broadcast %42 : vector<1x8xf32> to vector<16x8xf32>
    %44 = arith.addf %41, %43 : vector<16x8xf32>
    %cst_79 = arith.constant 0.000000e+00 : f32
    %45 = vector.broadcast %cst_79 : f32 to vector<16x8xf32>
    %46 = arith.maximumf %44, %45 : vector<16x8xf32>
    %47 = vector.shape_cast %46 : vector<16x8xf32> to vector<4x4x8xf32>
    %48 = vector.shape_cast %47 : vector<4x4x8xf32> to vector<2x2x4x8xf32>
    %49 = vector.extract_strided_slice %48 {offsets = [0, 0, 0, 0], sizes = [2, 1, 4, 8], strides = [1, 1, 1, 1]} : vector<2x2x4x8xf32> to vector<2x1x4x8xf32>
    %50 = vector.shape_cast %49 : vector<2x1x4x8xf32> to vector<2x4x8xf32>
    %51 = vector.extract_strided_slice %48 {offsets = [0, 1, 0, 0], sizes = [2, 1, 4, 8], strides = [1, 1, 1, 1]} : vector<2x2x4x8xf32> to vector<2x1x4x8xf32>
    %52 = vector.shape_cast %51 : vector<2x1x4x8xf32> to vector<2x4x8xf32>
    %53 = arith.maximumf %50, %52 : vector<2x4x8xf32>
    %c0_80 = arith.constant 0 : index
    %c0_81 = arith.constant 0 : index
    %c0_82 = arith.constant 0 : index
    %c0_83 = arith.constant 0 : index
    %54 = vector.load %arg6[%c0_80, %c0_81, %c0_82, %c0_83] : memref<1x2x4x8xf32, #tpu.memory_space<vmem>>, vector<1x2x4x8xf32>
    %55 = vector.shape_cast %54 : vector<1x2x4x8xf32> to vector<2x4x8xf32>
    %56 = vector.shape_cast %53 : vector<2x4x8xf32> to vector<1x2x4x8xf32>
    tpu.vector_store %arg6[%c0_80, %c0_81, %c0_82, %c0_83], %56 {strides = array<i32>} : memref<1x2x4x8xf32, #tpu.memory_space<vmem>>, vector<1x2x4x8xf32>,
    return
  }
  func.func @transform_0(%arg0: i32) -> (i32, i32, i32, i32) {
    %c0_i32 = arith.constant 0 : i32
    %c0_i32_0 = arith.constant 0 : i32
    %c0_i32_1 = arith.constant 0 : i32
    %c0_i32_2 = arith.constant 0 : i32
    return %arg0, %c0_i32, %c0_i32_0, %c0_i32_1 : i32, i32, i32, i32
  }
  func.func @transform_1(%arg0: i32) -> (i32, i32) {
    %c0_i32 = arith.constant 0 : i32
    %c0_i32_0 = arith.constant 0 : i32
    %c0_i32_1 = arith.constant 0 : i32
    return %c0_i32, %c0_i32_0 : i32, i32
  }
  func.func @transform_2(%arg0: i32) -> (i32, i32) {
    %c0_i32 = arith.constant 0 : i32
    %c0_i32_0 = arith.constant 0 : i32
    %c0_i32_1 = arith.constant 0 : i32
    return %c0_i32, %c0_i32_0 : i32, i32
  }
  func.func @transform_3(%arg0: i32) -> (i32, i32) {
    %c0_i32 = arith.constant 0 : i32
    %c0_i32_0 = arith.constant 0 : i32
    %c0_i32_1 = arith.constant 0 : i32
    return %c0_i32, %c0_i32_0 : i32, i32
  }
  func.func @transform_4(%arg0: i32) -> (i32, i32) {
    %c0_i32 = arith.constant 0 : i32
    %c0_i32_0 = arith.constant 0 : i32
    %c0_i32_1 = arith.constant 0 : i32
    return %c0_i32, %c0_i32_0 : i32, i32
  }
  func.func @transform_5(%arg0: i32) -> (i32, i32, i32, i32) {
    %c0_i32 = arith.constant 0 : i32
    %c0_i32_0 = arith.constant 0 : i32
    %c0_i32_1 = arith.constant 0 : i32
    %c0_i32_2 = arith.constant 0 : i32
    return %arg0, %c0_i32, %c0_i32_0, %c0_i32_1 : i32, i32, i32, i32
  }
}

</mosaic_0001>

<llo_original>
// kernel: unet_forward.8
$region0: #{unet_forward.8}
  #allocation0 [shape = 'u32[]', space=smem, size = 0x4, offset = 0x4, fixed_abs, tag = 'smem constant byte address 0x4 - core index']
  #allocation1 [shape = 'u32[72,128]{1,0:T(1,128)}', space=vmem, size = 0x9000, scoped, tag = 'internal scratch']
  #allocation2 [shape = 'f32[10,10,8]{2,1,0:T(8,128)}', space=vmem, size = 0x14000, scoped, tag = 'scratch operand']
  #allocation3 [shape = 'f32[10,10,16]{2,1,0:T(8,128)}', space=vmem, size = 0x14000, scoped, tag = 'scratch operand']
  %s0 = inlined_call_operand.vmem [shape: f32[2,8,8,8], index: 0, kind: input, shape index: {}]
  %s1 = inlined_call_operand.vmem [shape: bf16[72,16], index: 1, kind: input, shape index: {}]
  %s2 = inlined_call_operand.vmem [shape: f32[1,16], index: 2, kind: input, shape index: {}]
  %s3 = inlined_call_operand.vmem [shape: bf16[144,16], index: 3, kind: input, shape index: {}]
  %s4 = inlined_call_operand.vmem [shape: f32[1,16], index: 4, kind: input, shape index: {}]
  %s5 = inlined_call_operand.vmem [shape: f32[2,4,8,16], index: 5, kind: output, shape index: {}]
  %s6 = sld [smem:[#allocation0]]
  $region53: #{unet_forward.8} parent=0
    _
  %s8 = ssub.s32 1, %s6
  %s9 = scalar_select 0, %s8, %s6
  loop: start=0, step=1, limit=4
  $region2: #{unet_forward.8} parent=0 // loop_pre_header
    _
  $region3: #{unet_forward.8} parent=0 // loop_header
    %s11 = sphi 0, %s15
    %p12 = scmp.ge.s32.totalorder %s11, 4
    %s21 = sphi 0, %s23
    %s24 = sphi 0, %s21
    %s25 = sphi 0, %s24
    %s41 = sphi 0, %s25
    %s45 = sphi 0, %s45
    %s47 = sphi 0, %s45
    %s48 = sphi 0, %s47
    %s62 = sphi 0, %s48
    %s66 = sphi 0, %s66
    %s68 = sphi 0, %s66
    %s69 = sphi 0, %s68
    %s83 = sphi 0, %s69
    %s87 = sphi 0, %s87
    %s89 = sphi 0, %s87
    %s90 = sphi 0, %s89
    %s104 = sphi 0, %s90
    %s108 = sphi 0, %s108
    %s110 = sphi 0, %s108
    %s111 = sphi 0, %s110
    %s125 = sphi 0, %s111
    %s131 = sphi 0, %s133
    %s134 = sphi 0, %s131
    %s135 = sphi 0, %s134
    %s151 = sphi 0, %s135
  $region4: #{unet_forward.8} parent=0 // loop_header_branch
    %14 = sbr.rel (%p12) target = $region8
  $region5: #{unet_forward.8} parent=0 // loop_body
    %s16 = ssub.s32 %s11, 1
    %s17 = ssub.s32 %s11, 2
    %s18 = sadd.s32 %s11, 1
    %s19 = ssub.s32 %s11, %s18
    %p20 = scmp.eq.s32.totalorder %s19, 0
    %s22 = sadd.s32 %s21, 1
    %s23 = scalar_select %p20, %s21, %s22
    %p26 = pneg %p20
    %p27 = scmp.eq.s32.totalorder %s11, 1
    %p28 = por %p26, %p27
    %p29 = scmp.ne.s32.totalorder %s21, %s24
    %p30 = scmp.eq.s32.totalorder %s11, 0
    %p31 = por %p29, %p30
    %p32 = scmp.ne.s32.totalorder %s21, %s24
    %p33 = scmp.eq.s32.totalorder %s16, 1
    %p34 = por %p32, %p33
    %p35 = scmp.ne.s32.totalorder %s24, %s25
    %p36 = scmp.eq.s32.totalorder %s16, 0
    %p37 = por %p35, %p36
    %p38 = scmp.ne.s32.totalorder %s24, %s25
    %p39 = scmp.eq.s32.totalorder %s17, 1
    %p40 = por %p38, %p39
    %p42 = scmp.ne.s32.totalorder %s25, %s41
    %p43 = scmp.eq.s32.totalorder %s17, 0
    %p44 = por %p42, %p43
    %s46 = sadd.s32 %s45, 1
    %p49 = scmp.eq.s32.totalorder %s11, 1
    %p50 = scmp.ne.s32.totalorder %s45, %s47
    %p51 = scmp.eq.s32.totalorder %s11, 0
    %p52 = por %p50, %p51
    %p53 = scmp.ne.s32.totalorder %s45, %s47
    %p54 = scmp.eq.s32.totalorder %s16, 1
    %p55 = por %p53, %p54
    %p56 = scmp.ne.s32.totalorder %s47, %s48
    %p57 = scmp.eq.s32.totalorder %s16, 0
    %p58 = por %p56, %p57
    %p59 = scmp.ne.s32.totalorder %s47, %s48
    %p60 = scmp.eq.s32.totalorder %s17, 1
    %p61 = por %p59, %p60
    %p63 = scmp.ne.s32.totalorder %s48, %s62
    %p64 = scmp.eq.s32.totalorder %s17, 0
    %p65 = por %p63, %p64
    %s67 = sadd.s32 %s66, 1
    %p70 = scmp.eq.s32.totalorder %s11, 1
    %p71 = scmp.ne.s32.totalorder %s66, %s68
    %p72 = scmp.eq.s32.totalorder %s11, 0
    %p73 = por %p71, %p72
    %p74 = scmp.ne.s32.totalorder %s66, %s68
    %p75 = scmp.eq.s32.totalorder %s16, 1
    %p76 = por %p74, %p75
    %p77 = scmp.ne.s32.totalorder %s68, %s69
    %p78 = scmp.eq.s32.totalorder %s16, 0
    %p79 = por %p77, %p78
    %p80 = scmp.ne.s32.totalorder %s68, %s69
    %p81 = scmp.eq.s32.totalorder %s17, 1
    %p82 = por %p80, %p81
    %p84 = scmp.ne.s32.totalorder %s69, %s83
    %p85 = scmp.eq.s32.totalorder %s17, 0
    %p86 = por %p84, %p85
    %s88 = sadd.s32 %s87, 1
    %p91 = scmp.eq.s32.totalorder %s11, 1
    %p92 = scmp.ne.s32.totalorder %s87, %s89
    %p93 = scmp.eq.s32.totalorder %s11, 0
    %p94 = por %p92, %p93
    %p95 = scmp.ne.s32.totalorder %s87, %s89
    %p96 = scmp.eq.s32.totalorder %s16, 1
    %p97 = por %p95, %p96
    %p98 = scmp.ne.s32.totalorder %s89, %s90
    %p99 = scmp.eq.s32.totalorder %s16, 0
    %p100 = por %p98, %p99
    %p101 = scmp.ne.s32.totalorder %s89, %s90
    %p102 = scmp.eq.s32.totalorder %s17, 1
    %p103 = por %p101, %p102
    %p105 = scmp.ne.s32.totalorder %s90, %s104
    %p106 = scmp.eq.s32.totalorder %s17, 0
    %p107 = por %p105, %p106
    %s109 = sadd.s32 %s108, 1
    %p112 = scmp.eq.s32.totalorder %s11, 1
    %p113 = scmp.ne.s32.totalorder %s108, %s110
    %p114 = scmp.eq.s32.totalorder %s11, 0
    %p115 = por %p113, %p114
    %p116 = scmp.ne.s32.totalorder %s108, %s110
    %p117 = scmp.eq.s32.totalorder %s16, 1
    %p118 = por %p116, %p117
    %p119 = scmp.ne.s32.totalorder %s110, %s111
    %p120 = scmp.eq.s32.totalorder %s16, 0
    %p121 = por %p119, %p120
    %p122 = scmp.ne.s32.totalorder %s110, %s111
    %p123 = scmp.eq.s32.totalorder %s17, 1
    %p124 = por %p122, %p123
    %p126 = scmp.ne.s32.totalorder %s111, %s125
    %p127 = scmp.eq.s32.totalorder %s17, 0
    %p128 = por %p126, %p127
    %s129 = ssub.s32 %s11, %s18
    %p130 = scmp.eq.s32.totalorder %s129, 0
    %s132 = sadd.s32 %s131, 1
    %s133 = scalar_select %p130, %s131, %s132
    %p136 = pneg %p130
    %p137 = scmp.eq.s32.totalorder %s11, 1
    %p138 = por %p136, %p137
    %p139 = scmp.ne.s32.totalorder %s131, %s134
    %p140 = scmp.eq.s32.totalorder %s11, 0
    %p141 = por %p139, %p140
    %p142 = scmp.ne.s32.totalorder %s131, %s134
    %p143 = scmp.eq.s32.totalorder %s16, 1
    %p144 = por %p142, %p143
    %p145 = scmp.ne.s32.totalorder %s134, %s135
    %p146 = scmp.eq.s32.totalorder %s16, 0
    %p147 = por %p145, %p146
    %p148 = scmp.ne.s32.totalorder %s134, %s135
    %p149 = scmp.eq.s32.totalorder %s17, 1
    %p150 = por %p148, %p149
    %p152 = scmp.ne.s32.totalorder %s135, %s151
    %p153 = scmp.eq.s32.totalorder %s17, 0
    %p154 = por %p152, %p153
    %p155 = scmp.le.s32.totalorder 1, %s11
    %p156 = scmp.lt.s32.totalorder %s11, 3
    %p157 = pnand %p155, %p156
    %p158 = pneg %p157
    // Predicated region
    $region9: #{unet_forward.8} parent=5 // pred_check
      _
    $region10: #{unet_forward.8} parent=5 // pred_check_branch
      %160 = sbr.rel (%p157) target = $region12
    $region11: #{unet_forward.8} parent=5 // pred_region
      %s161 = ssub.s32 %s11, 1
      // Predicated region
      $region13: #{unet_forward.8} parent=11 // pred_check
        %p162 = pneg %p58
      $region14: #{unet_forward.8} parent=11 // pred_check_branch
        %164 = sbr.rel (%p162) target = $region16
      $region15: #{unet_forward.8} parent=11 // pred_region
        _
      $region16: #{unet_forward.8} parent=11 // pred_fallthru
        _
      // Predicated region
      $region17: #{unet_forward.8} parent=11 // pred_check
        %p165 = pneg %p79
      $region18: #{unet_forward.8} parent=11 // pred_check_branch
        %167 = sbr.rel (%p165) target = $region20
      $region19: #{unet_forward.8} parent=11 // pred_region
        _
      $region20: #{unet_forward.8} parent=11 // pred_fallthru
        _
      // Predicated region
      $region21: #{unet_forward.8} parent=11 // pred_check
        %p168 = pneg %p100
      $region22: #{unet_forward.8} parent=11 // pred_check_branch
        %170 = sbr.rel (%p168) target = $region24
      $region23: #{unet_forward.8} parent=11 // pred_region
        _
      $region24: #{unet_forward.8} parent=11 // pred_fallthru
        _
      // Predicated region
      $region25: #{unet_forward.8} parent=11 // pred_check
        %p171 = pneg %p121
      $region26: #{unet_forward.8} parent=11 // pred_check_branch
        %173 = sbr.rel (%p171) target = $region28
      $region27: #{unet_forward.8} parent=11 // pred_region
        _
      $region28: #{unet_forward.8} parent=11 // pred_fallthru
        _
    $region12: #{unet_forward.8} parent=5 // pred_fallthru
      _
    %p174 = scmp.lt.s32.totalorder %s11, 2
    // Predicated region
    $region29: #{unet_forward.8} parent=5 // pred_check
      %p175 = pneg %p174
    $region30: #{unet_forward.8} parent=5 // pred_check_branch
      %177 = sbr.rel (%p175) target = $region32
    $region31: #{unet_forward.8} parent=5 // pred_region
      // Predicated region
      $region33: #{unet_forward.8} parent=31 // pred_check
        %p178 = pneg %p31
      $region34: #{unet_forward.8} parent=31 // pred_check_branch
        %180 = sbr.rel (%p178) target = $region36
      $region35: #{unet_forward.8} parent=31 // pred_region
        %p181 = scmp.lt.s32.totalorder %s11, 1
        %s182 = scalar_select %p181, %s11, 1
        %s183 = smul.addr %s182, 8
        %s184 = smul.addr %s183, 8
        %s185 = scalar_lea.vmem %s0, %s184
      $region36: #{unet_forward.8} parent=31 // pred_fallthru
        _
    $region32: #{unet_forward.8} parent=5 // pred_fallthru
      _
    %p186 = scmp.le.s32.totalorder 1, %s11
    %p187 = scmp.lt.s32.totalorder %s11, 3
    %p188 = pnand %p186, %p187
    %p189 = pneg %p188
    // Predicated region
    $region37: #{unet_forward.8} parent=5 // pred_check
      _
    $region38: #{unet_forward.8} parent=5 // pred_check_branch
      %191 = sbr.rel (%p188) target = $region40
    $region39: #{unet_forward.8} parent=5 // pred_region
      %s192 = ssub.s32 %s11, 1
      %p193 = scmp.lt.s32.totalorder %s16, 1
      %s194 = scalar_select %p193, %s16, 1
      %s195 = smul.addr %s194, 8
      %s196 = smul.addr %s195, 8
      %s197 = scalar_lea.vmem %s0, %s196
      %p198 = pneg %p37
      %p199 = pneg %p34
      %p200 = pneg %p58
      %p201 = pneg %p55
      %p202 = pneg %p79
      %p203 = pneg %p76
      %p204 = pneg %p100
      %p205 = pneg %p97
      %p206 = pneg %p121
      %p207 = pneg %p118
      %p208 = pneg %p147
      %p209 = pneg %p144
      %p210 = scmp.lt.s32.totalorder %s16, 1
      %s211 = scalar_select %p210, %s16, 1
      %s212 = smul.addr %s211, 4
      %s213 = smul.addr %s212, 8
      %s214 = scalar_lea.vmem %s5, %s213
      %p215 = scmp.lt.s32.totalorder %s16, 1
      %s216 = scalar_select %p215, %s16, 1
      %s217 = smul.addr %s216, 8
      %s218 = smul.addr %s217, 8
      %s219 = scalar_lea.vmem %s0, %s218
      %p220 = scmp.lt.s32.totalorder %s16, 1
      %s221 = scalar_select %p220, %s16, 1
      %s222 = smul.addr %s221, 4
      %s223 = smul.addr %s222, 8
      %s224 = scalar_lea.vmem %s5, %s223
      %vm226 = vcmask 64512
      %227 = vst.msk [vmem:[#allocation2] sm:$0xff] %vm226, 0.0
      %vm228 = vcmask 58368
      %229 = vst.msk [vmem:[#allocation2 + $0x8] sm:$0x3] %vm228, 0.0
      %230 = vst.msk [vmem:[#allocation2 + $0x10] sm:$0xff] %vm226, 0.0
      %231 = vst.msk [vmem:[#allocation2 + $0x18] sm:$0x3] %vm228, 0.0
      %232 = vst.msk [vmem:[#allocation2 + $0x20] sm:$0xff] %vm226, 0.0
      %233 = vst.msk [vmem:[#allocation2 + $0x28] sm:$0x3] %vm228, 0.0
      %234 = vst.msk [vmem:[#allocation2 + $0x30] sm:$0xff] %vm226, 0.0
      %235 = vst.msk [vmem:[#allocation2 + $0x38] sm:$0x3] %vm228, 0.0
      %236 = vst.msk [vmem:[#allocation2 + $0x40] sm:$0xff] %vm226, 0.0
      %237 = vst.msk [vmem:[#allocation2 + $0x48] sm:$0x3] %vm228, 0.0
      %238 = vst.msk [vmem:[#allocation2 + $0x50] sm:$0xff] %vm226, 0.0
      %239 = vst.msk [vmem:[#allocation2 + $0x58] sm:$0x3] %vm228, 0.0
      %240 = vst.msk [vmem:[#allocation2 + $0x60] sm:$0xff] %vm226, 0.0
      %241 = vst.msk [vmem:[#allocation2 + $0x68] sm:$0x3] %vm228, 0.0
      %242 = vst.msk [vmem:[#allocation2 + $0x70] sm:$0xff] %vm226, 0.0
      %243 = vst.msk [vmem:[#allocation2 + $0x78] sm:$0x3] %vm228, 0.0
      %244 = vst.msk [vmem:[#allocation2 + $0x80] sm:$0xff] %vm226, 0.0
      %245 = vst.msk [vmem:[#allocation2 + $0x88] sm:$0x3] %vm228, 0.0
      %246 = vst.msk [vmem:[#allocation2 + $0x90] sm:$0xff] %vm226, 0.0
      %247 = vst.msk [vmem:[#allocation2 + $0x98] sm:$0x3] %vm228, 0.0
      %v248 = vld [vmem:[%s219] sm:$0xff]
      %v249 = vld [vmem:[%s219 + $0x8] sm:$0xff]
      %v250 = vld [vmem:[%s219 + $0x10] sm:$0xff]
      %v251 = vld [vmem:[%s219 + $0x18] sm:$0xff]
      %v252 = vld [vmem:[%s219 + $0x20] sm:$0xff]
      %v253 = vld [vmem:[%s219 + $0x28] sm:$0xff]
      %v254 = vld [vmem:[%s219 + $0x30] sm:$0xff]
      %v255 = vld [vmem:[%s219 + $0x38] sm:$0xff]
      %s256 = scalar_lea.vmem [#allocation2], 16
      %257 = vst.msk [vmem:[%s256 + $0x1] sm:$0xff] %vm226, %v248
      %258 = vst.msk [vmem:[%s256 + $0x11] sm:$0xff] %vm226, %v249
      %259 = vst.msk [vmem:[%s256 + $0x21] sm:$0xff] %vm226, %v250
      %260 = vst.msk [vmem:[%s256 + $0x31] sm:$0xff] %vm226, %v251
      %261 = vst.msk [vmem:[%s256 + $0x41] sm:$0xff] %vm226, %v252
      %262 = vst.msk [vmem:[%s256 + $0x51] sm:$0xff] %vm226, %v253
      %263 = vst.msk [vmem:[%s256 + $0x61] sm:$0xff] %vm226, %v254
      %264 = vst.msk [vmem:[%s256 + $0x71] sm:$0xff] %vm226, %v255
      %v265 = vld [vmem:[#allocation2] sm:$0xff]
      %v266 = vld [vmem:[#allocation2 + $0x10] sm:$0xff]
      %v267 = vld [vmem:[#allocation2 + $0x20] sm:$0xff]
      %v268 = vld [vmem:[#allocation2 + $0x30] sm:$0xff]
      %v269 = vld [vmem:[#allocation2 + $0x40] sm:$0xff]
      %v270 = vld [vmem:[#allocation2 + $0x50] sm:$0xff]
      %v271 = vld [vmem:[#allocation2 + $0x60] sm:$0xff]
      %v272 = vld [vmem:[#allocation2 + $0x70] sm:$0xff]
      %v273 = vld [vmem:[#allocation2 + $0x1] sm:$0xff]
      %v274 = vld [vmem:[#allocation2 + $0x11] sm:$0xff]
      %v275 = vld [vmem:[#allocation2 + $0x21] sm:$0xff]
      %v276 = vld [vmem:[#allocation2 + $0x31] sm:$0xff]
      %v277 = vld [vmem:[#allocation2 + $0x41] sm:$0xff]
      %v278 = vld [vmem:[#allocation2 + $0x51] sm:$0xff]
      %v279 = vld [vmem:[#allocation2 + $0x61] sm:$0xff]
      %v280 = vld [vmem:[#allocation2 + $0x71] sm:$0xff]
      %v281 = vld [vmem:[#allocation2 + $0x2] sm:$0xff]
      %v282 = vld [vmem:[#allocation2 + $0x12] sm:$0xff]
      %v283 = vld [vmem:[#allocation2 + $0x22] sm:$0xff]
      %v284 = vld [vmem:[#allocation2 + $0x32] sm:$0xff]
      %v285 = vld [vmem:[#allocation2 + $0x42] sm:$0xff]
      %v286 = vld [vmem:[#allocation2 + $0x52] sm:$0xff]
      %v287 = vld [vmem:[#allocation2 + $0x62] sm:$0xff]
      %v288 = vld [vmem:[#allocation2 + $0x72] sm:$0xff]
      %v289 = vld [vmem:[%s256] sm:$0xff]
      %v290 = vld [vmem:[%s256 + $0x10] sm:$0xff]
      %v291 = vld [vmem:[%s256 + $0x20] sm:$0xff]
      %v292 = vld [vmem:[%s256 + $0x30] sm:$0xff]
      %v293 = vld [vmem:[%s256 + $0x40] sm:$0xff]
      %v294 = vld [vmem:[%s256 + $0x50] sm:$0xff]
      %v295 = vld [vmem:[%s256 + $0x60] sm:$0xff]
      %v296 = vld [vmem:[%s256 + $0x70] sm:$0xff]
      %v297 = vld [vmem:[%s256 + $0x1] sm:$0xff]
      %v298 = vld [vmem:[%s256 + $0x11] sm:$0xff]
      %v299 = vld [vmem:[%s256 + $0x21] sm:$0xff]
      %v300 = vld [vmem:[%s256 + $0x31] sm:$0xff]
      %v301 = vld [vmem:[%s256 + $0x41] sm:$0xff]
      %v302 = vld [vmem:[%s256 + $0x51] sm:$0xff]
      %v303 = vld [vmem:[%s256 + $0x61] sm:$0xff]
      %v304 = vld [vmem:[%s256 + $0x71] sm:$0xff]
      %v305 = vld [vmem:[%s256 + $0x2] sm:$0xff]
      %v306 = vld [vmem:[%s256 + $0x12] sm:$0xff]
      %v307 = vld [vmem:[%s256 + $0x22] sm:$0xff]
      %v308 = vld [vmem:[%s256 + $0x32] sm:$0xff]
      %v309 = vld [vmem:[%s256 + $0x42] sm:$0xff]
      %v310 = vld [vmem:[%s256 + $0x52] sm:$0xff]
      %v311 = vld [vmem:[%s256 + $0x62] sm:$0xff]
      %v312 = vld [vmem:[%s256 + $0x72] sm:$0xff]
      %s313 = scalar_lea.vmem [#allocation2], 32
      %v314 = vld [vmem:[%s313] sm:$0xff]
      %v315 = vld [vmem:[%s313 + $0x10] sm:$0xff]
      %v316 = vld [vmem:[%s313 + $0x20] sm:$0xff]
      %v317 = vld [vmem:[%s313 + $0x30] sm:$0xff]
      %v318 = vld [vmem:[%s313 + $0x40] sm:$0xff]
      %v319 = vld [vmem:[%s313 + $0x50] sm:$0xff]
      %v320 = vld [vmem:[%s313 + $0x60] sm:$0xff]
      %v321 = vld [vmem:[%s313 + $0x70] sm:$0xff]
      %v322 = vld [vmem:[%s313 + $0x1] sm:$0xff]
      %v323 = vld [vmem:[%s313 + $0x11] sm:$0xff]
      %v324 = vld [vmem:[%s313 + $0x21] sm:$0xff]
      %v325 = vld [vmem:[%s313 + $0x31] sm:$0xff]
      %v326 = vld [vmem:[%s313 + $0x41] sm:$0xff]
      %v327 = vld [vmem:[%s313 + $0x51] sm:$0xff]
      %v328 = vld [vmem:[%s313 + $0x61] sm:$0xff]
      %v329 = vld [vmem:[%s313 + $0x71] sm:$0xff]
      %v330 = vld [vmem:[%s313 + $0x2] sm:$0xff]
      %v331 = vld [vmem:[%s313 + $0x12] sm:$0xff]
      %v332 = vld [vmem:[%s313 + $0x22] sm:$0xff]
      %v333 = vld [vmem:[%s313 + $0x32] sm:$0xff]
      %v334 = vld [vmem:[%s313 + $0x42] sm:$0xff]
      %v335 = vld [vmem:[%s313 + $0x52] sm:$0xff]
      %v336 = vld [vmem:[%s313 + $0x62] sm:$0xff]
      %v337 = vld [vmem:[%s313 + $0x72] sm:$0xff]
      %346 = vrot.lane.b32.xlu0 %v273, 8
      %v347 = vpop.permute.xlu0 %346
      %348 = vrot.lane.b32.xlu0 %v274, 8
      %v349 = vpop.permute.xlu0 %348
      %350 = vrot.lane.b32.xlu0 %v275, 8
      %v351 = vpop.permute.xlu0 %350
      %352 = vrot.lane.b32.xlu0 %v276, 8
      %v353 = vpop.permute.xlu0 %352
      %354 = vrot.lane.b32.xlu0 %v277, 8
      %v355 = vpop.permute.xlu0 %354
      %356 = vrot.lane.b32.xlu0 %v278, 8
      %v357 = vpop.permute.xlu0 %356
      %358 = vrot.lane.b32.xlu0 %v279, 8
      %v359 = vpop.permute.xlu0 %358
      %360 = vrot.lane.b32.xlu0 %v280, 8
      %v361 = vpop.permute.xlu0 %360
      %378 = vrot.lane.b32.xlu0 %v281, 16
      %v379 = vpop.permute.xlu0 %378
      %380 = vrot.lane.b32.xlu0 %v282, 16
      %v381 = vpop.permute.xlu0 %380
      %382 = vrot.lane.b32.xlu0 %v283, 16
      %v383 = vpop.permute.xlu0 %382
      %384 = vrot.lane.b32.xlu0 %v284, 16
      %v385 = vpop.permute.xlu0 %384
      %386 = vrot.lane.b32.xlu0 %v285, 16
      %v387 = vpop.permute.xlu0 %386
      %388 = vrot.lane.b32.xlu0 %v286, 16
      %v389 = vpop.permute.xlu0 %388
      %390 = vrot.lane.b32.xlu0 %v287, 16
      %v391 = vpop.permute.xlu0 %390
      %392 = vrot.lane.b32.xlu0 %v288, 16
      %v393 = vpop.permute.xlu0 %392
      %410 = vrot.lane.b32.xlu0 %v289, 24
      %v411 = vpop.permute.xlu0 %410
      %412 = vrot.lane.b32.xlu0 %v290, 24
      %v413 = vpop.permute.xlu0 %412
      %414 = vrot.lane.b32.xlu0 %v291, 24
      %v415 = vpop.permute.xlu0 %414
      %416 = vrot.lane.b32.xlu0 %v292, 24
      %v417 = vpop.permute.xlu0 %416
      %418 = vrot.lane.b32.xlu0 %v293, 24
      %v419 = vpop.permute.xlu0 %418
      %420 = vrot.lane.b32.xlu0 %v294, 24
      %v421 = vpop.permute.xlu0 %420
      %422 = vrot.lane.b32.xlu0 %v295, 24
      %v423 = vpop.permute.xlu0 %422
      %424 = vrot.lane.b32.xlu0 %v296, 24
      %v425 = vpop.permute.xlu0 %424
      %442 = vrot.lane.b32.xlu0 %v297, 32
      %v443 = vpop.permute.xlu0 %442
      %444 = vrot.lane.b32.xlu0 %v298, 32
      %v445 = vpop.permute.xlu0 %444
      %446 = vrot.lane.b32.xlu0 %v299, 32
      %v447 = vpop.permute.xlu0 %446
      %448 = vrot.lane.b32.xlu0 %v300, 32
      %v449 = vpop.permute.xlu0 %448
      %450 = vrot.lane.b32.xlu0 %v301, 32
      %v451 = vpop.permute.xlu0 %450
      %452 = vrot.lane.b32.xlu0 %v302, 32
      %v453 = vpop.permute.xlu0 %452
      %454 = vrot.lane.b32.xlu0 %v303, 32
      %v455 = vpop.permute.xlu0 %454
      %456 = vrot.lane.b32.xlu0 %v304, 32
      %v457 = vpop.permute.xlu0 %456
      %474 = vrot.lane.b32.xlu0 %v305, 40
      %v475 = vpop.permute.xlu0 %474
      %476 = vrot.lane.b32.xlu0 %v306, 40
      %v477 = vpop.permute.xlu0 %476
      %478 = vrot.lane.b32.xlu0 %v307, 40
      %v479 = vpop.permute.xlu0 %478
      %480 = vrot.lane.b32.xlu0 %v308, 40
      %v481 = vpop.permute.xlu0 %480
      %482 = vrot.lane.b32.xlu0 %v309, 40
      %v483 = vpop.permute.xlu0 %482
      %484 = vrot.lane.b32.xlu0 %v310, 40
      %v485 = vpop.permute.xlu0 %484
      %486 = vrot.lane.b32.xlu0 %v311, 40
      %v487 = vpop.permute.xlu0 %486
      %488 = vrot.lane.b32.xlu0 %v312, 40
      %v489 = vpop.permute.xlu0 %488
      %506 = vrot.lane.b32.xlu0 %v314, 48
      %v507 = vpop.permute.xlu0 %506
      %508 = vrot.lane.b32.xlu0 %v315, 48
      %v509 = vpop.permute.xlu0 %508
      %510 = vrot.lane.b32.xlu0 %v316, 48
      %v511 = vpop.permute.xlu0 %510
      %512 = vrot.lane.b32.xlu0 %v317, 48
      %v513 = vpop.permute.xlu0 %512
      %514 = vrot.lane.b32.xlu0 %v318, 48
      %v515 = vpop.permute.xlu0 %514
      %516 = vrot.lane.b32.xlu0 %v319, 48
      %v517 = vpop.permute.xlu0 %516
      %518 = vrot.lane.b32.xlu0 %v320, 48
      %v519 = vpop.permute.xlu0 %518
      %520 = vrot.lane.b32.xlu0 %v321, 48
      %v521 = vpop.permute.xlu0 %520
      %538 = vrot.lane.b32.xlu0 %v322, 56
      %v539 = vpop.permute.xlu0 %538
      %540 = vrot.lane.b32.xlu0 %v323, 56
      %v541 = vpop.permute.xlu0 %540
      %542 = vrot.lane.b32.xlu0 %v324, 56
      %v543 = vpop.permute.xlu0 %542
      %544 = vrot.lane.b32.xlu0 %v325, 56
      %v545 = vpop.permute.xlu0 %544
      %546 = vrot.lane.b32.xlu0 %v326, 56
      %v547 = vpop.permute.xlu0 %546
      %548 = vrot.lane.b32.xlu0 %v327, 56
      %v549 = vpop.permute.xlu0 %548
      %550 = vrot.lane.b32.xlu0 %v328, 56
      %v551 = vpop.permute.xlu0 %550
      %552 = vrot.lane.b32.xlu0 %v329, 56
      %v553 = vpop.permute.xlu0 %552
      %570 = vrot.lane.b32.xlu0 %v330, 64
      %v571 = vpop.permute.xlu0 %570
      %572 = vrot.lane.b32.xlu0 %v331, 64
      %v573 = vpop.permute.xlu0 %572
      %574 = vrot.lane.b32.xlu0 %v332, 64
      %v575 = vpop.permute.xlu0 %574
      %576 = vrot.lane.b32.xlu0 %v333, 64
      %v577 = vpop.permute.xlu0 %576
      %578 = vrot.lane.b32.xlu0 %v334, 64
      %v579 = vpop.permute.xlu0 %578
      %580 = vrot.lane.b32.xlu0 %v335, 64
      %v581 = vpop.permute.xlu0 %580
      %582 = vrot.lane.b32.xlu0 %v336, 64
      %v583 = vpop.permute.xlu0 %582
      %584 = vrot.lane.b32.xlu0 %v337, 64
      %v585 = vpop.permute.xlu0 %584
      %v594 = vsel %vm226, %v265, %v347
      %v595 = vsel %vm226, %v266, %v349
      %v596 = vsel %vm226, %v267, %v351
      %v597 = vsel %vm226, %v268, %v353
      %v598 = vsel %vm226, %v269, %v355
      %v599 = vsel %vm226, %v270, %v357
      %v600 = vsel %vm226, %v271, %v359
      %v601 = vsel %vm226, %v272, %v361
      %vm602 = vcmask 130048
      %v603 = vsel %vm602, %v594, %v379
      %v604 = vsel %vm602, %v595, %v381
      %v605 = vsel %vm602, %v596, %v383
      %v606 = vsel %vm602, %v597, %v385
      %v607 = vsel %vm602, %v598, %v387
      %v608 = vsel %vm602, %v599, %v389
      %v609 = vsel %vm602, %v600, %v391
      %v610 = vsel %vm602, %v601, %v393
      %vm611 = vcmask 195584
      %v612 = vsel %vm611, %v603, %v411
      %v613 = vsel %vm611, %v604, %v413
      %v614 = vsel %vm611, %v605, %v415
      %v615 = vsel %vm611, %v606, %v417
      %v616 = vsel %vm611, %v607, %v419
      %v617 = vsel %vm611, %v608, %v421
      %v618 = vsel %vm611, %v609, %v423
      %v619 = vsel %vm611, %v610, %v425
      %vm620 = vcmask 261120
      %v621 = vsel %vm620, %v612, %v443
      %v622 = vsel %vm620, %v613, %v445
      %v623 = vsel %vm620, %v614, %v447
      %v624 = vsel %vm620, %v615, %v449
      %v625 = vsel %vm620, %v616, %v451
      %v626 = vsel %vm620, %v617, %v453
      %v627 = vsel %vm620, %v618, %v455
      %v628 = vsel %vm620, %v619, %v457
      %vm629 = vcmask 326656
      %v630 = vsel %vm629, %v621, %v475
      %v631 = vsel %vm629, %v622, %v477
      %v632 = vsel %vm629, %v623, %v479
      %v633 = vsel %vm629, %v624, %v481
      %v634 = vsel %vm629, %v625, %v483
      %v635 = vsel %vm629, %v626, %v485
      %v636 = vsel %vm629, %v627, %v487
      %v637 = vsel %vm629, %v628, %v489
      %vm638 = vcmask 392192
      %v639 = vsel %vm638, %v630, %v507
      %v640 = vsel %vm638, %v631, %v509
      %v641 = vsel %vm638, %v632, %v511
      %v642 = vsel %vm638, %v633, %v513
      %v643 = vsel %vm638, %v634, %v515
      %v644 = vsel %vm638, %v635, %v517
      %v645 = vsel %vm638, %v636, %v519
      %v646 = vsel %vm638, %v637, %v521
      %vm647 = vcmask 457728
      %v648 = vsel %vm647, %v639, %v539
      %v649 = vsel %vm647, %v640, %v541
      %v650 = vsel %vm647, %v641, %v543
      %v651 = vsel %vm647, %v642, %v545
      %v652 = vsel %vm647, %v643, %v547
      %v653 = vsel %vm647, %v644, %v549
      %v654 = vsel %vm647, %v645, %v551
      %v655 = vsel %vm647, %v646, %v553
      %vm656 = vcmask 523264
      %v657 = vsel %vm656, %v648, %v571
      %v658 = vsel %vm656, %v649, %v573
      %v659 = vsel %vm656, %v650, %v575
      %v660 = vsel %vm656, %v651, %v577
      %v661 = vsel %vm656, %v652, %v579
      %v662 = vsel %vm656, %v653, %v581
      %v663 = vsel %vm656, %v654, %v583
      %v664 = vsel %vm656, %v655, %v585
      %v665 = vpack.c.bf16 %v658, %v657
      %v666 = vpack.c.bf16 %v660, %v659
      %v667 = vpack.c.bf16 %v662, %v661
      %v668 = vpack.c.bf16 %v664, %v663
      %v669 = vld [vmem:[%s1] sm:$0xf]
      %v670 = vld [vmem:[%s1 + $0x4] sm:$0xf]
      %v671 = vld [vmem:[%s1 + $0x8] sm:$0xf]
      %v672 = vld [vmem:[%s1 + $0xc] sm:$0xf]
      %v673 = vld [vmem:[%s1 + $0x10] sm:$0xf]
      %v674 = vld [vmem:[%s1 + $0x14] sm:$0xf]
      %v675 = vld [vmem:[%s1 + $0x18] sm:$0xf]
      %v676 = vld [vmem:[%s1 + $0x1c] sm:$0xf]
      %v677 = vld [vmem:[%s1 + $0x20] sm:$0xf]
      %v678 = vld [vmem:[%s2] sm:$0x1]
      %v680 = vperm.slane %v678, 0
      %v691 = vunpack.c.l.b16 %v669
      %v692 = vunpack.c.l.b16 %v670
      %v693 = vunpack.c.l.b16 %v671
      %v694 = vunpack.c.l.b16 %v672
      %v695 = vunpack.c.l.b16 %v673
      %v696 = vunpack.c.l.b16 %v674
      %v697 = vunpack.c.l.b16 %v675
      %v698 = vunpack.c.l.b16 %v676
      %v699 = vunpack.c.l.b16 %v677
      %v700 = vpack.c.b16 %v692, %v691
      %v701 = vpack.c.b16 %v694, %v693
      %v702 = vpack.c.b16 %v696, %v695
      %v703 = vpack.c.b16 %v698, %v697
      %v704 = vpack.c.b16 %v699, %v699
      %vm709 = vcmask 588800
      %v711 = vsel %vm709, %v665, 0
      %v714 = vsel %vm709, %v666, 0
      %v717 = vsel %vm709, %v667, 0
      %v720 = vsel %vm709, %v668, 0
      %vm722 = vcmask 1043456
      %v724 = vsel %vm722, %v704, 0
      %726 = vmatpush.bf16.msra.mxu0 0
      %727 = vmatpush.bf16.msra.mxu0 0
      %728 = vmatpush.bf16.msra.mxu0 0
      %729 = vmatpush.bf16.msra.mxu0 %v724
      %730 = vmatpush.bf16.msra.mxu0 %v703
      %731 = vmatpush.bf16.msra.mxu0 %v702
      %732 = vmatpush.bf16.msra.mxu0 %v701
      %733 = vmatpush.bf16.msra.mxu0 %v700
      %734 = vmatmul.bf16.gmra.mxu0 %v711
      %v735 = vpop.f32.mrf.mxu0
      %v736 = vadd.f32 %v680, %v735
      %v737 = vpop.f32.mrf.mxu0
      %v738 = vadd.f32 %v680, %v737
      %739 = vmatmul.bf16.gmra.mxu0 %v714
      %v740 = vpop.f32.mrf.mxu0
      %v741 = vadd.f32 %v680, %v740
      %v742 = vpop.f32.mrf.mxu0
      %v743 = vadd.f32 %v680, %v742
      %744 = vmatmul.bf16.gmra.mxu0 %v717
      %v745 = vpop.f32.mrf.mxu0
      %v746 = vadd.f32 %v680, %v745
      %v747 = vpop.f32.mrf.mxu0
      %v748 = vadd.f32 %v680, %v747
      %749 = vmatmul.bf16.gmra.mxu0 %v720
      %v750 = vpop.f32.mrf.mxu0
      %v751 = vadd.f32 %v680, %v750
      %v752 = vpop.f32.mrf.mxu0
      %v753 = vadd.f32 %v680, %v752
      %754 = vdwg.mxu0
      %v755 = vmax.f32 %v736, 0.0
      %v756 = vmax.f32 %v738, 0.0
      %v757 = vmax.f32 %v741, 0.0
      %v758 = vmax.f32 %v743, 0.0
      %v759 = vmax.f32 %v746, 0.0
      %v760 = vmax.f32 %v748, 0.0
      %v761 = vmax.f32 %v751, 0.0
      %v762 = vmax.f32 %v753, 0.0
      %763 = vst.msk [vmem:[#allocation3] sm:$0xff] %vm602, 0.0
      %vm764 = vcmask 123904
      %765 = vst.msk [vmem:[#allocation3 + $0x8] sm:$0x3] %vm764, 0.0
      %766 = vst.msk [vmem:[#allocation3 + $0x10] sm:$0xff] %vm602, 0.0
      %767 = vst.msk [vmem:[#allocation3 + $0x18] sm:$0x3] %vm764, 0.0
      %768 = vst.msk [vmem:[#allocation3 + $0x20] sm:$0xff] %vm602, 0.0
      %769 = vst.msk [vmem:[#allocation3 + $0x28] sm:$0x3] %vm764, 0.0
      %770 = vst.msk [vmem:[#allocation3 + $0x30] sm:$0xff] %vm602, 0.0
      %771 = vst.msk [vmem:[#allocation3 + $0x38] sm:$0x3] %vm764, 0.0
      %772 = vst.msk [vmem:[#allocation3 + $0x40] sm:$0xff] %vm602, 0.0
      %773 = vst.msk [vmem:[#allocation3 + $0x48] sm:$0x3] %vm764, 0.0
      %774 = vst.msk [vmem:[#allocation3 + $0x50] sm:$0xff] %vm602, 0.0
      %775 = vst.msk [vmem:[#allocation3 + $0x58] sm:$0x3] %vm764, 0.0
      %776 = vst.msk [vmem:[#allocation3 + $0x60] sm:$0xff] %vm602, 0.0
      %777 = vst.msk [vmem:[#allocation3 + $0x68] sm:$0x3] %vm764, 0.0
      %778 = vst.msk [vmem:[#allocation3 + $0x70] sm:$0xff] %vm602, 0.0
      %779 = vst.msk [vmem:[#allocation3 + $0x78] sm:$0x3] %vm764, 0.0
      %780 = vst.msk [vmem:[#allocation3 + $0x80] sm:$0xff] %vm602, 0.0
      %781 = vst.msk [vmem:[#allocation3 + $0x88] sm:$0x3] %vm764, 0.0
      %782 = vst.msk [vmem:[#allocation3 + $0x90] sm:$0xff] %vm602, 0.0
      %783 = vst.msk [vmem:[#allocation3 + $0x98] sm:$0x3] %vm764, 0.0
      %s784 = scalar_lea.vmem [#allocation3], 16
      %785 = vst.msk [vmem:[%s784 + $0x1] sm:$0xff] %vm602, %v755
      %786 = vst.msk [vmem:[%s784 + $0x11] sm:$0xff] %vm602, %v756
      %787 = vst.msk [vmem:[%s784 + $0x21] sm:$0xff] %vm602, %v757
      %788 = vst.msk [vmem:[%s784 + $0x31] sm:$0xff] %vm602, %v758
      %789 = vst.msk [vmem:[%s784 + $0x41] sm:$0xff] %vm602, %v759
      %790 = vst.msk [vmem:[%s784 + $0x51] sm:$0xff] %vm602, %v760
      %791 = vst.msk [vmem:[%s784 + $0x61] sm:$0xff] %vm602, %v761
      %792 = vst.msk [vmem:[%s784 + $0x71] sm:$0xff] %vm602, %v762
      %v793 = vld [vmem:[#allocation3] sm:$0xff]
      %v794 = vld [vmem:[#allocation3 + $0x10] sm:$0xff]
      %v795 = vld [vmem:[#allocation3 + $0x20] sm:$0xff]
      %v796 = vld [vmem:[#allocation3 + $0x30] sm:$0xff]
      %v797 = vld [vmem:[#allocation3 + $0x40] sm:$0xff]
      %v798 = vld [vmem:[#allocation3 + $0x50] sm:$0xff]
      %v799 = vld [vmem:[#allocation3 + $0x60] sm:$0xff]
      %v800 = vld [vmem:[#allocation3 + $0x70] sm:$0xff]
      %v801 = vld [vmem:[#allocation3 + $0x1] sm:$0xff]
      %v802 = vld [vmem:[#allocation3 + $0x11] sm:$0xff]
      %v803 = vld [vmem:[#allocation3 + $0x21] sm:$0xff]
      %v804 = vld [vmem:[#allocation3 + $0x31] sm:$0xff]
      %v805 = vld [vmem:[#allocation3 + $0x41] sm:$0xff]
      %v806 = vld [vmem:[#allocation3 + $0x51] sm:$0xff]
      %v807 = vld [vmem:[#allocation3 + $0x61] sm:$0xff]
      %v808 = vld [vmem:[#allocation3 + $0x71] sm:$0xff]
      %v809 = vld [vmem:[#allocation3 + $0x2] sm:$0xff]
      %v810 = vld [vmem:[#allocation3 + $0x12] sm:$0xff]
      %v811 = vld [vmem:[#allocation3 + $0x22] sm:$0xff]
      %v812 = vld [vmem:[#allocation3 + $0x32] sm:$0xff]
      %v813 = vld [vmem:[#allocation3 + $0x42] sm:$0xff]
      %v814 = vld [vmem:[#allocation3 + $0x52] sm:$0xff]
      %v815 = vld [vmem:[#allocation3 + $0x62] sm:$0xff]
      %v816 = vld [vmem:[#allocation3 + $0x72] sm:$0xff]
      %v817 = vld [vmem:[%s784] sm:$0xff]
      %v818 = vld [vmem:[%s784 + $0x10] sm:$0xff]
      %v819 = vld [vmem:[%s784 + $0x20] sm:$0xff]
      %v820 = vld [vmem:[%s784 + $0x30] sm:$0xff]
      %v821 = vld [vmem:[%s784 + $0x40] sm:$0xff]
      %v822 = vld [vmem:[%s784 + $0x50] sm:$0xff]
      %v823 = vld [vmem:[%s784 + $0x60] sm:$0xff]
      %v824 = vld [vmem:[%s784 + $0x70] sm:$0xff]
      %v825 = vld [vmem:[%s784 + $0x1] sm:$0xff]
      %v826 = vld [vmem:[%s784 + $0x11] sm:$0xff]
      %v827 = vld [vmem:[%s784 + $0x21] sm:$0xff]
      %v828 = vld [vmem:[%s784 + $0x31] sm:$0xff]
      %v829 = vld [vmem:[%s784 + $0x41] sm:$0xff]
      %v830 = vld [vmem:[%s784 + $0x51] sm:$0xff]
      %v831 = vld [vmem:[%s784 + $0x61] sm:$0xff]
      %v832 = vld [vmem:[%s784 + $0x71] sm:$0xff]
      %v833 = vld [vmem:[%s784 + $0x2] sm:$0xff]
      %v834 = vld [vmem:[%s784 + $0x12] sm:$0xff]
      %v835 = vld [vmem:[%s784 + $0x22] sm:$0xff]
      %v836 = vld [vmem:[%s784 + $0x32] sm:$0xff]
      %v837 = vld [vmem:[%s784 + $0x42] sm:$0xff]
      %v838 = vld [vmem:[%s784 + $0x52] sm:$0xff]
      %v839 = vld [vmem:[%s784 + $0x62] sm:$0xff]
      %v840 = vld [vmem:[%s784 + $0x72] sm:$0xff]
      %s841 = scalar_lea.vmem [#allocation3], 32
      %v842 = vld [vmem:[%s841] sm:$0xff]
      %v843 = vld [vmem:[%s841 + $0x10] sm:$0xff]
      %v844 = vld [vmem:[%s841 + $0x20] sm:$0xff]
      %v845 = vld [vmem:[%s841 + $0x30] sm:$0xff]
      %v846 = vld [vmem:[%s841 + $0x40] sm:$0xff]
      %v847 = vld [vmem:[%s841 + $0x50] sm:$0xff]
      %v848 = vld [vmem:[%s841 + $0x60] sm:$0xff]
      %v849 = vld [vmem:[%s841 + $0x70] sm:$0xff]
      %v850 = vld [vmem:[%s841 + $0x1] sm:$0xff]
      %v851 = vld [vmem:[%s841 + $0x11] sm:$0xff]
      %v852 = vld [vmem:[%s841 + $0x21] sm:$0xff]
      %v853 = vld [vmem:[%s841 + $0x31] sm:$0xff]
      %v854 = vld [vmem:[%s841 + $0x41] sm:$0xff]
      %v855 = vld [vmem:[%s841 + $0x51] sm:$0xff]
      %v856 = vld [vmem:[%s841 + $0x61] sm:$0xff]
      %v857 = vld [vmem:[%s841 + $0x71] sm:$0xff]
      %v858 = vld [vmem:[%s841 + $0x2] sm:$0xff]
      %v859 = vld [vmem:[%s841 + $0x12] sm:$0xff]
      %v860 = vld [vmem:[%s841 + $0x22] sm:$0xff]
      %v861 = vld [vmem:[%s841 + $0x32] sm:$0xff]
      %v862 = vld [vmem:[%s841 + $0x42] sm:$0xff]
      %v863 = vld [vmem:[%s841 + $0x52] sm:$0xff]
      %v864 = vld [vmem:[%s841 + $0x62] sm:$0xff]
      %v865 = vld [vmem:[%s841 + $0x72] sm:$0xff]
      %874 = vrot.lane.b32.xlu0 %v801, 16
      %v875 = vpop.permute.xlu0 %874
      %876 = vrot.lane.b32.xlu0 %v802, 16
      %v877 = vpop.permute.xlu0 %876
      %878 = vrot.lane.b32.xlu0 %v803, 16
      %v879 = vpop.permute.xlu0 %878
      %880 = vrot.lane.b32.xlu0 %v804, 16
      %v881 = vpop.permute.xlu0 %880
      %882 = vrot.lane.b32.xlu0 %v805, 16
      %v883 = vpop.permute.xlu0 %882
      %884 = vrot.lane.b32.xlu0 %v806, 16
      %v885 = vpop.permute.xlu0 %884
      %886 = vrot.lane.b32.xlu0 %v807, 16
      %v887 = vpop.permute.xlu0 %886
      %888 = vrot.lane.b32.xlu0 %v808, 16
      %v889 = vpop.permute.xlu0 %888
      %906 = vrot.lane.b32.xlu0 %v809, 32
      %v907 = vpop.permute.xlu0 %906
      %908 = vrot.lane.b32.xlu0 %v810, 32
      %v909 = vpop.permute.xlu0 %908
      %910 = vrot.lane.b32.xlu0 %v811, 32
      %v911 = vpop.permute.xlu0 %910
      %912 = vrot.lane.b32.xlu0 %v812, 32
      %v913 = vpop.permute.xlu0 %912
      %914 = vrot.lane.b32.xlu0 %v813, 32
      %v915 = vpop.permute.xlu0 %914
      %916 = vrot.lane.b32.xlu0 %v814, 32
      %v917 = vpop.permute.xlu0 %916
      %918 = vrot.lane.b32.xlu0 %v815, 32
      %v919 = vpop.permute.xlu0 %918
      %920 = vrot.lane.b32.xlu0 %v816, 32
      %v921 = vpop.permute.xlu0 %920
      %938 = vrot.lane.b32.xlu0 %v817, 48
      %v939 = vpop.permute.xlu0 %938
      %940 = vrot.lane.b32.xlu0 %v818, 48
      %v941 = vpop.permute.xlu0 %940
      %942 = vrot.lane.b32.xlu0 %v819, 48
      %v943 = vpop.permute.xlu0 %942
      %944 = vrot.lane.b32.xlu0 %v820, 48
      %v945 = vpop.permute.xlu0 %944
      %946 = vrot.lane.b32.xlu0 %v821, 48
      %v947 = vpop.permute.xlu0 %946
      %948 = vrot.lane.b32.xlu0 %v822, 48
      %v949 = vpop.permute.xlu0 %948
      %950 = vrot.lane.b32.xlu0 %v823, 48
      %v951 = vpop.permute.xlu0 %950
      %952 = vrot.lane.b32.xlu0 %v824, 48
      %v953 = vpop.permute.xlu0 %952
      %970 = vrot.lane.b32.xlu0 %v825, 64
      %v971 = vpop.permute.xlu0 %970
      %972 = vrot.lane.b32.xlu0 %v826, 64
      %v973 = vpop.permute.xlu0 %972
      %974 = vrot.lane.b32.xlu0 %v827, 64
      %v975 = vpop.permute.xlu0 %974
      %976 = vrot.lane.b32.xlu0 %v828, 64
      %v977 = vpop.permute.xlu0 %976
      %978 = vrot.lane.b32.xlu0 %v829, 64
      %v979 = vpop.permute.xlu0 %978
      %980 = vrot.lane.b32.xlu0 %v830, 64
      %v981 = vpop.permute.xlu0 %980
      %982 = vrot.lane.b32.xlu0 %v831, 64
      %v983 = vpop.permute.xlu0 %982
      %984 = vrot.lane.b32.xlu0 %v832, 64
      %v985 = vpop.permute.xlu0 %984
      %1002 = vrot.lane.b32.xlu0 %v833, 80
      %v1003 = vpop.permute.xlu0 %1002
      %1004 = vrot.lane.b32.xlu0 %v834, 80
      %v1005 = vpop.permute.xlu0 %1004
      %1006 = vrot.lane.b32.xlu0 %v835, 80
      %v1007 = vpop.permute.xlu0 %1006
      %1008 = vrot.lane.b32.xlu0 %v836, 80
      %v1009 = vpop.permute.xlu0 %1008
      %1010 = vrot.lane.b32.xlu0 %v837, 80
      %v1011 = vpop.permute.xlu0 %1010
      %1012 = vrot.lane.b32.xlu0 %v838, 80
      %v1013 = vpop.permute.xlu0 %1012
      %1014 = vrot.lane.b32.xlu0 %v839, 80
      %v1015 = vpop.permute.xlu0 %1014
      %1016 = vrot.lane.b32.xlu0 %v840, 80
      %v1017 = vpop.permute.xlu0 %1016
      %1034 = vrot.lane.b32.xlu0 %v842, 96
      %v1035 = vpop.permute.xlu0 %1034
      %1036 = vrot.lane.b32.xlu0 %v843, 96
      %v1037 = vpop.permute.xlu0 %1036
      %1038 = vrot.lane.b32.xlu0 %v844, 96
      %v1039 = vpop.permute.xlu0 %1038
      %1040 = vrot.lane.b32.xlu0 %v845, 96
      %v1041 = vpop.permute.xlu0 %1040
      %1042 = vrot.lane.b32.xlu0 %v846, 96
      %v1043 = vpop.permute.xlu0 %1042
      %1044 = vrot.lane.b32.xlu0 %v847, 96
      %v1045 = vpop.permute.xlu0 %1044
      %1046 = vrot.lane.b32.xlu0 %v848, 96
      %v1047 = vpop.permute.xlu0 %1046
      %1048 = vrot.lane.b32.xlu0 %v849, 96
      %v1049 = vpop.permute.xlu0 %1048
      %1066 = vrot.lane.b32.xlu0 %v850, 112
      %v1067 = vpop.permute.xlu0 %1066
      %1068 = vrot.lane.b32.xlu0 %v851, 112
      %v1069 = vpop.permute.xlu0 %1068
      %1070 = vrot.lane.b32.xlu0 %v852, 112
      %v1071 = vpop.permute.xlu0 %1070
      %1072 = vrot.lane.b32.xlu0 %v853, 112
      %v1073 = vpop.permute.xlu0 %1072
      %1074 = vrot.lane.b32.xlu0 %v854, 112
      %v1075 = vpop.permute.xlu0 %1074
      %1076 = vrot.lane.b32.xlu0 %v855, 112
      %v1077 = vpop.permute.xlu0 %1076
      %1078 = vrot.lane.b32.xlu0 %v856, 112
      %v1079 = vpop.permute.xlu0 %1078
      %1080 = vrot.lane.b32.xlu0 %v857, 112
      %v1081 = vpop.permute.xlu0 %1080
      %v1090 = vsel %vm602, %v793, %v875
      %v1091 = vsel %vm602, %v794, %v877
      %v1092 = vsel %vm602, %v795, %v879
      %v1093 = vsel %vm602, %v796, %v881
      %v1094 = vsel %vm602, %v797, %v883
      %v1095 = vsel %vm602, %v798, %v885
      %v1096 = vsel %vm602, %v799, %v887
      %v1097 = vsel %vm602, %v800, %v889
      %v1098 = vsel %vm620, %v1090, %v907
      %v1099 = vsel %vm620, %v1091, %v909
      %v1100 = vsel %vm620, %v1092, %v911
      %v1101 = vsel %vm620, %v1093, %v913
      %v1102 = vsel %vm620, %v1094, %v915
      %v1103 = vsel %vm620, %v1095, %v917
      %v1104 = vsel %vm620, %v1096, %v919
      %v1105 = vsel %vm620, %v1097, %v921
      %v1106 = vsel %vm638, %v1098, %v939
      %v1107 = vsel %vm638, %v1099, %v941
      %v1108 = vsel %vm638, %v1100, %v943
      %v1109 = vsel %vm638, %v1101, %v945
      %v1110 = vsel %vm638, %v1102, %v947
      %v1111 = vsel %vm638, %v1103, %v949
      %v1112 = vsel %vm638, %v1104, %v951
      %v1113 = vsel %vm638, %v1105, %v953
      %v1114 = vsel %vm656, %v1106, %v971
      %v1115 = vsel %vm656, %v1107, %v973
      %v1116 = vsel %vm656, %v1108, %v975
      %v1117 = vsel %vm656, %v1109, %v977
      %v1118 = vsel %vm656, %v1110, %v979
      %v1119 = vsel %vm656, %v1111, %v981
      %v1120 = vsel %vm656, %v1112, %v983
      %v1121 = vsel %vm656, %v1113, %v985
      %vm1122 = vcmask 654336
      %v1123 = vsel %vm1122, %v1114, %v1003
      %v1124 = vsel %vm1122, %v1115, %v1005
      %v1125 = vsel %vm1122, %v1116, %v1007
      %v1126 = vsel %vm1122, %v1117, %v1009
      %v1127 = vsel %vm1122, %v1118, %v1011
      %v1128 = vsel %vm1122, %v1119, %v1013
      %v1129 = vsel %vm1122, %v1120, %v1015
      %v1130 = vsel %vm1122, %v1121, %v1017
      %vm1131 = vcmask 785408
      %v1132 = vsel %vm1131, %v1123, %v1035
      %v1133 = vsel %vm1131, %v1124, %v1037
      %v1134 = vsel %vm1131, %v1125, %v1039
      %v1135 = vsel %vm1131, %v1126, %v1041
      %v1136 = vsel %vm1131, %v1127, %v1043
      %v1137 = vsel %vm1131, %v1128, %v1045
      %v1138 = vsel %vm1131, %v1129, %v1047
      %v1139 = vsel %vm1131, %v1130, %v1049
      %vm1140 = vcmask 916480
      %v1141 = vsel %vm1140, %v1132, %v1067
      %v1142 = vsel %vm1140, %v1133, %v1069
      %v1143 = vsel %vm1140, %v1134, %v1071
      %v1144 = vsel %vm1140, %v1135, %v1073
      %v1145 = vsel %vm1140, %v1136, %v1075
      %v1146 = vsel %vm1140, %v1137, %v1077
      %v1147 = vsel %vm1140, %v1138, %v1079
      %v1148 = vsel %vm1140, %v1139, %v1081
      %v1149 = vpack.c.bf16 %v1142, %v1141
      %v1150 = vpack.c.bf16 %v859, %v858
      %v1151 = vpack.c.bf16 %v1144, %v1143
      %v1152 = vpack.c.bf16 %v861, %v860
      %v1153 = vpack.c.bf16 %v1146, %v1145
      %v1154 = vpack.c.bf16 %v863, %v862
      %v1155 = vpack.c.bf16 %v1148, %v1147
      %v1156 = vpack.c.bf16 %v865, %v864
      %v1157 = vld [vmem:[%s3] sm:$0xf]
      %v1158 = vld [vmem:[%s3 + $0x4] sm:$0xf]
      %v1159 = vld [vmem:[%s3 + $0x8] sm:$0xf]
      %v1160 = vld [vmem:[%s3 + $0xc] sm:$0xf]
      %v1161 = vld [vmem:[%s3 + $0x10] sm:$0xf]
      %v1162 = vld [vmem:[%s3 + $0x14] sm:$0xf]
      %v1163 = vld [vmem:[%s3 + $0x18] sm:$0xf]
      %v1164 = vld [vmem:[%s3 + $0x1c] sm:$0xf]
      %v1165 = vld [vmem:[%s3 + $0x20] sm:$0xf]
      %v1166 = vld [vmem:[%s3 + $0x24] sm:$0xf]
      %v1167 = vld [vmem:[%s3 + $0x28] sm:$0xf]
      %v1168 = vld [vmem:[%s3 + $0x2c] sm:$0xf]
      %v1169 = vld [vmem:[%s3 + $0x30] sm:$0xf]
      %v1170 = vld [vmem:[%s3 + $0x34] sm:$0xf]
      %v1171 = vld [vmem:[%s3 + $0x38] sm:$0xf]
      %v1172 = vld [vmem:[%s3 + $0x3c] sm:$0xf]
      %v1173 = vld [vmem:[%s3 + $0x40] sm:$0xf]
      %v1174 = vld [vmem:[%s3 + $0x44] sm:$0xf]
      %v1175 = vld [vmem:[%s4] sm:$0x1]
      %v1177 = vperm.slane %v1175, 0
      %v1197 = vunpack.c.l.b16 %v1157
      %v1198 = vunpack.c.l.b16 %v1158
      %v1199 = vunpack.c.l.b16 %v1159
      %v1200 = vunpack.c.l.b16 %v1160
      %v1201 = vunpack.c.l.b16 %v1161
      %v1202 = vunpack.c.l.b16 %v1162
      %v1203 = vunpack.c.l.b16 %v1163
      %v1204 = vunpack.c.l.b16 %v1164
      %v1205 = vunpack.c.l.b16 %v1165
      %v1206 = vunpack.c.l.b16 %v1166
      %v1207 = vunpack.c.l.b16 %v1167
      %v1208 = vunpack.c.l.b16 %v1168
      %v1209 = vunpack.c.l.b16 %v1169
      %v1210 = vunpack.c.l.b16 %v1170
      %v1211 = vunpack.c.l.b16 %v1171
      %v1212 = vunpack.c.l.b16 %v1172
      %v1213 = vunpack.c.l.b16 %v1173
      %v1214 = vunpack.c.l.b16 %v1174
      %v1215 = vpack.c.b16 %v1198, %v1197
      %v1216 = vpack.c.b16 %v1200, %v1199
      %v1217 = vpack.c.b16 %v1202, %v1201
      %v1218 = vpack.c.b16 %v1204, %v1203
      %v1219 = vpack.c.b16 %v1206, %v1205
      %v1220 = vpack.c.b16 %v1208, %v1207
      %v1221 = vpack.c.b16 %v1210, %v1209
      %v1222 = vpack.c.b16 %v1212, %v1211
      %v1223 = vpack.c.b16 %v1214, %v1213
      %v1234 = vsel %vm602, %v1150, 0
      %v1237 = vsel %vm602, %v1152, 0
      %v1240 = vsel %vm602, %v1154, 0
      %v1243 = vsel %vm602, %v1156, 0
      %1245 = vmatpush.bf16.msra.mxu0 %v1222
      %1246 = vmatpush.bf16.msra.mxu0 %v1221
      %1247 = vmatpush.bf16.msra.mxu0 %v1220
      %1248 = vmatpush.bf16.msra.mxu0 %v1219
      %1249 = vmatpush.bf16.msra.mxu0 %v1218
      %1250 = vmatpush.bf16.msra.mxu0 %v1217
      %1251 = vmatpush.bf16.msra.mxu0 %v1216
      %1252 = vmatpush.bf16.msra.mxu0 %v1215
      %1253 = vmatmul.bf16.gmra.mxu0 %v1149
      %v1254 = vpop.f32.mrf.mxu0
      %v1255 = vadd.f32 %v1177, %v1254
      %v1256 = vpop.f32.mrf.mxu0
      %v1257 = vadd.f32 %v1177, %v1256
      %1258 = vmatmul.bf16.gmra.mxu0 %v1151
      %v1259 = vpop.f32.mrf.mxu0
      %v1260 = vadd.f32 %v1177, %v1259
      %v1261 = vpop.f32.mrf.mxu0
      %v1262 = vadd.f32 %v1177, %v1261
      %1263 = vmatmul.bf16.gmra.mxu0 %v1153
      %v1264 = vpop.f32.mrf.mxu0
      %v1265 = vadd.f32 %v1177, %v1264
      %v1266 = vpop.f32.mrf.mxu0
      %v1267 = vadd.f32 %v1177, %v1266
      %1268 = vmatmul.bf16.gmra.mxu0 %v1155
      %v1269 = vpop.f32.mrf.mxu0
      %v1270 = vadd.f32 %v1177, %v1269
      %v1271 = vpop.f32.mrf.mxu0
      %v1272 = vadd.f32 %v1177, %v1271
      %1273 = vdwg.mxu0
      %1274 = vmatpush.bf16.msra.mxu0 0
      %1275 = vmatpush.bf16.msra.mxu0 0
      %1276 = vmatpush.bf16.msra.mxu0 0
      %1277 = vmatpush.bf16.msra.mxu0 0
      %1278 = vmatpush.bf16.msra.mxu0 0
      %1279 = vmatpush.bf16.msra.mxu0 0
      %1280 = vmatpush.bf16.msra.mxu0 0
      %1281 = vmatpush.bf16.msra.mxu0 %v1223
      %1282 = vmatmul.bf16.gmra.mxu0 %v1234
      %v1283 = vpop.f32.mrf.mxu0
      %v1284 = vadd.f32 %v1255, %v1283
      %v1285 = vpop.f32.mrf.mxu0
      %v1286 = vadd.f32 %v1257, %v1285
      %1287 = vmatmul.bf16.gmra.mxu0 %v1237
      %v1288 = vpop.f32.mrf.mxu0
      %v1289 = vadd.f32 %v1260, %v1288
      %v1290 = vpop.f32.mrf.mxu0
      %v1291 = vadd.f32 %v1262, %v1290
      %1292 = vmatmul.bf16.gmra.mxu0 %v1240
      %v1293 = vpop.f32.mrf.mxu0
      %v1294 = vadd.f32 %v1265, %v1293
      %v1295 = vpop.f32.mrf.mxu0
      %v1296 = vadd.f32 %v1267, %v1295
      %1297 = vmatmul.bf16.gmra.mxu0 %v1243
      %v1298 = vpop.f32.mrf.mxu0
      %v1299 = vadd.f32 %v1270, %v1298
      %v1300 = vpop.f32.mrf.mxu0
      %v1301 = vadd.f32 %v1272, %v1300
      %1302 = vdwg.mxu0
      %v1303 = vmax.f32 %v1284, 0.0
      %v1304 = vmax.f32 %v1286, 0.0
      %v1305 = vmax.f32 %v1289, 0.0
      %v1306 = vmax.f32 %v1291, 0.0
      %v1307 = vmax.f32 %v1294, 0.0
      %v1308 = vmax.f32 %v1296, 0.0
      %v1309 = vmax.f32 %v1299, 0.0
      %v1310 = vmax.f32 %v1301, 0.0
      %v1311 = vmax.f32 %v1303, %v1304
      %v1312 = vmax.f32 %v1305, %v1306
      %v1313 = vmax.f32 %v1307, %v1308
      %v1314 = vmax.f32 %v1309, %v1310
      %1315 = vst.msk [vmem:[%s224] sm:$0xff] %vm602, %v1311
      %1316 = vst.msk [vmem:[%s224 + $0x8] sm:$0xff] %vm602, %v1312
      %1317 = vst.msk [vmem:[%s224 + $0x10] sm:$0xff] %vm602, %v1313
      %1318 = vst.msk [vmem:[%s224 + $0x18] sm:$0xff] %vm602, %v1314
      %p1319 = scmp.lt.s32.totalorder %s16, 1
      %s1320 = scalar_select %p1319, %s16, 1
      %s1321 = smul.addr %s1320, 4
      %s1322 = smul.addr %s1321, 8
      %s1323 = scalar_lea.vmem %s5, %s1322
      // Predicated region
      $region41: #{unet_forward.8} parent=39 // pred_check
        %p1324 = pneg %p144
      $region42: #{unet_forward.8} parent=39 // pred_check_branch
        %1326 = sbr.rel (%p1324) target = $region44
      $region43: #{unet_forward.8} parent=39 // pred_region
        _
      $region44: #{unet_forward.8} parent=39 // pred_fallthru
        _
    $region40: #{unet_forward.8} parent=5 // pred_fallthru
      _
    %p1327 = scmp.le.s32.totalorder 2, %s11
    // Predicated region
    $region45: #{unet_forward.8} parent=5 // pred_check
      %p1328 = pneg %p1327
    $region46: #{unet_forward.8} parent=5 // pred_check_branch
      %1330 = sbr.rel (%p1328) target = $region48
    $region47: #{unet_forward.8} parent=5 // pred_region
      %s1331 = ssub.s32 %s11, 2
      // Predicated region
      $region49: #{unet_forward.8} parent=47 // pred_check
        %p1332 = pneg %p150
      $region50: #{unet_forward.8} parent=47 // pred_check_branch
        %1334 = sbr.rel (%p1332) target = $region52
      $region51: #{unet_forward.8} parent=47 // pred_region
        %p1335 = scmp.lt.s32.totalorder %s17, 1
        %s1336 = scalar_select %p1335, %s17, 1
        %s1337 = smul.addr %s1336, 4
        %s1338 = smul.addr %s1337, 8
        %s1339 = scalar_lea.vmem %s5, %s1338
      $region52: #{unet_forward.8} parent=47 // pred_fallthru
        _
    $region48: #{unet_forward.8} parent=5 // pred_fallthru
      _
  $region6: #{unet_forward.8} parent=0 // loop_footer
    %s15 = sadd.s32 1, %s11
  $region7: #{unet_forward.8} parent=0 // loop_footer_branch
    %10 = sbr.rel target = $region3
  $region8: #{unet_forward.8} parent=0 // loop_exit
    _

// kernel: unet_forward.9
$region0: #{unet_forward.9}
  #allocation0 [shape = 'u32[]', space=smem, size = 0x4, offset = 0x4, fixed_abs, tag = 'smem constant byte address 0x4 - core index']
  #allocation1 [shape = 'u32[72,128]{1,0:T(1,128)}', space=vmem, size = 0x9000, scoped, tag = 'internal scratch']
  #allocation2 [shape = 'f32[6,6,16]{2,1,0:T(8,128)}', space=vmem, size = 0x6000, scoped, tag = 'scratch operand']
  #allocation3 [shape = 'f32[6,6,32]{2,1,0:T(8,128)}', space=vmem, size = 0x6000, scoped, tag = 'scratch operand']
  %s0 = inlined_call_operand.vmem [shape: f32[2,4,4,16], index: 0, kind: input, shape index: {}]
  %s1 = inlined_call_operand.vmem [shape: bf16[144,32], index: 1, kind: input, shape index: {}]
  %s2 = inlined_call_operand.vmem [shape: f32[1,32], index: 2, kind: input, shape index: {}]
  %s3 = inlined_call_operand.vmem [shape: bf16[288,32], index: 3, kind: input, shape index: {}]
  %s4 = inlined_call_operand.vmem [shape: f32[1,32], index: 4, kind: input, shape index: {}]
  %s5 = inlined_call_operand.vmem [shape: f32[2,2,4,32], index: 5, kind: output, shape index: {}]
  %s6 = sld [smem:[#allocation0]]
  $region53: #{unet_forward.9} parent=0
    _
  %s8 = ssub.s32 1, %s6
  %s9 = scalar_select 0, %s8, %s6
  loop: start=0, step=1, limit=4
  $region2: #{unet_forward.9} parent=0 // loop_pre_header
    _
  $region3: #{unet_forward.9} parent=0 // loop_header
    %s11 = sphi 0, %s15
    %p12 = scmp.ge.s32.totalorder %s11, 4
    %s21 = sphi 0, %s23
    %s24 = sphi 0, %s21
    %s25 = sphi 0, %s24
    %s41 = sphi 0, %s25
    %s45 = sphi 0, %s45
    %s47 = sphi 0, %s45
    %s48 = sphi 0, %s47
    %s62 = sphi 0, %s48
    %s66 = sphi 0, %s66
    %s68 = sphi 0, %s66
    %s69 = sphi 0, %s68
    %s83 = sphi 0, %s69
    %s87 = sphi 0, %s87
    %s89 = sphi 0, %s87
    %s90 = sphi 0, %s89
    %s104 = sphi 0, %s90
    %s108 = sphi 0, %s108
    %s110 = sphi 0, %s108
    %s111 = sphi 0, %s110
    %s125 = sphi 0, %s111
    %s131 = sphi 0, %s133
    %s134 = sphi 0, %s131
    %s135 = sphi 0, %s134
    %s151 = sphi 0, %s135
  $region4: #{unet_forward.9} parent=0 // loop_header_branch
    %14 = sbr.rel (%p12) target = $region8
  $region5: #{unet_forward.9} parent=0 // loop_body
    %s16 = ssub.s32 %s11, 1
    %s17 = ssub.s32 %s11, 2
    %s18 = sadd.s32 %s11, 1
    %s19 = ssub.s32 %s11, %s18
    %p20 = scmp.eq.s32.totalorder %s19, 0
    %s22 = sadd.s32 %s21, 1
    %s23 = scalar_select %p20, %s21, %s22
    %p26 = pneg %p20
    %p27 = scmp.eq.s32.totalorder %s11, 1
    %p28 = por %p26, %p27
    %p29 = scmp.ne.s32.totalorder %s21, %s24
    %p30 = scmp.eq.s32.totalorder %s11, 0
    %p31 = por %p29, %p30
    %p32 = scmp.ne.s32.totalorder %s21, %s24
    %p33 = scmp.eq.s32.totalorder %s16, 1
    %p34 = por %p32, %p33
    %p35 = scmp.ne.s32.totalorder %s24, %s25
    %p36 = scmp.eq.s32.totalorder %s16, 0
    %p37 = por %p35, %p36
    %p38 = scmp.ne.s32.totalorder %s24, %s25
    %p39 = scmp.eq.s32.totalorder %s17, 1
    %p40 = por %p38, %p39
    %p42 = scmp.ne.s32.totalorder %s25, %s41
    %p43 = scmp.eq.s32.totalorder %s17, 0
    %p44 = por %p42, %p43
    %s46 = sadd.s32 %s45, 1
    %p49 = scmp.eq.s32.totalorder %s11, 1
    %p50 = scmp.ne.s32.totalorder %s45, %s47
    %p51 = scmp.eq.s32.totalorder %s11, 0
    %p52 = por %p50, %p51
    %p53 = scmp.ne.s32.totalorder %s45, %s47
    %p54 = scmp.eq.s32.totalorder %s16, 1
    %p55 = por %p53, %p54
    %p56 = scmp.ne.s32.totalorder %s47, %s48
    %p57 = scmp.eq.s32.totalorder %s16, 0
    %p58 = por %p56, %p57
    %p59 = scmp.ne.s32.totalorder %s47, %s48
    %p60 = scmp.eq.s32.totalorder %s17, 1
    %p61 = por %p59, %p60
    %p63 = scmp.ne.s32.totalorder %s48, %s62
    %p64 = scmp.eq.s32.totalorder %s17, 0
    %p65 = por %p63, %p64
    %s67 = sadd.s32 %s66, 1
    %p70 = scmp.eq.s32.totalorder %s11, 1
    %p71 = scmp.ne.s32.totalorder %s66, %s68
    %p72 = scmp.eq.s32.totalorder %s11, 0
    %p73 = por %p71, %p72
    %p74 = scmp.ne.s32.totalorder %s66, %s68
    %p75 = scmp.eq.s32.totalorder %s16, 1
    %p76 = por %p74, %p75
    %p77 = scmp.ne.s32.totalorder %s68, %s69
    %p78 = scmp.eq.s32.totalorder %s16, 0
    %p79 = por %p77, %p78
    %p80 = scmp.ne.s32.totalorder %s68, %s69
    %p81 = scmp.eq.s32.totalorder %s17, 1
    %p82 = por %p80, %p81
    %p84 = scmp.ne.s32.totalorder %s69, %s83
    %p85 = scmp.eq.s32.totalorder %s17, 0
    %p86 = por %p84, %p85
    %s88 = sadd.s32 %s87, 1
    %p91 = scmp.eq.s32.totalorder %s11, 1
    %p92 = scmp.ne.s32.totalorder %s87, %s89
    %p93 = scmp.eq.s32.totalorder %s11, 0
    %p94 = por %p92, %p93
    %p95 = scmp.ne.s32.totalorder %s87, %s89
    %p96 = scmp.eq.s32.totalorder %s16, 1
    %p97 = por %p95, %p96
    %p98 = scmp.ne.s32.totalorder %s89, %s90
    %p99 = scmp.eq.s32.totalorder %s16, 0
    %p100 = por %p98, %p99
    %p101 = scmp.ne.s32.totalorder %s89, %s90
    %p102 = scmp.eq.s32.totalorder %s17, 1
    %p103 = por %p101, %p102
    %p105 = scmp.ne.s32.totalorder %s90, %s104
    %p106 = scmp.eq.s32.totalorder %s17, 0
    %p107 = por %p105, %p106
    %s109 = sadd.s32 %s108, 1
    %p112 = scmp.eq.s32.totalorder %s11, 1
    %p113 = scmp.ne.s32.totalorder %s108, %s110
    %p114 = scmp.eq.s32.totalorder %s11, 0
    %p115 = por %p113, %p114
    %p116 = scmp.ne.s32.totalorder %s108, %s110
    %p117 = scmp.eq.s32.totalorder %s16, 1
    %p118 = por %p116, %p117
    %p119 = scmp.ne.s32.totalorder %s110, %s111
    %p120 = scmp.eq.s32.totalorder %s16, 0
    %p121 = por %p119, %p120
    %p122 = scmp.ne.s32.totalorder %s110, %s111
    %p123 = scmp.eq.s32.totalorder %s17, 1
    %p124 = por %p122, %p123
    %p126 = scmp.ne.s32.totalorder %s111, %s125
    %p127 = scmp.eq.s32.totalorder %s17, 0
    %p128 = por %p126, %p127
    %s129 = ssub.s32 %s11, %s18
    %p130 = scmp.eq.s32.totalorder %s129, 0
    %s132 = sadd.s32 %s131, 1
    %s133 = scalar_select %p130, %s131, %s132
    %p136 = pneg %p130
    %p137 = scmp.eq.s32.totalorder %s11, 1
    %p138 = por %p136, %p137
    %p139 = scmp.ne.s32.totalorder %s131, %s134
    %p140 = scmp.eq.s32.totalorder %s11, 0
    %p141 = por %p139, %p140
    %p142 = scmp.ne.s32.totalorder %s131, %s134
    %p143 = scmp.eq.s32.totalorder %s16, 1
    %p144 = por %p142, %p143
    %p145 = scmp.ne.s32.totalorder %s134, %s135
    %p146 = scmp.eq.s32.totalorder %s16, 0
    %p147 = por %p145, %p146
    %p148 = scmp.ne.s32.totalorder %s134, %s135
    %p149 = scmp.eq.s32.totalorder %s17, 1
    %p150 = por %p148, %p149
    %p152 = scmp.ne.s32.totalorder %s135, %s151
    %p153 = scmp.eq.s32.totalorder %s17, 0
    %p154 = por %p152, %p153
    %p155 = scmp.le.s32.totalorder 1, %s11
    %p156 = scmp.lt.s32.totalorder %s11, 3
    %p157 = pnand %p155, %p156
    %p158 = pneg %p157
    // Predicated region
    $region9: #{unet_forward.9} parent=5 // pred_check
      _
    $region10: #{unet_forward.9} parent=5 // pred_check_branch
      %160 = sbr.rel (%p157) target = $region12
    $region11: #{unet_forward.9} parent=5 // pred_region
      %s161 = ssub.s32 %s11, 1
      // Predicated region
      $region13: #{unet_forward.9} parent=11 // pred_check
        %p162 = pneg %p58
      $region14: #{unet_forward.9} parent=11 // pred_check_branch
        %164 = sbr.rel (%p162) target = $region16
      $region15: #{unet_forward.9} parent=11 // pred_region
        _
      $region16: #{unet_forward.9} parent=11 // pred_fallthru
        _
      // Predicated region
      $region17: #{unet_forward.9} parent=11 // pred_check
        %p165 = pneg %p79
      $region18: #{unet_forward.9} parent=11 // pred_check_branch
        %167 = sbr.rel (%p165) target = $region20
      $region19: #{unet_forward.9} parent=11 // pred_region
        _
      $region20: #{unet_forward.9} parent=11 // pred_fallthru
        _
      // Predicated region
      $region21: #{unet_forward.9} parent=11 // pred_check
        %p168 = pneg %p100
      $region22: #{unet_forward.9} parent=11 // pred_check_branch
        %170 = sbr.rel (%p168) target = $region24
      $region23: #{unet_forward.9} parent=11 // pred_region
        _
      $region24: #{unet_forward.9} parent=11 // pred_fallthru
        _
      // Predicated region
      $region25: #{unet_forward.9} parent=11 // pred_check
        %p171 = pneg %p121
      $region26: #{unet_forward.9} parent=11 // pred_check_branch
        %173 = sbr.rel (%p171) target = $region28
      $region27: #{unet_forward.9} parent=11 // pred_region
        _
      $region28: #{unet_forward.9} parent=11 // pred_fallthru
        _
    $region12: #{unet_forward.9} parent=5 // pred_fallthru
      _
    %p174 = scmp.lt.s32.totalorder %s11, 2
    // Predicated region
    $region29: #{unet_forward.9} parent=5 // pred_check
      %p175 = pneg %p174
    $region30: #{unet_forward.9} parent=5 // pred_check_branch
      %177 = sbr.rel (%p175) target = $region32
    $region31: #{unet_forward.9} parent=5 // pred_region
      // Predicated region
      $region33: #{unet_forward.9} parent=31 // pred_check
        %p178 = pneg %p31
      $region34: #{unet_forward.9} parent=31 // pred_check_branch
        %180 = sbr.rel (%p178) target = $region36
      $region35: #{unet_forward.9} parent=31 // pred_region
        %p181 = scmp.lt.s32.totalorder %s11, 1
        %s182 = scalar_select %p181, %s11, 1
        %s183 = smul.addr %s182, 4
        %s184 = smul.addr %s183, 4
        %s185 = scalar_lea.vmem %s0, %s184
      $region36: #{unet_forward.9} parent=31 // pred_fallthru
        _
    $region32: #{unet_forward.9} parent=5 // pred_fallthru
      _
    %p186 = scmp.le.s32.totalorder 1, %s11
    %p187 = scmp.lt.s32.totalorder %s11, 3
    %p188 = pnand %p186, %p187
    %p189 = pneg %p188
    // Predicated region
    $region37: #{unet_forward.9} parent=5 // pred_check
      _
    $region38: #{unet_forward.9} parent=5 // pred_check_branch
      %191 = sbr.rel (%p188) target = $region40
    $region39: #{unet_forward.9} parent=5 // pred_region
      %s192 = ssub.s32 %s11, 1
      %p193 = scmp.lt.s32.totalorder %s16, 1
      %s194 = scalar_select %p193, %s16, 1
      %s195 = smul.addr %s194, 4
      %s196 = smul.addr %s195, 4
      %s197 = scalar_lea.vmem %s0, %s196
      %p198 = pneg %p37
      %p199 = pneg %p34
      %p200 = pneg %p58
      %p201 = pneg %p55
      %p202 = pneg %p79
      %p203 = pneg %p76
      %p204 = pneg %p100
      %p205 = pneg %p97
      %p206 = pneg %p121
      %p207 = pneg %p118
      %p208 = pneg %p147
      %p209 = pneg %p144
      %p210 = scmp.lt.s32.totalorder %s16, 1
      %s211 = scalar_select %p210, %s16, 1
      %s212 = smul.addr %s211, 2
      %s213 = smul.addr %s212, 4
      %s214 = scalar_lea.vmem %s5, %s213
      %p215 = scmp.lt.s32.totalorder %s16, 1
      %s216 = scalar_select %p215, %s16, 1
      %s217 = smul.addr %s216, 4
      %s218 = smul.addr %s217, 4
      %s219 = scalar_lea.vmem %s0, %s218
      %p220 = scmp.lt.s32.totalorder %s16, 1
      %s221 = scalar_select %p220, %s16, 1
      %s222 = smul.addr %s221, 2
      %s223 = smul.addr %s222, 4
      %s224 = scalar_lea.vmem %s5, %s223
      %vm226 = vcmask 128000
      %227 = vst.msk [vmem:[#allocation2] sm:$0x3f] %vm226, 0.0
      %228 = vst.msk [vmem:[#allocation2 + $0x8] sm:$0x3f] %vm226, 0.0
      %229 = vst.msk [vmem:[#allocation2 + $0x10] sm:$0x3f] %vm226, 0.0
      %230 = vst.msk [vmem:[#allocation2 + $0x18] sm:$0x3f] %vm226, 0.0
      %231 = vst.msk [vmem:[#allocation2 + $0x20] sm:$0x3f] %vm226, 0.0
      %232 = vst.msk [vmem:[#allocation2 + $0x28] sm:$0x3f] %vm226, 0.0
      %v233 = vld [vmem:[%s219] sm:$0xf]
      %v234 = vld [vmem:[%s219 + $0x4] sm:$0xf]
      %v235 = vld [vmem:[%s219 + $0x8] sm:$0xf]
      %v236 = vld [vmem:[%s219 + $0xc] sm:$0xf]
      %s237 = scalar_lea.vmem [#allocation2], 8
      %vm238 = vcmask 125952
      %239 = vst.msk [vmem:[%s237 + $0x1] sm:$0xf] %vm238, %v233
      %240 = vst.msk [vmem:[%s237 + $0x9] sm:$0xf] %vm238, %v234
      %241 = vst.msk [vmem:[%s237 + $0x11] sm:$0xf] %vm238, %v235
      %242 = vst.msk [vmem:[%s237 + $0x19] sm:$0xf] %vm238, %v236
      %v243 = vld [vmem:[#allocation2] sm:$0xf]
      %v244 = vld [vmem:[#allocation2 + $0x8] sm:$0xf]
      %v245 = vld [vmem:[#allocation2 + $0x10] sm:$0xf]
      %v246 = vld [vmem:[#allocation2 + $0x18] sm:$0xf]
      %v247 = vld [vmem:[#allocation2 + $0x1] sm:$0xf]
      %v248 = vld [vmem:[#allocation2 + $0x9] sm:$0xf]
      %v249 = vld [vmem:[#allocation2 + $0x11] sm:$0xf]
      %v250 = vld [vmem:[#allocation2 + $0x19] sm:$0xf]
      %v251 = vld [vmem:[#allocation2 + $0x2] sm:$0xf]
      %v252 = vld [vmem:[#allocation2 + $0xa] sm:$0xf]
      %v253 = vld [vmem:[#allocation2 + $0x12] sm:$0xf]
      %v254 = vld [vmem:[#allocation2 + $0x1a] sm:$0xf]
      %v255 = vld [vmem:[%s237] sm:$0xf]
      %v256 = vld [vmem:[%s237 + $0x8] sm:$0xf]
      %v257 = vld [vmem:[%s237 + $0x10] sm:$0xf]
      %v258 = vld [vmem:[%s237 + $0x18] sm:$0xf]
      %v259 = vld [vmem:[%s237 + $0x1] sm:$0xf]
      %v260 = vld [vmem:[%s237 + $0x9] sm:$0xf]
      %v261 = vld [vmem:[%s237 + $0x11] sm:$0xf]
      %v262 = vld [vmem:[%s237 + $0x19] sm:$0xf]
      %v263 = vld [vmem:[%s237 + $0x2] sm:$0xf]
      %v264 = vld [vmem:[%s237 + $0xa] sm:$0xf]
      %v265 = vld [vmem:[%s237 + $0x12] sm:$0xf]
      %v266 = vld [vmem:[%s237 + $0x1a] sm:$0xf]
      %s267 = scalar_lea.vmem [#allocation2], 16
      %v268 = vld [vmem:[%s267] sm:$0xf]
      %v269 = vld [vmem:[%s267 + $0x8] sm:$0xf]
      %v270 = vld [vmem:[%s267 + $0x10] sm:$0xf]
      %v271 = vld [vmem:[%s267 + $0x18] sm:$0xf]
      %v272 = vld [vmem:[%s267 + $0x1] sm:$0xf]
      %v273 = vld [vmem:[%s267 + $0x9] sm:$0xf]
      %v274 = vld [vmem:[%s267 + $0x11] sm:$0xf]
      %v275 = vld [vmem:[%s267 + $0x19] sm:$0xf]
      %v276 = vld [vmem:[%s267 + $0x2] sm:$0xf]
      %v277 = vld [vmem:[%s267 + $0xa] sm:$0xf]
      %v278 = vld [vmem:[%s267 + $0x12] sm:$0xf]
      %v279 = vld [vmem:[%s267 + $0x1a] sm:$0xf]
      %284 = vrot.lane.b32.xlu0 %v247, 16
      %v285 = vpop.permute.xlu0 %284
      %286 = vrot.lane.b32.xlu0 %v248, 16
      %v287 = vpop.permute.xlu0 %286
      %288 = vrot.lane.b32.xlu0 %v249, 16
      %v289 = vpop.permute.xlu0 %288
      %290 = vrot.lane.b32.xlu0 %v250, 16
      %v291 = vpop.permute.xlu0 %290
      %300 = vrot.lane.b32.xlu0 %v251, 32
      %v301 = vpop.permute.xlu0 %300
      %302 = vrot.lane.b32.xlu0 %v252, 32
      %v303 = vpop.permute.xlu0 %302
      %304 = vrot.lane.b32.xlu0 %v253, 32
      %v305 = vpop.permute.xlu0 %304
      %306 = vrot.lane.b32.xlu0 %v254, 32
      %v307 = vpop.permute.xlu0 %306
      %316 = vrot.lane.b32.xlu0 %v255, 48
      %v317 = vpop.permute.xlu0 %316
      %318 = vrot.lane.b32.xlu0 %v256, 48
      %v319 = vpop.permute.xlu0 %318
      %320 = vrot.lane.b32.xlu0 %v257, 48
      %v321 = vpop.permute.xlu0 %320
      %322 = vrot.lane.b32.xlu0 %v258, 48
      %v323 = vpop.permute.xlu0 %322
      %332 = vrot.lane.b32.xlu0 %v259, 64
      %v333 = vpop.permute.xlu0 %332
      %334 = vrot.lane.b32.xlu0 %v260, 64
      %v335 = vpop.permute.xlu0 %334
      %336 = vrot.lane.b32.xlu0 %v261, 64
      %v337 = vpop.permute.xlu0 %336
      %338 = vrot.lane.b32.xlu0 %v262, 64
      %v339 = vpop.permute.xlu0 %338
      %348 = vrot.lane.b32.xlu0 %v263, 80
      %v349 = vpop.permute.xlu0 %348
      %350 = vrot.lane.b32.xlu0 %v264, 80
      %v351 = vpop.permute.xlu0 %350
      %352 = vrot.lane.b32.xlu0 %v265, 80
      %v353 = vpop.permute.xlu0 %352
      %354 = vrot.lane.b32.xlu0 %v266, 80
      %v355 = vpop.permute.xlu0 %354
      %364 = vrot.lane.b32.xlu0 %v268, 96
      %v365 = vpop.permute.xlu0 %364
      %366 = vrot.lane.b32.xlu0 %v269, 96
      %v367 = vpop.permute.xlu0 %366
      %368 = vrot.lane.b32.xlu0 %v270, 96
      %v369 = vpop.permute.xlu0 %368
      %370 = vrot.lane.b32.xlu0 %v271, 96
      %v371 = vpop.permute.xlu0 %370
      %380 = vrot.lane.b32.xlu0 %v272, 112
      %v381 = vpop.permute.xlu0 %380
      %382 = vrot.lane.b32.xlu0 %v273, 112
      %v383 = vpop.permute.xlu0 %382
      %384 = vrot.lane.b32.xlu0 %v274, 112
      %v385 = vpop.permute.xlu0 %384
      %386 = vrot.lane.b32.xlu0 %v275, 112
      %v387 = vpop.permute.xlu0 %386
      %vm392 = vcmask 130048
      %v393 = vsel %vm392, %v243, %v285
      %v394 = vsel %vm392, %v244, %v287
      %v395 = vsel %vm392, %v245, %v289
      %v396 = vsel %vm392, %v246, %v291
      %vm397 = vcmask 261120
      %v398 = vsel %vm397, %v393, %v301
      %v399 = vsel %vm397, %v394, %v303
      %v400 = vsel %vm397, %v395, %v305
      %v401 = vsel %vm397, %v396, %v307
      %vm402 = vcmask 392192
      %v403 = vsel %vm402, %v398, %v317
      %v404 = vsel %vm402, %v399, %v319
      %v405 = vsel %vm402, %v400, %v321
      %v406 = vsel %vm402, %v401, %v323
      %vm407 = vcmask 523264
      %v408 = vsel %vm407, %v403, %v333
      %v409 = vsel %vm407, %v404, %v335
      %v410 = vsel %vm407, %v405, %v337
      %v411 = vsel %vm407, %v406, %v339
      %vm412 = vcmask 654336
      %v413 = vsel %vm412, %v408, %v349
      %v414 = vsel %vm412, %v409, %v351
      %v415 = vsel %vm412, %v410, %v353
      %v416 = vsel %vm412, %v411, %v355
      %vm417 = vcmask 785408
      %v418 = vsel %vm417, %v413, %v365
      %v419 = vsel %vm417, %v414, %v367
      %v420 = vsel %vm417, %v415, %v369
      %v421 = vsel %vm417, %v416, %v371
      %vm422 = vcmask 916480
      %v423 = vsel %vm422, %v418, %v381
      %v424 = vsel %vm422, %v419, %v383
      %v425 = vsel %vm422, %v420, %v385
      %v426 = vsel %vm422, %v421, %v387
      %v435 = vrot.slane %v276, 4
      %v436 = vrot.slane %v277, 4
      %v437 = vrot.slane %v278, 4
      %v438 = vrot.slane %v279, 4
      %vm439 = vcmask 1043456
      %v440 = vsel %vm439, %v423, %v435
      %v441 = vsel %vm439, %v424, %v436
      %v442 = vsel %vm439, %v425, %v437
      %v443 = vsel %vm439, %v426, %v438
      %444 = vst [vmem:[#allocation1] ss:$2 sm:$0xff] %v440
      %s445 = scalar_lea.vmem [#allocation1], 1
      %446 = vst [vmem:[%s445] ss:$2 sm:$0xff] %v441
      %s447 = scalar_lea.vmem [#allocation1], 16
      %448 = vst [vmem:[%s447] ss:$2 sm:$0xff] %v442
      %s449 = scalar_lea.vmem [#allocation1], 17
      %450 = vst [vmem:[%s449] ss:$2 sm:$0xff] %v443
      %v451 = vld.sshfl [vmem:[#allocation1] sm:$0xff pattern:$0x75316420]
      %v452 = vld.sshfl [vmem:[#allocation1 + $0x8] sm:$0xff pattern:$0x75316420]
      %v453 = vld.sshfl [vmem:[#allocation1 + $0x10] sm:$0xff pattern:$0x75316420]
      %v454 = vld.sshfl [vmem:[#allocation1 + $0x18] sm:$0xff pattern:$0x75316420]
      %v459 = vpack.c.bf16 %v453, %v451
      %v460 = vpack.c.bf16 %v454, %v452
      %v461 = vld [vmem:[%s1] sm:$0xf]
      %v462 = vld [vmem:[%s1 + $0x4] sm:$0xf]
      %v463 = vld [vmem:[%s1 + $0x8] sm:$0xf]
      %v464 = vld [vmem:[%s1 + $0xc] sm:$0xf]
      %v465 = vld [vmem:[%s1 + $0x10] sm:$0xf]
      %v466 = vld [vmem:[%s1 + $0x14] sm:$0xf]
      %v467 = vld [vmem:[%s1 + $0x18] sm:$0xf]
      %v468 = vld [vmem:[%s1 + $0x1c] sm:$0xf]
      %v469 = vld [vmem:[%s1 + $0x20] sm:$0xf]
      %v470 = vld [vmem:[%s1 + $0x24] sm:$0xf]
      %v471 = vld [vmem:[%s1 + $0x28] sm:$0xf]
      %v472 = vld [vmem:[%s1 + $0x2c] sm:$0xf]
      %v473 = vld [vmem:[%s1 + $0x30] sm:$0xf]
      %v474 = vld [vmem:[%s1 + $0x34] sm:$0xf]
      %v475 = vld [vmem:[%s1 + $0x38] sm:$0xf]
      %v476 = vld [vmem:[%s1 + $0x3c] sm:$0xf]
      %v477 = vld [vmem:[%s1 + $0x40] sm:$0xf]
      %v478 = vld [vmem:[%s1 + $0x44] sm:$0xf]
      %v479 = vld [vmem:[%s2] sm:$0x1]
      %v481 = vperm.slane %v479, 0
      %v501 = vunpack.c.l.b16 %v461
      %v502 = vunpack.c.l.b16 %v462
      %v503 = vunpack.c.l.b16 %v463
      %v504 = vunpack.c.l.b16 %v464
      %v505 = vunpack.c.l.b16 %v465
      %v506 = vunpack.c.l.b16 %v466
      %v507 = vunpack.c.l.b16 %v467
      %v508 = vunpack.c.l.b16 %v468
      %v509 = vunpack.c.l.b16 %v469
      %v510 = vunpack.c.l.b16 %v470
      %v511 = vunpack.c.l.b16 %v471
      %v512 = vunpack.c.l.b16 %v472
      %v513 = vunpack.c.l.b16 %v473
      %v514 = vunpack.c.l.b16 %v474
      %v515 = vunpack.c.l.b16 %v475
      %v516 = vunpack.c.l.b16 %v476
      %v517 = vunpack.c.l.b16 %v477
      %v518 = vunpack.c.l.b16 %v478
      %v519 = vpack.c.b16 %v502, %v501
      %v520 = vpack.c.b16 %v504, %v503
      %v521 = vpack.c.b16 %v506, %v505
      %v522 = vpack.c.b16 %v508, %v507
      %v523 = vpack.c.b16 %v510, %v509
      %v524 = vpack.c.b16 %v512, %v511
      %v525 = vpack.c.b16 %v514, %v513
      %v526 = vpack.c.b16 %v516, %v515
      %v527 = vpack.c.b16 %v518, %v517
      %v538 = vsel %vm392, %v460, 0
      %540 = vmatpush.bf16.msra.mxu0 %v526
      %541 = vmatpush.bf16.msra.mxu0 %v525
      %542 = vmatpush.bf16.msra.mxu0 %v524
      %543 = vmatpush.bf16.msra.mxu0 %v523
      %544 = vmatpush.bf16.msra.mxu0 %v522
      %545 = vmatpush.bf16.msra.mxu0 %v521
      %546 = vmatpush.bf16.msra.mxu0 %v520
      %547 = vmatpush.bf16.msra.mxu0 %v519
      %548 = vmatmul.bf16.gmra.mxu0 %v459
      %v549 = vpop.f32.mrf.mxu0
      %v550 = vadd.f32 %v481, %v549
      %v551 = vpop.f32.mrf.mxu0
      %v552 = vadd.f32 %v481, %v551
      %553 = vdwg.mxu0
      %554 = vmatpush.bf16.msra.mxu0 0
      %555 = vmatpush.bf16.msra.mxu0 0
      %556 = vmatpush.bf16.msra.mxu0 0
      %557 = vmatpush.bf16.msra.mxu0 0
      %558 = vmatpush.bf16.msra.mxu0 0
      %559 = vmatpush.bf16.msra.mxu0 0
      %560 = vmatpush.bf16.msra.mxu0 0
      %561 = vmatpush.bf16.msra.mxu0 %v527
      %562 = vmatmul.bf16.gmra.mxu0 %v538
      %v563 = vpop.f32.mrf.mxu0
      %v564 = vadd.f32 %v550, %v563
      %v565 = vpop.f32.mrf.mxu0
      %v566 = vadd.f32 %v552, %v565
      %567 = vdwg.mxu0
      %v568 = vmax.f32 %v564, 0.0
      %v569 = vmax.f32 %v566, 0.0
      %vm570 = vcmask 259072
      %571 = vst.msk [vmem:[#allocation3] sm:$0x3f] %vm570, 0.0
      %572 = vst.msk [vmem:[#allocation3 + $0x8] sm:$0x3f] %vm570, 0.0
      %573 = vst.msk [vmem:[#allocation3 + $0x10] sm:$0x3f] %vm570, 0.0
      %574 = vst.msk [vmem:[#allocation3 + $0x18] sm:$0x3f] %vm570, 0.0
      %575 = vst.msk [vmem:[#allocation3 + $0x20] sm:$0x3f] %vm570, 0.0
      %576 = vst.msk [vmem:[#allocation3 + $0x28] sm:$0x3f] %vm570, 0.0
      %v579 = vrot.slane %v568, 4
      %v580 = vrot.slane %v569, 4
      %s583 = scalar_lea.vmem [#allocation3], 8
      %vm584 = vcmask 257024
      %585 = vst.msk [vmem:[%s583 + $0x1] sm:$0xf] %vm584, %v568
      %586 = vst.msk [vmem:[%s583 + $0x9] sm:$0xf] %vm584, %v579
      %587 = vst.msk [vmem:[%s583 + $0x11] sm:$0xf] %vm584, %v569
      %588 = vst.msk [vmem:[%s583 + $0x19] sm:$0xf] %vm584, %v580
      %v589 = vld [vmem:[#allocation3] sm:$0xf]
      %v590 = vld [vmem:[#allocation3 + $0x8] sm:$0xf]
      %v591 = vld [vmem:[#allocation3 + $0x10] sm:$0xf]
      %v592 = vld [vmem:[#allocation3 + $0x18] sm:$0xf]
      %v593 = vld [vmem:[#allocation3 + $0x1] sm:$0xf]
      %v594 = vld [vmem:[#allocation3 + $0x9] sm:$0xf]
      %v595 = vld [vmem:[#allocation3 + $0x11] sm:$0xf]
      %v596 = vld [vmem:[#allocation3 + $0x19] sm:$0xf]
      %v597 = vld [vmem:[#allocation3 + $0x2] sm:$0xf]
      %v598 = vld [vmem:[#allocation3 + $0xa] sm:$0xf]
      %v599 = vld [vmem:[#allocation3 + $0x12] sm:$0xf]
      %v600 = vld [vmem:[#allocation3 + $0x1a] sm:$0xf]
      %v601 = vld [vmem:[%s583] sm:$0xf]
      %v602 = vld [vmem:[%s583 + $0x8] sm:$0xf]
      %v603 = vld [vmem:[%s583 + $0x10] sm:$0xf]
      %v604 = vld [vmem:[%s583 + $0x18] sm:$0xf]
      %v605 = vld [vmem:[%s583 + $0x1] sm:$0xf]
      %v606 = vld [vmem:[%s583 + $0x9] sm:$0xf]
      %v607 = vld [vmem:[%s583 + $0x11] sm:$0xf]
      %v608 = vld [vmem:[%s583 + $0x19] sm:$0xf]
      %v609 = vld [vmem:[%s583 + $0x2] sm:$0xf]
      %v610 = vld [vmem:[%s583 + $0xa] sm:$0xf]
      %v611 = vld [vmem:[%s583 + $0x12] sm:$0xf]
      %v612 = vld [vmem:[%s583 + $0x1a] sm:$0xf]
      %s613 = scalar_lea.vmem [#allocation3], 16
      %v614 = vld [vmem:[%s613] sm:$0xf]
      %v615 = vld [vmem:[%s613 + $0x8] sm:$0xf]
      %v616 = vld [vmem:[%s613 + $0x10] sm:$0xf]
      %v617 = vld [vmem:[%s613 + $0x18] sm:$0xf]
      %v618 = vld [vmem:[%s613 + $0x1] sm:$0xf]
      %v619 = vld [vmem:[%s613 + $0x9] sm:$0xf]
      %v620 = vld [vmem:[%s613 + $0x11] sm:$0xf]
      %v621 = vld [vmem:[%s613 + $0x19] sm:$0xf]
      %v622 = vld [vmem:[%s613 + $0x2] sm:$0xf]
      %v623 = vld [vmem:[%s613 + $0xa] sm:$0xf]
      %v624 = vld [vmem:[%s613 + $0x12] sm:$0xf]
      %v625 = vld [vmem:[%s613 + $0x1a] sm:$0xf]
      %630 = vrot.lane.b32.xlu0 %v593, 32
      %v631 = vpop.permute.xlu0 %630
      %632 = vrot.lane.b32.xlu0 %v594, 32
      %v633 = vpop.permute.xlu0 %632
      %634 = vrot.lane.b32.xlu0 %v595, 32
      %v635 = vpop.permute.xlu0 %634
      %636 = vrot.lane.b32.xlu0 %v596, 32
      %v637 = vpop.permute.xlu0 %636
      %646 = vrot.lane.b32.xlu0 %v597, 64
      %v647 = vpop.permute.xlu0 %646
      %648 = vrot.lane.b32.xlu0 %v598, 64
      %v649 = vpop.permute.xlu0 %648
      %650 = vrot.lane.b32.xlu0 %v599, 64
      %v651 = vpop.permute.xlu0 %650
      %652 = vrot.lane.b32.xlu0 %v600, 64
      %v653 = vpop.permute.xlu0 %652
      %662 = vrot.lane.b32.xlu0 %v601, 96
      %v663 = vpop.permute.xlu0 %662
      %664 = vrot.lane.b32.xlu0 %v602, 96
      %v665 = vpop.permute.xlu0 %664
      %666 = vrot.lane.b32.xlu0 %v603, 96
      %v667 = vpop.permute.xlu0 %666
      %668 = vrot.lane.b32.xlu0 %v604, 96
      %v669 = vpop.permute.xlu0 %668
      %678 = vrot.lane.b32.xlu0 %v609, 32
      %v679 = vpop.permute.xlu0 %678
      %680 = vrot.lane.b32.xlu0 %v610, 32
      %v681 = vpop.permute.xlu0 %680
      %682 = vrot.lane.b32.xlu0 %v611, 32
      %v683 = vpop.permute.xlu0 %682
      %684 = vrot.lane.b32.xlu0 %v612, 32
      %v685 = vpop.permute.xlu0 %684
      %694 = vrot.lane.b32.xlu0 %v614, 64
      %v695 = vpop.permute.xlu0 %694
      %696 = vrot.lane.b32.xlu0 %v615, 64
      %v697 = vpop.permute.xlu0 %696
      %698 = vrot.lane.b32.xlu0 %v616, 64
      %v699 = vpop.permute.xlu0 %698
      %700 = vrot.lane.b32.xlu0 %v617, 64
      %v701 = vpop.permute.xlu0 %700
      %710 = vrot.lane.b32.xlu0 %v618, 96
      %v711 = vpop.permute.xlu0 %710
      %712 = vrot.lane.b32.xlu0 %v619, 96
      %v713 = vpop.permute.xlu0 %712
      %714 = vrot.lane.b32.xlu0 %v620, 96
      %v715 = vpop.permute.xlu0 %714
      %716 = vrot.lane.b32.xlu0 %v621, 96
      %v717 = vpop.permute.xlu0 %716
      %v722 = vsel %vm397, %v589, %v631
      %v723 = vsel %vm397, %v590, %v633
      %v724 = vsel %vm397, %v591, %v635
      %v725 = vsel %vm397, %v592, %v637
      %v726 = vsel %vm407, %v722, %v647
      %v727 = vsel %vm407, %v723, %v649
      %v728 = vsel %vm407, %v724, %v651
      %v729 = vsel %vm407, %v725, %v653
      %v730 = vsel %vm417, %v726, %v663
      %v731 = vsel %vm417, %v727, %v665
      %v732 = vsel %vm417, %v728, %v667
      %v733 = vsel %vm417, %v729, %v669
      %v734 = vsel %vm397, %v605, %v679
      %v735 = vsel %vm397, %v606, %v681
      %v736 = vsel %vm397, %v607, %v683
      %v737 = vsel %vm397, %v608, %v685
      %v738 = vsel %vm407, %v734, %v695
      %v739 = vsel %vm407, %v735, %v697
      %v740 = vsel %vm407, %v736, %v699
      %v741 = vsel %vm407, %v737, %v701
      %v742 = vsel %vm417, %v738, %v711
      %v743 = vsel %vm417, %v739, %v713
      %v744 = vsel %vm417, %v740, %v715
      %v745 = vsel %vm417, %v741, %v717
      %v758 = vrot.slane %v742, 4
      %v759 = vrot.slane %v743, 4
      %v760 = vrot.slane %v744, 4
      %v761 = vrot.slane %v745, 4
      %v762 = vsel %vm439, %v730, %v758
      %v763 = vsel %vm439, %v731, %v759
      %v764 = vsel %vm439, %v732, %v760
      %v765 = vsel %vm439, %v733, %v761
      %766 = vst [vmem:[#allocation1] ss:$2 sm:$0xff] %v762
      %s767 = scalar_lea.vmem [#allocation1], 1
      %768 = vst [vmem:[%s767] ss:$2 sm:$0xff] %v763
      %s769 = scalar_lea.vmem [#allocation1], 16
      %770 = vst [vmem:[%s769] ss:$2 sm:$0xff] %v622
      %s771 = scalar_lea.vmem [#allocation1], 17
      %772 = vst [vmem:[%s771] ss:$2 sm:$0xff] %v623
      %s773 = scalar_lea.vmem [#allocation1], 32
      %774 = vst [vmem:[%s773] ss:$2 sm:$0xff] %v764
      %s775 = scalar_lea.vmem [#allocation1], 33
      %776 = vst [vmem:[%s775] ss:$2 sm:$0xff] %v765
      %s777 = scalar_lea.vmem [#allocation1], 48
      %778 = vst [vmem:[%s777] ss:$2 sm:$0xff] %v624
      %s779 = scalar_lea.vmem [#allocation1], 49
      %780 = vst [vmem:[%s779] ss:$2 sm:$0xff] %v625
      %v781 = vld.sshfl [vmem:[#allocation1] sm:$0xff pattern:$0x75316420]
      %v782 = vld.sshfl [vmem:[#allocation1 + $0x8] sm:$0xff pattern:$0x75316420]
      %v783 = vld.sshfl [vmem:[#allocation1 + $0x10] sm:$0xff pattern:$0x75316420]
      %v784 = vld.sshfl [vmem:[#allocation1 + $0x20] sm:$0xff pattern:$0x75316420]
      %v785 = vld.sshfl [vmem:[#allocation1 + $0x28] sm:$0xff pattern:$0x75316420]
      %v786 = vld.sshfl [vmem:[#allocation1 + $0x30] sm:$0xff pattern:$0x75316420]
      %v793 = vpack.c.bf16 %v784, %v781
      %v794 = vpack.c.bf16 %v785, %v782
      %v795 = vpack.c.bf16 %v786, %v783
      %v796 = vld [vmem:[%s3] sm:$0xf]
      %v797 = vld [vmem:[%s3 + $0x4] sm:$0xf]
      %v798 = vld [vmem:[%s3 + $0x8] sm:$0xf]
      %v799 = vld [vmem:[%s3 + $0xc] sm:$0xf]
      %v800 = vld [vmem:[%s3 + $0x10] sm:$0xf]
      %v801 = vld [vmem:[%s3 + $0x14] sm:$0xf]
      %v802 = vld [vmem:[%s3 + $0x18] sm:$0xf]
      %v803 = vld [vmem:[%s3 + $0x1c] sm:$0xf]
      %v804 = vld [vmem:[%s3 + $0x20] sm:$0xf]
      %v805 = vld [vmem:[%s3 + $0x24] sm:$0xf]
      %v806 = vld [vmem:[%s3 + $0x28] sm:$0xf]
      %v807 = vld [vmem:[%s3 + $0x2c] sm:$0xf]
      %v808 = vld [vmem:[%s3 + $0x30] sm:$0xf]
      %v809 = vld [vmem:[%s3 + $0x34] sm:$0xf]
      %v810 = vld [vmem:[%s3 + $0x38] sm:$0xf]
      %v811 = vld [vmem:[%s3 + $0x3c] sm:$0xf]
      %v812 = vld [vmem:[%s3 + $0x40] sm:$0xf]
      %v813 = vld [vmem:[%s3 + $0x44] sm:$0xf]
      %v814 = vld [vmem:[%s3 + $0x48] sm:$0xf]
      %v815 = vld [vmem:[%s3 + $0x4c] sm:$0xf]
      %v816 = vld [vmem:[%s3 + $0x50] sm:$0xf]
      %v817 = vld [vmem:[%s3 + $0x54] sm:$0xf]
      %v818 = vld [vmem:[%s3 + $0x58] sm:$0xf]
      %v819 = vld [vmem:[%s3 + $0x5c] sm:$0xf]
      %v820 = vld [vmem:[%s3 + $0x60] sm:$0xf]
      %v821 = vld [vmem:[%s3 + $0x64] sm:$0xf]
      %v822 = vld [vmem:[%s3 + $0x68] sm:$0xf]
      %v823 = vld [vmem:[%s3 + $0x6c] sm:$0xf]
      %v824 = vld [vmem:[%s3 + $0x70] sm:$0xf]
      %v825 = vld [vmem:[%s3 + $0x74] sm:$0xf]
      %v826 = vld [vmem:[%s3 + $0x78] sm:$0xf]
      %v827 = vld [vmem:[%s3 + $0x7c] sm:$0xf]
      %v828 = vld [vmem:[%s3 + $0x80] sm:$0xf]
      %v829 = vld [vmem:[%s3 + $0x84] sm:$0xf]
      %v830 = vld [vmem:[%s3 + $0x88] sm:$0xf]
      %v831 = vld [vmem:[%s3 + $0x8c] sm:$0xf]
      %v832 = vld [vmem:[%s4] sm:$0x1]
      %v834 = vperm.slane %v832, 0
      %v872 = vunpack.c.l.b16 %v796
      %v873 = vunpack.c.l.b16 %v797
      %v874 = vunpack.c.l.b16 %v798
      %v875 = vunpack.c.l.b16 %v799
      %v876 = vunpack.c.l.b16 %v800
      %v877 = vunpack.c.l.b16 %v801
      %v878 = vunpack.c.l.b16 %v802
      %v879 = vunpack.c.l.b16 %v803
      %v880 = vunpack.c.l.b16 %v804
      %v881 = vunpack.c.l.b16 %v805
      %v882 = vunpack.c.l.b16 %v806
      %v883 = vunpack.c.l.b16 %v807
      %v884 = vunpack.c.l.b16 %v808
      %v885 = vunpack.c.l.b16 %v809
      %v886 = vunpack.c.l.b16 %v810
      %v887 = vunpack.c.l.b16 %v811
      %v888 = vunpack.c.l.b16 %v812
      %v889 = vunpack.c.l.b16 %v813
      %v890 = vunpack.c.l.b16 %v814
      %v891 = vunpack.c.l.b16 %v815
      %v892 = vunpack.c.l.b16 %v816
      %v893 = vunpack.c.l.b16 %v817
      %v894 = vunpack.c.l.b16 %v818
      %v895 = vunpack.c.l.b16 %v819
      %v896 = vunpack.c.l.b16 %v820
      %v897 = vunpack.c.l.b16 %v821
      %v898 = vunpack.c.l.b16 %v822
      %v899 = vunpack.c.l.b16 %v823
      %v900 = vunpack.c.l.b16 %v824
      %v901 = vunpack.c.l.b16 %v825
      %v902 = vunpack.c.l.b16 %v826
      %v903 = vunpack.c.l.b16 %v827
      %v904 = vunpack.c.l.b16 %v828
      %v905 = vunpack.c.l.b16 %v829
      %v906 = vunpack.c.l.b16 %v830
      %v907 = vunpack.c.l.b16 %v831
      %v908 = vpack.c.b16 %v873, %v872
      %v909 = vpack.c.b16 %v875, %v874
      %v910 = vpack.c.b16 %v877, %v876
      %v911 = vpack.c.b16 %v879, %v878
      %v912 = vpack.c.b16 %v881, %v880
      %v913 = vpack.c.b16 %v883, %v882
      %v914 = vpack.c.b16 %v885, %v884
      %v915 = vpack.c.b16 %v887, %v886
      %v916 = vpack.c.b16 %v889, %v888
      %v917 = vpack.c.b16 %v891, %v890
      %v918 = vpack.c.b16 %v893, %v892
      %v919 = vpack.c.b16 %v895, %v894
      %v920 = vpack.c.b16 %v897, %v896
      %v921 = vpack.c.b16 %v899, %v898
      %v922 = vpack.c.b16 %v901, %v900
      %v923 = vpack.c.b16 %v903, %v902
      %v924 = vpack.c.b16 %v905, %v904
      %v925 = vpack.c.b16 %v907, %v906
      %v945 = vsel %vm397, %v795, 0
      %947 = vmatpush.bf16.msra.mxu0 %v915
      %948 = vmatpush.bf16.msra.mxu0 %v914
      %949 = vmatpush.bf16.msra.mxu0 %v913
      %950 = vmatpush.bf16.msra.mxu0 %v912
      %951 = vmatpush.bf16.msra.mxu0 %v911
      %952 = vmatpush.bf16.msra.mxu0 %v910
      %953 = vmatpush.bf16.msra.mxu0 %v909
      %954 = vmatpush.bf16.msra.mxu0 %v908
      %955 = vmatmul.bf16.gmra.mxu0 %v793
      %v956 = vpop.f32.mrf.mxu0
      %v957 = vadd.f32 %v834, %v956
      %v958 = vpop.f32.mrf.mxu0
      %v959 = vadd.f32 %v834, %v958
      %960 = vdwg.mxu0
      %961 = vmatpush.bf16.msra.mxu0 %v923
      %962 = vmatpush.bf16.msra.mxu0 %v922
      %963 = vmatpush.bf16.msra.mxu0 %v921
      %964 = vmatpush.bf16.msra.mxu0 %v920
      %965 = vmatpush.bf16.msra.mxu0 %v919
      %966 = vmatpush.bf16.msra.mxu0 %v918
      %967 = vmatpush.bf16.msra.mxu0 %v917
      %968 = vmatpush.bf16.msra.mxu0 %v916
      %969 = vmatmul.bf16.gmra.mxu0 %v794
      %v970 = vpop.f32.mrf.mxu0
      %v971 = vadd.f32 %v957, %v970
      %v972 = vpop.f32.mrf.mxu0
      %v973 = vadd.f32 %v959, %v972
      %974 = vdwg.mxu0
      %975 = vmatpush.bf16.msra.mxu0 0
      %976 = vmatpush.bf16.msra.mxu0 0
      %977 = vmatpush.bf16.msra.mxu0 0
      %978 = vmatpush.bf16.msra.mxu0 0
      %979 = vmatpush.bf16.msra.mxu0 0
      %980 = vmatpush.bf16.msra.mxu0 0
      %981 = vmatpush.bf16.msra.mxu0 %v925
      %982 = vmatpush.bf16.msra.mxu0 %v924
      %983 = vmatmul.bf16.gmra.mxu0 %v945
      %v984 = vpop.f32.mrf.mxu0
      %v985 = vadd.f32 %v971, %v984
      %v986 = vpop.f32.mrf.mxu0
      %v987 = vadd.f32 %v973, %v986
      %988 = vdwg.mxu0
      %v989 = vmax.f32 %v985, 0.0
      %v990 = vmax.f32 %v987, 0.0
      %v993 = vrot.slane %v989, 4
      %v994 = vrot.slane %v990, 4
      %v997 = vmax.f32 %v989, %v993
      %v998 = vmax.f32 %v990, %v994
      %999 = vst.msk [vmem:[%s224] sm:$0xf] %vm584, %v997
      %1000 = vst.msk [vmem:[%s224 + $0x4] sm:$0xf] %vm584, %v998
      %p1001 = scmp.lt.s32.totalorder %s16, 1
      %s1002 = scalar_select %p1001, %s16, 1
      %s1003 = smul.addr %s1002, 2
      %s1004 = smul.addr %s1003, 4
      %s1005 = scalar_lea.vmem %s5, %s1004
      // Predicated region
      $region41: #{unet_forward.9} parent=39 // pred_check
        %p1006 = pneg %p144
      $region42: #{unet_forward.9} parent=39 // pred_check_branch
        %1008 = sbr.rel (%p1006) target = $region44
      $region43: #{unet_forward.9} parent=39 // pred_region
        _
      $region44: #{unet_forward.9} parent=39 // pred_fallthru
        _
    $region40: #{unet_forward.9} parent=5 // pred_fallthru
      _
    %p1009 = scmp.le.s32.totalorder 2, %s11
    // Predicated region
    $region45: #{unet_forward.9} parent=5 // pred_check
      %p1010 = pneg %p1009
    $region46: #{unet_forward.9} parent=5 // pred_check_branch
      %1012 = sbr.rel (%p1010) target = $region48
    $region47: #{unet_forward.9} parent=5 // pred_region
      %s1013 = ssub.s32 %s11, 2
      // Predicated region
      $region49: #{unet_forward.9} parent=47 // pred_check
        %p1014 = pneg %p150
      $region50: #{unet_forward.9} parent=47 // pred_check_branch
        %1016 = sbr.rel (%p1014) target = $region52
      $region51: #{unet_forward.9} parent=47 // pred_region
        %p1017 = scmp.lt.s32.totalorder %s17, 1
        %s1018 = scalar_select %p1017, %s17, 1
        %s1019 = smul.addr %s1018, 2
        %s1020 = smul.addr %s1019, 4
        %s1021 = scalar_lea.vmem %s5, %s1020
      $region52: #{unet_forward.9} parent=47 // pred_fallthru
        _
    $region48: #{unet_forward.9} parent=5 // pred_fallthru
      _
  $region6: #{unet_forward.9} parent=0 // loop_footer
    %s15 = sadd.s32 1, %s11
  $region7: #{unet_forward.9} parent=0 // loop_footer_branch
    %10 = sbr.rel target = $region3
  $region8: #{unet_forward.9} parent=0 // loop_exit
    _

// kernel: unet_forward.10
$region0: #{unet_forward.10}
  #allocation0 [shape = 'u32[]', space=smem, size = 0x4, offset = 0x4, fixed_abs, tag = 'smem constant byte address 0x4 - core index']
  #allocation1 [shape = 'u32[72,128]{1,0:T(1,128)}', space=vmem, size = 0x9000, scoped, tag = 'internal scratch']
  #allocation2 [shape = 'f32[6,6,64]{2,1,0:T(8,128)}', space=vmem, size = 0x6000, scoped, tag = 'scratch operand']
  #allocation3 [shape = 'f32[6,6,32]{2,1,0:T(8,128)}', space=vmem, size = 0x6000, scoped, tag = 'scratch operand']
  %s0 = inlined_call_operand.vmem [shape: f32[2,4,4,64], index: 0, kind: input, shape index: {}]
  %s1 = inlined_call_operand.vmem [shape: bf16[576,32], index: 1, kind: input, shape index: {}]
  %s2 = inlined_call_operand.vmem [shape: f32[1,32], index: 2, kind: input, shape index: {}]
  %s3 = inlined_call_operand.vmem [shape: bf16[288,32], index: 3, kind: input, shape index: {}]
  %s4 = inlined_call_operand.vmem [shape: f32[1,32], index: 4, kind: input, shape index: {}]
  %s5 = inlined_call_operand.vmem [shape: f32[2,2,4,32], index: 5, kind: output, shape index: {}]
  %s6 = sld [smem:[#allocation0]]
  $region53: #{unet_forward.10} parent=0
    _
  %s8 = ssub.s32 1, %s6
  %s9 = scalar_select 0, %s8, %s6
  loop: start=0, step=1, limit=4
  $region2: #{unet_forward.10} parent=0 // loop_pre_header
    _
  $region3: #{unet_forward.10} parent=0 // loop_header
    %s11 = sphi 0, %s15
    %p12 = scmp.ge.s32.totalorder %s11, 4
    %s21 = sphi 0, %s23
    %s24 = sphi 0, %s21
    %s25 = sphi 0, %s24
    %s41 = sphi 0, %s25
    %s45 = sphi 0, %s45
    %s47 = sphi 0, %s45
    %s48 = sphi 0, %s47
    %s62 = sphi 0, %s48
    %s66 = sphi 0, %s66
    %s68 = sphi 0, %s66
    %s69 = sphi 0, %s68
    %s83 = sphi 0, %s69
    %s87 = sphi 0, %s87
    %s89 = sphi 0, %s87
    %s90 = sphi 0, %s89
    %s104 = sphi 0, %s90
    %s108 = sphi 0, %s108
    %s110 = sphi 0, %s108
    %s111 = sphi 0, %s110
    %s125 = sphi 0, %s111
    %s131 = sphi 0, %s133
    %s134 = sphi 0, %s131
    %s135 = sphi 0, %s134
    %s151 = sphi 0, %s135
  $region4: #{unet_forward.10} parent=0 // loop_header_branch
    %14 = sbr.rel (%p12) target = $region8
  $region5: #{unet_forward.10} parent=0 // loop_body
    %s16 = ssub.s32 %s11, 1
    %s17 = ssub.s32 %s11, 2
    %s18 = sadd.s32 %s11, 1
    %s19 = ssub.s32 %s11, %s18
    %p20 = scmp.eq.s32.totalorder %s19, 0
    %s22 = sadd.s32 %s21, 1
    %s23 = scalar_select %p20, %s21, %s22
    %p26 = pneg %p20
    %p27 = scmp.eq.s32.totalorder %s11, 1
    %p28 = por %p26, %p27
    %p29 = scmp.ne.s32.totalorder %s21, %s24
    %p30 = scmp.eq.s32.totalorder %s11, 0
    %p31 = por %p29, %p30
    %p32 = scmp.ne.s32.totalorder %s21, %s24
    %p33 = scmp.eq.s32.totalorder %s16, 1
    %p34 = por %p32, %p33
    %p35 = scmp.ne.s32.totalorder %s24, %s25
    %p36 = scmp.eq.s32.totalorder %s16, 0
    %p37 = por %p35, %p36
    %p38 = scmp.ne.s32.totalorder %s24, %s25
    %p39 = scmp.eq.s32.totalorder %s17, 1
    %p40 = por %p38, %p39
    %p42 = scmp.ne.s32.totalorder %s25, %s41
    %p43 = scmp.eq.s32.totalorder %s17, 0
    %p44 = por %p42, %p43
    %s46 = sadd.s32 %s45, 1
    %p49 = scmp.eq.s32.totalorder %s11, 1
    %p50 = scmp.ne.s32.totalorder %s45, %s47
    %p51 = scmp.eq.s32.totalorder %s11, 0
    %p52 = por %p50, %p51
    %p53 = scmp.ne.s32.totalorder %s45, %s47
    %p54 = scmp.eq.s32.totalorder %s16, 1
    %p55 = por %p53, %p54
    %p56 = scmp.ne.s32.totalorder %s47, %s48
    %p57 = scmp.eq.s32.totalorder %s16, 0
    %p58 = por %p56, %p57
    %p59 = scmp.ne.s32.totalorder %s47, %s48
    %p60 = scmp.eq.s32.totalorder %s17, 1
    %p61 = por %p59, %p60
    %p63 = scmp.ne.s32.totalorder %s48, %s62
    %p64 = scmp.eq.s32.totalorder %s17, 0
    %p65 = por %p63, %p64
    %s67 = sadd.s32 %s66, 1
    %p70 = scmp.eq.s32.totalorder %s11, 1
    %p71 = scmp.ne.s32.totalorder %s66, %s68
    %p72 = scmp.eq.s32.totalorder %s11, 0
    %p73 = por %p71, %p72
    %p74 = scmp.ne.s32.totalorder %s66, %s68
    %p75 = scmp.eq.s32.totalorder %s16, 1
    %p76 = por %p74, %p75
    %p77 = scmp.ne.s32.totalorder %s68, %s69
    %p78 = scmp.eq.s32.totalorder %s16, 0
    %p79 = por %p77, %p78
    %p80 = scmp.ne.s32.totalorder %s68, %s69
    %p81 = scmp.eq.s32.totalorder %s17, 1
    %p82 = por %p80, %p81
    %p84 = scmp.ne.s32.totalorder %s69, %s83
    %p85 = scmp.eq.s32.totalorder %s17, 0
    %p86 = por %p84, %p85
    %s88 = sadd.s32 %s87, 1
    %p91 = scmp.eq.s32.totalorder %s11, 1
    %p92 = scmp.ne.s32.totalorder %s87, %s89
    %p93 = scmp.eq.s32.totalorder %s11, 0
    %p94 = por %p92, %p93
    %p95 = scmp.ne.s32.totalorder %s87, %s89
    %p96 = scmp.eq.s32.totalorder %s16, 1
    %p97 = por %p95, %p96
    %p98 = scmp.ne.s32.totalorder %s89, %s90
    %p99 = scmp.eq.s32.totalorder %s16, 0
    %p100 = por %p98, %p99
    %p101 = scmp.ne.s32.totalorder %s89, %s90
    %p102 = scmp.eq.s32.totalorder %s17, 1
    %p103 = por %p101, %p102
    %p105 = scmp.ne.s32.totalorder %s90, %s104
    %p106 = scmp.eq.s32.totalorder %s17, 0
    %p107 = por %p105, %p106
    %s109 = sadd.s32 %s108, 1
    %p112 = scmp.eq.s32.totalorder %s11, 1
    %p113 = scmp.ne.s32.totalorder %s108, %s110
    %p114 = scmp.eq.s32.totalorder %s11, 0
    %p115 = por %p113, %p114
    %p116 = scmp.ne.s32.totalorder %s108, %s110
    %p117 = scmp.eq.s32.totalorder %s16, 1
    %p118 = por %p116, %p117
    %p119 = scmp.ne.s32.totalorder %s110, %s111
    %p120 = scmp.eq.s32.totalorder %s16, 0
    %p121 = por %p119, %p120
    %p122 = scmp.ne.s32.totalorder %s110, %s111
    %p123 = scmp.eq.s32.totalorder %s17, 1
    %p124 = por %p122, %p123
    %p126 = scmp.ne.s32.totalorder %s111, %s125
    %p127 = scmp.eq.s32.totalorder %s17, 0
    %p128 = por %p126, %p127
    %s129 = ssub.s32 %s11, %s18
    %p130 = scmp.eq.s32.totalorder %s129, 0
    %s132 = sadd.s32 %s131, 1
    %s133 = scalar_select %p130, %s131, %s132
    %p136 = pneg %p130
    %p137 = scmp.eq.s32.totalorder %s11, 1
    %p138 = por %p136, %p137
    %p139 = scmp.ne.s32.totalorder %s131, %s134
    %p140 = scmp.eq.s32.totalorder %s11, 0
    %p141 = por %p139, %p140
    %p142 = scmp.ne.s32.totalorder %s131, %s134
    %p143 = scmp.eq.s32.totalorder %s16, 1
    %p144 = por %p142, %p143
    %p145 = scmp.ne.s32.totalorder %s134, %s135
    %p146 = scmp.eq.s32.totalorder %s16, 0
    %p147 = por %p145, %p146
    %p148 = scmp.ne.s32.totalorder %s134, %s135
    %p149 = scmp.eq.s32.totalorder %s17, 1
    %p150 = por %p148, %p149
    %p152 = scmp.ne.s32.totalorder %s135, %s151
    %p153 = scmp.eq.s32.totalorder %s17, 0
    %p154 = por %p152, %p153
    %p155 = scmp.le.s32.totalorder 1, %s11
    %p156 = scmp.lt.s32.totalorder %s11, 3
    %p157 = pnand %p155, %p156
    %p158 = pneg %p157
    // Predicated region
    $region9: #{unet_forward.10} parent=5 // pred_check
      _
    $region10: #{unet_forward.10} parent=5 // pred_check_branch
      %160 = sbr.rel (%p157) target = $region12
    $region11: #{unet_forward.10} parent=5 // pred_region
      %s161 = ssub.s32 %s11, 1
      // Predicated region
      $region13: #{unet_forward.10} parent=11 // pred_check
        %p162 = pneg %p58
      $region14: #{unet_forward.10} parent=11 // pred_check_branch
        %164 = sbr.rel (%p162) target = $region16
      $region15: #{unet_forward.10} parent=11 // pred_region
        _
      $region16: #{unet_forward.10} parent=11 // pred_fallthru
        _
      // Predicated region
      $region17: #{unet_forward.10} parent=11 // pred_check
        %p165 = pneg %p79
      $region18: #{unet_forward.10} parent=11 // pred_check_branch
        %167 = sbr.rel (%p165) target = $region20
      $region19: #{unet_forward.10} parent=11 // pred_region
        _
      $region20: #{unet_forward.10} parent=11 // pred_fallthru
        _
      // Predicated region
      $region21: #{unet_forward.10} parent=11 // pred_check
        %p168 = pneg %p100
      $region22: #{unet_forward.10} parent=11 // pred_check_branch
        %170 = sbr.rel (%p168) target = $region24
      $region23: #{unet_forward.10} parent=11 // pred_region
        _
      $region24: #{unet_forward.10} parent=11 // pred_fallthru
        _
      // Predicated region
      $region25: #{unet_forward.10} parent=11 // pred_check
        %p171 = pneg %p121
      $region26: #{unet_forward.10} parent=11 // pred_check_branch
        %173 = sbr.rel (%p171) target = $region28
      $region27: #{unet_forward.10} parent=11 // pred_region
        _
      $region28: #{unet_forward.10} parent=11 // pred_fallthru
        _
    $region12: #{unet_forward.10} parent=5 // pred_fallthru
      _
    %p174 = scmp.lt.s32.totalorder %s11, 2
    // Predicated region
    $region29: #{unet_forward.10} parent=5 // pred_check
      %p175 = pneg %p174
    $region30: #{unet_forward.10} parent=5 // pred_check_branch
      %177 = sbr.rel (%p175) target = $region32
    $region31: #{unet_forward.10} parent=5 // pred_region
      // Predicated region
      $region33: #{unet_forward.10} parent=31 // pred_check
        %p178 = pneg %p31
      $region34: #{unet_forward.10} parent=31 // pred_check_branch
        %180 = sbr.rel (%p178) target = $region36
      $region35: #{unet_forward.10} parent=31 // pred_region
        %p181 = scmp.lt.s32.totalorder %s11, 1
        %s182 = scalar_select %p181, %s11, 1
        %s183 = smul.addr %s182, 4
        %s184 = smul.addr %s183, 4
        %s185 = scalar_lea.vmem %s0, %s184
      $region36: #{unet_forward.10} parent=31 // pred_fallthru
        _
    $region32: #{unet_forward.10} parent=5 // pred_fallthru
      _
    %p186 = scmp.le.s32.totalorder 1, %s11
    %p187 = scmp.lt.s32.totalorder %s11, 3
    %p188 = pnand %p186, %p187
    %p189 = pneg %p188
    // Predicated region
    $region37: #{unet_forward.10} parent=5 // pred_check
      _
    $region38: #{unet_forward.10} parent=5 // pred_check_branch
      %191 = sbr.rel (%p188) target = $region40
    $region39: #{unet_forward.10} parent=5 // pred_region
      %s192 = ssub.s32 %s11, 1
      %p193 = scmp.lt.s32.totalorder %s16, 1
      %s194 = scalar_select %p193, %s16, 1
      %s195 = smul.addr %s194, 4
      %s196 = smul.addr %s195, 4
      %s197 = scalar_lea.vmem %s0, %s196
      %p198 = pneg %p37
      %p199 = pneg %p34
      %p200 = pneg %p58
      %p201 = pneg %p55
      %p202 = pneg %p79
      %p203 = pneg %p76
      %p204 = pneg %p100
      %p205 = pneg %p97
      %p206 = pneg %p121
      %p207 = pneg %p118
      %p208 = pneg %p147
      %p209 = pneg %p144
      %p210 = scmp.lt.s32.totalorder %s16, 1
      %s211 = scalar_select %p210, %s16, 1
      %s212 = smul.addr %s211, 2
      %s213 = smul.addr %s212, 4
      %s214 = scalar_lea.vmem %s5, %s213
      %p215 = scmp.lt.s32.totalorder %s16, 1
      %s216 = scalar_select %p215, %s16, 1
      %s217 = smul.addr %s216, 4
      %s218 = smul.addr %s217, 4
      %s219 = scalar_lea.vmem %s0, %s218
      %p220 = scmp.lt.s32.totalorder %s16, 1
      %s221 = scalar_select %p220, %s16, 1
      %s222 = smul.addr %s221, 2
      %s223 = smul.addr %s222, 4
      %s224 = scalar_lea.vmem %s5, %s223
      %vm226 = vcmask 521216
      %227 = vst.msk [vmem:[#allocation2] sm:$0x3f] %vm226, 0.0
      %228 = vst.msk [vmem:[#allocation2 + $0x8] sm:$0x3f] %vm226, 0.0
      %229 = vst.msk [vmem:[#allocation2 + $0x10] sm:$0x3f] %vm226, 0.0
      %230 = vst.msk [vmem:[#allocation2 + $0x18] sm:$0x3f] %vm226, 0.0
      %231 = vst.msk [vmem:[#allocation2 + $0x20] sm:$0x3f] %vm226, 0.0
      %232 = vst.msk [vmem:[#allocation2 + $0x28] sm:$0x3f] %vm226, 0.0
      %v233 = vld [vmem:[%s219] sm:$0xf]
      %v234 = vld [vmem:[%s219 + $0x4] sm:$0xf]
      %v235 = vld [vmem:[%s219 + $0x8] sm:$0xf]
      %v236 = vld [vmem:[%s219 + $0xc] sm:$0xf]
      %s237 = scalar_lea.vmem [#allocation2], 8
      %vm238 = vcmask 519168
      %239 = vst.msk [vmem:[%s237 + $0x1] sm:$0xf] %vm238, %v233
      %240 = vst.msk [vmem:[%s237 + $0x9] sm:$0xf] %vm238, %v234
      %241 = vst.msk [vmem:[%s237 + $0x11] sm:$0xf] %vm238, %v235
      %242 = vst.msk [vmem:[%s237 + $0x19] sm:$0xf] %vm238, %v236
      %v243 = vld [vmem:[#allocation2] sm:$0xf]
      %v244 = vld [vmem:[#allocation2 + $0x8] sm:$0xf]
      %v245 = vld [vmem:[#allocation2 + $0x10] sm:$0xf]
      %v246 = vld [vmem:[#allocation2 + $0x18] sm:$0xf]
      %v247 = vld [vmem:[#allocation2 + $0x1] sm:$0xf]
      %v248 = vld [vmem:[#allocation2 + $0x9] sm:$0xf]
      %v249 = vld [vmem:[#allocation2 + $0x11] sm:$0xf]
      %v250 = vld [vmem:[#allocation2 + $0x19] sm:$0xf]
      %v251 = vld [vmem:[#allocation2 + $0x2] sm:$0xf]
      %v252 = vld [vmem:[#allocation2 + $0xa] sm:$0xf]
      %v253 = vld [vmem:[#allocation2 + $0x12] sm:$0xf]
      %v254 = vld [vmem:[#allocation2 + $0x1a] sm:$0xf]
      %v255 = vld [vmem:[%s237] sm:$0xf]
      %v256 = vld [vmem:[%s237 + $0x8] sm:$0xf]
      %v257 = vld [vmem:[%s237 + $0x10] sm:$0xf]
      %v258 = vld [vmem:[%s237 + $0x18] sm:$0xf]
      %v259 = vld [vmem:[%s237 + $0x1] sm:$0xf]
      %v260 = vld [vmem:[%s237 + $0x9] sm:$0xf]
      %v261 = vld [vmem:[%s237 + $0x11] sm:$0xf]
      %v262 = vld [vmem:[%s237 + $0x19] sm:$0xf]
      %v263 = vld [vmem:[%s237 + $0x2] sm:$0xf]
      %v264 = vld [vmem:[%s237 + $0xa] sm:$0xf]
      %v265 = vld [vmem:[%s237 + $0x12] sm:$0xf]
      %v266 = vld [vmem:[%s237 + $0x1a] sm:$0xf]
      %s267 = scalar_lea.vmem [#allocation2], 16
      %v268 = vld [vmem:[%s267] sm:$0xf]
      %v269 = vld [vmem:[%s267 + $0x8] sm:$0xf]
      %v270 = vld [vmem:[%s267 + $0x10] sm:$0xf]
      %v271 = vld [vmem:[%s267 + $0x18] sm:$0xf]
      %v272 = vld [vmem:[%s267 + $0x1] sm:$0xf]
      %v273 = vld [vmem:[%s267 + $0x9] sm:$0xf]
      %v274 = vld [vmem:[%s267 + $0x11] sm:$0xf]
      %v275 = vld [vmem:[%s267 + $0x19] sm:$0xf]
      %v276 = vld [vmem:[%s267 + $0x2] sm:$0xf]
      %v277 = vld [vmem:[%s267 + $0xa] sm:$0xf]
      %v278 = vld [vmem:[%s267 + $0x12] sm:$0xf]
      %v279 = vld [vmem:[%s267 + $0x1a] sm:$0xf]
      %284 = vrot.lane.b32.xlu0 %v247, 64
      %v285 = vpop.permute.xlu0 %284
      %286 = vrot.lane.b32.xlu0 %v248, 64
      %v287 = vpop.permute.xlu0 %286
      %288 = vrot.lane.b32.xlu0 %v249, 64
      %v289 = vpop.permute.xlu0 %288
      %290 = vrot.lane.b32.xlu0 %v250, 64
      %v291 = vpop.permute.xlu0 %290
      %300 = vrot.lane.b32.xlu0 %v255, 64
      %v301 = vpop.permute.xlu0 %300
      %302 = vrot.lane.b32.xlu0 %v256, 64
      %v303 = vpop.permute.xlu0 %302
      %304 = vrot.lane.b32.xlu0 %v257, 64
      %v305 = vpop.permute.xlu0 %304
      %306 = vrot.lane.b32.xlu0 %v258, 64
      %v307 = vpop.permute.xlu0 %306
      %316 = vrot.lane.b32.xlu0 %v263, 64
      %v317 = vpop.permute.xlu0 %316
      %318 = vrot.lane.b32.xlu0 %v264, 64
      %v319 = vpop.permute.xlu0 %318
      %320 = vrot.lane.b32.xlu0 %v265, 64
      %v321 = vpop.permute.xlu0 %320
      %322 = vrot.lane.b32.xlu0 %v266, 64
      %v323 = vpop.permute.xlu0 %322
      %332 = vrot.lane.b32.xlu0 %v272, 64
      %v333 = vpop.permute.xlu0 %332
      %334 = vrot.lane.b32.xlu0 %v273, 64
      %v335 = vpop.permute.xlu0 %334
      %336 = vrot.lane.b32.xlu0 %v274, 64
      %v337 = vpop.permute.xlu0 %336
      %338 = vrot.lane.b32.xlu0 %v275, 64
      %v339 = vpop.permute.xlu0 %338
      %vm344 = vcmask 523264
      %v345 = vsel %vm344, %v243, %v285
      %v346 = vsel %vm344, %v244, %v287
      %v347 = vsel %vm344, %v245, %v289
      %v348 = vsel %vm344, %v246, %v291
      %v349 = vsel %vm344, %v251, %v301
      %v350 = vsel %vm344, %v252, %v303
      %v351 = vsel %vm344, %v253, %v305
      %v352 = vsel %vm344, %v254, %v307
      %v353 = vsel %vm344, %v259, %v317
      %v354 = vsel %vm344, %v260, %v319
      %v355 = vsel %vm344, %v261, %v321
      %v356 = vsel %vm344, %v262, %v323
      %v357 = vsel %vm344, %v268, %v333
      %v358 = vsel %vm344, %v269, %v335
      %v359 = vsel %vm344, %v270, %v337
      %v360 = vsel %vm344, %v271, %v339
      %v381 = vrot.slane %v349, 4
      %v382 = vrot.slane %v357, 4
      %v383 = vrot.slane %v350, 4
      %v384 = vrot.slane %v358, 4
      %v385 = vrot.slane %v351, 4
      %v386 = vrot.slane %v359, 4
      %v387 = vrot.slane %v352, 4
      %v388 = vrot.slane %v360, 4
      %vm389 = vcmask 1043456
      %v390 = vsel %vm389, %v345, %v381
      %v391 = vsel %vm389, %v353, %v382
      %v392 = vsel %vm389, %v346, %v383
      %v393 = vsel %vm389, %v354, %v384
      %v394 = vsel %vm389, %v347, %v385
      %v395 = vsel %vm389, %v355, %v386
      %v396 = vsel %vm389, %v348, %v387
      %v397 = vsel %vm389, %v356, %v388
      %398 = vst [vmem:[#allocation1] ss:$2 sm:$0xff] %v390
      %s399 = scalar_lea.vmem [#allocation1], 1
      %400 = vst [vmem:[%s399] ss:$2 sm:$0xff] %v392
      %s401 = scalar_lea.vmem [#allocation1], 16
      %402 = vst [vmem:[%s401] ss:$2 sm:$0xff] %v391
      %s403 = scalar_lea.vmem [#allocation1], 17
      %404 = vst [vmem:[%s403] ss:$2 sm:$0xff] %v393
      %s405 = scalar_lea.vmem [#allocation1], 32
      %406 = vst [vmem:[%s405] ss:$2 sm:$0xff] %v276
      %s407 = scalar_lea.vmem [#allocation1], 33
      %408 = vst [vmem:[%s407] ss:$2 sm:$0xff] %v277
      %s409 = scalar_lea.vmem [#allocation1], 48
      %410 = vst [vmem:[%s409] ss:$2 sm:$0xff] %v394
      %s411 = scalar_lea.vmem [#allocation1], 49
      %412 = vst [vmem:[%s411] ss:$2 sm:$0xff] %v396
      %v413 = vld.sshfl [vmem:[#allocation1] sm:$0xff pattern:$0x75316420]
      %v414 = vld.sshfl [vmem:[#allocation1 + $0x8] sm:$0xff pattern:$0x75316420]
      %v415 = vld.sshfl [vmem:[#allocation1 + $0x10] sm:$0xff pattern:$0x75316420]
      %v416 = vld.sshfl [vmem:[#allocation1 + $0x18] sm:$0xff pattern:$0x75316420]
      %v417 = vld.sshfl [vmem:[#allocation1 + $0x20] sm:$0xff pattern:$0x75316420]
      %v418 = vld.sshfl [vmem:[#allocation1 + $0x30] sm:$0xff pattern:$0x75316420]
      %v419 = vld.sshfl [vmem:[#allocation1 + $0x38] sm:$0xff pattern:$0x75316420]
      %420 = vst [vmem:[#allocation1] ss:$2 sm:$0xff] %v395
      %421 = vst [vmem:[%s399] ss:$2 sm:$0xff] %v397
      %422 = vst [vmem:[%s401] ss:$2 sm:$0xff] %v278
      %423 = vst [vmem:[%s403] ss:$2 sm:$0xff] %v279
      %v424 = vld.sshfl [vmem:[#allocation1] sm:$0xff pattern:$0x75316420]
      %v425 = vld.sshfl [vmem:[#allocation1 + $0x8] sm:$0xff pattern:$0x75316420]
      %v426 = vld.sshfl [vmem:[#allocation1 + $0x10] sm:$0xff pattern:$0x75316420]
      %v437 = vpack.c.bf16 %v418, %v413
      %v438 = vpack.c.bf16 %v419, %v414
      %v439 = vpack.c.bf16 %v424, %v415
      %v440 = vpack.c.bf16 %v425, %v416
      %v441 = vpack.c.bf16 %v426, %v417
      %v442 = vld [vmem:[%s1] sm:$0xf]
      %v443 = vld [vmem:[%s1 + $0x4] sm:$0xf]
      %v444 = vld [vmem:[%s1 + $0x8] sm:$0xf]
      %v445 = vld [vmem:[%s1 + $0xc] sm:$0xf]
      %v446 = vld [vmem:[%s1 + $0x10] sm:$0xf]
      %v447 = vld [vmem:[%s1 + $0x14] sm:$0xf]
      %v448 = vld [vmem:[%s1 + $0x18] sm:$0xf]
      %v449 = vld [vmem:[%s1 + $0x1c] sm:$0xf]
      %v450 = vld [vmem:[%s1 + $0x20] sm:$0xf]
      %v451 = vld [vmem:[%s1 + $0x24] sm:$0xf]
      %v452 = vld [vmem:[%s1 + $0x28] sm:$0xf]
      %v453 = vld [vmem:[%s1 + $0x2c] sm:$0xf]
      %v454 = vld [vmem:[%s1 + $0x30] sm:$0xf]
      %v455 = vld [vmem:[%s1 + $0x34] sm:$0xf]
      %v456 = vld [vmem:[%s1 + $0x38] sm:$0xf]
      %v457 = vld [vmem:[%s1 + $0x3c] sm:$0xf]
      %v458 = vld [vmem:[%s1 + $0x40] sm:$0xf]
      %v459 = vld [vmem:[%s1 + $0x44] sm:$0xf]
      %v460 = vld [vmem:[%s1 + $0x48] sm:$0xf]
      %v461 = vld [vmem:[%s1 + $0x4c] sm:$0xf]
      %v462 = vld [vmem:[%s1 + $0x50] sm:$0xf]
      %v463 = vld [vmem:[%s1 + $0x54] sm:$0xf]
      %v464 = vld [vmem:[%s1 + $0x58] sm:$0xf]
      %v465 = vld [vmem:[%s1 + $0x5c] sm:$0xf]
      %v466 = vld [vmem:[%s1 + $0x60] sm:$0xf]
      %v467 = vld [vmem:[%s1 + $0x64] sm:$0xf]
      %v468 = vld [vmem:[%s1 + $0x68] sm:$0xf]
      %v469 = vld [vmem:[%s1 + $0x6c] sm:$0xf]
      %v470 = vld [vmem:[%s1 + $0x70] sm:$0xf]
      %v471 = vld [vmem:[%s1 + $0x74] sm:$0xf]
      %v472 = vld [vmem:[%s1 + $0x78] sm:$0xf]
      %v473 = vld [vmem:[%s1 + $0x7c] sm:$0xf]
      %v474 = vld [vmem:[%s1 + $0x80] sm:$0xf]
      %v475 = vld [vmem:[%s1 + $0x84] sm:$0xf]
      %v476 = vld [vmem:[%s1 + $0x88] sm:$0xf]
      %v477 = vld [vmem:[%s1 + $0x8c] sm:$0xf]
      %v478 = vld [vmem:[%s1 + $0x90] sm:$0xf]
      %v479 = vld [vmem:[%s1 + $0x94] sm:$0xf]
      %v480 = vld [vmem:[%s1 + $0x98] sm:$0xf]
      %v481 = vld [vmem:[%s1 + $0x9c] sm:$0xf]
      %v482 = vld [vmem:[%s1 + $0xa0] sm:$0xf]
      %v483 = vld [vmem:[%s1 + $0xa4] sm:$0xf]
      %v484 = vld [vmem:[%s1 + $0xa8] sm:$0xf]
      %v485 = vld [vmem:[%s1 + $0xac] sm:$0xf]
      %v486 = vld [vmem:[%s1 + $0xb0] sm:$0xf]
      %v487 = vld [vmem:[%s1 + $0xb4] sm:$0xf]
      %v488 = vld [vmem:[%s1 + $0xb8] sm:$0xf]
      %v489 = vld [vmem:[%s1 + $0xbc] sm:$0xf]
      %v490 = vld [vmem:[%s1 + $0xc0] sm:$0xf]
      %v491 = vld [vmem:[%s1 + $0xc4] sm:$0xf]
      %v492 = vld [vmem:[%s1 + $0xc8] sm:$0xf]
      %v493 = vld [vmem:[%s1 + $0xcc] sm:$0xf]
      %v494 = vld [vmem:[%s1 + $0xd0] sm:$0xf]
      %v495 = vld [vmem:[%s1 + $0xd4] sm:$0xf]
      %v496 = vld [vmem:[%s1 + $0xd8] sm:$0xf]
      %v497 = vld [vmem:[%s1 + $0xdc] sm:$0xf]
      %v498 = vld [vmem:[%s1 + $0xe0] sm:$0xf]
      %v499 = vld [vmem:[%s1 + $0xe4] sm:$0xf]
      %v500 = vld [vmem:[%s1 + $0xe8] sm:$0xf]
      %v501 = vld [vmem:[%s1 + $0xec] sm:$0xf]
      %v502 = vld [vmem:[%s1 + $0xf0] sm:$0xf]
      %v503 = vld [vmem:[%s1 + $0xf4] sm:$0xf]
      %v504 = vld [vmem:[%s1 + $0xf8] sm:$0xf]
      %v505 = vld [vmem:[%s1 + $0xfc] sm:$0xf]
      %v506 = vld [vmem:[%s1 + $0x100] sm:$0xf]
      %v507 = vld [vmem:[%s1 + $0x104] sm:$0xf]
      %v508 = vld [vmem:[%s1 + $0x108] sm:$0xf]
      %v509 = vld [vmem:[%s1 + $0x10c] sm:$0xf]
      %v510 = vld [vmem:[%s1 + $0x110] sm:$0xf]
      %v511 = vld [vmem:[%s1 + $0x114] sm:$0xf]
      %v512 = vld [vmem:[%s1 + $0x118] sm:$0xf]
      %v513 = vld [vmem:[%s1 + $0x11c] sm:$0xf]
      %v514 = vld [vmem:[%s2] sm:$0x1]
      %v516 = vperm.slane %v514, 0
      %v590 = vunpack.c.l.b16 %v442
      %v591 = vunpack.c.l.b16 %v443
      %v592 = vunpack.c.l.b16 %v444
      %v593 = vunpack.c.l.b16 %v445
      %v594 = vunpack.c.l.b16 %v446
      %v595 = vunpack.c.l.b16 %v447
      %v596 = vunpack.c.l.b16 %v448
      %v597 = vunpack.c.l.b16 %v449
      %v598 = vunpack.c.l.b16 %v450
      %v599 = vunpack.c.l.b16 %v451
      %v600 = vunpack.c.l.b16 %v452
      %v601 = vunpack.c.l.b16 %v453
      %v602 = vunpack.c.l.b16 %v454
      %v603 = vunpack.c.l.b16 %v455
      %v604 = vunpack.c.l.b16 %v456
      %v605 = vunpack.c.l.b16 %v457
      %v606 = vunpack.c.l.b16 %v458
      %v607 = vunpack.c.l.b16 %v459
      %v608 = vunpack.c.l.b16 %v460
      %v609 = vunpack.c.l.b16 %v461
      %v610 = vunpack.c.l.b16 %v462
      %v611 = vunpack.c.l.b16 %v463
      %v612 = vunpack.c.l.b16 %v464
      %v613 = vunpack.c.l.b16 %v465
      %v614 = vunpack.c.l.b16 %v466
      %v615 = vunpack.c.l.b16 %v467
      %v616 = vunpack.c.l.b16 %v468
      %v617 = vunpack.c.l.b16 %v469
      %v618 = vunpack.c.l.b16 %v470
      %v619 = vunpack.c.l.b16 %v471
      %v620 = vunpack.c.l.b16 %v472
      %v621 = vunpack.c.l.b16 %v473
      %v622 = vunpack.c.l.b16 %v474
      %v623 = vunpack.c.l.b16 %v475
      %v624 = vunpack.c.l.b16 %v476
      %v625 = vunpack.c.l.b16 %v477
      %v626 = vunpack.c.l.b16 %v478
      %v627 = vunpack.c.l.b16 %v479
      %v628 = vunpack.c.l.b16 %v480
      %v629 = vunpack.c.l.b16 %v481
      %v630 = vunpack.c.l.b16 %v482
      %v631 = vunpack.c.l.b16 %v483
      %v632 = vunpack.c.l.b16 %v484
      %v633 = vunpack.c.l.b16 %v485
      %v634 = vunpack.c.l.b16 %v486
      %v635 = vunpack.c.l.b16 %v487
      %v636 = vunpack.c.l.b16 %v488
      %v637 = vunpack.c.l.b16 %v489
      %v638 = vunpack.c.l.b16 %v490
      %v639 = vunpack.c.l.b16 %v491
      %v640 = vunpack.c.l.b16 %v492
      %v641 = vunpack.c.l.b16 %v493
      %v642 = vunpack.c.l.b16 %v494
      %v643 = vunpack.c.l.b16 %v495
      %v644 = vunpack.c.l.b16 %v496
      %v645 = vunpack.c.l.b16 %v497
      %v646 = vunpack.c.l.b16 %v498
      %v647 = vunpack.c.l.b16 %v499
      %v648 = vunpack.c.l.b16 %v500
      %v649 = vunpack.c.l.b16 %v501
      %v650 = vunpack.c.l.b16 %v502
      %v651 = vunpack.c.l.b16 %v503
      %v652 = vunpack.c.l.b16 %v504
      %v653 = vunpack.c.l.b16 %v505
      %v654 = vunpack.c.l.b16 %v506
      %v655 = vunpack.c.l.b16 %v507
      %v656 = vunpack.c.l.b16 %v508
      %v657 = vunpack.c.l.b16 %v509
      %v658 = vunpack.c.l.b16 %v510
      %v659 = vunpack.c.l.b16 %v511
      %v660 = vunpack.c.l.b16 %v512
      %v661 = vunpack.c.l.b16 %v513
      %v662 = vpack.c.b16 %v591, %v590
      %v663 = vpack.c.b16 %v593, %v592
      %v664 = vpack.c.b16 %v595, %v594
      %v665 = vpack.c.b16 %v597, %v596
      %v666 = vpack.c.b16 %v599, %v598
      %v667 = vpack.c.b16 %v601, %v600
      %v668 = vpack.c.b16 %v603, %v602
      %v669 = vpack.c.b16 %v605, %v604
      %v670 = vpack.c.b16 %v607, %v606
      %v671 = vpack.c.b16 %v609, %v608
      %v672 = vpack.c.b16 %v611, %v610
      %v673 = vpack.c.b16 %v613, %v612
      %v674 = vpack.c.b16 %v615, %v614
      %v675 = vpack.c.b16 %v617, %v616
      %v676 = vpack.c.b16 %v619, %v618
      %v677 = vpack.c.b16 %v621, %v620
      %v678 = vpack.c.b16 %v623, %v622
      %v679 = vpack.c.b16 %v625, %v624
      %v680 = vpack.c.b16 %v627, %v626
      %v681 = vpack.c.b16 %v629, %v628
      %v682 = vpack.c.b16 %v631, %v630
      %v683 = vpack.c.b16 %v633, %v632
      %v684 = vpack.c.b16 %v635, %v634
      %v685 = vpack.c.b16 %v637, %v636
      %v686 = vpack.c.b16 %v639, %v638
      %v687 = vpack.c.b16 %v641, %v640
      %v688 = vpack.c.b16 %v643, %v642
      %v689 = vpack.c.b16 %v645, %v644
      %v690 = vpack.c.b16 %v647, %v646
      %v691 = vpack.c.b16 %v649, %v648
      %v692 = vpack.c.b16 %v651, %v650
      %v693 = vpack.c.b16 %v653, %v652
      %v694 = vpack.c.b16 %v655, %v654
      %v695 = vpack.c.b16 %v657, %v656
      %v696 = vpack.c.b16 %v659, %v658
      %v697 = vpack.c.b16 %v661, %v660
      %v735 = vsel %vm344, %v441, 0
      %737 = vmatpush.bf16.msra.mxu0 %v669
      %738 = vmatpush.bf16.msra.mxu0 %v668
      %739 = vmatpush.bf16.msra.mxu0 %v667
      %740 = vmatpush.bf16.msra.mxu0 %v666
      %741 = vmatpush.bf16.msra.mxu0 %v665
      %742 = vmatpush.bf16.msra.mxu0 %v664
      %743 = vmatpush.bf16.msra.mxu0 %v663
      %744 = vmatpush.bf16.msra.mxu0 %v662
      %745 = vmatmul.bf16.gmra.mxu0 %v437
      %v746 = vpop.f32.mrf.mxu0
      %v747 = vadd.f32 %v516, %v746
      %v748 = vpop.f32.mrf.mxu0
      %v749 = vadd.f32 %v516, %v748
      %750 = vdwg.mxu0
      %751 = vmatpush.bf16.msra.mxu0 %v677
      %752 = vmatpush.bf16.msra.mxu0 %v676
      %753 = vmatpush.bf16.msra.mxu0 %v675
      %754 = vmatpush.bf16.msra.mxu0 %v674
      %755 = vmatpush.bf16.msra.mxu0 %v673
      %756 = vmatpush.bf16.msra.mxu0 %v672
      %757 = vmatpush.bf16.msra.mxu0 %v671
      %758 = vmatpush.bf16.msra.mxu0 %v670
      %759 = vmatmul.bf16.gmra.mxu0 %v438
      %v760 = vpop.f32.mrf.mxu0
      %v761 = vadd.f32 %v747, %v760
      %v762 = vpop.f32.mrf.mxu0
      %v763 = vadd.f32 %v749, %v762
      %764 = vdwg.mxu0
      %765 = vmatpush.bf16.msra.mxu0 %v685
      %766 = vmatpush.bf16.msra.mxu0 %v684
      %767 = vmatpush.bf16.msra.mxu0 %v683
      %768 = vmatpush.bf16.msra.mxu0 %v682
      %769 = vmatpush.bf16.msra.mxu0 %v681
      %770 = vmatpush.bf16.msra.mxu0 %v680
      %771 = vmatpush.bf16.msra.mxu0 %v679
      %772 = vmatpush.bf16.msra.mxu0 %v678
      %773 = vmatmul.bf16.gmra.mxu0 %v439
      %v774 = vpop.f32.mrf.mxu0
      %v775 = vadd.f32 %v761, %v774
      %v776 = vpop.f32.mrf.mxu0
      %v777 = vadd.f32 %v763, %v776
      %778 = vdwg.mxu0
      %779 = vmatpush.bf16.msra.mxu0 %v693
      %780 = vmatpush.bf16.msra.mxu0 %v692
      %781 = vmatpush.bf16.msra.mxu0 %v691
      %782 = vmatpush.bf16.msra.mxu0 %v690
      %783 = vmatpush.bf16.msra.mxu0 %v689
      %784 = vmatpush.bf16.msra.mxu0 %v688
      %785 = vmatpush.bf16.msra.mxu0 %v687
      %786 = vmatpush.bf16.msra.mxu0 %v686
      %787 = vmatmul.bf16.gmra.mxu0 %v440
      %v788 = vpop.f32.mrf.mxu0
      %v789 = vadd.f32 %v775, %v788
      %v790 = vpop.f32.mrf.mxu0
      %v791 = vadd.f32 %v777, %v790
      %792 = vdwg.mxu0
      %793 = vmatpush.bf16.msra.mxu0 0
      %794 = vmatpush.bf16.msra.mxu0 0
      %795 = vmatpush.bf16.msra.mxu0 0
      %796 = vmatpush.bf16.msra.mxu0 0
      %797 = vmatpush.bf16.msra.mxu0 %v697
      %798 = vmatpush.bf16.msra.mxu0 %v696
      %799 = vmatpush.bf16.msra.mxu0 %v695
      %800 = vmatpush.bf16.msra.mxu0 %v694
      %801 = vmatmul.bf16.gmra.mxu0 %v735
      %v802 = vpop.f32.mrf.mxu0
      %v803 = vadd.f32 %v789, %v802
      %v804 = vpop.f32.mrf.mxu0
      %v805 = vadd.f32 %v791, %v804
      %806 = vdwg.mxu0
      %v807 = vmax.f32 %v803, 0.0
      %v808 = vmax.f32 %v805, 0.0
      %vm809 = vcmask 259072
      %810 = vst.msk [vmem:[#allocation3] sm:$0x3f] %vm809, 0.0
      %811 = vst.msk [vmem:[#allocation3 + $0x8] sm:$0x3f] %vm809, 0.0
      %812 = vst.msk [vmem:[#allocation3 + $0x10] sm:$0x3f] %vm809, 0.0
      %813 = vst.msk [vmem:[#allocation3 + $0x18] sm:$0x3f] %vm809, 0.0
      %814 = vst.msk [vmem:[#allocation3 + $0x20] sm:$0x3f] %vm809, 0.0
      %815 = vst.msk [vmem:[#allocation3 + $0x28] sm:$0x3f] %vm809, 0.0
      %v818 = vrot.slane %v807, 4
      %v819 = vrot.slane %v808, 4
      %s822 = scalar_lea.vmem [#allocation3], 8
      %vm823 = vcmask 257024
      %824 = vst.msk [vmem:[%s822 + $0x1] sm:$0xf] %vm823, %v807
      %825 = vst.msk [vmem:[%s822 + $0x9] sm:$0xf] %vm823, %v818
      %826 = vst.msk [vmem:[%s822 + $0x11] sm:$0xf] %vm823, %v808
      %827 = vst.msk [vmem:[%s822 + $0x19] sm:$0xf] %vm823, %v819
      %v828 = vld [vmem:[#allocation3] sm:$0xf]
      %v829 = vld [vmem:[#allocation3 + $0x8] sm:$0xf]
      %v830 = vld [vmem:[#allocation3 + $0x10] sm:$0xf]
      %v831 = vld [vmem:[#allocation3 + $0x18] sm:$0xf]
      %v832 = vld [vmem:[#allocation3 + $0x1] sm:$0xf]
      %v833 = vld [vmem:[#allocation3 + $0x9] sm:$0xf]
      %v834 = vld [vmem:[#allocation3 + $0x11] sm:$0xf]
      %v835 = vld [vmem:[#allocation3 + $0x19] sm:$0xf]
      %v836 = vld [vmem:[#allocation3 + $0x2] sm:$0xf]
      %v837 = vld [vmem:[#allocation3 + $0xa] sm:$0xf]
      %v838 = vld [vmem:[#allocation3 + $0x12] sm:$0xf]
      %v839 = vld [vmem:[#allocation3 + $0x1a] sm:$0xf]
      %v840 = vld [vmem:[%s822] sm:$0xf]
      %v841 = vld [vmem:[%s822 + $0x8] sm:$0xf]
      %v842 = vld [vmem:[%s822 + $0x10] sm:$0xf]
      %v843 = vld [vmem:[%s822 + $0x18] sm:$0xf]
      %v844 = vld [vmem:[%s822 + $0x1] sm:$0xf]
      %v845 = vld [vmem:[%s822 + $0x9] sm:$0xf]
      %v846 = vld [vmem:[%s822 + $0x11] sm:$0xf]
      %v847 = vld [vmem:[%s822 + $0x19] sm:$0xf]
      %v848 = vld [vmem:[%s822 + $0x2] sm:$0xf]
      %v849 = vld [vmem:[%s822 + $0xa] sm:$0xf]
      %v850 = vld [vmem:[%s822 + $0x12] sm:$0xf]
      %v851 = vld [vmem:[%s822 + $0x1a] sm:$0xf]
      %s852 = scalar_lea.vmem [#allocation3], 16
      %v853 = vld [vmem:[%s852] sm:$0xf]
      %v854 = vld [vmem:[%s852 + $0x8] sm:$0xf]
      %v855 = vld [vmem:[%s852 + $0x10] sm:$0xf]
      %v856 = vld [vmem:[%s852 + $0x18] sm:$0xf]
      %v857 = vld [vmem:[%s852 + $0x1] sm:$0xf]
      %v858 = vld [vmem:[%s852 + $0x9] sm:$0xf]
      %v859 = vld [vmem:[%s852 + $0x11] sm:$0xf]
      %v860 = vld [vmem:[%s852 + $0x19] sm:$0xf]
      %v861 = vld [vmem:[%s852 + $0x2] sm:$0xf]
      %v862 = vld [vmem:[%s852 + $0xa] sm:$0xf]
      %v863 = vld [vmem:[%s852 + $0x12] sm:$0xf]
      %v864 = vld [vmem:[%s852 + $0x1a] sm:$0xf]
      %869 = vrot.lane.b32.xlu0 %v832, 32
      %v870 = vpop.permute.xlu0 %869
      %871 = vrot.lane.b32.xlu0 %v833, 32
      %v872 = vpop.permute.xlu0 %871
      %873 = vrot.lane.b32.xlu0 %v834, 32
      %v874 = vpop.permute.xlu0 %873
      %875 = vrot.lane.b32.xlu0 %v835, 32
      %v876 = vpop.permute.xlu0 %875
      %885 = vrot.lane.b32.xlu0 %v836, 64
      %v886 = vpop.permute.xlu0 %885
      %887 = vrot.lane.b32.xlu0 %v837, 64
      %v888 = vpop.permute.xlu0 %887
      %889 = vrot.lane.b32.xlu0 %v838, 64
      %v890 = vpop.permute.xlu0 %889
      %891 = vrot.lane.b32.xlu0 %v839, 64
      %v892 = vpop.permute.xlu0 %891
      %901 = vrot.lane.b32.xlu0 %v840, 96
      %v902 = vpop.permute.xlu0 %901
      %903 = vrot.lane.b32.xlu0 %v841, 96
      %v904 = vpop.permute.xlu0 %903
      %905 = vrot.lane.b32.xlu0 %v842, 96
      %v906 = vpop.permute.xlu0 %905
      %907 = vrot.lane.b32.xlu0 %v843, 96
      %v908 = vpop.permute.xlu0 %907
      %917 = vrot.lane.b32.xlu0 %v848, 32
      %v918 = vpop.permute.xlu0 %917
      %919 = vrot.lane.b32.xlu0 %v849, 32
      %v920 = vpop.permute.xlu0 %919
      %921 = vrot.lane.b32.xlu0 %v850, 32
      %v922 = vpop.permute.xlu0 %921
      %923 = vrot.lane.b32.xlu0 %v851, 32
      %v924 = vpop.permute.xlu0 %923
      %933 = vrot.lane.b32.xlu0 %v853, 64
      %v934 = vpop.permute.xlu0 %933
      %935 = vrot.lane.b32.xlu0 %v854, 64
      %v936 = vpop.permute.xlu0 %935
      %937 = vrot.lane.b32.xlu0 %v855, 64
      %v938 = vpop.permute.xlu0 %937
      %939 = vrot.lane.b32.xlu0 %v856, 64
      %v940 = vpop.permute.xlu0 %939
      %949 = vrot.lane.b32.xlu0 %v857, 96
      %v950 = vpop.permute.xlu0 %949
      %951 = vrot.lane.b32.xlu0 %v858, 96
      %v952 = vpop.permute.xlu0 %951
      %953 = vrot.lane.b32.xlu0 %v859, 96
      %v954 = vpop.permute.xlu0 %953
      %955 = vrot.lane.b32.xlu0 %v860, 96
      %v956 = vpop.permute.xlu0 %955
      %vm961 = vcmask 261120
      %v962 = vsel %vm961, %v828, %v870
      %v963 = vsel %vm961, %v829, %v872
      %v964 = vsel %vm961, %v830, %v874
      %v965 = vsel %vm961, %v831, %v876
      %v966 = vsel %vm344, %v962, %v886
      %v967 = vsel %vm344, %v963, %v888
      %v968 = vsel %vm344, %v964, %v890
      %v969 = vsel %vm344, %v965, %v892
      %vm970 = vcmask 785408
      %v971 = vsel %vm970, %v966, %v902
      %v972 = vsel %vm970, %v967, %v904
      %v973 = vsel %vm970, %v968, %v906
      %v974 = vsel %vm970, %v969, %v908
      %v975 = vsel %vm961, %v844, %v918
      %v976 = vsel %vm961, %v845, %v920
      %v977 = vsel %vm961, %v846, %v922
      %v978 = vsel %vm961, %v847, %v924
      %v979 = vsel %vm344, %v975, %v934
      %v980 = vsel %vm344, %v976, %v936
      %v981 = vsel %vm344, %v977, %v938
      %v982 = vsel %vm344, %v978, %v940
      %v983 = vsel %vm970, %v979, %v950
      %v984 = vsel %vm970, %v980, %v952
      %v985 = vsel %vm970, %v981, %v954
      %v986 = vsel %vm970, %v982, %v956
      %v999 = vrot.slane %v983, 4
      %v1000 = vrot.slane %v984, 4
      %v1001 = vrot.slane %v985, 4
      %v1002 = vrot.slane %v986, 4
      %v1003 = vsel %vm389, %v971, %v999
      %v1004 = vsel %vm389, %v972, %v1000
      %v1005 = vsel %vm389, %v973, %v1001
      %v1006 = vsel %vm389, %v974, %v1002
      %1007 = vst [vmem:[#allocation1] ss:$2 sm:$0xff] %v1003
      %s1008 = scalar_lea.vmem [#allocation1], 1
      %1009 = vst [vmem:[%s1008] ss:$2 sm:$0xff] %v1004
      %s1010 = scalar_lea.vmem [#allocation1], 16
      %1011 = vst [vmem:[%s1010] ss:$2 sm:$0xff] %v861
      %s1012 = scalar_lea.vmem [#allocation1], 17
      %1013 = vst [vmem:[%s1012] ss:$2 sm:$0xff] %v862
      %s1014 = scalar_lea.vmem [#allocation1], 32
      %1015 = vst [vmem:[%s1014] ss:$2 sm:$0xff] %v1005
      %s1016 = scalar_lea.vmem [#allocation1], 33
      %1017 = vst [vmem:[%s1016] ss:$2 sm:$0xff] %v1006
      %s1018 = scalar_lea.vmem [#allocation1], 48
      %1019 = vst [vmem:[%s1018] ss:$2 sm:$0xff] %v863
      %s1020 = scalar_lea.vmem [#allocation1], 49
      %1021 = vst [vmem:[%s1020] ss:$2 sm:$0xff] %v864
      %v1022 = vld.sshfl [vmem:[#allocation1] sm:$0xff pattern:$0x75316420]
      %v1023 = vld.sshfl [vmem:[#allocation1 + $0x8] sm:$0xff pattern:$0x75316420]
      %v1024 = vld.sshfl [vmem:[#allocation1 + $0x10] sm:$0xff pattern:$0x75316420]
      %v1025 = vld.sshfl [vmem:[#allocation1 + $0x20] sm:$0xff pattern:$0x75316420]
      %v1026 = vld.sshfl [vmem:[#allocation1 + $0x28] sm:$0xff pattern:$0x75316420]
      %v1027 = vld.sshfl [vmem:[#allocation1 + $0x30] sm:$0xff pattern:$0x75316420]
      %v1034 = vpack.c.bf16 %v1025, %v1022
      %v1035 = vpack.c.bf16 %v1026, %v1023
      %v1036 = vpack.c.bf16 %v1027, %v1024
      %v1037 = vld [vmem:[%s3] sm:$0xf]
      %v1038 = vld [vmem:[%s3 + $0x4] sm:$0xf]
      %v1039 = vld [vmem:[%s3 + $0x8] sm:$0xf]
      %v1040 = vld [vmem:[%s3 + $0xc] sm:$0xf]
      %v1041 = vld [vmem:[%s3 + $0x10] sm:$0xf]
      %v1042 = vld [vmem:[%s3 + $0x14] sm:$0xf]
      %v1043 = vld [vmem:[%s3 + $0x18] sm:$0xf]
      %v1044 = vld [vmem:[%s3 + $0x1c] sm:$0xf]
      %v1045 = vld [vmem:[%s3 + $0x20] sm:$0xf]
      %v1046 = vld [vmem:[%s3 + $0x24] sm:$0xf]
      %v1047 = vld [vmem:[%s3 + $0x28] sm:$0xf]
      %v1048 = vld [vmem:[%s3 + $0x2c] sm:$0xf]
      %v1049 = vld [vmem:[%s3 + $0x30] sm:$0xf]
      %v1050 = vld [vmem:[%s3 + $0x34] sm:$0xf]
      %v1051 = vld [vmem:[%s3 + $0x38] sm:$0xf]
      %v1052 = vld [vmem:[%s3 + $0x3c] sm:$0xf]
      %v1053 = vld [vmem:[%s3 + $0x40] sm:$0xf]
      %v1054 = vld [vmem:[%s3 + $0x44] sm:$0xf]
      %v1055 = vld [vmem:[%s3 + $0x48] sm:$0xf]
      %v1056 = vld [vmem:[%s3 + $0x4c] sm:$0xf]
      %v1057 = vld [vmem:[%s3 + $0x50] sm:$0xf]
      %v1058 = vld [vmem:[%s3 + $0x54] sm:$0xf]
      %v1059 = vld [vmem:[%s3 + $0x58] sm:$0xf]
      %v1060 = vld [vmem:[%s3 + $0x5c] sm:$0xf]
      %v1061 = vld [vmem:[%s3 + $0x60] sm:$0xf]
      %v1062 = vld [vmem:[%s3 + $0x64] sm:$0xf]
      %v1063 = vld [vmem:[%s3 + $0x68] sm:$0xf]
      %v1064 = vld [vmem:[%s3 + $0x6c] sm:$0xf]
      %v1065 = vld [vmem:[%s3 + $0x70] sm:$0xf]
      %v1066 = vld [vmem:[%s3 + $0x74] sm:$0xf]
      %v1067 = vld [vmem:[%s3 + $0x78] sm:$0xf]
      %v1068 = vld [vmem:[%s3 + $0x7c] sm:$0xf]
      %v1069 = vld [vmem:[%s3 + $0x80] sm:$0xf]
      %v1070 = vld [vmem:[%s3 + $0x84] sm:$0xf]
      %v1071 = vld [vmem:[%s3 + $0x88] sm:$0xf]
      %v1072 = vld [vmem:[%s3 + $0x8c] sm:$0xf]
      %v1073 = vld [vmem:[%s4] sm:$0x1]
      %v1075 = vperm.slane %v1073, 0
      %v1113 = vunpack.c.l.b16 %v1037
      %v1114 = vunpack.c.l.b16 %v1038
      %v1115 = vunpack.c.l.b16 %v1039
      %v1116 = vunpack.c.l.b16 %v1040
      %v1117 = vunpack.c.l.b16 %v1041
      %v1118 = vunpack.c.l.b16 %v1042
      %v1119 = vunpack.c.l.b16 %v1043
      %v1120 = vunpack.c.l.b16 %v1044
      %v1121 = vunpack.c.l.b16 %v1045
      %v1122 = vunpack.c.l.b16 %v1046
      %v1123 = vunpack.c.l.b16 %v1047
      %v1124 = vunpack.c.l.b16 %v1048
      %v1125 = vunpack.c.l.b16 %v1049
      %v1126 = vunpack.c.l.b16 %v1050
      %v1127 = vunpack.c.l.b16 %v1051
      %v1128 = vunpack.c.l.b16 %v1052
      %v1129 = vunpack.c.l.b16 %v1053
      %v1130 = vunpack.c.l.b16 %v1054
      %v1131 = vunpack.c.l.b16 %v1055
      %v1132 = vunpack.c.l.b16 %v1056
      %v1133 = vunpack.c.l.b16 %v1057
      %v1134 = vunpack.c.l.b16 %v1058
      %v1135 = vunpack.c.l.b16 %v1059
      %v1136 = vunpack.c.l.b16 %v1060
      %v1137 = vunpack.c.l.b16 %v1061
      %v1138 = vunpack.c.l.b16 %v1062
      %v1139 = vunpack.c.l.b16 %v1063
      %v1140 = vunpack.c.l.b16 %v1064
      %v1141 = vunpack.c.l.b16 %v1065
      %v1142 = vunpack.c.l.b16 %v1066
      %v1143 = vunpack.c.l.b16 %v1067
      %v1144 = vunpack.c.l.b16 %v1068
      %v1145 = vunpack.c.l.b16 %v1069
      %v1146 = vunpack.c.l.b16 %v1070
      %v1147 = vunpack.c.l.b16 %v1071
      %v1148 = vunpack.c.l.b16 %v1072
      %v1149 = vpack.c.b16 %v1114, %v1113
      %v1150 = vpack.c.b16 %v1116, %v1115
      %v1151 = vpack.c.b16 %v1118, %v1117
      %v1152 = vpack.c.b16 %v1120, %v1119
      %v1153 = vpack.c.b16 %v1122, %v1121
      %v1154 = vpack.c.b16 %v1124, %v1123
      %v1155 = vpack.c.b16 %v1126, %v1125
      %v1156 = vpack.c.b16 %v1128, %v1127
      %v1157 = vpack.c.b16 %v1130, %v1129
      %v1158 = vpack.c.b16 %v1132, %v1131
      %v1159 = vpack.c.b16 %v1134, %v1133
      %v1160 = vpack.c.b16 %v1136, %v1135
      %v1161 = vpack.c.b16 %v1138, %v1137
      %v1162 = vpack.c.b16 %v1140, %v1139
      %v1163 = vpack.c.b16 %v1142, %v1141
      %v1164 = vpack.c.b16 %v1144, %v1143
      %v1165 = vpack.c.b16 %v1146, %v1145
      %v1166 = vpack.c.b16 %v1148, %v1147
      %v1186 = vsel %vm961, %v1036, 0
      %1188 = vmatpush.bf16.msra.mxu0 %v1156
      %1189 = vmatpush.bf16.msra.mxu0 %v1155
      %1190 = vmatpush.bf16.msra.mxu0 %v1154
      %1191 = vmatpush.bf16.msra.mxu0 %v1153
      %1192 = vmatpush.bf16.msra.mxu0 %v1152
      %1193 = vmatpush.bf16.msra.mxu0 %v1151
      %1194 = vmatpush.bf16.msra.mxu0 %v1150
      %1195 = vmatpush.bf16.msra.mxu0 %v1149
      %1196 = vmatmul.bf16.gmra.mxu0 %v1034
      %v1197 = vpop.f32.mrf.mxu0
      %v1198 = vadd.f32 %v1075, %v1197
      %v1199 = vpop.f32.mrf.mxu0
      %v1200 = vadd.f32 %v1075, %v1199
      %1201 = vdwg.mxu0
      %1202 = vmatpush.bf16.msra.mxu0 %v1164
      %1203 = vmatpush.bf16.msra.mxu0 %v1163
      %1204 = vmatpush.bf16.msra.mxu0 %v1162
      %1205 = vmatpush.bf16.msra.mxu0 %v1161
      %1206 = vmatpush.bf16.msra.mxu0 %v1160
      %1207 = vmatpush.bf16.msra.mxu0 %v1159
      %1208 = vmatpush.bf16.msra.mxu0 %v1158
      %1209 = vmatpush.bf16.msra.mxu0 %v1157
      %1210 = vmatmul.bf16.gmra.mxu0 %v1035
      %v1211 = vpop.f32.mrf.mxu0
      %v1212 = vadd.f32 %v1198, %v1211
      %v1213 = vpop.f32.mrf.mxu0
      %v1214 = vadd.f32 %v1200, %v1213
      %1215 = vdwg.mxu0
      %1216 = vmatpush.bf16.msra.mxu0 0
      %1217 = vmatpush.bf16.msra.mxu0 0
      %1218 = vmatpush.bf16.msra.mxu0 0
      %1219 = vmatpush.bf16.msra.mxu0 0
      %1220 = vmatpush.bf16.msra.mxu0 0
      %1221 = vmatpush.bf16.msra.mxu0 0
      %1222 = vmatpush.bf16.msra.mxu0 %v1166
      %1223 = vmatpush.bf16.msra.mxu0 %v1165
      %1224 = vmatmul.bf16.gmra.mxu0 %v1186
      %v1225 = vpop.f32.mrf.mxu0
      %v1226 = vadd.f32 %v1212, %v1225
      %v1227 = vpop.f32.mrf.mxu0
      %v1228 = vadd.f32 %v1214, %v1227
      %1229 = vdwg.mxu0
      %v1230 = vmax.f32 %v1226, 0.0
      %v1231 = vmax.f32 %v1228, 0.0
      %v1234 = vrot.slane %v1230, 4
      %v1235 = vrot.slane %v1231, 4
      %v1238 = vmax.f32 %v1230, %v1234
      %v1239 = vmax.f32 %v1231, %v1235
      %1240 = vst.msk [vmem:[%s224] sm:$0xf] %vm823, %v1238
      %1241 = vst.msk [vmem:[%s224 + $0x4] sm:$0xf] %vm823, %v1239
      %p1242 = scmp.lt.s32.totalorder %s16, 1
      %s1243 = scalar_select %p1242, %s16, 1
      %s1244 = smul.addr %s1243, 2
      %s1245 = smul.addr %s1244, 4
      %s1246 = scalar_lea.vmem %s5, %s1245
      // Predicated region
      $region41: #{unet_forward.10} parent=39 // pred_check
        %p1247 = pneg %p144
      $region42: #{unet_forward.10} parent=39 // pred_check_branch
        %1249 = sbr.rel (%p1247) target = $region44
      $region43: #{unet_forward.10} parent=39 // pred_region
        _
      $region44: #{unet_forward.10} parent=39 // pred_fallthru
        _
    $region40: #{unet_forward.10} parent=5 // pred_fallthru
      _
    %p1250 = scmp.le.s32.totalorder 2, %s11
    // Predicated region
    $region45: #{unet_forward.10} parent=5 // pred_check
      %p1251 = pneg %p1250
    $region46: #{unet_forward.10} parent=5 // pred_check_branch
      %1253 = sbr.rel (%p1251) target = $region48
    $region47: #{unet_forward.10} parent=5 // pred_region
      %s1254 = ssub.s32 %s11, 2
      // Predicated region
      $region49: #{unet_forward.10} parent=47 // pred_check
        %p1255 = pneg %p150
      $region50: #{unet_forward.10} parent=47 // pred_check_branch
        %1257 = sbr.rel (%p1255) target = $region52
      $region51: #{unet_forward.10} parent=47 // pred_region
        %p1258 = scmp.lt.s32.totalorder %s17, 1
        %s1259 = scalar_select %p1258, %s17, 1
        %s1260 = smul.addr %s1259, 2
        %s1261 = smul.addr %s1260, 4
        %s1262 = scalar_lea.vmem %s5, %s1261
      $region52: #{unet_forward.10} parent=47 // pred_fallthru
        _
    $region48: #{unet_forward.10} parent=5 // pred_fallthru
      _
  $region6: #{unet_forward.10} parent=0 // loop_footer
    %s15 = sadd.s32 1, %s11
  $region7: #{unet_forward.10} parent=0 // loop_footer_branch
    %10 = sbr.rel target = $region3
  $region8: #{unet_forward.10} parent=0 // loop_exit
    _

// kernel: unet_forward.7
$region0: #{unet_forward.7}
  #allocation0 [shape = 'u32[]', space=smem, size = 0x4, offset = 0x4, fixed_abs, tag = 'smem constant byte address 0x4 - core index']
  #allocation1 [shape = 'u32[72,128]{1,0:T(1,128)}', space=vmem, size = 0x9000, scoped, tag = 'internal scratch']
  #allocation2 [shape = 'f32[18,18,1]{2,1,0:T(8,128)}', space=vmem, size = 0x36000, scoped, tag = 'scratch operand']
  #allocation3 [shape = 'f32[18,18,8]{2,1,0:T(8,128)}', space=vmem, size = 0x36000, scoped, tag = 'scratch operand']
  %s0 = inlined_call_operand.vmem [shape: f32[2,16,16,1], index: 0, kind: input, shape index: {}]
  %s1 = inlined_call_operand.vmem [shape: bf16[9,8], index: 1, kind: input, shape index: {}]
  %s2 = inlined_call_operand.vmem [shape: f32[1,8], index: 2, kind: input, shape index: {}]
  %s3 = inlined_call_operand.vmem [shape: bf16[72,8], index: 3, kind: input, shape index: {}]
  %s4 = inlined_call_operand.vmem [shape: f32[1,8], index: 4, kind: input, shape index: {}]
  %s5 = inlined_call_operand.vmem [shape: f32[2,8,16,8], index: 5, kind: output, shape index: {}]
  %s6 = sld [smem:[#allocation0]]
  $region53: #{unet_forward.7} parent=0
    _
  %s8 = ssub.s32 1, %s6
  %s9 = scalar_select 0, %s8, %s6
  loop: start=0, step=1, limit=4
  $region2: #{unet_forward.7} parent=0 // loop_pre_header
    _
  $region3: #{unet_forward.7} parent=0 // loop_header
    %s11 = sphi 0, %s15
    %p12 = scmp.ge.s32.totalorder %s11, 4
    %s21 = sphi 0, %s23
    %s24 = sphi 0, %s21
    %s25 = sphi 0, %s24
    %s41 = sphi 0, %s25
    %s45 = sphi 0, %s45
    %s47 = sphi 0, %s45
    %s48 = sphi 0, %s47
    %s62 = sphi 0, %s48
    %s66 = sphi 0, %s66
    %s68 = sphi 0, %s66
    %s69 = sphi 0, %s68
    %s83 = sphi 0, %s69
    %s87 = sphi 0, %s87
    %s89 = sphi 0, %s87
    %s90 = sphi 0, %s89
    %s104 = sphi 0, %s90
    %s108 = sphi 0, %s108
    %s110 = sphi 0, %s108
    %s111 = sphi 0, %s110
    %s125 = sphi 0, %s111
    %s131 = sphi 0, %s133
    %s134 = sphi 0, %s131
    %s135 = sphi 0, %s134
    %s151 = sphi 0, %s135
  $region4: #{unet_forward.7} parent=0 // loop_header_branch
    %14 = sbr.rel (%p12) target = $region8
  $region5: #{unet_forward.7} parent=0 // loop_body
    %s16 = ssub.s32 %s11, 1
    %s17 = ssub.s32 %s11, 2
    %s18 = sadd.s32 %s11, 1
    %s19 = ssub.s32 %s11, %s18
    %p20 = scmp.eq.s32.totalorder %s19, 0
    %s22 = sadd.s32 %s21, 1
    %s23 = scalar_select %p20, %s21, %s22
    %p26 = pneg %p20
    %p27 = scmp.eq.s32.totalorder %s11, 1
    %p28 = por %p26, %p27
    %p29 = scmp.ne.s32.totalorder %s21, %s24
    %p30 = scmp.eq.s32.totalorder %s11, 0
    %p31 = por %p29, %p30
    %p32 = scmp.ne.s32.totalorder %s21, %s24
    %p33 = scmp.eq.s32.totalorder %s16, 1
    %p34 = por %p32, %p33
    %p35 = scmp.ne.s32.totalorder %s24, %s25
    %p36 = scmp.eq.s32.totalorder %s16, 0
    %p37 = por %p35, %p36
    %p38 = scmp.ne.s32.totalorder %s24, %s25
    %p39 = scmp.eq.s32.totalorder %s17, 1
    %p40 = por %p38, %p39
    %p42 = scmp.ne.s32.totalorder %s25, %s41
    %p43 = scmp.eq.s32.totalorder %s17, 0
    %p44 = por %p42, %p43
    %s46 = sadd.s32 %s45, 1
    %p49 = scmp.eq.s32.totalorder %s11, 1
    %p50 = scmp.ne.s32.totalorder %s45, %s47
    %p51 = scmp.eq.s32.totalorder %s11, 0
    %p52 = por %p50, %p51
    %p53 = scmp.ne.s32.totalorder %s45, %s47
    %p54 = scmp.eq.s32.totalorder %s16, 1
    %p55 = por %p53, %p54
    %p56 = scmp.ne.s32.totalorder %s47, %s48
    %p57 = scmp.eq.s32.totalorder %s16, 0
    %p58 = por %p56, %p57
    %p59 = scmp.ne.s32.totalorder %s47, %s48
    %p60 = scmp.eq.s32.totalorder %s17, 1
    %p61 = por %p59, %p60
    %p63 = scmp.ne.s32.totalorder %s48, %s62
    %p64 = scmp.eq.s32.totalorder %s17, 0
    %p65 = por %p63, %p64
    %s67 = sadd.s32 %s66, 1
    %p70 = scmp.eq.s32.totalorder %s11, 1
    %p71 = scmp.ne.s32.totalorder %s66, %s68
    %p72 = scmp.eq.s32.totalorder %s11, 0
    %p73 = por %p71, %p72
    %p74 = scmp.ne.s32.totalorder %s66, %s68
    %p75 = scmp.eq.s32.totalorder %s16, 1
    %p76 = por %p74, %p75
    %p77 = scmp.ne.s32.totalorder %s68, %s69
    %p78 = scmp.eq.s32.totalorder %s16, 0
    %p79 = por %p77, %p78
    %p80 = scmp.ne.s32.totalorder %s68, %s69
    %p81 = scmp.eq.s32.totalorder %s17, 1
    %p82 = por %p80, %p81
    %p84 = scmp.ne.s32.totalorder %s69, %s83
    %p85 = scmp.eq.s32.totalorder %s17, 0
    %p86 = por %p84, %p85
    %s88 = sadd.s32 %s87, 1
    %p91 = scmp.eq.s32.totalorder %s11, 1
    %p92 = scmp.ne.s32.totalorder %s87, %s89
    %p93 = scmp.eq.s32.totalorder %s11, 0
    %p94 = por %p92, %p93
    %p95 = scmp.ne.s32.totalorder %s87, %s89
    %p96 = scmp.eq.s32.totalorder %s16, 1
    %p97 = por %p95, %p96
    %p98 = scmp.ne.s32.totalorder %s89, %s90
    %p99 = scmp.eq.s32.totalorder %s16, 0
    %p100 = por %p98, %p99
    %p101 = scmp.ne.s32.totalorder %s89, %s90
    %p102 = scmp.eq.s32.totalorder %s17, 1
    %p103 = por %p101, %p102
    %p105 = scmp.ne.s32.totalorder %s90, %s104
    %p106 = scmp.eq.s32.totalorder %s17, 0
    %p107 = por %p105, %p106
    %s109 = sadd.s32 %s108, 1
    %p112 = scmp.eq.s32.totalorder %s11, 1
    %p113 = scmp.ne.s32.totalorder %s108, %s110
    %p114 = scmp.eq.s32.totalorder %s11, 0
    %p115 = por %p113, %p114
    %p116 = scmp.ne.s32.totalorder %s108, %s110
    %p117 = scmp.eq.s32.totalorder %s16, 1
    %p118 = por %p116, %p117
    %p119 = scmp.ne.s32.totalorder %s110, %s111
    %p120 = scmp.eq.s32.totalorder %s16, 0
    %p121 = por %p119, %p120
    %p122 = scmp.ne.s32.totalorder %s110, %s111
    %p123 = scmp.eq.s32.totalorder %s17, 1
    %p124 = por %p122, %p123
    %p126 = scmp.ne.s32.totalorder %s111, %s125
    %p127 = scmp.eq.s32.totalorder %s17, 0
    %p128 = por %p126, %p127
    %s129 = ssub.s32 %s11, %s18
    %p130 = scmp.eq.s32.totalorder %s129, 0
    %s132 = sadd.s32 %s131, 1
    %s133 = scalar_select %p130, %s131, %s132
    %p136 = pneg %p130
    %p137 = scmp.eq.s32.totalorder %s11, 1
    %p138 = por %p136, %p137
    %p139 = scmp.ne.s32.totalorder %s131, %s134
    %p140 = scmp.eq.s32.totalorder %s11, 0
    %p141 = por %p139, %p140
    %p142 = scmp.ne.s32.totalorder %s131, %s134
    %p143 = scmp.eq.s32.totalorder %s16, 1
    %p144 = por %p142, %p143
    %p145 = scmp.ne.s32.totalorder %s134, %s135
    %p146 = scmp.eq.s32.totalorder %s16, 0
    %p147 = por %p145, %p146
    %p148 = scmp.ne.s32.totalorder %s134, %s135
    %p149 = scmp.eq.s32.totalorder %s17, 1
    %p150 = por %p148, %p149
    %p152 = scmp.ne.s32.totalorder %s135, %s151
    %p153 = scmp.eq.s32.totalorder %s17, 0
    %p154 = por %p152, %p153
    %p155 = scmp.le.s32.totalorder 1, %s11
    %p156 = scmp.lt.s32.totalorder %s11, 3
    %p157 = pnand %p155, %p156
    %p158 = pneg %p157
    // Predicated region
    $region9: #{unet_forward.7} parent=5 // pred_check
      _
    $region10: #{unet_forward.7} parent=5 // pred_check_branch
      %160 = sbr.rel (%p157) target = $region12
    $region11: #{unet_forward.7} parent=5 // pred_region
      %s161 = ssub.s32 %s11, 1
      // Predicated region
      $region13: #{unet_forward.7} parent=11 // pred_check
        %p162 = pneg %p58
      $region14: #{unet_forward.7} parent=11 // pred_check_branch
        %164 = sbr.rel (%p162) target = $region16
      $region15: #{unet_forward.7} parent=11 // pred_region
        _
      $region16: #{unet_forward.7} parent=11 // pred_fallthru
        _
      // Predicated region
      $region17: #{unet_forward.7} parent=11 // pred_check
        %p165 = pneg %p79
      $region18: #{unet_forward.7} parent=11 // pred_check_branch
        %167 = sbr.rel (%p165) target = $region20
      $region19: #{unet_forward.7} parent=11 // pred_region
        _
      $region20: #{unet_forward.7} parent=11 // pred_fallthru
        _
      // Predicated region
      $region21: #{unet_forward.7} parent=11 // pred_check
        %p168 = pneg %p100
      $region22: #{unet_forward.7} parent=11 // pred_check_branch
        %170 = sbr.rel (%p168) target = $region24
      $region23: #{unet_forward.7} parent=11 // pred_region
        _
      $region24: #{unet_forward.7} parent=11 // pred_fallthru
        _
      // Predicated region
      $region25: #{unet_forward.7} parent=11 // pred_check
        %p171 = pneg %p121
      $region26: #{unet_forward.7} parent=11 // pred_check_branch
        %173 = sbr.rel (%p171) target = $region28
      $region27: #{unet_forward.7} parent=11 // pred_region
        _
      $region28: #{unet_forward.7} parent=11 // pred_fallthru
        _
    $region12: #{unet_forward.7} parent=5 // pred_fallthru
      _
    %p174 = scmp.lt.s32.totalorder %s11, 2
    // Predicated region
    $region29: #{unet_forward.7} parent=5 // pred_check
      %p175 = pneg %p174
    $region30: #{unet_forward.7} parent=5 // pred_check_branch
      %177 = sbr.rel (%p175) target = $region32
    $region31: #{unet_forward.7} parent=5 // pred_region
      // Predicated region
      $region33: #{unet_forward.7} parent=31 // pred_check
        %p178 = pneg %p31
      $region34: #{unet_forward.7} parent=31 // pred_check_branch
        %180 = sbr.rel (%p178) target = $region36
      $region35: #{unet_forward.7} parent=31 // pred_region
        %p181 = scmp.lt.s32.totalorder %s11, 1
        %s182 = scalar_select %p181, %s11, 1
        %s183 = smul.addr %s182, 32
        %s184 = smul.addr %s183, 8
        %s185 = scalar_lea.vmem %s0, %s184
      $region36: #{unet_forward.7} parent=31 // pred_fallthru
        _
    $region32: #{unet_forward.7} parent=5 // pred_fallthru
      _
    %p186 = scmp.le.s32.totalorder 1, %s11
    %p187 = scmp.lt.s32.totalorder %s11, 3
    %p188 = pnand %p186, %p187
    %p189 = pneg %p188
    // Predicated region
    $region37: #{unet_forward.7} parent=5 // pred_check
      _
    $region38: #{unet_forward.7} parent=5 // pred_check_branch
      %191 = sbr.rel (%p188) target = $region40
    $region39: #{unet_forward.7} parent=5 // pred_region
      %s192 = ssub.s32 %s11, 1
      %p193 = scmp.lt.s32.totalorder %s16, 1
      %s194 = scalar_select %p193, %s16, 1
      %s195 = smul.addr %s194, 32
      %s196 = smul.addr %s195, 8
      %s197 = scalar_lea.vmem %s0, %s196
      %p198 = pneg %p37
      %p199 = pneg %p34
      %p200 = pneg %p58
      %p201 = pneg %p55
      %p202 = pneg %p79
      %p203 = pneg %p76
      %p204 = pneg %p100
      %p205 = pneg %p97
      %p206 = pneg %p121
      %p207 = pneg %p118
      %p208 = pneg %p147
      %p209 = pneg %p144
      %p210 = scmp.lt.s32.totalorder %s16, 1
      %s211 = scalar_select %p210, %s16, 1
      %s212 = smul.addr %s211, 16
      %s213 = smul.addr %s212, 8
      %s214 = scalar_lea.vmem %s5, %s213
      %p215 = scmp.lt.s32.totalorder %s16, 1
      %s216 = scalar_select %p215, %s16, 1
      %s217 = smul.addr %s216, 32
      %s218 = smul.addr %s217, 8
      %s219 = scalar_lea.vmem %s0, %s218
      %p220 = scmp.lt.s32.totalorder %s16, 1
      %s221 = scalar_select %p220, %s16, 1
      %s222 = smul.addr %s221, 16
      %s223 = smul.addr %s222, 8
      %s224 = scalar_lea.vmem %s5, %s223
      %vm226 = vcmask 7168
      %227 = vst.msk [vmem:[#allocation2] sm:$0xff] %vm226, 0.0
      %228 = vst.msk [vmem:[#allocation2 + $0x8] sm:$0xff] %vm226, 0.0
      %vm229 = vcmask 1024
      %230 = vst.msk [vmem:[#allocation2 + $0x10] sm:$0x3] %vm229, 0.0
      %231 = vst.msk [vmem:[#allocation2 + $0x18] sm:$0xff] %vm226, 0.0
      %232 = vst.msk [vmem:[#allocation2 + $0x20] sm:$0xff] %vm226, 0.0
      %233 = vst.msk [vmem:[#allocation2 + $0x28] sm:$0x3] %vm229, 0.0
      %234 = vst.msk [vmem:[#allocation2 + $0x30] sm:$0xff] %vm226, 0.0
      %235 = vst.msk [vmem:[#allocation2 + $0x38] sm:$0xff] %vm226, 0.0
      %236 = vst.msk [vmem:[#allocation2 + $0x40] sm:$0x3] %vm229, 0.0
      %237 = vst.msk [vmem:[#allocation2 + $0x48] sm:$0xff] %vm226, 0.0
      %238 = vst.msk [vmem:[#allocation2 + $0x50] sm:$0xff] %vm226, 0.0
      %239 = vst.msk [vmem:[#allocation2 + $0x58] sm:$0x3] %vm229, 0.0
      %240 = vst.msk [vmem:[#allocation2 + $0x60] sm:$0xff] %vm226, 0.0
      %241 = vst.msk [vmem:[#allocation2 + $0x68] sm:$0xff] %vm226, 0.0
      %242 = vst.msk [vmem:[#allocation2 + $0x70] sm:$0x3] %vm229, 0.0
      %243 = vst.msk [vmem:[#allocation2 + $0x78] sm:$0xff] %vm226, 0.0
      %244 = vst.msk [vmem:[#allocation2 + $0x80] sm:$0xff] %vm226, 0.0
      %245 = vst.msk [vmem:[#allocation2 + $0x88] sm:$0x3] %vm229, 0.0
      %246 = vst.msk [vmem:[#allocation2 + $0x90] sm:$0xff] %vm226, 0.0
      %247 = vst.msk [vmem:[#allocation2 + $0x98] sm:$0xff] %vm226, 0.0
      %248 = vst.msk [vmem:[#allocation2 + $0xa0] sm:$0x3] %vm229, 0.0
      %249 = vst.msk [vmem:[#allocation2 + $0xa8] sm:$0xff] %vm226, 0.0
      %250 = vst.msk [vmem:[#allocation2 + $0xb0] sm:$0xff] %vm226, 0.0
      %251 = vst.msk [vmem:[#allocation2 + $0xb8] sm:$0x3] %vm229, 0.0
      %252 = vst.msk [vmem:[#allocation2 + $0xc0] sm:$0xff] %vm226, 0.0
      %253 = vst.msk [vmem:[#allocation2 + $0xc8] sm:$0xff] %vm226, 0.0
      %254 = vst.msk [vmem:[#allocation2 + $0xd0] sm:$0x3] %vm229, 0.0
      %255 = vst.msk [vmem:[#allocation2 + $0xd8] sm:$0xff] %vm226, 0.0
      %256 = vst.msk [vmem:[#allocation2 + $0xe0] sm:$0xff] %vm226, 0.0
      %257 = vst.msk [vmem:[#allocation2 + $0xe8] sm:$0x3] %vm229, 0.0
      %258 = vst.msk [vmem:[#allocation2 + $0xf0] sm:$0xff] %vm226, 0.0
      %259 = vst.msk [vmem:[#allocation2 + $0xf8] sm:$0xff] %vm226, 0.0
      %260 = vst.msk [vmem:[#allocation2 + $0x100] sm:$0x3] %vm229, 0.0
      %261 = vst.msk [vmem:[#allocation2 + $0x108] sm:$0xff] %vm226, 0.0
      %262 = vst.msk [vmem:[#allocation2 + $0x110] sm:$0xff] %vm226, 0.0
      %263 = vst.msk [vmem:[#allocation2 + $0x118] sm:$0x3] %vm229, 0.0
      %264 = vst.msk [vmem:[#allocation2 + $0x120] sm:$0xff] %vm226, 0.0
      %265 = vst.msk [vmem:[#allocation2 + $0x128] sm:$0xff] %vm226, 0.0
      %266 = vst.msk [vmem:[#allocation2 + $0x130] sm:$0x3] %vm229, 0.0
      %267 = vst.msk [vmem:[#allocation2 + $0x138] sm:$0xff] %vm226, 0.0
      %268 = vst.msk [vmem:[#allocation2 + $0x140] sm:$0xff] %vm226, 0.0
      %269 = vst.msk [vmem:[#allocation2 + $0x148] sm:$0x3] %vm229, 0.0
      %270 = vst.msk [vmem:[#allocation2 + $0x150] sm:$0xff] %vm226, 0.0
      %271 = vst.msk [vmem:[#allocation2 + $0x158] sm:$0xff] %vm226, 0.0
      %272 = vst.msk [vmem:[#allocation2 + $0x160] sm:$0x3] %vm229, 0.0
      %273 = vst.msk [vmem:[#allocation2 + $0x168] sm:$0xff] %vm226, 0.0
      %274 = vst.msk [vmem:[#allocation2 + $0x170] sm:$0xff] %vm226, 0.0
      %275 = vst.msk [vmem:[#allocation2 + $0x178] sm:$0x3] %vm229, 0.0
      %276 = vst.msk [vmem:[#allocation2 + $0x180] sm:$0xff] %vm226, 0.0
      %277 = vst.msk [vmem:[#allocation2 + $0x188] sm:$0xff] %vm226, 0.0
      %278 = vst.msk [vmem:[#allocation2 + $0x190] sm:$0x3] %vm229, 0.0
      %279 = vst.msk [vmem:[#allocation2 + $0x198] sm:$0xff] %vm226, 0.0
      %280 = vst.msk [vmem:[#allocation2 + $0x1a0] sm:$0xff] %vm226, 0.0
      %281 = vst.msk [vmem:[#allocation2 + $0x1a8] sm:$0x3] %vm229, 0.0
      %v282 = vld [vmem:[%s219] sm:$0xff]
      %v283 = vld [vmem:[%s219 + $0x8] sm:$0xff]
      %v284 = vld [vmem:[%s219 + $0x10] sm:$0xff]
      %v285 = vld [vmem:[%s219 + $0x18] sm:$0xff]
      %v286 = vld [vmem:[%s219 + $0x20] sm:$0xff]
      %v287 = vld [vmem:[%s219 + $0x28] sm:$0xff]
      %v288 = vld [vmem:[%s219 + $0x30] sm:$0xff]
      %v289 = vld [vmem:[%s219 + $0x38] sm:$0xff]
      %v290 = vld [vmem:[%s219 + $0x40] sm:$0xff]
      %v291 = vld [vmem:[%s219 + $0x48] sm:$0xff]
      %v292 = vld [vmem:[%s219 + $0x50] sm:$0xff]
      %v293 = vld [vmem:[%s219 + $0x58] sm:$0xff]
      %v294 = vld [vmem:[%s219 + $0x60] sm:$0xff]
      %v295 = vld [vmem:[%s219 + $0x68] sm:$0xff]
      %v296 = vld [vmem:[%s219 + $0x70] sm:$0xff]
      %v297 = vld [vmem:[%s219 + $0x78] sm:$0xff]
      %v298 = vld [vmem:[%s219 + $0x80] sm:$0xff]
      %v299 = vld [vmem:[%s219 + $0x88] sm:$0xff]
      %v300 = vld [vmem:[%s219 + $0x90] sm:$0xff]
      %v301 = vld [vmem:[%s219 + $0x98] sm:$0xff]
      %v302 = vld [vmem:[%s219 + $0xa0] sm:$0xff]
      %v303 = vld [vmem:[%s219 + $0xa8] sm:$0xff]
      %v304 = vld [vmem:[%s219 + $0xb0] sm:$0xff]
      %v305 = vld [vmem:[%s219 + $0xb8] sm:$0xff]
      %v306 = vld [vmem:[%s219 + $0xc0] sm:$0xff]
      %v307 = vld [vmem:[%s219 + $0xc8] sm:$0xff]
      %v308 = vld [vmem:[%s219 + $0xd0] sm:$0xff]
      %v309 = vld [vmem:[%s219 + $0xd8] sm:$0xff]
      %v310 = vld [vmem:[%s219 + $0xe0] sm:$0xff]
      %v311 = vld [vmem:[%s219 + $0xe8] sm:$0xff]
      %v312 = vld [vmem:[%s219 + $0xf0] sm:$0xff]
      %v313 = vld [vmem:[%s219 + $0xf8] sm:$0xff]
      %s314 = scalar_lea.vmem [#allocation2], 24
      %315 = vst.msk [vmem:[%s314 + $0x1] sm:$0xff] %vm226, %v282
      %316 = vst.msk [vmem:[%s314 + $0x9] sm:$0xff] %vm226, %v283
      %317 = vst.msk [vmem:[%s314 + $0x19] sm:$0xff] %vm226, %v284
      %318 = vst.msk [vmem:[%s314 + $0x21] sm:$0xff] %vm226, %v285
      %319 = vst.msk [vmem:[%s314 + $0x31] sm:$0xff] %vm226, %v286
      %320 = vst.msk [vmem:[%s314 + $0x39] sm:$0xff] %vm226, %v287
      %321 = vst.msk [vmem:[%s314 + $0x49] sm:$0xff] %vm226, %v288
      %322 = vst.msk [vmem:[%s314 + $0x51] sm:$0xff] %vm226, %v289
      %323 = vst.msk [vmem:[%s314 + $0x61] sm:$0xff] %vm226, %v290
      %324 = vst.msk [vmem:[%s314 + $0x69] sm:$0xff] %vm226, %v291
      %325 = vst.msk [vmem:[%s314 + $0x79] sm:$0xff] %vm226, %v292
      %326 = vst.msk [vmem:[%s314 + $0x81] sm:$0xff] %vm226, %v293
      %327 = vst.msk [vmem:[%s314 + $0x91] sm:$0xff] %vm226, %v294
      %328 = vst.msk [vmem:[%s314 + $0x99] sm:$0xff] %vm226, %v295
      %329 = vst.msk [vmem:[%s314 + $0xa9] sm:$0xff] %vm226, %v296
      %330 = vst.msk [vmem:[%s314 + $0xb1] sm:$0xff] %vm226, %v297
      %331 = vst.msk [vmem:[%s314 + $0xc1] sm:$0xff] %vm226, %v298
      %332 = vst.msk [vmem:[%s314 + $0xc9] sm:$0xff] %vm226, %v299
      %333 = vst.msk [vmem:[%s314 + $0xd9] sm:$0xff] %vm226, %v300
      %334 = vst.msk [vmem:[%s314 + $0xe1] sm:$0xff] %vm226, %v301
      %335 = vst.msk [vmem:[%s314 + $0xf1] sm:$0xff] %vm226, %v302
      %336 = vst.msk [vmem:[%s314 + $0xf9] sm:$0xff] %vm226, %v303
      %337 = vst.msk [vmem:[%s314 + $0x109] sm:$0xff] %vm226, %v304
      %338 = vst.msk [vmem:[%s314 + $0x111] sm:$0xff] %vm226, %v305
      %339 = vst.msk [vmem:[%s314 + $0x121] sm:$0xff] %vm226, %v306
      %340 = vst.msk [vmem:[%s314 + $0x129] sm:$0xff] %vm226, %v307
      %341 = vst.msk [vmem:[%s314 + $0x139] sm:$0xff] %vm226, %v308
      %342 = vst.msk [vmem:[%s314 + $0x141] sm:$0xff] %vm226, %v309
      %343 = vst.msk [vmem:[%s314 + $0x151] sm:$0xff] %vm226, %v310
      %344 = vst.msk [vmem:[%s314 + $0x159] sm:$0xff] %vm226, %v311
      %345 = vst.msk [vmem:[%s314 + $0x169] sm:$0xff] %vm226, %v312
      %346 = vst.msk [vmem:[%s314 + $0x171] sm:$0xff] %vm226, %v313
      %v347 = vld [vmem:[#allocation2] sm:$0xff]
      %v348 = vld [vmem:[#allocation2 + $0x8] sm:$0xff]
      %v349 = vld [vmem:[#allocation2 + $0x18] sm:$0xff]
      %v350 = vld [vmem:[#allocation2 + $0x20] sm:$0xff]
      %v351 = vld [vmem:[#allocation2 + $0x30] sm:$0xff]
      %v352 = vld [vmem:[#allocation2 + $0x38] sm:$0xff]
      %v353 = vld [vmem:[#allocation2 + $0x48] sm:$0xff]
      %v354 = vld [vmem:[#allocation2 + $0x50] sm:$0xff]
      %v355 = vld [vmem:[#allocation2 + $0x60] sm:$0xff]
      %v356 = vld [vmem:[#allocation2 + $0x68] sm:$0xff]
      %v357 = vld [vmem:[#allocation2 + $0x78] sm:$0xff]
      %v358 = vld [vmem:[#allocation2 + $0x80] sm:$0xff]
      %v359 = vld [vmem:[#allocation2 + $0x90] sm:$0xff]
      %v360 = vld [vmem:[#allocation2 + $0x98] sm:$0xff]
      %v361 = vld [vmem:[#allocation2 + $0xa8] sm:$0xff]
      %v362 = vld [vmem:[#allocation2 + $0xb0] sm:$0xff]
      %v363 = vld [vmem:[#allocation2 + $0xc0] sm:$0xff]
      %v364 = vld [vmem:[#allocation2 + $0xc8] sm:$0xff]
      %v365 = vld [vmem:[#allocation2 + $0xd8] sm:$0xff]
      %v366 = vld [vmem:[#allocation2 + $0xe0] sm:$0xff]
      %v367 = vld [vmem:[#allocation2 + $0xf0] sm:$0xff]
      %v368 = vld [vmem:[#allocation2 + $0xf8] sm:$0xff]
      %v369 = vld [vmem:[#allocation2 + $0x108] sm:$0xff]
      %v370 = vld [vmem:[#allocation2 + $0x110] sm:$0xff]
      %v371 = vld [vmem:[#allocation2 + $0x120] sm:$0xff]
      %v372 = vld [vmem:[#allocation2 + $0x128] sm:$0xff]
      %v373 = vld [vmem:[#allocation2 + $0x138] sm:$0xff]
      %v374 = vld [vmem:[#allocation2 + $0x140] sm:$0xff]
      %v375 = vld [vmem:[#allocation2 + $0x150] sm:$0xff]
      %v376 = vld [vmem:[#allocation2 + $0x158] sm:$0xff]
      %v377 = vld [vmem:[#allocation2 + $0x168] sm:$0xff]
      %v378 = vld [vmem:[#allocation2 + $0x170] sm:$0xff]
      %v379 = vld [vmem:[#allocation2 + $0x1] sm:$0xff]
      %v380 = vld [vmem:[#allocation2 + $0x9] sm:$0xff]
      %v381 = vld [vmem:[#allocation2 + $0x19] sm:$0xff]
      %v382 = vld [vmem:[#allocation2 + $0x21] sm:$0xff]
      %v383 = vld [vmem:[#allocation2 + $0x31] sm:$0xff]
      %v384 = vld [vmem:[#allocation2 + $0x39] sm:$0xff]
      %v385 = vld [vmem:[#allocation2 + $0x49] sm:$0xff]
      %v386 = vld [vmem:[#allocation2 + $0x51] sm:$0xff]
      %v387 = vld [vmem:[#allocation2 + $0x61] sm:$0xff]
      %v388 = vld [vmem:[#allocation2 + $0x69] sm:$0xff]
      %v389 = vld [vmem:[#allocation2 + $0x79] sm:$0xff]
      %v390 = vld [vmem:[#allocation2 + $0x81] sm:$0xff]
      %v391 = vld [vmem:[#allocation2 + $0x91] sm:$0xff]
      %v392 = vld [vmem:[#allocation2 + $0x99] sm:$0xff]
      %v393 = vld [vmem:[#allocation2 + $0xa9] sm:$0xff]
      %v394 = vld [vmem:[#allocation2 + $0xb1] sm:$0xff]
      %v395 = vld [vmem:[#allocation2 + $0xc1] sm:$0xff]
      %v396 = vld [vmem:[#allocation2 + $0xc9] sm:$0xff]
      %v397 = vld [vmem:[#allocation2 + $0xd9] sm:$0xff]
      %v398 = vld [vmem:[#allocation2 + $0xe1] sm:$0xff]
      %v399 = vld [vmem:[#allocation2 + $0xf1] sm:$0xff]
      %v400 = vld [vmem:[#allocation2 + $0xf9] sm:$0xff]
      %v401 = vld [vmem:[#allocation2 + $0x109] sm:$0xff]
      %v402 = vld [vmem:[#allocation2 + $0x111] sm:$0xff]
      %v403 = vld [vmem:[#allocation2 + $0x121] sm:$0xff]
      %v404 = vld [vmem:[#allocation2 + $0x129] sm:$0xff]
      %v405 = vld [vmem:[#allocation2 + $0x139] sm:$0xff]
      %v406 = vld [vmem:[#allocation2 + $0x141] sm:$0xff]
      %v407 = vld [vmem:[#allocation2 + $0x151] sm:$0xff]
      %v408 = vld [vmem:[#allocation2 + $0x159] sm:$0xff]
      %v409 = vld [vmem:[#allocation2 + $0x169] sm:$0xff]
      %v410 = vld [vmem:[#allocation2 + $0x171] sm:$0xff]
      %v411 = vld [vmem:[#allocation2 + $0x2] sm:$0xff]
      %v412 = vld [vmem:[#allocation2 + $0xa] sm:$0xff]
      %v413 = vld [vmem:[#allocation2 + $0x1a] sm:$0xff]
      %v414 = vld [vmem:[#allocation2 + $0x22] sm:$0xff]
      %v415 = vld [vmem:[#allocation2 + $0x32] sm:$0xff]
      %v416 = vld [vmem:[#allocation2 + $0x3a] sm:$0xff]
      %v417 = vld [vmem:[#allocation2 + $0x4a] sm:$0xff]
      %v418 = vld [vmem:[#allocation2 + $0x52] sm:$0xff]
      %v419 = vld [vmem:[#allocation2 + $0x62] sm:$0xff]
      %v420 = vld [vmem:[#allocation2 + $0x6a] sm:$0xff]
      %v421 = vld [vmem:[#allocation2 + $0x7a] sm:$0xff]
      %v422 = vld [vmem:[#allocation2 + $0x82] sm:$0xff]
      %v423 = vld [vmem:[#allocation2 + $0x92] sm:$0xff]
      %v424 = vld [vmem:[#allocation2 + $0x9a] sm:$0xff]
      %v425 = vld [vmem:[#allocation2 + $0xaa] sm:$0xff]
      %v426 = vld [vmem:[#allocation2 + $0xb2] sm:$0xff]
      %v427 = vld [vmem:[#allocation2 + $0xc2] sm:$0xff]
      %v428 = vld [vmem:[#allocation2 + $0xca] sm:$0xff]
      %v429 = vld [vmem:[#allocation2 + $0xda] sm:$0xff]
      %v430 = vld [vmem:[#allocation2 + $0xe2] sm:$0xff]
      %v431 = vld [vmem:[#allocation2 + $0xf2] sm:$0xff]
      %v432 = vld [vmem:[#allocation2 + $0xfa] sm:$0xff]
      %v433 = vld [vmem:[#allocation2 + $0x10a] sm:$0xff]
      %v434 = vld [vmem:[#allocation2 + $0x112] sm:$0xff]
      %v435 = vld [vmem:[#allocation2 + $0x122] sm:$0xff]
      %v436 = vld [vmem:[#allocation2 + $0x12a] sm:$0xff]
      %v437 = vld [vmem:[#allocation2 + $0x13a] sm:$0xff]
      %v438 = vld [vmem:[#allocation2 + $0x142] sm:$0xff]
      %v439 = vld [vmem:[#allocation2 + $0x152] sm:$0xff]
      %v440 = vld [vmem:[#allocation2 + $0x15a] sm:$0xff]
      %v441 = vld [vmem:[#allocation2 + $0x16a] sm:$0xff]
      %v442 = vld [vmem:[#allocation2 + $0x172] sm:$0xff]
      %v443 = vld [vmem:[%s314] sm:$0xff]
      %v444 = vld [vmem:[%s314 + $0x8] sm:$0xff]
      %v445 = vld [vmem:[%s314 + $0x18] sm:$0xff]
      %v446 = vld [vmem:[%s314 + $0x20] sm:$0xff]
      %v447 = vld [vmem:[%s314 + $0x30] sm:$0xff]
      %v448 = vld [vmem:[%s314 + $0x38] sm:$0xff]
      %v449 = vld [vmem:[%s314 + $0x48] sm:$0xff]
      %v450 = vld [vmem:[%s314 + $0x50] sm:$0xff]
      %v451 = vld [vmem:[%s314 + $0x60] sm:$0xff]
      %v452 = vld [vmem:[%s314 + $0x68] sm:$0xff]
      %v453 = vld [vmem:[%s314 + $0x78] sm:$0xff]
      %v454 = vld [vmem:[%s314 + $0x80] sm:$0xff]
      %v455 = vld [vmem:[%s314 + $0x90] sm:$0xff]
      %v456 = vld [vmem:[%s314 + $0x98] sm:$0xff]
      %v457 = vld [vmem:[%s314 + $0xa8] sm:$0xff]
      %v458 = vld [vmem:[%s314 + $0xb0] sm:$0xff]
      %v459 = vld [vmem:[%s314 + $0xc0] sm:$0xff]
      %v460 = vld [vmem:[%s314 + $0xc8] sm:$0xff]
      %v461 = vld [vmem:[%s314 + $0xd8] sm:$0xff]
      %v462 = vld [vmem:[%s314 + $0xe0] sm:$0xff]
      %v463 = vld [vmem:[%s314 + $0xf0] sm:$0xff]
      %v464 = vld [vmem:[%s314 + $0xf8] sm:$0xff]
      %v465 = vld [vmem:[%s314 + $0x108] sm:$0xff]
      %v466 = vld [vmem:[%s314 + $0x110] sm:$0xff]
      %v467 = vld [vmem:[%s314 + $0x120] sm:$0xff]
      %v468 = vld [vmem:[%s314 + $0x128] sm:$0xff]
      %v469 = vld [vmem:[%s314 + $0x138] sm:$0xff]
      %v470 = vld [vmem:[%s314 + $0x140] sm:$0xff]
      %v471 = vld [vmem:[%s314 + $0x150] sm:$0xff]
      %v472 = vld [vmem:[%s314 + $0x158] sm:$0xff]
      %v473 = vld [vmem:[%s314 + $0x168] sm:$0xff]
      %v474 = vld [vmem:[%s314 + $0x170] sm:$0xff]
      %v475 = vld [vmem:[%s314 + $0x1] sm:$0xff]
      %v476 = vld [vmem:[%s314 + $0x9] sm:$0xff]
      %v477 = vld [vmem:[%s314 + $0x19] sm:$0xff]
      %v478 = vld [vmem:[%s314 + $0x21] sm:$0xff]
      %v479 = vld [vmem:[%s314 + $0x31] sm:$0xff]
      %v480 = vld [vmem:[%s314 + $0x39] sm:$0xff]
      %v481 = vld [vmem:[%s314 + $0x49] sm:$0xff]
      %v482 = vld [vmem:[%s314 + $0x51] sm:$0xff]
      %v483 = vld [vmem:[%s314 + $0x61] sm:$0xff]
      %v484 = vld [vmem:[%s314 + $0x69] sm:$0xff]
      %v485 = vld [vmem:[%s314 + $0x79] sm:$0xff]
      %v486 = vld [vmem:[%s314 + $0x81] sm:$0xff]
      %v487 = vld [vmem:[%s314 + $0x91] sm:$0xff]
      %v488 = vld [vmem:[%s314 + $0x99] sm:$0xff]
      %v489 = vld [vmem:[%s314 + $0xa9] sm:$0xff]
      %v490 = vld [vmem:[%s314 + $0xb1] sm:$0xff]
      %v491 = vld [vmem:[%s314 + $0xc1] sm:$0xff]
      %v492 = vld [vmem:[%s314 + $0xc9] sm:$0xff]
      %v493 = vld [vmem:[%s314 + $0xd9] sm:$0xff]
      %v494 = vld [vmem:[%s314 + $0xe1] sm:$0xff]
      %v495 = vld [vmem:[%s314 + $0xf1] sm:$0xff]
      %v496 = vld [vmem:[%s314 + $0xf9] sm:$0xff]
      %v497 = vld [vmem:[%s314 + $0x109] sm:$0xff]
      %v498 = vld [vmem:[%s314 + $0x111] sm:$0xff]
      %v499 = vld [vmem:[%s314 + $0x121] sm:$0xff]
      %v500 = vld [vmem:[%s314 + $0x129] sm:$0xff]
      %v501 = vld [vmem:[%s314 + $0x139] sm:$0xff]
      %v502 = vld [vmem:[%s314 + $0x141] sm:$0xff]
      %v503 = vld [vmem:[%s314 + $0x151] sm:$0xff]
      %v504 = vld [vmem:[%s314 + $0x159] sm:$0xff]
      %v505 = vld [vmem:[%s314 + $0x169] sm:$0xff]
      %v506 = vld [vmem:[%s314 + $0x171] sm:$0xff]
      %v507 = vld [vmem:[%s314 + $0x2] sm:$0xff]
      %v508 = vld [vmem:[%s314 + $0xa] sm:$0xff]
      %v509 = vld [vmem:[%s314 + $0x1a] sm:$0xff]
      %v510 = vld [vmem:[%s314 + $0x22] sm:$0xff]
      %v511 = vld [vmem:[%s314 + $0x32] sm:$0xff]
      %v512 = vld [vmem:[%s314 + $0x3a] sm:$0xff]
      %v513 = vld [vmem:[%s314 + $0x4a] sm:$0xff]
      %v514 = vld [vmem:[%s314 + $0x52] sm:$0xff]
      %v515 = vld [vmem:[%s314 + $0x62] sm:$0xff]
      %v516 = vld [vmem:[%s314 + $0x6a] sm:$0xff]
      %v517 = vld [vmem:[%s314 + $0x7a] sm:$0xff]
      %v518 = vld [vmem:[%s314 + $0x82] sm:$0xff]
      %v519 = vld [vmem:[%s314 + $0x92] sm:$0xff]
      %v520 = vld [vmem:[%s314 + $0x9a] sm:$0xff]
      %v521 = vld [vmem:[%s314 + $0xaa] sm:$0xff]
      %v522 = vld [vmem:[%s314 + $0xb2] sm:$0xff]
      %v523 = vld [vmem:[%s314 + $0xc2] sm:$0xff]
      %v524 = vld [vmem:[%s314 + $0xca] sm:$0xff]
      %v525 = vld [vmem:[%s314 + $0xda] sm:$0xff]
      %v526 = vld [vmem:[%s314 + $0xe2] sm:$0xff]
      %v527 = vld [vmem:[%s314 + $0xf2] sm:$0xff]
      %v528 = vld [vmem:[%s314 + $0xfa] sm:$0xff]
      %v529 = vld [vmem:[%s314 + $0x10a] sm:$0xff]
      %v530 = vld [vmem:[%s314 + $0x112] sm:$0xff]
      %v531 = vld [vmem:[%s314 + $0x122] sm:$0xff]
      %v532 = vld [vmem:[%s314 + $0x12a] sm:$0xff]
      %v533 = vld [vmem:[%s314 + $0x13a] sm:$0xff]
      %v534 = vld [vmem:[%s314 + $0x142] sm:$0xff]
      %v535 = vld [vmem:[%s314 + $0x152] sm:$0xff]
      %v536 = vld [vmem:[%s314 + $0x15a] sm:$0xff]
      %v537 = vld [vmem:[%s314 + $0x16a] sm:$0xff]
      %v538 = vld [vmem:[%s314 + $0x172] sm:$0xff]
      %s539 = scalar_lea.vmem [#allocation2], 48
      %v540 = vld [vmem:[%s539] sm:$0xff]
      %v541 = vld [vmem:[%s539 + $0x8] sm:$0xff]
      %v542 = vld [vmem:[%s539 + $0x18] sm:$0xff]
      %v543 = vld [vmem:[%s539 + $0x20] sm:$0xff]
      %v544 = vld [vmem:[%s539 + $0x30] sm:$0xff]
      %v545 = vld [vmem:[%s539 + $0x38] sm:$0xff]
      %v546 = vld [vmem:[%s539 + $0x48] sm:$0xff]
      %v547 = vld [vmem:[%s539 + $0x50] sm:$0xff]
      %v548 = vld [vmem:[%s539 + $0x60] sm:$0xff]
      %v549 = vld [vmem:[%s539 + $0x68] sm:$0xff]
      %v550 = vld [vmem:[%s539 + $0x78] sm:$0xff]
      %v551 = vld [vmem:[%s539 + $0x80] sm:$0xff]
      %v552 = vld [vmem:[%s539 + $0x90] sm:$0xff]
      %v553 = vld [vmem:[%s539 + $0x98] sm:$0xff]
      %v554 = vld [vmem:[%s539 + $0xa8] sm:$0xff]
      %v555 = vld [vmem:[%s539 + $0xb0] sm:$0xff]
      %v556 = vld [vmem:[%s539 + $0xc0] sm:$0xff]
      %v557 = vld [vmem:[%s539 + $0xc8] sm:$0xff]
      %v558 = vld [vmem:[%s539 + $0xd8] sm:$0xff]
      %v559 = vld [vmem:[%s539 + $0xe0] sm:$0xff]
      %v560 = vld [vmem:[%s539 + $0xf0] sm:$0xff]
      %v561 = vld [vmem:[%s539 + $0xf8] sm:$0xff]
      %v562 = vld [vmem:[%s539 + $0x108] sm:$0xff]
      %v563 = vld [vmem:[%s539 + $0x110] sm:$0xff]
      %v564 = vld [vmem:[%s539 + $0x120] sm:$0xff]
      %v565 = vld [vmem:[%s539 + $0x128] sm:$0xff]
      %v566 = vld [vmem:[%s539 + $0x138] sm:$0xff]
      %v567 = vld [vmem:[%s539 + $0x140] sm:$0xff]
      %v568 = vld [vmem:[%s539 + $0x150] sm:$0xff]
      %v569 = vld [vmem:[%s539 + $0x158] sm:$0xff]
      %v570 = vld [vmem:[%s539 + $0x168] sm:$0xff]
      %v571 = vld [vmem:[%s539 + $0x170] sm:$0xff]
      %v572 = vld [vmem:[%s539 + $0x1] sm:$0xff]
      %v573 = vld [vmem:[%s539 + $0x9] sm:$0xff]
      %v574 = vld [vmem:[%s539 + $0x19] sm:$0xff]
      %v575 = vld [vmem:[%s539 + $0x21] sm:$0xff]
      %v576 = vld [vmem:[%s539 + $0x31] sm:$0xff]
      %v577 = vld [vmem:[%s539 + $0x39] sm:$0xff]
      %v578 = vld [vmem:[%s539 + $0x49] sm:$0xff]
      %v579 = vld [vmem:[%s539 + $0x51] sm:$0xff]
      %v580 = vld [vmem:[%s539 + $0x61] sm:$0xff]
      %v581 = vld [vmem:[%s539 + $0x69] sm:$0xff]
      %v582 = vld [vmem:[%s539 + $0x79] sm:$0xff]
      %v583 = vld [vmem:[%s539 + $0x81] sm:$0xff]
      %v584 = vld [vmem:[%s539 + $0x91] sm:$0xff]
      %v585 = vld [vmem:[%s539 + $0x99] sm:$0xff]
      %v586 = vld [vmem:[%s539 + $0xa9] sm:$0xff]
      %v587 = vld [vmem:[%s539 + $0xb1] sm:$0xff]
      %v588 = vld [vmem:[%s539 + $0xc1] sm:$0xff]
      %v589 = vld [vmem:[%s539 + $0xc9] sm:$0xff]
      %v590 = vld [vmem:[%s539 + $0xd9] sm:$0xff]
      %v591 = vld [vmem:[%s539 + $0xe1] sm:$0xff]
      %v592 = vld [vmem:[%s539 + $0xf1] sm:$0xff]
      %v593 = vld [vmem:[%s539 + $0xf9] sm:$0xff]
      %v594 = vld [vmem:[%s539 + $0x109] sm:$0xff]
      %v595 = vld [vmem:[%s539 + $0x111] sm:$0xff]
      %v596 = vld [vmem:[%s539 + $0x121] sm:$0xff]
      %v597 = vld [vmem:[%s539 + $0x129] sm:$0xff]
      %v598 = vld [vmem:[%s539 + $0x139] sm:$0xff]
      %v599 = vld [vmem:[%s539 + $0x141] sm:$0xff]
      %v600 = vld [vmem:[%s539 + $0x151] sm:$0xff]
      %v601 = vld [vmem:[%s539 + $0x159] sm:$0xff]
      %v602 = vld [vmem:[%s539 + $0x169] sm:$0xff]
      %v603 = vld [vmem:[%s539 + $0x171] sm:$0xff]
      %v604 = vld [vmem:[%s539 + $0x2] sm:$0xff]
      %v605 = vld [vmem:[%s539 + $0xa] sm:$0xff]
      %v606 = vld [vmem:[%s539 + $0x1a] sm:$0xff]
      %v607 = vld [vmem:[%s539 + $0x22] sm:$0xff]
      %v608 = vld [vmem:[%s539 + $0x32] sm:$0xff]
      %v609 = vld [vmem:[%s539 + $0x3a] sm:$0xff]
      %v610 = vld [vmem:[%s539 + $0x4a] sm:$0xff]
      %v611 = vld [vmem:[%s539 + $0x52] sm:$0xff]
      %v612 = vld [vmem:[%s539 + $0x62] sm:$0xff]
      %v613 = vld [vmem:[%s539 + $0x6a] sm:$0xff]
      %v614 = vld [vmem:[%s539 + $0x7a] sm:$0xff]
      %v615 = vld [vmem:[%s539 + $0x82] sm:$0xff]
      %v616 = vld [vmem:[%s539 + $0x92] sm:$0xff]
      %v617 = vld [vmem:[%s539 + $0x9a] sm:$0xff]
      %v618 = vld [vmem:[%s539 + $0xaa] sm:$0xff]
      %v619 = vld [vmem:[%s539 + $0xb2] sm:$0xff]
      %v620 = vld [vmem:[%s539 + $0xc2] sm:$0xff]
      %v621 = vld [vmem:[%s539 + $0xca] sm:$0xff]
      %v622 = vld [vmem:[%s539 + $0xda] sm:$0xff]
      %v623 = vld [vmem:[%s539 + $0xe2] sm:$0xff]
      %v624 = vld [vmem:[%s539 + $0xf2] sm:$0xff]
      %v625 = vld [vmem:[%s539 + $0xfa] sm:$0xff]
      %v626 = vld [vmem:[%s539 + $0x10a] sm:$0xff]
      %v627 = vld [vmem:[%s539 + $0x112] sm:$0xff]
      %v628 = vld [vmem:[%s539 + $0x122] sm:$0xff]
      %v629 = vld [vmem:[%s539 + $0x12a] sm:$0xff]
      %v630 = vld [vmem:[%s539 + $0x13a] sm:$0xff]
      %v631 = vld [vmem:[%s539 + $0x142] sm:$0xff]
      %v632 = vld [vmem:[%s539 + $0x152] sm:$0xff]
      %v633 = vld [vmem:[%s539 + $0x15a] sm:$0xff]
      %v634 = vld [vmem:[%s539 + $0x16a] sm:$0xff]
      %v635 = vld [vmem:[%s539 + $0x172] sm:$0xff]
      %668 = vrot.lane.b32.xlu0 %v379, 1
      %v669 = vpop.permute.xlu0 %668
      %670 = vrot.lane.b32.xlu0 %v380, 1
      %v671 = vpop.permute.xlu0 %670
      %672 = vrot.lane.b32.xlu0 %v381, 1
      %v673 = vpop.permute.xlu0 %672
      %674 = vrot.lane.b32.xlu0 %v382, 1
      %v675 = vpop.permute.xlu0 %674
      %676 = vrot.lane.b32.xlu0 %v383, 1
      %v677 = vpop.permute.xlu0 %676
      %678 = vrot.lane.b32.xlu0 %v384, 1
      %v679 = vpop.permute.xlu0 %678
      %680 = vrot.lane.b32.xlu0 %v385, 1
      %v681 = vpop.permute.xlu0 %680
      %682 = vrot.lane.b32.xlu0 %v386, 1
      %v683 = vpop.permute.xlu0 %682
      %684 = vrot.lane.b32.xlu0 %v387, 1
      %v685 = vpop.permute.xlu0 %684
      %686 = vrot.lane.b32.xlu0 %v388, 1
      %v687 = vpop.permute.xlu0 %686
      %688 = vrot.lane.b32.xlu0 %v389, 1
      %v689 = vpop.permute.xlu0 %688
      %690 = vrot.lane.b32.xlu0 %v390, 1
      %v691 = vpop.permute.xlu0 %690
      %692 = vrot.lane.b32.xlu0 %v391, 1
      %v693 = vpop.permute.xlu0 %692
      %694 = vrot.lane.b32.xlu0 %v392, 1
      %v695 = vpop.permute.xlu0 %694
      %696 = vrot.lane.b32.xlu0 %v393, 1
      %v697 = vpop.permute.xlu0 %696
      %698 = vrot.lane.b32.xlu0 %v394, 1
      %v699 = vpop.permute.xlu0 %698
      %700 = vrot.lane.b32.xlu0 %v395, 1
      %v701 = vpop.permute.xlu0 %700
      %702 = vrot.lane.b32.xlu0 %v396, 1
      %v703 = vpop.permute.xlu0 %702
      %704 = vrot.lane.b32.xlu0 %v397, 1
      %v705 = vpop.permute.xlu0 %704
      %706 = vrot.lane.b32.xlu0 %v398, 1
      %v707 = vpop.permute.xlu0 %706
      %708 = vrot.lane.b32.xlu0 %v399, 1
      %v709 = vpop.permute.xlu0 %708
      %710 = vrot.lane.b32.xlu0 %v400, 1
      %v711 = vpop.permute.xlu0 %710
      %712 = vrot.lane.b32.xlu0 %v401, 1
      %v713 = vpop.permute.xlu0 %712
      %714 = vrot.lane.b32.xlu0 %v402, 1
      %v715 = vpop.permute.xlu0 %714
      %716 = vrot.lane.b32.xlu0 %v403, 1
      %v717 = vpop.permute.xlu0 %716
      %718 = vrot.lane.b32.xlu0 %v404, 1
      %v719 = vpop.permute.xlu0 %718
      %720 = vrot.lane.b32.xlu0 %v405, 1
      %v721 = vpop.permute.xlu0 %720
      %722 = vrot.lane.b32.xlu0 %v406, 1
      %v723 = vpop.permute.xlu0 %722
      %724 = vrot.lane.b32.xlu0 %v407, 1
      %v725 = vpop.permute.xlu0 %724
      %726 = vrot.lane.b32.xlu0 %v408, 1
      %v727 = vpop.permute.xlu0 %726
      %728 = vrot.lane.b32.xlu0 %v409, 1
      %v729 = vpop.permute.xlu0 %728
      %730 = vrot.lane.b32.xlu0 %v410, 1
      %v731 = vpop.permute.xlu0 %730
      %796 = vrot.lane.b32.xlu0 %v411, 2
      %v797 = vpop.permute.xlu0 %796
      %798 = vrot.lane.b32.xlu0 %v412, 2
      %v799 = vpop.permute.xlu0 %798
      %800 = vrot.lane.b32.xlu0 %v413, 2
      %v801 = vpop.permute.xlu0 %800
      %802 = vrot.lane.b32.xlu0 %v414, 2
      %v803 = vpop.permute.xlu0 %802
      %804 = vrot.lane.b32.xlu0 %v415, 2
      %v805 = vpop.permute.xlu0 %804
      %806 = vrot.lane.b32.xlu0 %v416, 2
      %v807 = vpop.permute.xlu0 %806
      %808 = vrot.lane.b32.xlu0 %v417, 2
      %v809 = vpop.permute.xlu0 %808
      %810 = vrot.lane.b32.xlu0 %v418, 2
      %v811 = vpop.permute.xlu0 %810
      %812 = vrot.lane.b32.xlu0 %v419, 2
      %v813 = vpop.permute.xlu0 %812
      %814 = vrot.lane.b32.xlu0 %v420, 2
      %v815 = vpop.permute.xlu0 %814
      %816 = vrot.lane.b32.xlu0 %v421, 2
      %v817 = vpop.permute.xlu0 %816
      %818 = vrot.lane.b32.xlu0 %v422, 2
      %v819 = vpop.permute.xlu0 %818
      %820 = vrot.lane.b32.xlu0 %v423, 2
      %v821 = vpop.permute.xlu0 %820
      %822 = vrot.lane.b32.xlu0 %v424, 2
      %v823 = vpop.permute.xlu0 %822
      %824 = vrot.lane.b32.xlu0 %v425, 2
      %v825 = vpop.permute.xlu0 %824
      %826 = vrot.lane.b32.xlu0 %v426, 2
      %v827 = vpop.permute.xlu0 %826
      %828 = vrot.lane.b32.xlu0 %v427, 2
      %v829 = vpop.permute.xlu0 %828
      %830 = vrot.lane.b32.xlu0 %v428, 2
      %v831 = vpop.permute.xlu0 %830
      %832 = vrot.lane.b32.xlu0 %v429, 2
      %v833 = vpop.permute.xlu0 %832
      %834 = vrot.lane.b32.xlu0 %v430, 2
      %v835 = vpop.permute.xlu0 %834
      %836 = vrot.lane.b32.xlu0 %v431, 2
      %v837 = vpop.permute.xlu0 %836
      %838 = vrot.lane.b32.xlu0 %v432, 2
      %v839 = vpop.permute.xlu0 %838
      %840 = vrot.lane.b32.xlu0 %v433, 2
      %v841 = vpop.permute.xlu0 %840
      %842 = vrot.lane.b32.xlu0 %v434, 2
      %v843 = vpop.permute.xlu0 %842
      %844 = vrot.lane.b32.xlu0 %v435, 2
      %v845 = vpop.permute.xlu0 %844
      %846 = vrot.lane.b32.xlu0 %v436, 2
      %v847 = vpop.permute.xlu0 %846
      %848 = vrot.lane.b32.xlu0 %v437, 2
      %v849 = vpop.permute.xlu0 %848
      %850 = vrot.lane.b32.xlu0 %v438, 2
      %v851 = vpop.permute.xlu0 %850
      %852 = vrot.lane.b32.xlu0 %v439, 2
      %v853 = vpop.permute.xlu0 %852
      %854 = vrot.lane.b32.xlu0 %v440, 2
      %v855 = vpop.permute.xlu0 %854
      %856 = vrot.lane.b32.xlu0 %v441, 2
      %v857 = vpop.permute.xlu0 %856
      %858 = vrot.lane.b32.xlu0 %v442, 2
      %v859 = vpop.permute.xlu0 %858
      %924 = vrot.lane.b32.xlu0 %v443, 3
      %v925 = vpop.permute.xlu0 %924
      %926 = vrot.lane.b32.xlu0 %v444, 3
      %v927 = vpop.permute.xlu0 %926
      %928 = vrot.lane.b32.xlu0 %v445, 3
      %v929 = vpop.permute.xlu0 %928
      %930 = vrot.lane.b32.xlu0 %v446, 3
      %v931 = vpop.permute.xlu0 %930
      %932 = vrot.lane.b32.xlu0 %v447, 3
      %v933 = vpop.permute.xlu0 %932
      %934 = vrot.lane.b32.xlu0 %v448, 3
      %v935 = vpop.permute.xlu0 %934
      %936 = vrot.lane.b32.xlu0 %v449, 3
      %v937 = vpop.permute.xlu0 %936
      %938 = vrot.lane.b32.xlu0 %v450, 3
      %v939 = vpop.permute.xlu0 %938
      %940 = vrot.lane.b32.xlu0 %v451, 3
      %v941 = vpop.permute.xlu0 %940
      %942 = vrot.lane.b32.xlu0 %v452, 3
      %v943 = vpop.permute.xlu0 %942
      %944 = vrot.lane.b32.xlu0 %v453, 3
      %v945 = vpop.permute.xlu0 %944
      %946 = vrot.lane.b32.xlu0 %v454, 3
      %v947 = vpop.permute.xlu0 %946
      %948 = vrot.lane.b32.xlu0 %v455, 3
      %v949 = vpop.permute.xlu0 %948
      %950 = vrot.lane.b32.xlu0 %v456, 3
      %v951 = vpop.permute.xlu0 %950
      %952 = vrot.lane.b32.xlu0 %v457, 3
      %v953 = vpop.permute.xlu0 %952
      %954 = vrot.lane.b32.xlu0 %v458, 3
      %v955 = vpop.permute.xlu0 %954
      %956 = vrot.lane.b32.xlu0 %v459, 3
      %v957 = vpop.permute.xlu0 %956
      %958 = vrot.lane.b32.xlu0 %v460, 3
      %v959 = vpop.permute.xlu0 %958
      %960 = vrot.lane.b32.xlu0 %v461, 3
      %v961 = vpop.permute.xlu0 %960
      %962 = vrot.lane.b32.xlu0 %v462, 3
      %v963 = vpop.permute.xlu0 %962
      %964 = vrot.lane.b32.xlu0 %v463, 3
      %v965 = vpop.permute.xlu0 %964
      %966 = vrot.lane.b32.xlu0 %v464, 3
      %v967 = vpop.permute.xlu0 %966
      %968 = vrot.lane.b32.xlu0 %v465, 3
      %v969 = vpop.permute.xlu0 %968
      %970 = vrot.lane.b32.xlu0 %v466, 3
      %v971 = vpop.permute.xlu0 %970
      %972 = vrot.lane.b32.xlu0 %v467, 3
      %v973 = vpop.permute.xlu0 %972
      %974 = vrot.lane.b32.xlu0 %v468, 3
      %v975 = vpop.permute.xlu0 %974
      %976 = vrot.lane.b32.xlu0 %v469, 3
      %v977 = vpop.permute.xlu0 %976
      %978 = vrot.lane.b32.xlu0 %v470, 3
      %v979 = vpop.permute.xlu0 %978
      %980 = vrot.lane.b32.xlu0 %v471, 3
      %v981 = vpop.permute.xlu0 %980
      %982 = vrot.lane.b32.xlu0 %v472, 3
      %v983 = vpop.permute.xlu0 %982
      %984 = vrot.lane.b32.xlu0 %v473, 3
      %v985 = vpop.permute.xlu0 %984
      %986 = vrot.lane.b32.xlu0 %v474, 3
      %v987 = vpop.permute.xlu0 %986
      %1052 = vrot.lane.b32.xlu0 %v475, 4
      %v1053 = vpop.permute.xlu0 %1052
      %1054 = vrot.lane.b32.xlu0 %v476, 4
      %v1055 = vpop.permute.xlu0 %1054
      %1056 = vrot.lane.b32.xlu0 %v477, 4
      %v1057 = vpop.permute.xlu0 %1056
      %1058 = vrot.lane.b32.xlu0 %v478, 4
      %v1059 = vpop.permute.xlu0 %1058
      %1060 = vrot.lane.b32.xlu0 %v479, 4
      %v1061 = vpop.permute.xlu0 %1060
      %1062 = vrot.lane.b32.xlu0 %v480, 4
      %v1063 = vpop.permute.xlu0 %1062
      %1064 = vrot.lane.b32.xlu0 %v481, 4
      %v1065 = vpop.permute.xlu0 %1064
      %1066 = vrot.lane.b32.xlu0 %v482, 4
      %v1067 = vpop.permute.xlu0 %1066
      %1068 = vrot.lane.b32.xlu0 %v483, 4
      %v1069 = vpop.permute.xlu0 %1068
      %1070 = vrot.lane.b32.xlu0 %v484, 4
      %v1071 = vpop.permute.xlu0 %1070
      %1072 = vrot.lane.b32.xlu0 %v485, 4
      %v1073 = vpop.permute.xlu0 %1072
      %1074 = vrot.lane.b32.xlu0 %v486, 4
      %v1075 = vpop.permute.xlu0 %1074
      %1076 = vrot.lane.b32.xlu0 %v487, 4
      %v1077 = vpop.permute.xlu0 %1076
      %1078 = vrot.lane.b32.xlu0 %v488, 4
      %v1079 = vpop.permute.xlu0 %1078
      %1080 = vrot.lane.b32.xlu0 %v489, 4
      %v1081 = vpop.permute.xlu0 %1080
      %1082 = vrot.lane.b32.xlu0 %v490, 4
      %v1083 = vpop.permute.xlu0 %1082
      %1084 = vrot.lane.b32.xlu0 %v491, 4
      %v1085 = vpop.permute.xlu0 %1084
      %1086 = vrot.lane.b32.xlu0 %v492, 4
      %v1087 = vpop.permute.xlu0 %1086
      %1088 = vrot.lane.b32.xlu0 %v493, 4
      %v1089 = vpop.permute.xlu0 %1088
      %1090 = vrot.lane.b32.xlu0 %v494, 4
      %v1091 = vpop.permute.xlu0 %1090
      %1092 = vrot.lane.b32.xlu0 %v495, 4
      %v1093 = vpop.permute.xlu0 %1092
      %1094 = vrot.lane.b32.xlu0 %v496, 4
      %v1095 = vpop.permute.xlu0 %1094
      %1096 = vrot.lane.b32.xlu0 %v497, 4
      %v1097 = vpop.permute.xlu0 %1096
      %1098 = vrot.lane.b32.xlu0 %v498, 4
      %v1099 = vpop.permute.xlu0 %1098
      %1100 = vrot.lane.b32.xlu0 %v499, 4
      %v1101 = vpop.permute.xlu0 %1100
      %1102 = vrot.lane.b32.xlu0 %v500, 4
      %v1103 = vpop.permute.xlu0 %1102
      %1104 = vrot.lane.b32.xlu0 %v501, 4
      %v1105 = vpop.permute.xlu0 %1104
      %1106 = vrot.lane.b32.xlu0 %v502, 4
      %v1107 = vpop.permute.xlu0 %1106
      %1108 = vrot.lane.b32.xlu0 %v503, 4
      %v1109 = vpop.permute.xlu0 %1108
      %1110 = vrot.lane.b32.xlu0 %v504, 4
      %v1111 = vpop.permute.xlu0 %1110
      %1112 = vrot.lane.b32.xlu0 %v505, 4
      %v1113 = vpop.permute.xlu0 %1112
      %1114 = vrot.lane.b32.xlu0 %v506, 4
      %v1115 = vpop.permute.xlu0 %1114
      %1180 = vrot.lane.b32.xlu0 %v507, 5
      %v1181 = vpop.permute.xlu0 %1180
      %1182 = vrot.lane.b32.xlu0 %v508, 5
      %v1183 = vpop.permute.xlu0 %1182
      %1184 = vrot.lane.b32.xlu0 %v509, 5
      %v1185 = vpop.permute.xlu0 %1184
      %1186 = vrot.lane.b32.xlu0 %v510, 5
      %v1187 = vpop.permute.xlu0 %1186
      %1188 = vrot.lane.b32.xlu0 %v511, 5
      %v1189 = vpop.permute.xlu0 %1188
      %1190 = vrot.lane.b32.xlu0 %v512, 5
      %v1191 = vpop.permute.xlu0 %1190
      %1192 = vrot.lane.b32.xlu0 %v513, 5
      %v1193 = vpop.permute.xlu0 %1192
      %1194 = vrot.lane.b32.xlu0 %v514, 5
      %v1195 = vpop.permute.xlu0 %1194
      %1196 = vrot.lane.b32.xlu0 %v515, 5
      %v1197 = vpop.permute.xlu0 %1196
      %1198 = vrot.lane.b32.xlu0 %v516, 5
      %v1199 = vpop.permute.xlu0 %1198
      %1200 = vrot.lane.b32.xlu0 %v517, 5
      %v1201 = vpop.permute.xlu0 %1200
      %1202 = vrot.lane.b32.xlu0 %v518, 5
      %v1203 = vpop.permute.xlu0 %1202
      %1204 = vrot.lane.b32.xlu0 %v519, 5
      %v1205 = vpop.permute.xlu0 %1204
      %1206 = vrot.lane.b32.xlu0 %v520, 5
      %v1207 = vpop.permute.xlu0 %1206
      %1208 = vrot.lane.b32.xlu0 %v521, 5
      %v1209 = vpop.permute.xlu0 %1208
      %1210 = vrot.lane.b32.xlu0 %v522, 5
      %v1211 = vpop.permute.xlu0 %1210
      %1212 = vrot.lane.b32.xlu0 %v523, 5
      %v1213 = vpop.permute.xlu0 %1212
      %1214 = vrot.lane.b32.xlu0 %v524, 5
      %v1215 = vpop.permute.xlu0 %1214
      %1216 = vrot.lane.b32.xlu0 %v525, 5
      %v1217 = vpop.permute.xlu0 %1216
      %1218 = vrot.lane.b32.xlu0 %v526, 5
      %v1219 = vpop.permute.xlu0 %1218
      %1220 = vrot.lane.b32.xlu0 %v527, 5
      %v1221 = vpop.permute.xlu0 %1220
      %1222 = vrot.lane.b32.xlu0 %v528, 5
      %v1223 = vpop.permute.xlu0 %1222
      %1224 = vrot.lane.b32.xlu0 %v529, 5
      %v1225 = vpop.permute.xlu0 %1224
      %1226 = vrot.lane.b32.xlu0 %v530, 5
      %v1227 = vpop.permute.xlu0 %1226
      %1228 = vrot.lane.b32.xlu0 %v531, 5
      %v1229 = vpop.permute.xlu0 %1228
      %1230 = vrot.lane.b32.xlu0 %v532, 5
      %v1231 = vpop.permute.xlu0 %1230
      %1232 = vrot.lane.b32.xlu0 %v533, 5
      %v1233 = vpop.permute.xlu0 %1232
      %1234 = vrot.lane.b32.xlu0 %v534, 5
      %v1235 = vpop.permute.xlu0 %1234
      %1236 = vrot.lane.b32.xlu0 %v535, 5
      %v1237 = vpop.permute.xlu0 %1236
      %1238 = vrot.lane.b32.xlu0 %v536, 5
      %v1239 = vpop.permute.xlu0 %1238
      %1240 = vrot.lane.b32.xlu0 %v537, 5
      %v1241 = vpop.permute.xlu0 %1240
      %1242 = vrot.lane.b32.xlu0 %v538, 5
      %v1243 = vpop.permute.xlu0 %1242
      %1308 = vrot.lane.b32.xlu0 %v540, 6
      %v1309 = vpop.permute.xlu0 %1308
      %1310 = vrot.lane.b32.xlu0 %v541, 6
      %v1311 = vpop.permute.xlu0 %1310
      %1312 = vrot.lane.b32.xlu0 %v542, 6
      %v1313 = vpop.permute.xlu0 %1312
      %1314 = vrot.lane.b32.xlu0 %v543, 6
      %v1315 = vpop.permute.xlu0 %1314
      %1316 = vrot.lane.b32.xlu0 %v544, 6
      %v1317 = vpop.permute.xlu0 %1316
      %1318 = vrot.lane.b32.xlu0 %v545, 6
      %v1319 = vpop.permute.xlu0 %1318
      %1320 = vrot.lane.b32.xlu0 %v546, 6
      %v1321 = vpop.permute.xlu0 %1320
      %1322 = vrot.lane.b32.xlu0 %v547, 6
      %v1323 = vpop.permute.xlu0 %1322
      %1324 = vrot.lane.b32.xlu0 %v548, 6
      %v1325 = vpop.permute.xlu0 %1324
      %1326 = vrot.lane.b32.xlu0 %v549, 6
      %v1327 = vpop.permute.xlu0 %1326
      %1328 = vrot.lane.b32.xlu0 %v550, 6
      %v1329 = vpop.permute.xlu0 %1328
      %1330 = vrot.lane.b32.xlu0 %v551, 6
      %v1331 = vpop.permute.xlu0 %1330
      %1332 = vrot.lane.b32.xlu0 %v552, 6
      %v1333 = vpop.permute.xlu0 %1332
      %1334 = vrot.lane.b32.xlu0 %v553, 6
      %v1335 = vpop.permute.xlu0 %1334
      %1336 = vrot.lane.b32.xlu0 %v554, 6
      %v1337 = vpop.permute.xlu0 %1336
      %1338 = vrot.lane.b32.xlu0 %v555, 6
      %v1339 = vpop.permute.xlu0 %1338
      %1340 = vrot.lane.b32.xlu0 %v556, 6
      %v1341 = vpop.permute.xlu0 %1340
      %1342 = vrot.lane.b32.xlu0 %v557, 6
      %v1343 = vpop.permute.xlu0 %1342
      %1344 = vrot.lane.b32.xlu0 %v558, 6
      %v1345 = vpop.permute.xlu0 %1344
      %1346 = vrot.lane.b32.xlu0 %v559, 6
      %v1347 = vpop.permute.xlu0 %1346
      %1348 = vrot.lane.b32.xlu0 %v560, 6
      %v1349 = vpop.permute.xlu0 %1348
      %1350 = vrot.lane.b32.xlu0 %v561, 6
      %v1351 = vpop.permute.xlu0 %1350
      %1352 = vrot.lane.b32.xlu0 %v562, 6
      %v1353 = vpop.permute.xlu0 %1352
      %1354 = vrot.lane.b32.xlu0 %v563, 6
      %v1355 = vpop.permute.xlu0 %1354
      %1356 = vrot.lane.b32.xlu0 %v564, 6
      %v1357 = vpop.permute.xlu0 %1356
      %1358 = vrot.lane.b32.xlu0 %v565, 6
      %v1359 = vpop.permute.xlu0 %1358
      %1360 = vrot.lane.b32.xlu0 %v566, 6
      %v1361 = vpop.permute.xlu0 %1360
      %1362 = vrot.lane.b32.xlu0 %v567, 6
      %v1363 = vpop.permute.xlu0 %1362
      %1364 = vrot.lane.b32.xlu0 %v568, 6
      %v1365 = vpop.permute.xlu0 %1364
      %1366 = vrot.lane.b32.xlu0 %v569, 6
      %v1367 = vpop.permute.xlu0 %1366
      %1368 = vrot.lane.b32.xlu0 %v570, 6
      %v1369 = vpop.permute.xlu0 %1368
      %1370 = vrot.lane.b32.xlu0 %v571, 6
      %v1371 = vpop.permute.xlu0 %1370
      %1436 = vrot.lane.b32.xlu0 %v572, 7
      %v1437 = vpop.permute.xlu0 %1436
      %1438 = vrot.lane.b32.xlu0 %v573, 7
      %v1439 = vpop.permute.xlu0 %1438
      %1440 = vrot.lane.b32.xlu0 %v574, 7
      %v1441 = vpop.permute.xlu0 %1440
      %1442 = vrot.lane.b32.xlu0 %v575, 7
      %v1443 = vpop.permute.xlu0 %1442
      %1444 = vrot.lane.b32.xlu0 %v576, 7
      %v1445 = vpop.permute.xlu0 %1444
      %1446 = vrot.lane.b32.xlu0 %v577, 7
      %v1447 = vpop.permute.xlu0 %1446
      %1448 = vrot.lane.b32.xlu0 %v578, 7
      %v1449 = vpop.permute.xlu0 %1448
      %1450 = vrot.lane.b32.xlu0 %v579, 7
      %v1451 = vpop.permute.xlu0 %1450
      %1452 = vrot.lane.b32.xlu0 %v580, 7
      %v1453 = vpop.permute.xlu0 %1452
      %1454 = vrot.lane.b32.xlu0 %v581, 7
      %v1455 = vpop.permute.xlu0 %1454
      %1456 = vrot.lane.b32.xlu0 %v582, 7
      %v1457 = vpop.permute.xlu0 %1456
      %1458 = vrot.lane.b32.xlu0 %v583, 7
      %v1459 = vpop.permute.xlu0 %1458
      %1460 = vrot.lane.b32.xlu0 %v584, 7
      %v1461 = vpop.permute.xlu0 %1460
      %1462 = vrot.lane.b32.xlu0 %v585, 7
      %v1463 = vpop.permute.xlu0 %1462
      %1464 = vrot.lane.b32.xlu0 %v586, 7
      %v1465 = vpop.permute.xlu0 %1464
      %1466 = vrot.lane.b32.xlu0 %v587, 7
      %v1467 = vpop.permute.xlu0 %1466
      %1468 = vrot.lane.b32.xlu0 %v588, 7
      %v1469 = vpop.permute.xlu0 %1468
      %1470 = vrot.lane.b32.xlu0 %v589, 7
      %v1471 = vpop.permute.xlu0 %1470
      %1472 = vrot.lane.b32.xlu0 %v590, 7
      %v1473 = vpop.permute.xlu0 %1472
      %1474 = vrot.lane.b32.xlu0 %v591, 7
      %v1475 = vpop.permute.xlu0 %1474
      %1476 = vrot.lane.b32.xlu0 %v592, 7
      %v1477 = vpop.permute.xlu0 %1476
      %1478 = vrot.lane.b32.xlu0 %v593, 7
      %v1479 = vpop.permute.xlu0 %1478
      %1480 = vrot.lane.b32.xlu0 %v594, 7
      %v1481 = vpop.permute.xlu0 %1480
      %1482 = vrot.lane.b32.xlu0 %v595, 7
      %v1483 = vpop.permute.xlu0 %1482
      %1484 = vrot.lane.b32.xlu0 %v596, 7
      %v1485 = vpop.permute.xlu0 %1484
      %1486 = vrot.lane.b32.xlu0 %v597, 7
      %v1487 = vpop.permute.xlu0 %1486
      %1488 = vrot.lane.b32.xlu0 %v598, 7
      %v1489 = vpop.permute.xlu0 %1488
      %1490 = vrot.lane.b32.xlu0 %v599, 7
      %v1491 = vpop.permute.xlu0 %1490
      %1492 = vrot.lane.b32.xlu0 %v600, 7
      %v1493 = vpop.permute.xlu0 %1492
      %1494 = vrot.lane.b32.xlu0 %v601, 7
      %v1495 = vpop.permute.xlu0 %1494
      %1496 = vrot.lane.b32.xlu0 %v602, 7
      %v1497 = vpop.permute.xlu0 %1496
      %1498 = vrot.lane.b32.xlu0 %v603, 7
      %v1499 = vpop.permute.xlu0 %1498
      %1564 = vrot.lane.b32.xlu0 %v604, 8
      %v1565 = vpop.permute.xlu0 %1564
      %1566 = vrot.lane.b32.xlu0 %v605, 8
      %v1567 = vpop.permute.xlu0 %1566
      %1568 = vrot.lane.b32.xlu0 %v606, 8
      %v1569 = vpop.permute.xlu0 %1568
      %1570 = vrot.lane.b32.xlu0 %v607, 8
      %v1571 = vpop.permute.xlu0 %1570
      %1572 = vrot.lane.b32.xlu0 %v608, 8
      %v1573 = vpop.permute.xlu0 %1572
      %1574 = vrot.lane.b32.xlu0 %v609, 8
      %v1575 = vpop.permute.xlu0 %1574
      %1576 = vrot.lane.b32.xlu0 %v610, 8
      %v1577 = vpop.permute.xlu0 %1576
      %1578 = vrot.lane.b32.xlu0 %v611, 8
      %v1579 = vpop.permute.xlu0 %1578
      %1580 = vrot.lane.b32.xlu0 %v612, 8
      %v1581 = vpop.permute.xlu0 %1580
      %1582 = vrot.lane.b32.xlu0 %v613, 8
      %v1583 = vpop.permute.xlu0 %1582
      %1584 = vrot.lane.b32.xlu0 %v614, 8
      %v1585 = vpop.permute.xlu0 %1584
      %1586 = vrot.lane.b32.xlu0 %v615, 8
      %v1587 = vpop.permute.xlu0 %1586
      %1588 = vrot.lane.b32.xlu0 %v616, 8
      %v1589 = vpop.permute.xlu0 %1588
      %1590 = vrot.lane.b32.xlu0 %v617, 8
      %v1591 = vpop.permute.xlu0 %1590
      %1592 = vrot.lane.b32.xlu0 %v618, 8
      %v1593 = vpop.permute.xlu0 %1592
      %1594 = vrot.lane.b32.xlu0 %v619, 8
      %v1595 = vpop.permute.xlu0 %1594
      %1596 = vrot.lane.b32.xlu0 %v620, 8
      %v1597 = vpop.permute.xlu0 %1596
      %1598 = vrot.lane.b32.xlu0 %v621, 8
      %v1599 = vpop.permute.xlu0 %1598
      %1600 = vrot.lane.b32.xlu0 %v622, 8
      %v1601 = vpop.permute.xlu0 %1600
      %1602 = vrot.lane.b32.xlu0 %v623, 8
      %v1603 = vpop.permute.xlu0 %1602
      %1604 = vrot.lane.b32.xlu0 %v624, 8
      %v1605 = vpop.permute.xlu0 %1604
      %1606 = vrot.lane.b32.xlu0 %v625, 8
      %v1607 = vpop.permute.xlu0 %1606
      %1608 = vrot.lane.b32.xlu0 %v626, 8
      %v1609 = vpop.permute.xlu0 %1608
      %1610 = vrot.lane.b32.xlu0 %v627, 8
      %v1611 = vpop.permute.xlu0 %1610
      %1612 = vrot.lane.b32.xlu0 %v628, 8
      %v1613 = vpop.permute.xlu0 %1612
      %1614 = vrot.lane.b32.xlu0 %v629, 8
      %v1615 = vpop.permute.xlu0 %1614
      %1616 = vrot.lane.b32.xlu0 %v630, 8
      %v1617 = vpop.permute.xlu0 %1616
      %1618 = vrot.lane.b32.xlu0 %v631, 8
      %v1619 = vpop.permute.xlu0 %1618
      %1620 = vrot.lane.b32.xlu0 %v632, 8
      %v1621 = vpop.permute.xlu0 %1620
      %1622 = vrot.lane.b32.xlu0 %v633, 8
      %v1623 = vpop.permute.xlu0 %1622
      %1624 = vrot.lane.b32.xlu0 %v634, 8
      %v1625 = vpop.permute.xlu0 %1624
      %1626 = vrot.lane.b32.xlu0 %v635, 8
      %v1627 = vpop.permute.xlu0 %1626
      %v1660 = vsel %vm226, %v347, %v669
      %v1661 = vsel %vm226, %v348, %v671
      %v1662 = vsel %vm226, %v349, %v673
      %v1663 = vsel %vm226, %v350, %v675
      %v1664 = vsel %vm226, %v351, %v677
      %v1665 = vsel %vm226, %v352, %v679
      %v1666 = vsel %vm226, %v353, %v681
      %v1667 = vsel %vm226, %v354, %v683
      %v1668 = vsel %vm226, %v355, %v685
      %v1669 = vsel %vm226, %v356, %v687
      %v1670 = vsel %vm226, %v357, %v689
      %v1671 = vsel %vm226, %v358, %v691
      %v1672 = vsel %vm226, %v359, %v693
      %v1673 = vsel %vm226, %v360, %v695
      %v1674 = vsel %vm226, %v361, %v697
      %v1675 = vsel %vm226, %v362, %v699
      %v1676 = vsel %vm226, %v363, %v701
      %v1677 = vsel %vm226, %v364, %v703
      %v1678 = vsel %vm226, %v365, %v705
      %v1679 = vsel %vm226, %v366, %v707
      %v1680 = vsel %vm226, %v367, %v709
      %v1681 = vsel %vm226, %v368, %v711
      %v1682 = vsel %vm226, %v369, %v713
      %v1683 = vsel %vm226, %v370, %v715
      %v1684 = vsel %vm226, %v371, %v717
      %v1685 = vsel %vm226, %v372, %v719
      %v1686 = vsel %vm226, %v373, %v721
      %v1687 = vsel %vm226, %v374, %v723
      %v1688 = vsel %vm226, %v375, %v725
      %v1689 = vsel %vm226, %v376, %v727
      %v1690 = vsel %vm226, %v377, %v729
      %v1691 = vsel %vm226, %v378, %v731
      %vm1692 = vcmask 15360
      %v1693 = vsel %vm1692, %v1660, %v797
      %v1694 = vsel %vm1692, %v1661, %v799
      %v1695 = vsel %vm1692, %v1662, %v801
      %v1696 = vsel %vm1692, %v1663, %v803
      %v1697 = vsel %vm1692, %v1664, %v805
      %v1698 = vsel %vm1692, %v1665, %v807
      %v1699 = vsel %vm1692, %v1666, %v809
      %v1700 = vsel %vm1692, %v1667, %v811
      %v1701 = vsel %vm1692, %v1668, %v813
      %v1702 = vsel %vm1692, %v1669, %v815
      %v1703 = vsel %vm1692, %v1670, %v817
      %v1704 = vsel %vm1692, %v1671, %v819
      %v1705 = vsel %vm1692, %v1672, %v821
      %v1706 = vsel %vm1692, %v1673, %v823
      %v1707 = vsel %vm1692, %v1674, %v825
      %v1708 = vsel %vm1692, %v1675, %v827
      %v1709 = vsel %vm1692, %v1676, %v829
      %v1710 = vsel %vm1692, %v1677, %v831
      %v1711 = vsel %vm1692, %v1678, %v833
      %v1712 = vsel %vm1692, %v1679, %v835
      %v1713 = vsel %vm1692, %v1680, %v837
      %v1714 = vsel %vm1692, %v1681, %v839
      %v1715 = vsel %vm1692, %v1682, %v841
      %v1716 = vsel %vm1692, %v1683, %v843
      %v1717 = vsel %vm1692, %v1684, %v845
      %v1718 = vsel %vm1692, %v1685, %v847
      %v1719 = vsel %vm1692, %v1686, %v849
      %v1720 = vsel %vm1692, %v1687, %v851
      %v1721 = vsel %vm1692, %v1688, %v853
      %v1722 = vsel %vm1692, %v1689, %v855
      %v1723 = vsel %vm1692, %v1690, %v857
      %v1724 = vsel %vm1692, %v1691, %v859
      %vm1725 = vcmask 23552
      %v1726 = vsel %vm1725, %v1693, %v925
      %v1727 = vsel %vm1725, %v1694, %v927
      %v1728 = vsel %vm1725, %v1695, %v929
      %v1729 = vsel %vm1725, %v1696, %v931
      %v1730 = vsel %vm1725, %v1697, %v933
      %v1731 = vsel %vm1725, %v1698, %v935
      %v1732 = vsel %vm1725, %v1699, %v937
      %v1733 = vsel %vm1725, %v1700, %v939
      %v1734 = vsel %vm1725, %v1701, %v941
      %v1735 = vsel %vm1725, %v1702, %v943
      %v1736 = vsel %vm1725, %v1703, %v945
      %v1737 = vsel %vm1725, %v1704, %v947
      %v1738 = vsel %vm1725, %v1705, %v949
      %v1739 = vsel %vm1725, %v1706, %v951
      %v1740 = vsel %vm1725, %v1707, %v953
      %v1741 = vsel %vm1725, %v1708, %v955
      %v1742 = vsel %vm1725, %v1709, %v957
      %v1743 = vsel %vm1725, %v1710, %v959
      %v1744 = vsel %vm1725, %v1711, %v961
      %v1745 = vsel %vm1725, %v1712, %v963
      %v1746 = vsel %vm1725, %v1713, %v965
      %v1747 = vsel %vm1725, %v1714, %v967
      %v1748 = vsel %vm1725, %v1715, %v969
      %v1749 = vsel %vm1725, %v1716, %v971
      %v1750 = vsel %vm1725, %v1717, %v973
      %v1751 = vsel %vm1725, %v1718, %v975
      %v1752 = vsel %vm1725, %v1719, %v977
      %v1753 = vsel %vm1725, %v1720, %v979
      %v1754 = vsel %vm1725, %v1721, %v981
      %v1755 = vsel %vm1725, %v1722, %v983
      %v1756 = vsel %vm1725, %v1723, %v985
      %v1757 = vsel %vm1725, %v1724, %v987
      %vm1758 = vcmask 31744
      %v1759 = vsel %vm1758, %v1726, %v1053
      %v1760 = vsel %vm1758, %v1727, %v1055
      %v1761 = vsel %vm1758, %v1728, %v1057
      %v1762 = vsel %vm1758, %v1729, %v1059
      %v1763 = vsel %vm1758, %v1730, %v1061
      %v1764 = vsel %vm1758, %v1731, %v1063
      %v1765 = vsel %vm1758, %v1732, %v1065
      %v1766 = vsel %vm1758, %v1733, %v1067
      %v1767 = vsel %vm1758, %v1734, %v1069
      %v1768 = vsel %vm1758, %v1735, %v1071
      %v1769 = vsel %vm1758, %v1736, %v1073
      %v1770 = vsel %vm1758, %v1737, %v1075
      %v1771 = vsel %vm1758, %v1738, %v1077
      %v1772 = vsel %vm1758, %v1739, %v1079
      %v1773 = vsel %vm1758, %v1740, %v1081
      %v1774 = vsel %vm1758, %v1741, %v1083
      %v1775 = vsel %vm1758, %v1742, %v1085
      %v1776 = vsel %vm1758, %v1743, %v1087
      %v1777 = vsel %vm1758, %v1744, %v1089
      %v1778 = vsel %vm1758, %v1745, %v1091
      %v1779 = vsel %vm1758, %v1746, %v1093
      %v1780 = vsel %vm1758, %v1747, %v1095
      %v1781 = vsel %vm1758, %v1748, %v1097
      %v1782 = vsel %vm1758, %v1749, %v1099
      %v1783 = vsel %vm1758, %v1750, %v1101
      %v1784 = vsel %vm1758, %v1751, %v1103
      %v1785 = vsel %vm1758, %v1752, %v1105
      %v1786 = vsel %vm1758, %v1753, %v1107
      %v1787 = vsel %vm1758, %v1754, %v1109
      %v1788 = vsel %vm1758, %v1755, %v1111
      %v1789 = vsel %vm1758, %v1756, %v1113
      %v1790 = vsel %vm1758, %v1757, %v1115
      %vm1791 = vcmask 39936
      %v1792 = vsel %vm1791, %v1759, %v1181
      %v1793 = vsel %vm1791, %v1760, %v1183
      %v1794 = vsel %vm1791, %v1761, %v1185
      %v1795 = vsel %vm1791, %v1762, %v1187
      %v1796 = vsel %vm1791, %v1763, %v1189
      %v1797 = vsel %vm1791, %v1764, %v1191
      %v1798 = vsel %vm1791, %v1765, %v1193
      %v1799 = vsel %vm1791, %v1766, %v1195
      %v1800 = vsel %vm1791, %v1767, %v1197
      %v1801 = vsel %vm1791, %v1768, %v1199
      %v1802 = vsel %vm1791, %v1769, %v1201
      %v1803 = vsel %vm1791, %v1770, %v1203
      %v1804 = vsel %vm1791, %v1771, %v1205
      %v1805 = vsel %vm1791, %v1772, %v1207
      %v1806 = vsel %vm1791, %v1773, %v1209
      %v1807 = vsel %vm1791, %v1774, %v1211
      %v1808 = vsel %vm1791, %v1775, %v1213
      %v1809 = vsel %vm1791, %v1776, %v1215
      %v1810 = vsel %vm1791, %v1777, %v1217
      %v1811 = vsel %vm1791, %v1778, %v1219
      %v1812 = vsel %vm1791, %v1779, %v1221
      %v1813 = vsel %vm1791, %v1780, %v1223
      %v1814 = vsel %vm1791, %v1781, %v1225
      %v1815 = vsel %vm1791, %v1782, %v1227
      %v1816 = vsel %vm1791, %v1783, %v1229
      %v1817 = vsel %vm1791, %v1784, %v1231
      %v1818 = vsel %vm1791, %v1785, %v1233
      %v1819 = vsel %vm1791, %v1786, %v1235
      %v1820 = vsel %vm1791, %v1787, %v1237
      %v1821 = vsel %vm1791, %v1788, %v1239
      %v1822 = vsel %vm1791, %v1789, %v1241
      %v1823 = vsel %vm1791, %v1790, %v1243
      %vm1824 = vcmask 48128
      %v1825 = vsel %vm1824, %v1792, %v1309
      %v1826 = vsel %vm1824, %v1793, %v1311
      %v1827 = vsel %vm1824, %v1794, %v1313
      %v1828 = vsel %vm1824, %v1795, %v1315
      %v1829 = vsel %vm1824, %v1796, %v1317
      %v1830 = vsel %vm1824, %v1797, %v1319
      %v1831 = vsel %vm1824, %v1798, %v1321
      %v1832 = vsel %vm1824, %v1799, %v1323
      %v1833 = vsel %vm1824, %v1800, %v1325
      %v1834 = vsel %vm1824, %v1801, %v1327
      %v1835 = vsel %vm1824, %v1802, %v1329
      %v1836 = vsel %vm1824, %v1803, %v1331
      %v1837 = vsel %vm1824, %v1804, %v1333
      %v1838 = vsel %vm1824, %v1805, %v1335
      %v1839 = vsel %vm1824, %v1806, %v1337
      %v1840 = vsel %vm1824, %v1807, %v1339
      %v1841 = vsel %vm1824, %v1808, %v1341
      %v1842 = vsel %vm1824, %v1809, %v1343
      %v1843 = vsel %vm1824, %v1810, %v1345
      %v1844 = vsel %vm1824, %v1811, %v1347
      %v1845 = vsel %vm1824, %v1812, %v1349
      %v1846 = vsel %vm1824, %v1813, %v1351
      %v1847 = vsel %vm1824, %v1814, %v1353
      %v1848 = vsel %vm1824, %v1815, %v1355
      %v1849 = vsel %vm1824, %v1816, %v1357
      %v1850 = vsel %vm1824, %v1817, %v1359
      %v1851 = vsel %vm1824, %v1818, %v1361
      %v1852 = vsel %vm1824, %v1819, %v1363
      %v1853 = vsel %vm1824, %v1820, %v1365
      %v1854 = vsel %vm1824, %v1821, %v1367
      %v1855 = vsel %vm1824, %v1822, %v1369
      %v1856 = vsel %vm1824, %v1823, %v1371
      %vm1857 = vcmask 56320
      %v1858 = vsel %vm1857, %v1825, %v1437
      %v1859 = vsel %vm1857, %v1826, %v1439
      %v1860 = vsel %vm1857, %v1827, %v1441
      %v1861 = vsel %vm1857, %v1828, %v1443
      %v1862 = vsel %vm1857, %v1829, %v1445
      %v1863 = vsel %vm1857, %v1830, %v1447
      %v1864 = vsel %vm1857, %v1831, %v1449
      %v1865 = vsel %vm1857, %v1832, %v1451
      %v1866 = vsel %vm1857, %v1833, %v1453
      %v1867 = vsel %vm1857, %v1834, %v1455
      %v1868 = vsel %vm1857, %v1835, %v1457
      %v1869 = vsel %vm1857, %v1836, %v1459
      %v1870 = vsel %vm1857, %v1837, %v1461
      %v1871 = vsel %vm1857, %v1838, %v1463
      %v1872 = vsel %vm1857, %v1839, %v1465
      %v1873 = vsel %vm1857, %v1840, %v1467
      %v1874 = vsel %vm1857, %v1841, %v1469
      %v1875 = vsel %vm1857, %v1842, %v1471
      %v1876 = vsel %vm1857, %v1843, %v1473
      %v1877 = vsel %vm1857, %v1844, %v1475
      %v1878 = vsel %vm1857, %v1845, %v1477
      %v1879 = vsel %vm1857, %v1846, %v1479
      %v1880 = vsel %vm1857, %v1847, %v1481
      %v1881 = vsel %vm1857, %v1848, %v1483
      %v1882 = vsel %vm1857, %v1849, %v1485
      %v1883 = vsel %vm1857, %v1850, %v1487
      %v1884 = vsel %vm1857, %v1851, %v1489
      %v1885 = vsel %vm1857, %v1852, %v1491
      %v1886 = vsel %vm1857, %v1853, %v1493
      %v1887 = vsel %vm1857, %v1854, %v1495
      %v1888 = vsel %vm1857, %v1855, %v1497
      %v1889 = vsel %vm1857, %v1856, %v1499
      %vm1890 = vcmask 64512
      %v1891 = vsel %vm1890, %v1858, %v1565
      %v1892 = vsel %vm1890, %v1859, %v1567
      %v1893 = vsel %vm1890, %v1860, %v1569
      %v1894 = vsel %vm1890, %v1861, %v1571
      %v1895 = vsel %vm1890, %v1862, %v1573
      %v1896 = vsel %vm1890, %v1863, %v1575
      %v1897 = vsel %vm1890, %v1864, %v1577
      %v1898 = vsel %vm1890, %v1865, %v1579
      %v1899 = vsel %vm1890, %v1866, %v1581
      %v1900 = vsel %vm1890, %v1867, %v1583
      %v1901 = vsel %vm1890, %v1868, %v1585
      %v1902 = vsel %vm1890, %v1869, %v1587
      %v1903 = vsel %vm1890, %v1870, %v1589
      %v1904 = vsel %vm1890, %v1871, %v1591
      %v1905 = vsel %vm1890, %v1872, %v1593
      %v1906 = vsel %vm1890, %v1873, %v1595
      %v1907 = vsel %vm1890, %v1874, %v1597
      %v1908 = vsel %vm1890, %v1875, %v1599
      %v1909 = vsel %vm1890, %v1876, %v1601
      %v1910 = vsel %vm1890, %v1877, %v1603
      %v1911 = vsel %vm1890, %v1878, %v1605
      %v1912 = vsel %vm1890, %v1879, %v1607
      %v1913 = vsel %vm1890, %v1880, %v1609
      %v1914 = vsel %vm1890, %v1881, %v1611
      %v1915 = vsel %vm1890, %v1882, %v1613
      %v1916 = vsel %vm1890, %v1883, %v1615
      %v1917 = vsel %vm1890, %v1884, %v1617
      %v1918 = vsel %vm1890, %v1885, %v1619
      %v1919 = vsel %vm1890, %v1886, %v1621
      %v1920 = vsel %vm1890, %v1887, %v1623
      %v1921 = vsel %vm1890, %v1888, %v1625
      %v1922 = vsel %vm1890, %v1889, %v1627
      %v1923 = vpack.c.bf16 %v1892, %v1891
      %v1924 = vpack.c.bf16 %v1894, %v1893
      %v1925 = vpack.c.bf16 %v1896, %v1895
      %v1926 = vpack.c.bf16 %v1898, %v1897
      %v1927 = vpack.c.bf16 %v1900, %v1899
      %v1928 = vpack.c.bf16 %v1902, %v1901
      %v1929 = vpack.c.bf16 %v1904, %v1903
      %v1930 = vpack.c.bf16 %v1906, %v1905
      %v1931 = vpack.c.bf16 %v1908, %v1907
      %v1932 = vpack.c.bf16 %v1910, %v1909
      %v1933 = vpack.c.bf16 %v1912, %v1911
      %v1934 = vpack.c.bf16 %v1914, %v1913
      %v1935 = vpack.c.bf16 %v1916, %v1915
      %v1936 = vpack.c.bf16 %v1918, %v1917
      %v1937 = vpack.c.bf16 %v1920, %v1919
      %v1938 = vpack.c.bf16 %v1922, %v1921
      %v1939 = vld [vmem:[%s1] sm:$0xf]
      %v1940 = vld [vmem:[%s1 + $0x4] sm:$0x1]
      %v1941 = vld [vmem:[%s2] sm:$0x1]
      %v1943 = vperm.slane %v1941, 0
      %v1947 = vunpack.c.l.b16 %v1939
      %v1948 = vunpack.c.l.b16 %v1940
      %v1949 = vpack.c.b16 %v1948, %v1947
      %vm1950 = vcmask 72704
      %v1952 = vsel %vm1950, %v1923, 0
      %v1955 = vsel %vm1950, %v1924, 0
      %v1958 = vsel %vm1950, %v1925, 0
      %v1961 = vsel %vm1950, %v1926, 0
      %v1964 = vsel %vm1950, %v1927, 0
      %v1967 = vsel %vm1950, %v1928, 0
      %v1970 = vsel %vm1950, %v1929, 0
      %v1973 = vsel %vm1950, %v1930, 0
      %v1976 = vsel %vm1950, %v1931, 0
      %v1979 = vsel %vm1950, %v1932, 0
      %v1982 = vsel %vm1950, %v1933, 0
      %v1985 = vsel %vm1950, %v1934, 0
      %v1988 = vsel %vm1950, %v1935, 0
      %v1991 = vsel %vm1950, %v1936, 0
      %v1994 = vsel %vm1950, %v1937, 0
      %v1997 = vsel %vm1950, %v1938, 0
      %vm1999 = vcmask 1043456
      %vm2000 = vcmask 1044480
      %v2001 = vsel %vm1999, 4294967295, 65535
      %v2002 = vsel %vm2000, %v2001, 0
      %v2004 = vand.u32 %v1949, %v2002
      %2006 = vmatpush.bf16.msra.mxu0 0
      %2007 = vmatpush.bf16.msra.mxu0 0
      %2008 = vmatpush.bf16.msra.mxu0 0
      %2009 = vmatpush.bf16.msra.mxu0 0
      %2010 = vmatpush.bf16.msra.mxu0 0
      %2011 = vmatpush.bf16.msra.mxu0 0
      %2012 = vmatpush.bf16.msra.mxu0 0
      %2013 = vmatpush.bf16.msra.mxu0 %v2004
      %2014 = vmatmul.bf16.gmra.mxu0 %v1952
      %v2015 = vpop.f32.mrf.mxu0
      %v2016 = vadd.f32 %v1943, %v2015
      %v2017 = vpop.f32.mrf.mxu0
      %v2018 = vadd.f32 %v1943, %v2017
      %2019 = vmatmul.bf16.gmra.mxu0 %v1955
      %v2020 = vpop.f32.mrf.mxu0
      %v2021 = vadd.f32 %v1943, %v2020
      %v2022 = vpop.f32.mrf.mxu0
      %v2023 = vadd.f32 %v1943, %v2022
      %2024 = vmatmul.bf16.gmra.mxu0 %v1958
      %v2025 = vpop.f32.mrf.mxu0
      %v2026 = vadd.f32 %v1943, %v2025
      %v2027 = vpop.f32.mrf.mxu0
      %v2028 = vadd.f32 %v1943, %v2027
      %2029 = vmatmul.bf16.gmra.mxu0 %v1961
      %v2030 = vpop.f32.mrf.mxu0
      %v2031 = vadd.f32 %v1943, %v2030
      %v2032 = vpop.f32.mrf.mxu0
      %v2033 = vadd.f32 %v1943, %v2032
      %2034 = vmatmul.bf16.gmra.mxu0 %v1964
      %v2035 = vpop.f32.mrf.mxu0
      %v2036 = vadd.f32 %v1943, %v2035
      %v2037 = vpop.f32.mrf.mxu0
      %v2038 = vadd.f32 %v1943, %v2037
      %2039 = vmatmul.bf16.gmra.mxu0 %v1967
      %v2040 = vpop.f32.mrf.mxu0
      %v2041 = vadd.f32 %v1943, %v2040
      %v2042 = vpop.f32.mrf.mxu0
      %v2043 = vadd.f32 %v1943, %v2042
      %2044 = vmatmul.bf16.gmra.mxu0 %v1970
      %v2045 = vpop.f32.mrf.mxu0
      %v2046 = vadd.f32 %v1943, %v2045
      %v2047 = vpop.f32.mrf.mxu0
      %v2048 = vadd.f32 %v1943, %v2047
      %2049 = vmatmul.bf16.gmra.mxu0 %v1973
      %v2050 = vpop.f32.mrf.mxu0
      %v2051 = vadd.f32 %v1943, %v2050
      %v2052 = vpop.f32.mrf.mxu0
      %v2053 = vadd.f32 %v1943, %v2052
      %2054 = vmatmul.bf16.gmra.mxu0 %v1976
      %v2055 = vpop.f32.mrf.mxu0
      %v2056 = vadd.f32 %v1943, %v2055
      %v2057 = vpop.f32.mrf.mxu0
      %v2058 = vadd.f32 %v1943, %v2057
      %2059 = vmatmul.bf16.gmra.mxu0 %v1979
      %v2060 = vpop.f32.mrf.mxu0
      %v2061 = vadd.f32 %v1943, %v2060
      %v2062 = vpop.f32.mrf.mxu0
      %v2063 = vadd.f32 %v1943, %v2062
      %2064 = vmatmul.bf16.gmra.mxu0 %v1982
      %v2065 = vpop.f32.mrf.mxu0
      %v2066 = vadd.f32 %v1943, %v2065
      %v2067 = vpop.f32.mrf.mxu0
      %v2068 = vadd.f32 %v1943, %v2067
      %2069 = vmatmul.bf16.gmra.mxu0 %v1985
      %v2070 = vpop.f32.mrf.mxu0
      %v2071 = vadd.f32 %v1943, %v2070
      %v2072 = vpop.f32.mrf.mxu0
      %v2073 = vadd.f32 %v1943, %v2072
      %2074 = vmatmul.bf16.gmra.mxu0 %v1988
      %v2075 = vpop.f32.mrf.mxu0
      %v2076 = vadd.f32 %v1943, %v2075
      %v2077 = vpop.f32.mrf.mxu0
      %v2078 = vadd.f32 %v1943, %v2077
      %2079 = vmatmul.bf16.gmra.mxu0 %v1991
      %v2080 = vpop.f32.mrf.mxu0
      %v2081 = vadd.f32 %v1943, %v2080
      %v2082 = vpop.f32.mrf.mxu0
      %v2083 = vadd.f32 %v1943, %v2082
      %2084 = vmatmul.bf16.gmra.mxu0 %v1994
      %v2085 = vpop.f32.mrf.mxu0
      %v2086 = vadd.f32 %v1943, %v2085
      %v2087 = vpop.f32.mrf.mxu0
      %v2088 = vadd.f32 %v1943, %v2087
      %2089 = vmatmul.bf16.gmra.mxu0 %v1997
      %v2090 = vpop.f32.mrf.mxu0
      %v2091 = vadd.f32 %v1943, %v2090
      %v2092 = vpop.f32.mrf.mxu0
      %v2093 = vadd.f32 %v1943, %v2092
      %2094 = vdwg.mxu0
      %v2095 = vmax.f32 %v2016, 0.0
      %v2096 = vmax.f32 %v2018, 0.0
      %v2097 = vmax.f32 %v2021, 0.0
      %v2098 = vmax.f32 %v2023, 0.0
      %v2099 = vmax.f32 %v2026, 0.0
      %v2100 = vmax.f32 %v2028, 0.0
      %v2101 = vmax.f32 %v2031, 0.0
      %v2102 = vmax.f32 %v2033, 0.0
      %v2103 = vmax.f32 %v2036, 0.0
      %v2104 = vmax.f32 %v2038, 0.0
      %v2105 = vmax.f32 %v2041, 0.0
      %v2106 = vmax.f32 %v2043, 0.0
      %v2107 = vmax.f32 %v2046, 0.0
      %v2108 = vmax.f32 %v2048, 0.0
      %v2109 = vmax.f32 %v2051, 0.0
      %v2110 = vmax.f32 %v2053, 0.0
      %v2111 = vmax.f32 %v2056, 0.0
      %v2112 = vmax.f32 %v2058, 0.0
      %v2113 = vmax.f32 %v2061, 0.0
      %v2114 = vmax.f32 %v2063, 0.0
      %v2115 = vmax.f32 %v2066, 0.0
      %v2116 = vmax.f32 %v2068, 0.0
      %v2117 = vmax.f32 %v2071, 0.0
      %v2118 = vmax.f32 %v2073, 0.0
      %v2119 = vmax.f32 %v2076, 0.0
      %v2120 = vmax.f32 %v2078, 0.0
      %v2121 = vmax.f32 %v2081, 0.0
      %v2122 = vmax.f32 %v2083, 0.0
      %v2123 = vmax.f32 %v2086, 0.0
      %v2124 = vmax.f32 %v2088, 0.0
      %v2125 = vmax.f32 %v2091, 0.0
      %v2126 = vmax.f32 %v2093, 0.0
      %2127 = vst.msk [vmem:[#allocation3] sm:$0xff] %vm1890, 0.0
      %2128 = vst.msk [vmem:[#allocation3 + $0x8] sm:$0xff] %vm1890, 0.0
      %vm2129 = vcmask 58368
      %2130 = vst.msk [vmem:[#allocation3 + $0x10] sm:$0x3] %vm2129, 0.0
      %2131 = vst.msk [vmem:[#allocation3 + $0x18] sm:$0xff] %vm1890, 0.0
      %2132 = vst.msk [vmem:[#allocation3 + $0x20] sm:$0xff] %vm1890, 0.0
      %2133 = vst.msk [vmem:[#allocation3 + $0x28] sm:$0x3] %vm2129, 0.0
      %2134 = vst.msk [vmem:[#allocation3 + $0x30] sm:$0xff] %vm1890, 0.0
      %2135 = vst.msk [vmem:[#allocation3 + $0x38] sm:$0xff] %vm1890, 0.0
      %2136 = vst.msk [vmem:[#allocation3 + $0x40] sm:$0x3] %vm2129, 0.0
      %2137 = vst.msk [vmem:[#allocation3 + $0x48] sm:$0xff] %vm1890, 0.0
      %2138 = vst.msk [vmem:[#allocation3 + $0x50] sm:$0xff] %vm1890, 0.0
      %2139 = vst.msk [vmem:[#allocation3 + $0x58] sm:$0x3] %vm2129, 0.0
      %2140 = vst.msk [vmem:[#allocation3 + $0x60] sm:$0xff] %vm1890, 0.0
      %2141 = vst.msk [vmem:[#allocation3 + $0x68] sm:$0xff] %vm1890, 0.0
      %2142 = vst.msk [vmem:[#allocation3 + $0x70] sm:$0x3] %vm2129, 0.0
      %2143 = vst.msk [vmem:[#allocation3 + $0x78] sm:$0xff] %vm1890, 0.0
      %2144 = vst.msk [vmem:[#allocation3 + $0x80] sm:$0xff] %vm1890, 0.0
      %2145 = vst.msk [vmem:[#allocation3 + $0x88] sm:$0x3] %vm2129, 0.0
      %2146 = vst.msk [vmem:[#allocation3 + $0x90] sm:$0xff] %vm1890, 0.0
      %2147 = vst.msk [vmem:[#allocation3 + $0x98] sm:$0xff] %vm1890, 0.0
      %2148 = vst.msk [vmem:[#allocation3 + $0xa0] sm:$0x3] %vm2129, 0.0
      %2149 = vst.msk [vmem:[#allocation3 + $0xa8] sm:$0xff] %vm1890, 0.0
      %2150 = vst.msk [vmem:[#allocation3 + $0xb0] sm:$0xff] %vm1890, 0.0
      %2151 = vst.msk [vmem:[#allocation3 + $0xb8] sm:$0x3] %vm2129, 0.0
      %2152 = vst.msk [vmem:[#allocation3 + $0xc0] sm:$0xff] %vm1890, 0.0
      %2153 = vst.msk [vmem:[#allocation3 + $0xc8] sm:$0xff] %vm1890, 0.0
      %2154 = vst.msk [vmem:[#allocation3 + $0xd0] sm:$0x3] %vm2129, 0.0
      %2155 = vst.msk [vmem:[#allocation3 + $0xd8] sm:$0xff] %vm1890, 0.0
      %2156 = vst.msk [vmem:[#allocation3 + $0xe0] sm:$0xff] %vm1890, 0.0
      %2157 = vst.msk [vmem:[#allocation3 + $0xe8] sm:$0x3] %vm2129, 0.0
      %2158 = vst.msk [vmem:[#allocation3 + $0xf0] sm:$0xff] %vm1890, 0.0
      %2159 = vst.msk [vmem:[#allocation3 + $0xf8] sm:$0xff] %vm1890, 0.0
      %2160 = vst.msk [vmem:[#allocation3 + $0x100] sm:$0x3] %vm2129, 0.0
      %2161 = vst.msk [vmem:[#allocation3 + $0x108] sm:$0xff] %vm1890, 0.0
      %2162 = vst.msk [vmem:[#allocation3 + $0x110] sm:$0xff] %vm1890, 0.0
      %2163 = vst.msk [vmem:[#allocation3 + $0x118] sm:$0x3] %vm2129, 0.0
      %2164 = vst.msk [vmem:[#allocation3 + $0x120] sm:$0xff] %vm1890, 0.0
      %2165 = vst.msk [vmem:[#allocation3 + $0x128] sm:$0xff] %vm1890, 0.0
      %2166 = vst.msk [vmem:[#allocation3 + $0x130] sm:$0x3] %vm2129, 0.0
      %2167 = vst.msk [vmem:[#allocation3 + $0x138] sm:$0xff] %vm1890, 0.0
      %2168 = vst.msk [vmem:[#allocation3 + $0x140] sm:$0xff] %vm1890, 0.0
      %2169 = vst.msk [vmem:[#allocation3 + $0x148] sm:$0x3] %vm2129, 0.0
      %2170 = vst.msk [vmem:[#allocation3 + $0x150] sm:$0xff] %vm1890, 0.0
      %2171 = vst.msk [vmem:[#allocation3 + $0x158] sm:$0xff] %vm1890, 0.0
      %2172 = vst.msk [vmem:[#allocation3 + $0x160] sm:$0x3] %vm2129, 0.0
      %2173 = vst.msk [vmem:[#allocation3 + $0x168] sm:$0xff] %vm1890, 0.0
      %2174 = vst.msk [vmem:[#allocation3 + $0x170] sm:$0xff] %vm1890, 0.0
      %2175 = vst.msk [vmem:[#allocation3 + $0x178] sm:$0x3] %vm2129, 0.0
      %2176 = vst.msk [vmem:[#allocation3 + $0x180] sm:$0xff] %vm1890, 0.0
      %2177 = vst.msk [vmem:[#allocation3 + $0x188] sm:$0xff] %vm1890, 0.0
      %2178 = vst.msk [vmem:[#allocation3 + $0x190] sm:$0x3] %vm2129, 0.0
      %2179 = vst.msk [vmem:[#allocation3 + $0x198] sm:$0xff] %vm1890, 0.0
      %2180 = vst.msk [vmem:[#allocation3 + $0x1a0] sm:$0xff] %vm1890, 0.0
      %2181 = vst.msk [vmem:[#allocation3 + $0x1a8] sm:$0x3] %vm2129, 0.0
      %s2182 = scalar_lea.vmem [#allocation3], 24
      %2183 = vst.msk [vmem:[%s2182 + $0x1] sm:$0xff] %vm1890, %v2095
      %2184 = vst.msk [vmem:[%s2182 + $0x9] sm:$0xff] %vm1890, %v2096
      %2185 = vst.msk [vmem:[%s2182 + $0x19] sm:$0xff] %vm1890, %v2097
      %2186 = vst.msk [vmem:[%s2182 + $0x21] sm:$0xff] %vm1890, %v2098
      %2187 = vst.msk [vmem:[%s2182 + $0x31] sm:$0xff] %vm1890, %v2099
      %2188 = vst.msk [vmem:[%s2182 + $0x39] sm:$0xff] %vm1890, %v2100
      %2189 = vst.msk [vmem:[%s2182 + $0x49] sm:$0xff] %vm1890, %v2101
      %2190 = vst.msk [vmem:[%s2182 + $0x51] sm:$0xff] %vm1890, %v2102
      %2191 = vst.msk [vmem:[%s2182 + $0x61] sm:$0xff] %vm1890, %v2103
      %2192 = vst.msk [vmem:[%s2182 + $0x69] sm:$0xff] %vm1890, %v2104
      %2193 = vst.msk [vmem:[%s2182 + $0x79] sm:$0xff] %vm1890, %v2105
      %2194 = vst.msk [vmem:[%s2182 + $0x81] sm:$0xff] %vm1890, %v2106
      %2195 = vst.msk [vmem:[%s2182 + $0x91] sm:$0xff] %vm1890, %v2107
      %2196 = vst.msk [vmem:[%s2182 + $0x99] sm:$0xff] %vm1890, %v2108
      %2197 = vst.msk [vmem:[%s2182 + $0xa9] sm:$0xff] %vm1890, %v2109
      %2198 = vst.msk [vmem:[%s2182 + $0xb1] sm:$0xff] %vm1890, %v2110
      %2199 = vst.msk [vmem:[%s2182 + $0xc1] sm:$0xff] %vm1890, %v2111
      %2200 = vst.msk [vmem:[%s2182 + $0xc9] sm:$0xff] %vm1890, %v2112
      %2201 = vst.msk [vmem:[%s2182 + $0xd9] sm:$0xff] %vm1890, %v2113
      %2202 = vst.msk [vmem:[%s2182 + $0xe1] sm:$0xff] %vm1890, %v2114
      %2203 = vst.msk [vmem:[%s2182 + $0xf1] sm:$0xff] %vm1890, %v2115
      %2204 = vst.msk [vmem:[%s2182 + $0xf9] sm:$0xff] %vm1890, %v2116
      %2205 = vst.msk [vmem:[%s2182 + $0x109] sm:$0xff] %vm1890, %v2117
      %2206 = vst.msk [vmem:[%s2182 + $0x111] sm:$0xff] %vm1890, %v2118
      %2207 = vst.msk [vmem:[%s2182 + $0x121] sm:$0xff] %vm1890, %v2119
      %2208 = vst.msk [vmem:[%s2182 + $0x129] sm:$0xff] %vm1890, %v2120
      %2209 = vst.msk [vmem:[%s2182 + $0x139] sm:$0xff] %vm1890, %v2121
      %2210 = vst.msk [vmem:[%s2182 + $0x141] sm:$0xff] %vm1890, %v2122
      %2211 = vst.msk [vmem:[%s2182 + $0x151] sm:$0xff] %vm1890, %v2123
      %2212 = vst.msk [vmem:[%s2182 + $0x159] sm:$0xff] %vm1890, %v2124
      %2213 = vst.msk [vmem:[%s2182 + $0x169] sm:$0xff] %vm1890, %v2125
      %2214 = vst.msk [vmem:[%s2182 + $0x171] sm:$0xff] %vm1890, %v2126
      %v2215 = vld [vmem:[#allocation3] sm:$0xff]
      %v2216 = vld [vmem:[#allocation3 + $0x8] sm:$0xff]
      %v2217 = vld [vmem:[#allocation3 + $0x18] sm:$0xff]
      %v2218 = vld [vmem:[#allocation3 + $0x20] sm:$0xff]
      %v2219 = vld [vmem:[#allocation3 + $0x30] sm:$0xff]
      %v2220 = vld [vmem:[#allocation3 + $0x38] sm:$0xff]
      %v2221 = vld [vmem:[#allocation3 + $0x48] sm:$0xff]
      %v2222 = vld [vmem:[#allocation3 + $0x50] sm:$0xff]
      %v2223 = vld [vmem:[#allocation3 + $0x60] sm:$0xff]
      %v2224 = vld [vmem:[#allocation3 + $0x68] sm:$0xff]
      %v2225 = vld [vmem:[#allocation3 + $0x78] sm:$0xff]
      %v2226 = vld [vmem:[#allocation3 + $0x80] sm:$0xff]
      %v2227 = vld [vmem:[#allocation3 + $0x90] sm:$0xff]
      %v2228 = vld [vmem:[#allocation3 + $0x98] sm:$0xff]
      %v2229 = vld [vmem:[#allocation3 + $0xa8] sm:$0xff]
      %v2230 = vld [vmem:[#allocation3 + $0xb0] sm:$0xff]
      %v2231 = vld [vmem:[#allocation3 + $0xc0] sm:$0xff]
      %v2232 = vld [vmem:[#allocation3 + $0xc8] sm:$0xff]
      %v2233 = vld [vmem:[#allocation3 + $0xd8] sm:$0xff]
      %v2234 = vld [vmem:[#allocation3 + $0xe0] sm:$0xff]
      %v2235 = vld [vmem:[#allocation3 + $0xf0] sm:$0xff]
      %v2236 = vld [vmem:[#allocation3 + $0xf8] sm:$0xff]
      %v2237 = vld [vmem:[#allocation3 + $0x108] sm:$0xff]
      %v2238 = vld [vmem:[#allocation3 + $0x110] sm:$0xff]
      %v2239 = vld [vmem:[#allocation3 + $0x120] sm:$0xff]
      %v2240 = vld [vmem:[#allocation3 + $0x128] sm:$0xff]
      %v2241 = vld [vmem:[#allocation3 + $0x138] sm:$0xff]
      %v2242 = vld [vmem:[#allocation3 + $0x140] sm:$0xff]
      %v2243 = vld [vmem:[#allocation3 + $0x150] sm:$0xff]
      %v2244 = vld [vmem:[#allocation3 + $0x158] sm:$0xff]
      %v2245 = vld [vmem:[#allocation3 + $0x168] sm:$0xff]
      %v2246 = vld [vmem:[#allocation3 + $0x170] sm:$0xff]
      %v2247 = vld [vmem:[#allocation3 + $0x1] sm:$0xff]
      %v2248 = vld [vmem:[#allocation3 + $0x9] sm:$0xff]
      %v2249 = vld [vmem:[#allocation3 + $0x19] sm:$0xff]
      %v2250 = vld [vmem:[#allocation3 + $0x21] sm:$0xff]
      %v2251 = vld [vmem:[#allocation3 + $0x31] sm:$0xff]
      %v2252 = vld [vmem:[#allocation3 + $0x39] sm:$0xff]
      %v2253 = vld [vmem:[#allocation3 + $0x49] sm:$0xff]
      %v2254 = vld [vmem:[#allocation3 + $0x51] sm:$0xff]
      %v2255 = vld [vmem:[#allocation3 + $0x61] sm:$0xff]
      %v2256 = vld [vmem:[#allocation3 + $0x69] sm:$0xff]
      %v2257 = vld [vmem:[#allocation3 + $0x79] sm:$0xff]
      %v2258 = vld [vmem:[#allocation3 + $0x81] sm:$0xff]
      %v2259 = vld [vmem:[#allocation3 + $0x91] sm:$0xff]
      %v2260 = vld [vmem:[#allocation3 + $0x99] sm:$0xff]
      %v2261 = vld [vmem:[#allocation3 + $0xa9] sm:$0xff]
      %v2262 = vld [vmem:[#allocation3 + $0xb1] sm:$0xff]
      %v2263 = vld [vmem:[#allocation3 + $0xc1] sm:$0xff]
      %v2264 = vld [vmem:[#allocation3 + $0xc9] sm:$0xff]
      %v2265 = vld [vmem:[#allocation3 + $0xd9] sm:$0xff]
      %v2266 = vld [vmem:[#allocation3 + $0xe1] sm:$0xff]
      %v2267 = vld [vmem:[#allocation3 + $0xf1] sm:$0xff]
      %v2268 = vld [vmem:[#allocation3 + $0xf9] sm:$0xff]
      %v2269 = vld [vmem:[#allocation3 + $0x109] sm:$0xff]
      %v2270 = vld [vmem:[#allocation3 + $0x111] sm:$0xff]
      %v2271 = vld [vmem:[#allocation3 + $0x121] sm:$0xff]
      %v2272 = vld [vmem:[#allocation3 + $0x129] sm:$0xff]
      %v2273 = vld [vmem:[#allocation3 + $0x139] sm:$0xff]
      %v2274 = vld [vmem:[#allocation3 + $0x141] sm:$0xff]
      %v2275 = vld [vmem:[#allocation3 + $0x151] sm:$0xff]
      %v2276 = vld [vmem:[#allocation3 + $0x159] sm:$0xff]
      %v2277 = vld [vmem:[#allocation3 + $0x169] sm:$0xff]
      %v2278 = vld [vmem:[#allocation3 + $0x171] sm:$0xff]
      %v2279 = vld [vmem:[#allocation3 + $0x2] sm:$0xff]
      %v2280 = vld [vmem:[#allocation3 + $0xa] sm:$0xff]
      %v2281 = vld [vmem:[#allocation3 + $0x1a] sm:$0xff]
      %v2282 = vld [vmem:[#allocation3 + $0x22] sm:$0xff]
      %v2283 = vld [vmem:[#allocation3 + $0x32] sm:$0xff]
      %v2284 = vld [vmem:[#allocation3 + $0x3a] sm:$0xff]
      %v2285 = vld [vmem:[#allocation3 + $0x4a] sm:$0xff]
      %v2286 = vld [vmem:[#allocation3 + $0x52] sm:$0xff]
      %v2287 = vld [vmem:[#allocation3 + $0x62] sm:$0xff]
      %v2288 = vld [vmem:[#allocation3 + $0x6a] sm:$0xff]
      %v2289 = vld [vmem:[#allocation3 + $0x7a] sm:$0xff]
      %v2290 = vld [vmem:[#allocation3 + $0x82] sm:$0xff]
      %v2291 = vld [vmem:[#allocation3 + $0x92] sm:$0xff]
      %v2292 = vld [vmem:[#allocation3 + $0x9a] sm:$0xff]
      %v2293 = vld [vmem:[#allocation3 + $0xaa] sm:$0xff]
      %v2294 = vld [vmem:[#allocation3 + $0xb2] sm:$0xff]
      %v2295 = vld [vmem:[#allocation3 + $0xc2] sm:$0xff]
      %v2296 = vld [vmem:[#allocation3 + $0xca] sm:$0xff]
      %v2297 = vld [vmem:[#allocation3 + $0xda] sm:$0xff]
      %v2298 = vld [vmem:[#allocation3 + $0xe2] sm:$0xff]
      %v2299 = vld [vmem:[#allocation3 + $0xf2] sm:$0xff]
      %v2300 = vld [vmem:[#allocation3 + $0xfa] sm:$0xff]
      %v2301 = vld [vmem:[#allocation3 + $0x10a] sm:$0xff]
      %v2302 = vld [vmem:[#allocation3 + $0x112] sm:$0xff]
      %v2303 = vld [vmem:[#allocation3 + $0x122] sm:$0xff]
      %v2304 = vld [vmem:[#allocation3 + $0x12a] sm:$0xff]
      %v2305 = vld [vmem:[#allocation3 + $0x13a] sm:$0xff]
      %v2306 = vld [vmem:[#allocation3 + $0x142] sm:$0xff]
      %v2307 = vld [vmem:[#allocation3 + $0x152] sm:$0xff]
      %v2308 = vld [vmem:[#allocation3 + $0x15a] sm:$0xff]
      %v2309 = vld [vmem:[#allocation3 + $0x16a] sm:$0xff]
      %v2310 = vld [vmem:[#allocation3 + $0x172] sm:$0xff]
      %v2311 = vld [vmem:[%s2182] sm:$0xff]
      %v2312 = vld [vmem:[%s2182 + $0x8] sm:$0xff]
      %v2313 = vld [vmem:[%s2182 + $0x18] sm:$0xff]
      %v2314 = vld [vmem:[%s2182 + $0x20] sm:$0xff]
      %v2315 = vld [vmem:[%s2182 + $0x30] sm:$0xff]
      %v2316 = vld [vmem:[%s2182 + $0x38] sm:$0xff]
      %v2317 = vld [vmem:[%s2182 + $0x48] sm:$0xff]
      %v2318 = vld [vmem:[%s2182 + $0x50] sm:$0xff]
      %v2319 = vld [vmem:[%s2182 + $0x60] sm:$0xff]
      %v2320 = vld [vmem:[%s2182 + $0x68] sm:$0xff]
      %v2321 = vld [vmem:[%s2182 + $0x78] sm:$0xff]
      %v2322 = vld [vmem:[%s2182 + $0x80] sm:$0xff]
      %v2323 = vld [vmem:[%s2182 + $0x90] sm:$0xff]
      %v2324 = vld [vmem:[%s2182 + $0x98] sm:$0xff]
      %v2325 = vld [vmem:[%s2182 + $0xa8] sm:$0xff]
      %v2326 = vld [vmem:[%s2182 + $0xb0] sm:$0xff]
      %v2327 = vld [vmem:[%s2182 + $0xc0] sm:$0xff]
      %v2328 = vld [vmem:[%s2182 + $0xc8] sm:$0xff]
      %v2329 = vld [vmem:[%s2182 + $0xd8] sm:$0xff]
      %v2330 = vld [vmem:[%s2182 + $0xe0] sm:$0xff]
      %v2331 = vld [vmem:[%s2182 + $0xf0] sm:$0xff]
      %v2332 = vld [vmem:[%s2182 + $0xf8] sm:$0xff]
      %v2333 = vld [vmem:[%s2182 + $0x108] sm:$0xff]
      %v2334 = vld [vmem:[%s2182 + $0x110] sm:$0xff]
      %v2335 = vld [vmem:[%s2182 + $0x120] sm:$0xff]
      %v2336 = vld [vmem:[%s2182 + $0x128] sm:$0xff]
      %v2337 = vld [vmem:[%s2182 + $0x138] sm:$0xff]
      %v2338 = vld [vmem:[%s2182 + $0x140] sm:$0xff]
      %v2339 = vld [vmem:[%s2182 + $0x150] sm:$0xff]
      %v2340 = vld [vmem:[%s2182 + $0x158] sm:$0xff]
      %v2341 = vld [vmem:[%s2182 + $0x168] sm:$0xff]
      %v2342 = vld [vmem:[%s2182 + $0x170] sm:$0xff]
      %v2343 = vld [vmem:[%s2182 + $0x1] sm:$0xff]
      %v2344 = vld [vmem:[%s2182 + $0x9] sm:$0xff]
      %v2345 = vld [vmem:[%s2182 + $0x19] sm:$0xff]
      %v2346 = vld [vmem:[%s2182 + $0x21] sm:$0xff]
      %v2347 = vld [vmem:[%s2182 + $0x31] sm:$0xff]
      %v2348 = vld [vmem:[%s2182 + $0x39] sm:$0xff]
      %v2349 = vld [vmem:[%s2182 + $0x49] sm:$0xff]
      %v2350 = vld [vmem:[%s2182 + $0x51] sm:$0xff]
      %v2351 = vld [vmem:[%s2182 + $0x61] sm:$0xff]
      %v2352 = vld [vmem:[%s2182 + $0x69] sm:$0xff]
      %v2353 = vld [vmem:[%s2182 + $0x79] sm:$0xff]
      %v2354 = vld [vmem:[%s2182 + $0x81] sm:$0xff]
      %v2355 = vld [vmem:[%s2182 + $0x91] sm:$0xff]
      %v2356 = vld [vmem:[%s2182 + $0x99] sm:$0xff]
      %v2357 = vld [vmem:[%s2182 + $0xa9] sm:$0xff]
      %v2358 = vld [vmem:[%s2182 + $0xb1] sm:$0xff]
      %v2359 = vld [vmem:[%s2182 + $0xc1] sm:$0xff]
      %v2360 = vld [vmem:[%s2182 + $0xc9] sm:$0xff]
      %v2361 = vld [vmem:[%s2182 + $0xd9] sm:$0xff]
      %v2362 = vld [vmem:[%s2182 + $0xe1] sm:$0xff]
      %v2363 = vld [vmem:[%s2182 + $0xf1] sm:$0xff]
      %v2364 = vld [vmem:[%s2182 + $0xf9] sm:$0xff]
      %v2365 = vld [vmem:[%s2182 + $0x109] sm:$0xff]
      %v2366 = vld [vmem:[%s2182 + $0x111] sm:$0xff]
      %v2367 = vld [vmem:[%s2182 + $0x121] sm:$0xff]
      %v2368 = vld [vmem:[%s2182 + $0x129] sm:$0xff]
      %v2369 = vld [vmem:[%s2182 + $0x139] sm:$0xff]
      %v2370 = vld [vmem:[%s2182 + $0x141] sm:$0xff]
      %v2371 = vld [vmem:[%s2182 + $0x151] sm:$0xff]
      %v2372 = vld [vmem:[%s2182 + $0x159] sm:$0xff]
      %v2373 = vld [vmem:[%s2182 + $0x169] sm:$0xff]
      %v2374 = vld [vmem:[%s2182 + $0x171] sm:$0xff]
      %v2375 = vld [vmem:[%s2182 + $0x2] sm:$0xff]
      %v2376 = vld [vmem:[%s2182 + $0xa] sm:$0xff]
      %v2377 = vld [vmem:[%s2182 + $0x1a] sm:$0xff]
      %v2378 = vld [vmem:[%s2182 + $0x22] sm:$0xff]
      %v2379 = vld [vmem:[%s2182 + $0x32] sm:$0xff]
      %v2380 = vld [vmem:[%s2182 + $0x3a] sm:$0xff]
      %v2381 = vld [vmem:[%s2182 + $0x4a] sm:$0xff]
      %v2382 = vld [vmem:[%s2182 + $0x52] sm:$0xff]
      %v2383 = vld [vmem:[%s2182 + $0x62] sm:$0xff]
      %v2384 = vld [vmem:[%s2182 + $0x6a] sm:$0xff]
      %v2385 = vld [vmem:[%s2182 + $0x7a] sm:$0xff]
      %v2386 = vld [vmem:[%s2182 + $0x82] sm:$0xff]
      %v2387 = vld [vmem:[%s2182 + $0x92] sm:$0xff]
      %v2388 = vld [vmem:[%s2182 + $0x9a] sm:$0xff]
      %v2389 = vld [vmem:[%s2182 + $0xaa] sm:$0xff]
      %v2390 = vld [vmem:[%s2182 + $0xb2] sm:$0xff]
      %v2391 = vld [vmem:[%s2182 + $0xc2] sm:$0xff]
      %v2392 = vld [vmem:[%s2182 + $0xca] sm:$0xff]
      %v2393 = vld [vmem:[%s2182 + $0xda] sm:$0xff]
      %v2394 = vld [vmem:[%s2182 + $0xe2] sm:$0xff]
      %v2395 = vld [vmem:[%s2182 + $0xf2] sm:$0xff]
      %v2396 = vld [vmem:[%s2182 + $0xfa] sm:$0xff]
      %v2397 = vld [vmem:[%s2182 + $0x10a] sm:$0xff]
      %v2398 = vld [vmem:[%s2182 + $0x112] sm:$0xff]
      %v2399 = vld [vmem:[%s2182 + $0x122] sm:$0xff]
      %v2400 = vld [vmem:[%s2182 + $0x12a] sm:$0xff]
      %v2401 = vld [vmem:[%s2182 + $0x13a] sm:$0xff]
      %v2402 = vld [vmem:[%s2182 + $0x142] sm:$0xff]
      %v2403 = vld [vmem:[%s2182 + $0x152] sm:$0xff]
      %v2404 = vld [vmem:[%s2182 + $0x15a] sm:$0xff]
      %v2405 = vld [vmem:[%s2182 + $0x16a] sm:$0xff]
      %v2406 = vld [vmem:[%s2182 + $0x172] sm:$0xff]
      %s2407 = scalar_lea.vmem [#allocation3], 48
      %v2408 = vld [vmem:[%s2407] sm:$0xff]
      %v2409 = vld [vmem:[%s2407 + $0x8] sm:$0xff]
      %v2410 = vld [vmem:[%s2407 + $0x18] sm:$0xff]
      %v2411 = vld [vmem:[%s2407 + $0x20] sm:$0xff]
      %v2412 = vld [vmem:[%s2407 + $0x30] sm:$0xff]
      %v2413 = vld [vmem:[%s2407 + $0x38] sm:$0xff]
      %v2414 = vld [vmem:[%s2407 + $0x48] sm:$0xff]
      %v2415 = vld [vmem:[%s2407 + $0x50] sm:$0xff]
      %v2416 = vld [vmem:[%s2407 + $0x60] sm:$0xff]
      %v2417 = vld [vmem:[%s2407 + $0x68] sm:$0xff]
      %v2418 = vld [vmem:[%s2407 + $0x78] sm:$0xff]
      %v2419 = vld [vmem:[%s2407 + $0x80] sm:$0xff]
      %v2420 = vld [vmem:[%s2407 + $0x90] sm:$0xff]
      %v2421 = vld [vmem:[%s2407 + $0x98] sm:$0xff]
      %v2422 = vld [vmem:[%s2407 + $0xa8] sm:$0xff]
      %v2423 = vld [vmem:[%s2407 + $0xb0] sm:$0xff]
      %v2424 = vld [vmem:[%s2407 + $0xc0] sm:$0xff]
      %v2425 = vld [vmem:[%s2407 + $0xc8] sm:$0xff]
      %v2426 = vld [vmem:[%s2407 + $0xd8] sm:$0xff]
      %v2427 = vld [vmem:[%s2407 + $0xe0] sm:$0xff]
      %v2428 = vld [vmem:[%s2407 + $0xf0] sm:$0xff]
      %v2429 = vld [vmem:[%s2407 + $0xf8] sm:$0xff]
      %v2430 = vld [vmem:[%s2407 + $0x108] sm:$0xff]
      %v2431 = vld [vmem:[%s2407 + $0x110] sm:$0xff]
      %v2432 = vld [vmem:[%s2407 + $0x120] sm:$0xff]
      %v2433 = vld [vmem:[%s2407 + $0x128] sm:$0xff]
      %v2434 = vld [vmem:[%s2407 + $0x138] sm:$0xff]
      %v2435 = vld [vmem:[%s2407 + $0x140] sm:$0xff]
      %v2436 = vld [vmem:[%s2407 + $0x150] sm:$0xff]
      %v2437 = vld [vmem:[%s2407 + $0x158] sm:$0xff]
      %v2438 = vld [vmem:[%s2407 + $0x168] sm:$0xff]
      %v2439 = vld [vmem:[%s2407 + $0x170] sm:$0xff]
      %v2440 = vld [vmem:[%s2407 + $0x1] sm:$0xff]
      %v2441 = vld [vmem:[%s2407 + $0x9] sm:$0xff]
      %v2442 = vld [vmem:[%s2407 + $0x19] sm:$0xff]
      %v2443 = vld [vmem:[%s2407 + $0x21] sm:$0xff]
      %v2444 = vld [vmem:[%s2407 + $0x31] sm:$0xff]
      %v2445 = vld [vmem:[%s2407 + $0x39] sm:$0xff]
      %v2446 = vld [vmem:[%s2407 + $0x49] sm:$0xff]
      %v2447 = vld [vmem:[%s2407 + $0x51] sm:$0xff]
      %v2448 = vld [vmem:[%s2407 + $0x61] sm:$0xff]
      %v2449 = vld [vmem:[%s2407 + $0x69] sm:$0xff]
      %v2450 = vld [vmem:[%s2407 + $0x79] sm:$0xff]
      %v2451 = vld [vmem:[%s2407 + $0x81] sm:$0xff]
      %v2452 = vld [vmem:[%s2407 + $0x91] sm:$0xff]
      %v2453 = vld [vmem:[%s2407 + $0x99] sm:$0xff]
      %v2454 = vld [vmem:[%s2407 + $0xa9] sm:$0xff]
      %v2455 = vld [vmem:[%s2407 + $0xb1] sm:$0xff]
      %v2456 = vld [vmem:[%s2407 + $0xc1] sm:$0xff]
      %v2457 = vld [vmem:[%s2407 + $0xc9] sm:$0xff]
      %v2458 = vld [vmem:[%s2407 + $0xd9] sm:$0xff]
      %v2459 = vld [vmem:[%s2407 + $0xe1] sm:$0xff]
      %v2460 = vld [vmem:[%s2407 + $0xf1] sm:$0xff]
      %v2461 = vld [vmem:[%s2407 + $0xf9] sm:$0xff]
      %v2462 = vld [vmem:[%s2407 + $0x109] sm:$0xff]
      %v2463 = vld [vmem:[%s2407 + $0x111] sm:$0xff]
      %v2464 = vld [vmem:[%s2407 + $0x121] sm:$0xff]
      %v2465 = vld [vmem:[%s2407 + $0x129] sm:$0xff]
      %v2466 = vld [vmem:[%s2407 + $0x139] sm:$0xff]
      %v2467 = vld [vmem:[%s2407 + $0x141] sm:$0xff]
      %v2468 = vld [vmem:[%s2407 + $0x151] sm:$0xff]
      %v2469 = vld [vmem:[%s2407 + $0x159] sm:$0xff]
      %v2470 = vld [vmem:[%s2407 + $0x169] sm:$0xff]
      %v2471 = vld [vmem:[%s2407 + $0x171] sm:$0xff]
      %v2472 = vld [vmem:[%s2407 + $0x2] sm:$0xff]
      %v2473 = vld [vmem:[%s2407 + $0xa] sm:$0xff]
      %v2474 = vld [vmem:[%s2407 + $0x1a] sm:$0xff]
      %v2475 = vld [vmem:[%s2407 + $0x22] sm:$0xff]
      %v2476 = vld [vmem:[%s2407 + $0x32] sm:$0xff]
      %v2477 = vld [vmem:[%s2407 + $0x3a] sm:$0xff]
      %v2478 = vld [vmem:[%s2407 + $0x4a] sm:$0xff]
      %v2479 = vld [vmem:[%s2407 + $0x52] sm:$0xff]
      %v2480 = vld [vmem:[%s2407 + $0x62] sm:$0xff]
      %v2481 = vld [vmem:[%s2407 + $0x6a] sm:$0xff]
      %v2482 = vld [vmem:[%s2407 + $0x7a] sm:$0xff]
      %v2483 = vld [vmem:[%s2407 + $0x82] sm:$0xff]
      %v2484 = vld [vmem:[%s2407 + $0x92] sm:$0xff]
      %v2485 = vld [vmem:[%s2407 + $0x9a] sm:$0xff]
      %v2486 = vld [vmem:[%s2407 + $0xaa] sm:$0xff]
      %v2487 = vld [vmem:[%s2407 + $0xb2] sm:$0xff]
      %v2488 = vld [vmem:[%s2407 + $0xc2] sm:$0xff]
      %v2489 = vld [vmem:[%s2407 + $0xca] sm:$0xff]
      %v2490 = vld [vmem:[%s2407 + $0xda] sm:$0xff]
      %v2491 = vld [vmem:[%s2407 + $0xe2] sm:$0xff]
      %v2492 = vld [vmem:[%s2407 + $0xf2] sm:$0xff]
      %v2493 = vld [vmem:[%s2407 + $0xfa] sm:$0xff]
      %v2494 = vld [vmem:[%s2407 + $0x10a] sm:$0xff]
      %v2495 = vld [vmem:[%s2407 + $0x112] sm:$0xff]
      %v2496 = vld [vmem:[%s2407 + $0x122] sm:$0xff]
      %v2497 = vld [vmem:[%s2407 + $0x12a] sm:$0xff]
      %v2498 = vld [vmem:[%s2407 + $0x13a] sm:$0xff]
      %v2499 = vld [vmem:[%s2407 + $0x142] sm:$0xff]
      %v2500 = vld [vmem:[%s2407 + $0x152] sm:$0xff]
      %v2501 = vld [vmem:[%s2407 + $0x15a] sm:$0xff]
      %v2502 = vld [vmem:[%s2407 + $0x16a] sm:$0xff]
      %v2503 = vld [vmem:[%s2407 + $0x172] sm:$0xff]
      %2536 = vrot.lane.b32.xlu0 %v2247, 8
      %v2537 = vpop.permute.xlu0 %2536
      %2538 = vrot.lane.b32.xlu0 %v2248, 8
      %v2539 = vpop.permute.xlu0 %2538
      %2540 = vrot.lane.b32.xlu0 %v2249, 8
      %v2541 = vpop.permute.xlu0 %2540
      %2542 = vrot.lane.b32.xlu0 %v2250, 8
      %v2543 = vpop.permute.xlu0 %2542
      %2544 = vrot.lane.b32.xlu0 %v2251, 8
      %v2545 = vpop.permute.xlu0 %2544
      %2546 = vrot.lane.b32.xlu0 %v2252, 8
      %v2547 = vpop.permute.xlu0 %2546
      %2548 = vrot.lane.b32.xlu0 %v2253, 8
      %v2549 = vpop.permute.xlu0 %2548
      %2550 = vrot.lane.b32.xlu0 %v2254, 8
      %v2551 = vpop.permute.xlu0 %2550
      %2552 = vrot.lane.b32.xlu0 %v2255, 8
      %v2553 = vpop.permute.xlu0 %2552
      %2554 = vrot.lane.b32.xlu0 %v2256, 8
      %v2555 = vpop.permute.xlu0 %2554
      %2556 = vrot.lane.b32.xlu0 %v2257, 8
      %v2557 = vpop.permute.xlu0 %2556
      %2558 = vrot.lane.b32.xlu0 %v2258, 8
      %v2559 = vpop.permute.xlu0 %2558
      %2560 = vrot.lane.b32.xlu0 %v2259, 8
      %v2561 = vpop.permute.xlu0 %2560
      %2562 = vrot.lane.b32.xlu0 %v2260, 8
      %v2563 = vpop.permute.xlu0 %2562
      %2564 = vrot.lane.b32.xlu0 %v2261, 8
      %v2565 = vpop.permute.xlu0 %2564
      %2566 = vrot.lane.b32.xlu0 %v2262, 8
      %v2567 = vpop.permute.xlu0 %2566
      %2568 = vrot.lane.b32.xlu0 %v2263, 8
      %v2569 = vpop.permute.xlu0 %2568
      %2570 = vrot.lane.b32.xlu0 %v2264, 8
      %v2571 = vpop.permute.xlu0 %2570
      %2572 = vrot.lane.b32.xlu0 %v2265, 8
      %v2573 = vpop.permute.xlu0 %2572
      %2574 = vrot.lane.b32.xlu0 %v2266, 8
      %v2575 = vpop.permute.xlu0 %2574
      %2576 = vrot.lane.b32.xlu0 %v2267, 8
      %v2577 = vpop.permute.xlu0 %2576
      %2578 = vrot.lane.b32.xlu0 %v2268, 8
      %v2579 = vpop.permute.xlu0 %2578
      %2580 = vrot.lane.b32.xlu0 %v2269, 8
      %v2581 = vpop.permute.xlu0 %2580
      %2582 = vrot.lane.b32.xlu0 %v2270, 8
      %v2583 = vpop.permute.xlu0 %2582
      %2584 = vrot.lane.b32.xlu0 %v2271, 8
      %v2585 = vpop.permute.xlu0 %2584
      %2586 = vrot.lane.b32.xlu0 %v2272, 8
      %v2587 = vpop.permute.xlu0 %2586
      %2588 = vrot.lane.b32.xlu0 %v2273, 8
      %v2589 = vpop.permute.xlu0 %2588
      %2590 = vrot.lane.b32.xlu0 %v2274, 8
      %v2591 = vpop.permute.xlu0 %2590
      %2592 = vrot.lane.b32.xlu0 %v2275, 8
      %v2593 = vpop.permute.xlu0 %2592
      %2594 = vrot.lane.b32.xlu0 %v2276, 8
      %v2595 = vpop.permute.xlu0 %2594
      %2596 = vrot.lane.b32.xlu0 %v2277, 8
      %v2597 = vpop.permute.xlu0 %2596
      %2598 = vrot.lane.b32.xlu0 %v2278, 8
      %v2599 = vpop.permute.xlu0 %2598
      %2664 = vrot.lane.b32.xlu0 %v2279, 16
      %v2665 = vpop.permute.xlu0 %2664
      %2666 = vrot.lane.b32.xlu0 %v2280, 16
      %v2667 = vpop.permute.xlu0 %2666
      %2668 = vrot.lane.b32.xlu0 %v2281, 16
      %v2669 = vpop.permute.xlu0 %2668
      %2670 = vrot.lane.b32.xlu0 %v2282, 16
      %v2671 = vpop.permute.xlu0 %2670
      %2672 = vrot.lane.b32.xlu0 %v2283, 16
      %v2673 = vpop.permute.xlu0 %2672
      %2674 = vrot.lane.b32.xlu0 %v2284, 16
      %v2675 = vpop.permute.xlu0 %2674
      %2676 = vrot.lane.b32.xlu0 %v2285, 16
      %v2677 = vpop.permute.xlu0 %2676
      %2678 = vrot.lane.b32.xlu0 %v2286, 16
      %v2679 = vpop.permute.xlu0 %2678
      %2680 = vrot.lane.b32.xlu0 %v2287, 16
      %v2681 = vpop.permute.xlu0 %2680
      %2682 = vrot.lane.b32.xlu0 %v2288, 16
      %v2683 = vpop.permute.xlu0 %2682
      %2684 = vrot.lane.b32.xlu0 %v2289, 16
      %v2685 = vpop.permute.xlu0 %2684
      %2686 = vrot.lane.b32.xlu0 %v2290, 16
      %v2687 = vpop.permute.xlu0 %2686
      %2688 = vrot.lane.b32.xlu0 %v2291, 16
      %v2689 = vpop.permute.xlu0 %2688
      %2690 = vrot.lane.b32.xlu0 %v2292, 16
      %v2691 = vpop.permute.xlu0 %2690
      %2692 = vrot.lane.b32.xlu0 %v2293, 16
      %v2693 = vpop.permute.xlu0 %2692
      %2694 = vrot.lane.b32.xlu0 %v2294, 16
      %v2695 = vpop.permute.xlu0 %2694
      %2696 = vrot.lane.b32.xlu0 %v2295, 16
      %v2697 = vpop.permute.xlu0 %2696
      %2698 = vrot.lane.b32.xlu0 %v2296, 16
      %v2699 = vpop.permute.xlu0 %2698
      %2700 = vrot.lane.b32.xlu0 %v2297, 16
      %v2701 = vpop.permute.xlu0 %2700
      %2702 = vrot.lane.b32.xlu0 %v2298, 16
      %v2703 = vpop.permute.xlu0 %2702
      %2704 = vrot.lane.b32.xlu0 %v2299, 16
      %v2705 = vpop.permute.xlu0 %2704
      %2706 = vrot.lane.b32.xlu0 %v2300, 16
      %v2707 = vpop.permute.xlu0 %2706
      %2708 = vrot.lane.b32.xlu0 %v2301, 16
      %v2709 = vpop.permute.xlu0 %2708
      %2710 = vrot.lane.b32.xlu0 %v2302, 16
      %v2711 = vpop.permute.xlu0 %2710
      %2712 = vrot.lane.b32.xlu0 %v2303, 16
      %v2713 = vpop.permute.xlu0 %2712
      %2714 = vrot.lane.b32.xlu0 %v2304, 16
      %v2715 = vpop.permute.xlu0 %2714
      %2716 = vrot.lane.b32.xlu0 %v2305, 16
      %v2717 = vpop.permute.xlu0 %2716
      %2718 = vrot.lane.b32.xlu0 %v2306, 16
      %v2719 = vpop.permute.xlu0 %2718
      %2720 = vrot.lane.b32.xlu0 %v2307, 16
      %v2721 = vpop.permute.xlu0 %2720
      %2722 = vrot.lane.b32.xlu0 %v2308, 16
      %v2723 = vpop.permute.xlu0 %2722
      %2724 = vrot.lane.b32.xlu0 %v2309, 16
      %v2725 = vpop.permute.xlu0 %2724
      %2726 = vrot.lane.b32.xlu0 %v2310, 16
      %v2727 = vpop.permute.xlu0 %2726
      %2792 = vrot.lane.b32.xlu0 %v2311, 24
      %v2793 = vpop.permute.xlu0 %2792
      %2794 = vrot.lane.b32.xlu0 %v2312, 24
      %v2795 = vpop.permute.xlu0 %2794
      %2796 = vrot.lane.b32.xlu0 %v2313, 24
      %v2797 = vpop.permute.xlu0 %2796
      %2798 = vrot.lane.b32.xlu0 %v2314, 24
      %v2799 = vpop.permute.xlu0 %2798
      %2800 = vrot.lane.b32.xlu0 %v2315, 24
      %v2801 = vpop.permute.xlu0 %2800
      %2802 = vrot.lane.b32.xlu0 %v2316, 24
      %v2803 = vpop.permute.xlu0 %2802
      %2804 = vrot.lane.b32.xlu0 %v2317, 24
      %v2805 = vpop.permute.xlu0 %2804
      %2806 = vrot.lane.b32.xlu0 %v2318, 24
      %v2807 = vpop.permute.xlu0 %2806
      %2808 = vrot.lane.b32.xlu0 %v2319, 24
      %v2809 = vpop.permute.xlu0 %2808
      %2810 = vrot.lane.b32.xlu0 %v2320, 24
      %v2811 = vpop.permute.xlu0 %2810
      %2812 = vrot.lane.b32.xlu0 %v2321, 24
      %v2813 = vpop.permute.xlu0 %2812
      %2814 = vrot.lane.b32.xlu0 %v2322, 24
      %v2815 = vpop.permute.xlu0 %2814
      %2816 = vrot.lane.b32.xlu0 %v2323, 24
      %v2817 = vpop.permute.xlu0 %2816
      %2818 = vrot.lane.b32.xlu0 %v2324, 24
      %v2819 = vpop.permute.xlu0 %2818
      %2820 = vrot.lane.b32.xlu0 %v2325, 24
      %v2821 = vpop.permute.xlu0 %2820
      %2822 = vrot.lane.b32.xlu0 %v2326, 24
      %v2823 = vpop.permute.xlu0 %2822
      %2824 = vrot.lane.b32.xlu0 %v2327, 24
      %v2825 = vpop.permute.xlu0 %2824
      %2826 = vrot.lane.b32.xlu0 %v2328, 24
      %v2827 = vpop.permute.xlu0 %2826
      %2828 = vrot.lane.b32.xlu0 %v2329, 24
      %v2829 = vpop.permute.xlu0 %2828
      %2830 = vrot.lane.b32.xlu0 %v2330, 24
      %v2831 = vpop.permute.xlu0 %2830
      %2832 = vrot.lane.b32.xlu0 %v2331, 24
      %v2833 = vpop.permute.xlu0 %2832
      %2834 = vrot.lane.b32.xlu0 %v2332, 24
      %v2835 = vpop.permute.xlu0 %2834
      %2836 = vrot.lane.b32.xlu0 %v2333, 24
      %v2837 = vpop.permute.xlu0 %2836
      %2838 = vrot.lane.b32.xlu0 %v2334, 24
      %v2839 = vpop.permute.xlu0 %2838
      %2840 = vrot.lane.b32.xlu0 %v2335, 24
      %v2841 = vpop.permute.xlu0 %2840
      %2842 = vrot.lane.b32.xlu0 %v2336, 24
      %v2843 = vpop.permute.xlu0 %2842
      %2844 = vrot.lane.b32.xlu0 %v2337, 24
      %v2845 = vpop.permute.xlu0 %2844
      %2846 = vrot.lane.b32.xlu0 %v2338, 24
      %v2847 = vpop.permute.xlu0 %2846
      %2848 = vrot.lane.b32.xlu0 %v2339, 24
      %v2849 = vpop.permute.xlu0 %2848
      %2850 = vrot.lane.b32.xlu0 %v2340, 24
      %v2851 = vpop.permute.xlu0 %2850
      %2852 = vrot.lane.b32.xlu0 %v2341, 24
      %v2853 = vpop.permute.xlu0 %2852
      %2854 = vrot.lane.b32.xlu0 %v2342, 24
      %v2855 = vpop.permute.xlu0 %2854
      %2920 = vrot.lane.b32.xlu0 %v2343, 32
      %v2921 = vpop.permute.xlu0 %2920
      %2922 = vrot.lane.b32.xlu0 %v2344, 32
      %v2923 = vpop.permute.xlu0 %2922
      %2924 = vrot.lane.b32.xlu0 %v2345, 32
      %v2925 = vpop.permute.xlu0 %2924
      %2926 = vrot.lane.b32.xlu0 %v2346, 32
      %v2927 = vpop.permute.xlu0 %2926
      %2928 = vrot.lane.b32.xlu0 %v2347, 32
      %v2929 = vpop.permute.xlu0 %2928
      %2930 = vrot.lane.b32.xlu0 %v2348, 32
      %v2931 = vpop.permute.xlu0 %2930
      %2932 = vrot.lane.b32.xlu0 %v2349, 32
      %v2933 = vpop.permute.xlu0 %2932
      %2934 = vrot.lane.b32.xlu0 %v2350, 32
      %v2935 = vpop.permute.xlu0 %2934
      %2936 = vrot.lane.b32.xlu0 %v2351, 32
      %v2937 = vpop.permute.xlu0 %2936
      %2938 = vrot.lane.b32.xlu0 %v2352, 32
      %v2939 = vpop.permute.xlu0 %2938
      %2940 = vrot.lane.b32.xlu0 %v2353, 32
      %v2941 = vpop.permute.xlu0 %2940
      %2942 = vrot.lane.b32.xlu0 %v2354, 32
      %v2943 = vpop.permute.xlu0 %2942
      %2944 = vrot.lane.b32.xlu0 %v2355, 32
      %v2945 = vpop.permute.xlu0 %2944
      %2946 = vrot.lane.b32.xlu0 %v2356, 32
      %v2947 = vpop.permute.xlu0 %2946
      %2948 = vrot.lane.b32.xlu0 %v2357, 32
      %v2949 = vpop.permute.xlu0 %2948
      %2950 = vrot.lane.b32.xlu0 %v2358, 32
      %v2951 = vpop.permute.xlu0 %2950
      %2952 = vrot.lane.b32.xlu0 %v2359, 32
      %v2953 = vpop.permute.xlu0 %2952
      %2954 = vrot.lane.b32.xlu0 %v2360, 32
      %v2955 = vpop.permute.xlu0 %2954
      %2956 = vrot.lane.b32.xlu0 %v2361, 32
      %v2957 = vpop.permute.xlu0 %2956
      %2958 = vrot.lane.b32.xlu0 %v2362, 32
      %v2959 = vpop.permute.xlu0 %2958
      %2960 = vrot.lane.b32.xlu0 %v2363, 32
      %v2961 = vpop.permute.xlu0 %2960
      %2962 = vrot.lane.b32.xlu0 %v2364, 32
      %v2963 = vpop.permute.xlu0 %2962
      %2964 = vrot.lane.b32.xlu0 %v2365, 32
      %v2965 = vpop.permute.xlu0 %2964
      %2966 = vrot.lane.b32.xlu0 %v2366, 32
      %v2967 = vpop.permute.xlu0 %2966
      %2968 = vrot.lane.b32.xlu0 %v2367, 32
      %v2969 = vpop.permute.xlu0 %2968
      %2970 = vrot.lane.b32.xlu0 %v2368, 32
      %v2971 = vpop.permute.xlu0 %2970
      %2972 = vrot.lane.b32.xlu0 %v2369, 32
      %v2973 = vpop.permute.xlu0 %2972
      %2974 = vrot.lane.b32.xlu0 %v2370, 32
      %v2975 = vpop.permute.xlu0 %2974
      %2976 = vrot.lane.b32.xlu0 %v2371, 32
      %v2977 = vpop.permute.xlu0 %2976
      %2978 = vrot.lane.b32.xlu0 %v2372, 32
      %v2979 = vpop.permute.xlu0 %2978
      %2980 = vrot.lane.b32.xlu0 %v2373, 32
      %v2981 = vpop.permute.xlu0 %2980
      %2982 = vrot.lane.b32.xlu0 %v2374, 32
      %v2983 = vpop.permute.xlu0 %2982
      %3048 = vrot.lane.b32.xlu0 %v2375, 40
      %v3049 = vpop.permute.xlu0 %3048
      %3050 = vrot.lane.b32.xlu0 %v2376, 40
      %v3051 = vpop.permute.xlu0 %3050
      %3052 = vrot.lane.b32.xlu0 %v2377, 40
      %v3053 = vpop.permute.xlu0 %3052
      %3054 = vrot.lane.b32.xlu0 %v2378, 40
      %v3055 = vpop.permute.xlu0 %3054
      %3056 = vrot.lane.b32.xlu0 %v2379, 40
      %v3057 = vpop.permute.xlu0 %3056
      %3058 = vrot.lane.b32.xlu0 %v2380, 40
      %v3059 = vpop.permute.xlu0 %3058
      %3060 = vrot.lane.b32.xlu0 %v2381, 40
      %v3061 = vpop.permute.xlu0 %3060
      %3062 = vrot.lane.b32.xlu0 %v2382, 40
      %v3063 = vpop.permute.xlu0 %3062
      %3064 = vrot.lane.b32.xlu0 %v2383, 40
      %v3065 = vpop.permute.xlu0 %3064
      %3066 = vrot.lane.b32.xlu0 %v2384, 40
      %v3067 = vpop.permute.xlu0 %3066
      %3068 = vrot.lane.b32.xlu0 %v2385, 40
      %v3069 = vpop.permute.xlu0 %3068
      %3070 = vrot.lane.b32.xlu0 %v2386, 40
      %v3071 = vpop.permute.xlu0 %3070
      %3072 = vrot.lane.b32.xlu0 %v2387, 40
      %v3073 = vpop.permute.xlu0 %3072
      %3074 = vrot.lane.b32.xlu0 %v2388, 40
      %v3075 = vpop.permute.xlu0 %3074
      %3076 = vrot.lane.b32.xlu0 %v2389, 40
      %v3077 = vpop.permute.xlu0 %3076
      %3078 = vrot.lane.b32.xlu0 %v2390, 40
      %v3079 = vpop.permute.xlu0 %3078
      %3080 = vrot.lane.b32.xlu0 %v2391, 40
      %v3081 = vpop.permute.xlu0 %3080
      %3082 = vrot.lane.b32.xlu0 %v2392, 40
      %v3083 = vpop.permute.xlu0 %3082
      %3084 = vrot.lane.b32.xlu0 %v2393, 40
      %v3085 = vpop.permute.xlu0 %3084
      %3086 = vrot.lane.b32.xlu0 %v2394, 40
      %v3087 = vpop.permute.xlu0 %3086
      %3088 = vrot.lane.b32.xlu0 %v2395, 40
      %v3089 = vpop.permute.xlu0 %3088
      %3090 = vrot.lane.b32.xlu0 %v2396, 40
      %v3091 = vpop.permute.xlu0 %3090
      %3092 = vrot.lane.b32.xlu0 %v2397, 40
      %v3093 = vpop.permute.xlu0 %3092
      %3094 = vrot.lane.b32.xlu0 %v2398, 40
      %v3095 = vpop.permute.xlu0 %3094
      %3096 = vrot.lane.b32.xlu0 %v2399, 40
      %v3097 = vpop.permute.xlu0 %3096
      %3098 = vrot.lane.b32.xlu0 %v2400, 40
      %v3099 = vpop.permute.xlu0 %3098
      %3100 = vrot.lane.b32.xlu0 %v2401, 40
      %v3101 = vpop.permute.xlu0 %3100
      %3102 = vrot.lane.b32.xlu0 %v2402, 40
      %v3103 = vpop.permute.xlu0 %3102
      %3104 = vrot.lane.b32.xlu0 %v2403, 40
      %v3105 = vpop.permute.xlu0 %3104
      %3106 = vrot.lane.b32.xlu0 %v2404, 40
      %v3107 = vpop.permute.xlu0 %3106
      %3108 = vrot.lane.b32.xlu0 %v2405, 40
      %v3109 = vpop.permute.xlu0 %3108
      %3110 = vrot.lane.b32.xlu0 %v2406, 40
      %v3111 = vpop.permute.xlu0 %3110
      %3176 = vrot.lane.b32.xlu0 %v2408, 48
      %v3177 = vpop.permute.xlu0 %3176
      %3178 = vrot.lane.b32.xlu0 %v2409, 48
      %v3179 = vpop.permute.xlu0 %3178
      %3180 = vrot.lane.b32.xlu0 %v2410, 48
      %v3181 = vpop.permute.xlu0 %3180
      %3182 = vrot.lane.b32.xlu0 %v2411, 48
      %v3183 = vpop.permute.xlu0 %3182
      %3184 = vrot.lane.b32.xlu0 %v2412, 48
      %v3185 = vpop.permute.xlu0 %3184
      %3186 = vrot.lane.b32.xlu0 %v2413, 48
      %v3187 = vpop.permute.xlu0 %3186
      %3188 = vrot.lane.b32.xlu0 %v2414, 48
      %v3189 = vpop.permute.xlu0 %3188
      %3190 = vrot.lane.b32.xlu0 %v2415, 48
      %v3191 = vpop.permute.xlu0 %3190
      %3192 = vrot.lane.b32.xlu0 %v2416, 48
      %v3193 = vpop.permute.xlu0 %3192
      %3194 = vrot.lane.b32.xlu0 %v2417, 48
      %v3195 = vpop.permute.xlu0 %3194
      %3196 = vrot.lane.b32.xlu0 %v2418, 48
      %v3197 = vpop.permute.xlu0 %3196
      %3198 = vrot.lane.b32.xlu0 %v2419, 48
      %v3199 = vpop.permute.xlu0 %3198
      %3200 = vrot.lane.b32.xlu0 %v2420, 48
      %v3201 = vpop.permute.xlu0 %3200
      %3202 = vrot.lane.b32.xlu0 %v2421, 48
      %v3203 = vpop.permute.xlu0 %3202
      %3204 = vrot.lane.b32.xlu0 %v2422, 48
      %v3205 = vpop.permute.xlu0 %3204
      %3206 = vrot.lane.b32.xlu0 %v2423, 48
      %v3207 = vpop.permute.xlu0 %3206
      %3208 = vrot.lane.b32.xlu0 %v2424, 48
      %v3209 = vpop.permute.xlu0 %3208
      %3210 = vrot.lane.b32.xlu0 %v2425, 48
      %v3211 = vpop.permute.xlu0 %3210
      %3212 = vrot.lane.b32.xlu0 %v2426, 48
      %v3213 = vpop.permute.xlu0 %3212
      %3214 = vrot.lane.b32.xlu0 %v2427, 48
      %v3215 = vpop.permute.xlu0 %3214
      %3216 = vrot.lane.b32.xlu0 %v2428, 48
      %v3217 = vpop.permute.xlu0 %3216
      %3218 = vrot.lane.b32.xlu0 %v2429, 48
      %v3219 = vpop.permute.xlu0 %3218
      %3220 = vrot.lane.b32.xlu0 %v2430, 48
      %v3221 = vpop.permute.xlu0 %3220
      %3222 = vrot.lane.b32.xlu0 %v2431, 48
      %v3223 = vpop.permute.xlu0 %3222
      %3224 = vrot.lane.b32.xlu0 %v2432, 48
      %v3225 = vpop.permute.xlu0 %3224
      %3226 = vrot.lane.b32.xlu0 %v2433, 48
      %v3227 = vpop.permute.xlu0 %3226
      %3228 = vrot.lane.b32.xlu0 %v2434, 48
      %v3229 = vpop.permute.xlu0 %3228
      %3230 = vrot.lane.b32.xlu0 %v2435, 48
      %v3231 = vpop.permute.xlu0 %3230
      %3232 = vrot.lane.b32.xlu0 %v2436, 48
      %v3233 = vpop.permute.xlu0 %3232
      %3234 = vrot.lane.b32.xlu0 %v2437, 48
      %v3235 = vpop.permute.xlu0 %3234
      %3236 = vrot.lane.b32.xlu0 %v2438, 48
      %v3237 = vpop.permute.xlu0 %3236
      %3238 = vrot.lane.b32.xlu0 %v2439, 48
      %v3239 = vpop.permute.xlu0 %3238
      %3304 = vrot.lane.b32.xlu0 %v2440, 56
      %v3305 = vpop.permute.xlu0 %3304
      %3306 = vrot.lane.b32.xlu0 %v2441, 56
      %v3307 = vpop.permute.xlu0 %3306
      %3308 = vrot.lane.b32.xlu0 %v2442, 56
      %v3309 = vpop.permute.xlu0 %3308
      %3310 = vrot.lane.b32.xlu0 %v2443, 56
      %v3311 = vpop.permute.xlu0 %3310
      %3312 = vrot.lane.b32.xlu0 %v2444, 56
      %v3313 = vpop.permute.xlu0 %3312
      %3314 = vrot.lane.b32.xlu0 %v2445, 56
      %v3315 = vpop.permute.xlu0 %3314
      %3316 = vrot.lane.b32.xlu0 %v2446, 56
      %v3317 = vpop.permute.xlu0 %3316
      %3318 = vrot.lane.b32.xlu0 %v2447, 56
      %v3319 = vpop.permute.xlu0 %3318
      %3320 = vrot.lane.b32.xlu0 %v2448, 56
      %v3321 = vpop.permute.xlu0 %3320
      %3322 = vrot.lane.b32.xlu0 %v2449, 56
      %v3323 = vpop.permute.xlu0 %3322
      %3324 = vrot.lane.b32.xlu0 %v2450, 56
      %v3325 = vpop.permute.xlu0 %3324
      %3326 = vrot.lane.b32.xlu0 %v2451, 56
      %v3327 = vpop.permute.xlu0 %3326
      %3328 = vrot.lane.b32.xlu0 %v2452, 56
      %v3329 = vpop.permute.xlu0 %3328
      %3330 = vrot.lane.b32.xlu0 %v2453, 56
      %v3331 = vpop.permute.xlu0 %3330
      %3332 = vrot.lane.b32.xlu0 %v2454, 56
      %v3333 = vpop.permute.xlu0 %3332
      %3334 = vrot.lane.b32.xlu0 %v2455, 56
      %v3335 = vpop.permute.xlu0 %3334
      %3336 = vrot.lane.b32.xlu0 %v2456, 56
      %v3337 = vpop.permute.xlu0 %3336
      %3338 = vrot.lane.b32.xlu0 %v2457, 56
      %v3339 = vpop.permute.xlu0 %3338
      %3340 = vrot.lane.b32.xlu0 %v2458, 56
      %v3341 = vpop.permute.xlu0 %3340
      %3342 = vrot.lane.b32.xlu0 %v2459, 56
      %v3343 = vpop.permute.xlu0 %3342
      %3344 = vrot.lane.b32.xlu0 %v2460, 56
      %v3345 = vpop.permute.xlu0 %3344
      %3346 = vrot.lane.b32.xlu0 %v2461, 56
      %v3347 = vpop.permute.xlu0 %3346
      %3348 = vrot.lane.b32.xlu0 %v2462, 56
      %v3349 = vpop.permute.xlu0 %3348
      %3350 = vrot.lane.b32.xlu0 %v2463, 56
      %v3351 = vpop.permute.xlu0 %3350
      %3352 = vrot.lane.b32.xlu0 %v2464, 56
      %v3353 = vpop.permute.xlu0 %3352
      %3354 = vrot.lane.b32.xlu0 %v2465, 56
      %v3355 = vpop.permute.xlu0 %3354
      %3356 = vrot.lane.b32.xlu0 %v2466, 56
      %v3357 = vpop.permute.xlu0 %3356
      %3358 = vrot.lane.b32.xlu0 %v2467, 56
      %v3359 = vpop.permute.xlu0 %3358
      %3360 = vrot.lane.b32.xlu0 %v2468, 56
      %v3361 = vpop.permute.xlu0 %3360
      %3362 = vrot.lane.b32.xlu0 %v2469, 56
      %v3363 = vpop.permute.xlu0 %3362
      %3364 = vrot.lane.b32.xlu0 %v2470, 56
      %v3365 = vpop.permute.xlu0 %3364
      %3366 = vrot.lane.b32.xlu0 %v2471, 56
      %v3367 = vpop.permute.xlu0 %3366
      %3432 = vrot.lane.b32.xlu0 %v2472, 64
      %v3433 = vpop.permute.xlu0 %3432
      %3434 = vrot.lane.b32.xlu0 %v2473, 64
      %v3435 = vpop.permute.xlu0 %3434
      %3436 = vrot.lane.b32.xlu0 %v2474, 64
      %v3437 = vpop.permute.xlu0 %3436
      %3438 = vrot.lane.b32.xlu0 %v2475, 64
      %v3439 = vpop.permute.xlu0 %3438
      %3440 = vrot.lane.b32.xlu0 %v2476, 64
      %v3441 = vpop.permute.xlu0 %3440
      %3442 = vrot.lane.b32.xlu0 %v2477, 64
      %v3443 = vpop.permute.xlu0 %3442
      %3444 = vrot.lane.b32.xlu0 %v2478, 64
      %v3445 = vpop.permute.xlu0 %3444
      %3446 = vrot.lane.b32.xlu0 %v2479, 64
      %v3447 = vpop.permute.xlu0 %3446
      %3448 = vrot.lane.b32.xlu0 %v2480, 64
      %v3449 = vpop.permute.xlu0 %3448
      %3450 = vrot.lane.b32.xlu0 %v2481, 64
      %v3451 = vpop.permute.xlu0 %3450
      %3452 = vrot.lane.b32.xlu0 %v2482, 64
      %v3453 = vpop.permute.xlu0 %3452
      %3454 = vrot.lane.b32.xlu0 %v2483, 64
      %v3455 = vpop.permute.xlu0 %3454
      %3456 = vrot.lane.b32.xlu0 %v2484, 64
      %v3457 = vpop.permute.xlu0 %3456
      %3458 = vrot.lane.b32.xlu0 %v2485, 64
      %v3459 = vpop.permute.xlu0 %3458
      %3460 = vrot.lane.b32.xlu0 %v2486, 64
      %v3461 = vpop.permute.xlu0 %3460
      %3462 = vrot.lane.b32.xlu0 %v2487, 64
      %v3463 = vpop.permute.xlu0 %3462
      %3464 = vrot.lane.b32.xlu0 %v2488, 64
      %v3465 = vpop.permute.xlu0 %3464
      %3466 = vrot.lane.b32.xlu0 %v2489, 64
      %v3467 = vpop.permute.xlu0 %3466
      %3468 = vrot.lane.b32.xlu0 %v2490, 64
      %v3469 = vpop.permute.xlu0 %3468
      %3470 = vrot.lane.b32.xlu0 %v2491, 64
      %v3471 = vpop.permute.xlu0 %3470
      %3472 = vrot.lane.b32.xlu0 %v2492, 64
      %v3473 = vpop.permute.xlu0 %3472
      %3474 = vrot.lane.b32.xlu0 %v2493, 64
      %v3475 = vpop.permute.xlu0 %3474
      %3476 = vrot.lane.b32.xlu0 %v2494, 64
      %v3477 = vpop.permute.xlu0 %3476
      %3478 = vrot.lane.b32.xlu0 %v2495, 64
      %v3479 = vpop.permute.xlu0 %3478
      %3480 = vrot.lane.b32.xlu0 %v2496, 64
      %v3481 = vpop.permute.xlu0 %3480
      %3482 = vrot.lane.b32.xlu0 %v2497, 64
      %v3483 = vpop.permute.xlu0 %3482
      %3484 = vrot.lane.b32.xlu0 %v2498, 64
      %v3485 = vpop.permute.xlu0 %3484
      %3486 = vrot.lane.b32.xlu0 %v2499, 64
      %v3487 = vpop.permute.xlu0 %3486
      %3488 = vrot.lane.b32.xlu0 %v2500, 64
      %v3489 = vpop.permute.xlu0 %3488
      %3490 = vrot.lane.b32.xlu0 %v2501, 64
      %v3491 = vpop.permute.xlu0 %3490
      %3492 = vrot.lane.b32.xlu0 %v2502, 64
      %v3493 = vpop.permute.xlu0 %3492
      %3494 = vrot.lane.b32.xlu0 %v2503, 64
      %v3495 = vpop.permute.xlu0 %3494
      %v3528 = vsel %vm1890, %v2215, %v2537
      %v3529 = vsel %vm1890, %v2216, %v2539
      %v3530 = vsel %vm1890, %v2217, %v2541
      %v3531 = vsel %vm1890, %v2218, %v2543
      %v3532 = vsel %vm1890, %v2219, %v2545
      %v3533 = vsel %vm1890, %v2220, %v2547
      %v3534 = vsel %vm1890, %v2221, %v2549
      %v3535 = vsel %vm1890, %v2222, %v2551
      %v3536 = vsel %vm1890, %v2223, %v2553
      %v3537 = vsel %vm1890, %v2224, %v2555
      %v3538 = vsel %vm1890, %v2225, %v2557
      %v3539 = vsel %vm1890, %v2226, %v2559
      %v3540 = vsel %vm1890, %v2227, %v2561
      %v3541 = vsel %vm1890, %v2228, %v2563
      %v3542 = vsel %vm1890, %v2229, %v2565
      %v3543 = vsel %vm1890, %v2230, %v2567
      %v3544 = vsel %vm1890, %v2231, %v2569
      %v3545 = vsel %vm1890, %v2232, %v2571
      %v3546 = vsel %vm1890, %v2233, %v2573
      %v3547 = vsel %vm1890, %v2234, %v2575
      %v3548 = vsel %vm1890, %v2235, %v2577
      %v3549 = vsel %vm1890, %v2236, %v2579
      %v3550 = vsel %vm1890, %v2237, %v2581
      %v3551 = vsel %vm1890, %v2238, %v2583
      %v3552 = vsel %vm1890, %v2239, %v2585
      %v3553 = vsel %vm1890, %v2240, %v2587
      %v3554 = vsel %vm1890, %v2241, %v2589
      %v3555 = vsel %vm1890, %v2242, %v2591
      %v3556 = vsel %vm1890, %v2243, %v2593
      %v3557 = vsel %vm1890, %v2244, %v2595
      %v3558 = vsel %vm1890, %v2245, %v2597
      %v3559 = vsel %vm1890, %v2246, %v2599
      %vm3560 = vcmask 130048
      %v3561 = vsel %vm3560, %v3528, %v2665
      %v3562 = vsel %vm3560, %v3529, %v2667
      %v3563 = vsel %vm3560, %v3530, %v2669
      %v3564 = vsel %vm3560, %v3531, %v2671
      %v3565 = vsel %vm3560, %v3532, %v2673
      %v3566 = vsel %vm3560, %v3533, %v2675
      %v3567 = vsel %vm3560, %v3534, %v2677
      %v3568 = vsel %vm3560, %v3535, %v2679
      %v3569 = vsel %vm3560, %v3536, %v2681
      %v3570 = vsel %vm3560, %v3537, %v2683
      %v3571 = vsel %vm3560, %v3538, %v2685
      %v3572 = vsel %vm3560, %v3539, %v2687
      %v3573 = vsel %vm3560, %v3540, %v2689
      %v3574 = vsel %vm3560, %v3541, %v2691
      %v3575 = vsel %vm3560, %v3542, %v2693
      %v3576 = vsel %vm3560, %v3543, %v2695
      %v3577 = vsel %vm3560, %v3544, %v2697
      %v3578 = vsel %vm3560, %v3545, %v2699
      %v3579 = vsel %vm3560, %v3546, %v2701
      %v3580 = vsel %vm3560, %v3547, %v2703
      %v3581 = vsel %vm3560, %v3548, %v2705
      %v3582 = vsel %vm3560, %v3549, %v2707
      %v3583 = vsel %vm3560, %v3550, %v2709
      %v3584 = vsel %vm3560, %v3551, %v2711
      %v3585 = vsel %vm3560, %v3552, %v2713
      %v3586 = vsel %vm3560, %v3553, %v2715
      %v3587 = vsel %vm3560, %v3554, %v2717
      %v3588 = vsel %vm3560, %v3555, %v2719
      %v3589 = vsel %vm3560, %v3556, %v2721
      %v3590 = vsel %vm3560, %v3557, %v2723
      %v3591 = vsel %vm3560, %v3558, %v2725
      %v3592 = vsel %vm3560, %v3559, %v2727
      %vm3593 = vcmask 195584
      %v3594 = vsel %vm3593, %v3561, %v2793
      %v3595 = vsel %vm3593, %v3562, %v2795
      %v3596 = vsel %vm3593, %v3563, %v2797
      %v3597 = vsel %vm3593, %v3564, %v2799
      %v3598 = vsel %vm3593, %v3565, %v2801
      %v3599 = vsel %vm3593, %v3566, %v2803
      %v3600 = vsel %vm3593, %v3567, %v2805
      %v3601 = vsel %vm3593, %v3568, %v2807
      %v3602 = vsel %vm3593, %v3569, %v2809
      %v3603 = vsel %vm3593, %v3570, %v2811
      %v3604 = vsel %vm3593, %v3571, %v2813
      %v3605 = vsel %vm3593, %v3572, %v2815
      %v3606 = vsel %vm3593, %v3573, %v2817
      %v3607 = vsel %vm3593, %v3574, %v2819
      %v3608 = vsel %vm3593, %v3575, %v2821
      %v3609 = vsel %vm3593, %v3576, %v2823
      %v3610 = vsel %vm3593, %v3577, %v2825
      %v3611 = vsel %vm3593, %v3578, %v2827
      %v3612 = vsel %vm3593, %v3579, %v2829
      %v3613 = vsel %vm3593, %v3580, %v2831
      %v3614 = vsel %vm3593, %v3581, %v2833
      %v3615 = vsel %vm3593, %v3582, %v2835
      %v3616 = vsel %vm3593, %v3583, %v2837
      %v3617 = vsel %vm3593, %v3584, %v2839
      %v3618 = vsel %vm3593, %v3585, %v2841
      %v3619 = vsel %vm3593, %v3586, %v2843
      %v3620 = vsel %vm3593, %v3587, %v2845
      %v3621 = vsel %vm3593, %v3588, %v2847
      %v3622 = vsel %vm3593, %v3589, %v2849
      %v3623 = vsel %vm3593, %v3590, %v2851
      %v3624 = vsel %vm3593, %v3591, %v2853
      %v3625 = vsel %vm3593, %v3592, %v2855
      %vm3626 = vcmask 261120
      %v3627 = vsel %vm3626, %v3594, %v2921
      %v3628 = vsel %vm3626, %v3595, %v2923
      %v3629 = vsel %vm3626, %v3596, %v2925
      %v3630 = vsel %vm3626, %v3597, %v2927
      %v3631 = vsel %vm3626, %v3598, %v2929
      %v3632 = vsel %vm3626, %v3599, %v2931
      %v3633 = vsel %vm3626, %v3600, %v2933
      %v3634 = vsel %vm3626, %v3601, %v2935
      %v3635 = vsel %vm3626, %v3602, %v2937
      %v3636 = vsel %vm3626, %v3603, %v2939
      %v3637 = vsel %vm3626, %v3604, %v2941
      %v3638 = vsel %vm3626, %v3605, %v2943
      %v3639 = vsel %vm3626, %v3606, %v2945
      %v3640 = vsel %vm3626, %v3607, %v2947
      %v3641 = vsel %vm3626, %v3608, %v2949
      %v3642 = vsel %vm3626, %v3609, %v2951
      %v3643 = vsel %vm3626, %v3610, %v2953
      %v3644 = vsel %vm3626, %v3611, %v2955
      %v3645 = vsel %vm3626, %v3612, %v2957
      %v3646 = vsel %vm3626, %v3613, %v2959
      %v3647 = vsel %vm3626, %v3614, %v2961
      %v3648 = vsel %vm3626, %v3615, %v2963
      %v3649 = vsel %vm3626, %v3616, %v2965
      %v3650 = vsel %vm3626, %v3617, %v2967
      %v3651 = vsel %vm3626, %v3618, %v2969
      %v3652 = vsel %vm3626, %v3619, %v2971
      %v3653 = vsel %vm3626, %v3620, %v2973
      %v3654 = vsel %vm3626, %v3621, %v2975
      %v3655 = vsel %vm3626, %v3622, %v2977
      %v3656 = vsel %vm3626, %v3623, %v2979
      %v3657 = vsel %vm3626, %v3624, %v2981
      %v3658 = vsel %vm3626, %v3625, %v2983
      %vm3659 = vcmask 326656
      %v3660 = vsel %vm3659, %v3627, %v3049
      %v3661 = vsel %vm3659, %v3628, %v3051
      %v3662 = vsel %vm3659, %v3629, %v3053
      %v3663 = vsel %vm3659, %v3630, %v3055
      %v3664 = vsel %vm3659, %v3631, %v3057
      %v3665 = vsel %vm3659, %v3632, %v3059
      %v3666 = vsel %vm3659, %v3633, %v3061
      %v3667 = vsel %vm3659, %v3634, %v3063
      %v3668 = vsel %vm3659, %v3635, %v3065
      %v3669 = vsel %vm3659, %v3636, %v3067
      %v3670 = vsel %vm3659, %v3637, %v3069
      %v3671 = vsel %vm3659, %v3638, %v3071
      %v3672 = vsel %vm3659, %v3639, %v3073
      %v3673 = vsel %vm3659, %v3640, %v3075
      %v3674 = vsel %vm3659, %v3641, %v3077
      %v3675 = vsel %vm3659, %v3642, %v3079
      %v3676 = vsel %vm3659, %v3643, %v3081
      %v3677 = vsel %vm3659, %v3644, %v3083
      %v3678 = vsel %vm3659, %v3645, %v3085
      %v3679 = vsel %vm3659, %v3646, %v3087
      %v3680 = vsel %vm3659, %v3647, %v3089
      %v3681 = vsel %vm3659, %v3648, %v3091
      %v3682 = vsel %vm3659, %v3649, %v3093
      %v3683 = vsel %vm3659, %v3650, %v3095
      %v3684 = vsel %vm3659, %v3651, %v3097
      %v3685 = vsel %vm3659, %v3652, %v3099
      %v3686 = vsel %vm3659, %v3653, %v3101
      %v3687 = vsel %vm3659, %v3654, %v3103
      %v3688 = vsel %vm3659, %v3655, %v3105
      %v3689 = vsel %vm3659, %v3656, %v3107
      %v3690 = vsel %vm3659, %v3657, %v3109
      %v3691 = vsel %vm3659, %v3658, %v3111
      %vm3692 = vcmask 392192
      %v3693 = vsel %vm3692, %v3660, %v3177
      %v3694 = vsel %vm3692, %v3661, %v3179
      %v3695 = vsel %vm3692, %v3662, %v3181
      %v3696 = vsel %vm3692, %v3663, %v3183
      %v3697 = vsel %vm3692, %v3664, %v3185
      %v3698 = vsel %vm3692, %v3665, %v3187
      %v3699 = vsel %vm3692, %v3666, %v3189
      %v3700 = vsel %vm3692, %v3667, %v3191
      %v3701 = vsel %vm3692, %v3668, %v3193
      %v3702 = vsel %vm3692, %v3669, %v3195
      %v3703 = vsel %vm3692, %v3670, %v3197
      %v3704 = vsel %vm3692, %v3671, %v3199
      %v3705 = vsel %vm3692, %v3672, %v3201
      %v3706 = vsel %vm3692, %v3673, %v3203
      %v3707 = vsel %vm3692, %v3674, %v3205
      %v3708 = vsel %vm3692, %v3675, %v3207
      %v3709 = vsel %vm3692, %v3676, %v3209
      %v3710 = vsel %vm3692, %v3677, %v3211
      %v3711 = vsel %vm3692, %v3678, %v3213
      %v3712 = vsel %vm3692, %v3679, %v3215
      %v3713 = vsel %vm3692, %v3680, %v3217
      %v3714 = vsel %vm3692, %v3681, %v3219
      %v3715 = vsel %vm3692, %v3682, %v3221
      %v3716 = vsel %vm3692, %v3683, %v3223
      %v3717 = vsel %vm3692, %v3684, %v3225
      %v3718 = vsel %vm3692, %v3685, %v3227
      %v3719 = vsel %vm3692, %v3686, %v3229
      %v3720 = vsel %vm3692, %v3687, %v3231
      %v3721 = vsel %vm3692, %v3688, %v3233
      %v3722 = vsel %vm3692, %v3689, %v3235
      %v3723 = vsel %vm3692, %v3690, %v3237
      %v3724 = vsel %vm3692, %v3691, %v3239
      %vm3725 = vcmask 457728
      %v3726 = vsel %vm3725, %v3693, %v3305
      %v3727 = vsel %vm3725, %v3694, %v3307
      %v3728 = vsel %vm3725, %v3695, %v3309
      %v3729 = vsel %vm3725, %v3696, %v3311
      %v3730 = vsel %vm3725, %v3697, %v3313
      %v3731 = vsel %vm3725, %v3698, %v3315
      %v3732 = vsel %vm3725, %v3699, %v3317
      %v3733 = vsel %vm3725, %v3700, %v3319
      %v3734 = vsel %vm3725, %v3701, %v3321
      %v3735 = vsel %vm3725, %v3702, %v3323
      %v3736 = vsel %vm3725, %v3703, %v3325
      %v3737 = vsel %vm3725, %v3704, %v3327
      %v3738 = vsel %vm3725, %v3705, %v3329
      %v3739 = vsel %vm3725, %v3706, %v3331
      %v3740 = vsel %vm3725, %v3707, %v3333
      %v3741 = vsel %vm3725, %v3708, %v3335
      %v3742 = vsel %vm3725, %v3709, %v3337
      %v3743 = vsel %vm3725, %v3710, %v3339
      %v3744 = vsel %vm3725, %v3711, %v3341
      %v3745 = vsel %vm3725, %v3712, %v3343
      %v3746 = vsel %vm3725, %v3713, %v3345
      %v3747 = vsel %vm3725, %v3714, %v3347
      %v3748 = vsel %vm3725, %v3715, %v3349
      %v3749 = vsel %vm3725, %v3716, %v3351
      %v3750 = vsel %vm3725, %v3717, %v3353
      %v3751 = vsel %vm3725, %v3718, %v3355
      %v3752 = vsel %vm3725, %v3719, %v3357
      %v3753 = vsel %vm3725, %v3720, %v3359
      %v3754 = vsel %vm3725, %v3721, %v3361
      %v3755 = vsel %vm3725, %v3722, %v3363
      %v3756 = vsel %vm3725, %v3723, %v3365
      %v3757 = vsel %vm3725, %v3724, %v3367
      %vm3758 = vcmask 523264
      %v3759 = vsel %vm3758, %v3726, %v3433
      %v3760 = vsel %vm3758, %v3727, %v3435
      %v3761 = vsel %vm3758, %v3728, %v3437
      %v3762 = vsel %vm3758, %v3729, %v3439
      %v3763 = vsel %vm3758, %v3730, %v3441
      %v3764 = vsel %vm3758, %v3731, %v3443
      %v3765 = vsel %vm3758, %v3732, %v3445
      %v3766 = vsel %vm3758, %v3733, %v3447
      %v3767 = vsel %vm3758, %v3734, %v3449
      %v3768 = vsel %vm3758, %v3735, %v3451
      %v3769 = vsel %vm3758, %v3736, %v3453
      %v3770 = vsel %vm3758, %v3737, %v3455
      %v3771 = vsel %vm3758, %v3738, %v3457
      %v3772 = vsel %vm3758, %v3739, %v3459
      %v3773 = vsel %vm3758, %v3740, %v3461
      %v3774 = vsel %vm3758, %v3741, %v3463
      %v3775 = vsel %vm3758, %v3742, %v3465
      %v3776 = vsel %vm3758, %v3743, %v3467
      %v3777 = vsel %vm3758, %v3744, %v3469
      %v3778 = vsel %vm3758, %v3745, %v3471
      %v3779 = vsel %vm3758, %v3746, %v3473
      %v3780 = vsel %vm3758, %v3747, %v3475
      %v3781 = vsel %vm3758, %v3748, %v3477
      %v3782 = vsel %vm3758, %v3749, %v3479
      %v3783 = vsel %vm3758, %v3750, %v3481
      %v3784 = vsel %vm3758, %v3751, %v3483
      %v3785 = vsel %vm3758, %v3752, %v3485
      %v3786 = vsel %vm3758, %v3753, %v3487
      %v3787 = vsel %vm3758, %v3754, %v3489
      %v3788 = vsel %vm3758, %v3755, %v3491
      %v3789 = vsel %vm3758, %v3756, %v3493
      %v3790 = vsel %vm3758, %v3757, %v3495
      %v3791 = vpack.c.bf16 %v3760, %v3759
      %v3792 = vpack.c.bf16 %v3762, %v3761
      %v3793 = vpack.c.bf16 %v3764, %v3763
      %v3794 = vpack.c.bf16 %v3766, %v3765
      %v3795 = vpack.c.bf16 %v3768, %v3767
      %v3796 = vpack.c.bf16 %v3770, %v3769
      %v3797 = vpack.c.bf16 %v3772, %v3771
      %v3798 = vpack.c.bf16 %v3774, %v3773
      %v3799 = vpack.c.bf16 %v3776, %v3775
      %v3800 = vpack.c.bf16 %v3778, %v3777
      %v3801 = vpack.c.bf16 %v3780, %v3779
      %v3802 = vpack.c.bf16 %v3782, %v3781
      %v3803 = vpack.c.bf16 %v3784, %v3783
      %v3804 = vpack.c.bf16 %v3786, %v3785
      %v3805 = vpack.c.bf16 %v3788, %v3787
      %v3806 = vpack.c.bf16 %v3790, %v3789
      %v3807 = vld [vmem:[%s3] sm:$0xf]
      %v3808 = vld [vmem:[%s3 + $0x4] sm:$0xf]
      %v3809 = vld [vmem:[%s3 + $0x8] sm:$0xf]
      %v3810 = vld [vmem:[%s3 + $0xc] sm:$0xf]
      %v3811 = vld [vmem:[%s3 + $0x10] sm:$0xf]
      %v3812 = vld [vmem:[%s3 + $0x14] sm:$0xf]
      %v3813 = vld [vmem:[%s3 + $0x18] sm:$0xf]
      %v3814 = vld [vmem:[%s3 + $0x1c] sm:$0xf]
      %v3815 = vld [vmem:[%s3 + $0x20] sm:$0xf]
      %v3816 = vld [vmem:[%s4] sm:$0x1]
      %v3818 = vperm.slane %v3816, 0
      %v3829 = vunpack.c.l.b16 %v3807
      %v3830 = vunpack.c.l.b16 %v3808
      %v3831 = vunpack.c.l.b16 %v3809
      %v3832 = vunpack.c.l.b16 %v3810
      %v3833 = vunpack.c.l.b16 %v3811
      %v3834 = vunpack.c.l.b16 %v3812
      %v3835 = vunpack.c.l.b16 %v3813
      %v3836 = vunpack.c.l.b16 %v3814
      %v3837 = vunpack.c.l.b16 %v3815
      %v3838 = vpack.c.b16 %v3830, %v3829
      %v3839 = vpack.c.b16 %v3832, %v3831
      %v3840 = vpack.c.b16 %v3834, %v3833
      %v3841 = vpack.c.b16 %v3836, %v3835
      %v3842 = vpack.c.b16 %v3837, %v3837
      %vm3847 = vcmask 588800
      %v3849 = vsel %vm3847, %v3791, 0
      %v3852 = vsel %vm3847, %v3792, 0
      %v3855 = vsel %vm3847, %v3793, 0
      %v3858 = vsel %vm3847, %v3794, 0
      %v3861 = vsel %vm3847, %v3795, 0
      %v3864 = vsel %vm3847, %v3796, 0
      %v3867 = vsel %vm3847, %v3797, 0
      %v3870 = vsel %vm3847, %v3798, 0
      %v3873 = vsel %vm3847, %v3799, 0
      %v3876 = vsel %vm3847, %v3800, 0
      %v3879 = vsel %vm3847, %v3801, 0
      %v3882 = vsel %vm3847, %v3802, 0
      %v3885 = vsel %vm3847, %v3803, 0
      %v3888 = vsel %vm3847, %v3804, 0
      %v3891 = vsel %vm3847, %v3805, 0
      %v3894 = vsel %vm3847, %v3806, 0
      %v3897 = vsel %vm1999, %v3842, 0
      %3899 = vmatpush.bf16.msra.mxu0 0
      %3900 = vmatpush.bf16.msra.mxu0 0
      %3901 = vmatpush.bf16.msra.mxu0 0
      %3902 = vmatpush.bf16.msra.mxu0 %v3897
      %3903 = vmatpush.bf16.msra.mxu0 %v3841
      %3904 = vmatpush.bf16.msra.mxu0 %v3840
      %3905 = vmatpush.bf16.msra.mxu0 %v3839
      %3906 = vmatpush.bf16.msra.mxu0 %v3838
      %3907 = vmatmul.bf16.gmra.mxu0 %v3849
      %v3908 = vpop.f32.mrf.mxu0
      %v3909 = vadd.f32 %v3818, %v3908
      %v3910 = vpop.f32.mrf.mxu0
      %v3911 = vadd.f32 %v3818, %v3910
      %3912 = vmatmul.bf16.gmra.mxu0 %v3852
      %v3913 = vpop.f32.mrf.mxu0
      %v3914 = vadd.f32 %v3818, %v3913
      %v3915 = vpop.f32.mrf.mxu0
      %v3916 = vadd.f32 %v3818, %v3915
      %3917 = vmatmul.bf16.gmra.mxu0 %v3855
      %v3918 = vpop.f32.mrf.mxu0
      %v3919 = vadd.f32 %v3818, %v3918
      %v3920 = vpop.f32.mrf.mxu0
      %v3921 = vadd.f32 %v3818, %v3920
      %3922 = vmatmul.bf16.gmra.mxu0 %v3858
      %v3923 = vpop.f32.mrf.mxu0
      %v3924 = vadd.f32 %v3818, %v3923
      %v3925 = vpop.f32.mrf.mxu0
      %v3926 = vadd.f32 %v3818, %v3925
      %3927 = vmatmul.bf16.gmra.mxu0 %v3861
      %v3928 = vpop.f32.mrf.mxu0
      %v3929 = vadd.f32 %v3818, %v3928
      %v3930 = vpop.f32.mrf.mxu0
      %v3931 = vadd.f32 %v3818, %v3930
      %3932 = vmatmul.bf16.gmra.mxu0 %v3864
      %v3933 = vpop.f32.mrf.mxu0
      %v3934 = vadd.f32 %v3818, %v3933
      %v3935 = vpop.f32.mrf.mxu0
      %v3936 = vadd.f32 %v3818, %v3935
      %3937 = vmatmul.bf16.gmra.mxu0 %v3867
      %v3938 = vpop.f32.mrf.mxu0
      %v3939 = vadd.f32 %v3818, %v3938
      %v3940 = vpop.f32.mrf.mxu0
      %v3941 = vadd.f32 %v3818, %v3940
      %3942 = vmatmul.bf16.gmra.mxu0 %v3870
      %v3943 = vpop.f32.mrf.mxu0
      %v3944 = vadd.f32 %v3818, %v3943
      %v3945 = vpop.f32.mrf.mxu0
      %v3946 = vadd.f32 %v3818, %v3945
      %3947 = vmatmul.bf16.gmra.mxu0 %v3873
      %v3948 = vpop.f32.mrf.mxu0
      %v3949 = vadd.f32 %v3818, %v3948
      %v3950 = vpop.f32.mrf.mxu0
      %v3951 = vadd.f32 %v3818, %v3950
      %3952 = vmatmul.bf16.gmra.mxu0 %v3876
      %v3953 = vpop.f32.mrf.mxu0
      %v3954 = vadd.f32 %v3818, %v3953
      %v3955 = vpop.f32.mrf.mxu0
      %v3956 = vadd.f32 %v3818, %v3955
      %3957 = vmatmul.bf16.gmra.mxu0 %v3879
      %v3958 = vpop.f32.mrf.mxu0
      %v3959 = vadd.f32 %v3818, %v3958
      %v3960 = vpop.f32.mrf.mxu0
      %v3961 = vadd.f32 %v3818, %v3960
      %3962 = vmatmul.bf16.gmra.mxu0 %v3882
      %v3963 = vpop.f32.mrf.mxu0
      %v3964 = vadd.f32 %v3818, %v3963
      %v3965 = vpop.f32.mrf.mxu0
      %v3966 = vadd.f32 %v3818, %v3965
      %3967 = vmatmul.bf16.gmra.mxu0 %v3885
      %v3968 = vpop.f32.mrf.mxu0
      %v3969 = vadd.f32 %v3818, %v3968
      %v3970 = vpop.f32.mrf.mxu0
      %v3971 = vadd.f32 %v3818, %v3970
      %3972 = vmatmul.bf16.gmra.mxu0 %v3888
      %v3973 = vpop.f32.mrf.mxu0
      %v3974 = vadd.f32 %v3818, %v3973
      %v3975 = vpop.f32.mrf.mxu0
      %v3976 = vadd.f32 %v3818, %v3975
      %3977 = vmatmul.bf16.gmra.mxu0 %v3891
      %v3978 = vpop.f32.mrf.mxu0
      %v3979 = vadd.f32 %v3818, %v3978
      %v3980 = vpop.f32.mrf.mxu0
      %v3981 = vadd.f32 %v3818, %v3980
      %3982 = vmatmul.bf16.gmra.mxu0 %v3894
      %v3983 = vpop.f32.mrf.mxu0
      %v3984 = vadd.f32 %v3818, %v3983
      %v3985 = vpop.f32.mrf.mxu0
      %v3986 = vadd.f32 %v3818, %v3985
      %3987 = vdwg.mxu0
      %v3988 = vmax.f32 %v3909, 0.0
      %v3989 = vmax.f32 %v3911, 0.0
      %v3990 = vmax.f32 %v3914, 0.0
      %v3991 = vmax.f32 %v3916, 0.0
      %v3992 = vmax.f32 %v3919, 0.0
      %v3993 = vmax.f32 %v3921, 0.0
      %v3994 = vmax.f32 %v3924, 0.0
      %v3995 = vmax.f32 %v3926, 0.0
      %v3996 = vmax.f32 %v3929, 0.0
      %v3997 = vmax.f32 %v3931, 0.0
      %v3998 = vmax.f32 %v3934, 0.0
      %v3999 = vmax.f32 %v3936, 0.0
      %v4000 = vmax.f32 %v3939, 0.0
      %v4001 = vmax.f32 %v3941, 0.0
      %v4002 = vmax.f32 %v3944, 0.0
      %v4003 = vmax.f32 %v3946, 0.0
      %v4004 = vmax.f32 %v3949, 0.0
      %v4005 = vmax.f32 %v3951, 0.0
      %v4006 = vmax.f32 %v3954, 0.0
      %v4007 = vmax.f32 %v3956, 0.0
      %v4008 = vmax.f32 %v3959, 0.0
      %v4009 = vmax.f32 %v3961, 0.0
      %v4010 = vmax.f32 %v3964, 0.0
      %v4011 = vmax.f32 %v3966, 0.0
      %v4012 = vmax.f32 %v3969, 0.0
      %v4013 = vmax.f32 %v3971, 0.0
      %v4014 = vmax.f32 %v3974, 0.0
      %v4015 = vmax.f32 %v3976, 0.0
      %v4016 = vmax.f32 %v3979, 0.0
      %v4017 = vmax.f32 %v3981, 0.0
      %v4018 = vmax.f32 %v3984, 0.0
      %v4019 = vmax.f32 %v3986, 0.0
      %v4020 = vmax.f32 %v3988, %v3990
      %v4021 = vmax.f32 %v3989, %v3991
      %v4022 = vmax.f32 %v3992, %v3994
      %v4023 = vmax.f32 %v3993, %v3995
      %v4024 = vmax.f32 %v3996, %v3998
      %v4025 = vmax.f32 %v3997, %v3999
      %v4026 = vmax.f32 %v4000, %v4002
      %v4027 = vmax.f32 %v4001, %v4003
      %v4028 = vmax.f32 %v4004, %v4006
      %v4029 = vmax.f32 %v4005, %v4007
      %v4030 = vmax.f32 %v4008, %v4010
      %v4031 = vmax.f32 %v4009, %v4011
      %v4032 = vmax.f32 %v4012, %v4014
      %v4033 = vmax.f32 %v4013, %v4015
      %v4034 = vmax.f32 %v4016, %v4018
      %v4035 = vmax.f32 %v4017, %v4019
      %4036 = vst.msk [vmem:[%s224] sm:$0xff] %vm1890, %v4020
      %4037 = vst.msk [vmem:[%s224 + $0x8] sm:$0xff] %vm1890, %v4021
      %4038 = vst.msk [vmem:[%s224 + $0x10] sm:$0xff] %vm1890, %v4022
      %4039 = vst.msk [vmem:[%s224 + $0x18] sm:$0xff] %vm1890, %v4023
      %4040 = vst.msk [vmem:[%s224 + $0x20] sm:$0xff] %vm1890, %v4024
      %4041 = vst.msk [vmem:[%s224 + $0x28] sm:$0xff] %vm1890, %v4025
      %4042 = vst.msk [vmem:[%s224 + $0x30] sm:$0xff] %vm1890, %v4026
      %4043 = vst.msk [vmem:[%s224 + $0x38] sm:$0xff] %vm1890, %v4027
      %4044 = vst.msk [vmem:[%s224 + $0x40] sm:$0xff] %vm1890, %v4028
      %4045 = vst.msk [vmem:[%s224 + $0x48] sm:$0xff] %vm1890, %v4029
      %4046 = vst.msk [vmem:[%s224 + $0x50] sm:$0xff] %vm1890, %v4030
      %4047 = vst.msk [vmem:[%s224 + $0x58] sm:$0xff] %vm1890, %v4031
      %4048 = vst.msk [vmem:[%s224 + $0x60] sm:$0xff] %vm1890, %v4032
      %4049 = vst.msk [vmem:[%s224 + $0x68] sm:$0xff] %vm1890, %v4033
      %4050 = vst.msk [vmem:[%s224 + $0x70] sm:$0xff] %vm1890, %v4034
      %4051 = vst.msk [vmem:[%s224 + $0x78] sm:$0xff] %vm1890, %v4035
      %p4052 = scmp.lt.s32.totalorder %s16, 1
      %s4053 = scalar_select %p4052, %s16, 1
      %s4054 = smul.addr %s4053, 16
      %s4055 = smul.addr %s4054, 8
      %s4056 = scalar_lea.vmem %s5, %s4055
      // Predicated region
      $region41: #{unet_forward.7} parent=39 // pred_check
        %p4057 = pneg %p144
      $region42: #{unet_forward.7} parent=39 // pred_check_branch
        %4059 = sbr.rel (%p4057) target = $region44
      $region43: #{unet_forward.7} parent=39 // pred_region
        _
      $region44: #{unet_forward.7} parent=39 // pred_fallthru
        _
    $region40: #{unet_forward.7} parent=5 // pred_fallthru
      _
    %p4060 = scmp.le.s32.totalorder 2, %s11
    // Predicated region
    $region45: #{unet_forward.7} parent=5 // pred_check
      %p4061 = pneg %p4060
    $region46: #{unet_forward.7} parent=5 // pred_check_branch
      %4063 = sbr.rel (%p4061) target = $region48
    $region47: #{unet_forward.7} parent=5 // pred_region
      %s4064 = ssub.s32 %s11, 2
      // Predicated region
      $region49: #{unet_forward.7} parent=47 // pred_check
        %p4065 = pneg %p150
      $region50: #{unet_forward.7} parent=47 // pred_check_branch
        %4067 = sbr.rel (%p4065) target = $region52
      $region51: #{unet_forward.7} parent=47 // pred_region
        %p4068 = scmp.lt.s32.totalorder %s17, 1
        %s4069 = scalar_select %p4068, %s17, 1
        %s4070 = smul.addr %s4069, 16
        %s4071 = smul.addr %s4070, 8
        %s4072 = scalar_lea.vmem %s5, %s4071
      $region52: #{unet_forward.7} parent=47 // pred_fallthru
        _
    $region48: #{unet_forward.7} parent=5 // pred_fallthru
      _
  $region6: #{unet_forward.7} parent=0 // loop_footer
    %s15 = sadd.s32 1, %s11
  $region7: #{unet_forward.7} parent=0 // loop_footer_branch
    %10 = sbr.rel target = $region3
  $region8: #{unet_forward.7} parent=0 // loop_exit
    _

// kernel: unet_forward.11
$region0: #{unet_forward.11}
  #allocation0 [shape = 'u32[]', space=smem, size = 0x4, offset = 0x4, fixed_abs, tag = 'smem constant byte address 0x4 - core index']
  #allocation1 [shape = 'u32[72,128]{1,0:T(1,128)}', space=vmem, size = 0x9000, scoped, tag = 'internal scratch']
  #allocation2 [shape = 'f32[6,6,48]{2,1,0:T(8,128)}', space=vmem, size = 0x6000, scoped, tag = 'scratch operand']
  #allocation3 [shape = 'f32[6,6,16]{2,1,0:T(8,128)}', space=vmem, size = 0x6000, scoped, tag = 'scratch operand']
  %s0 = inlined_call_operand.vmem [shape: f32[2,4,4,48], index: 0, kind: input, shape index: {}]
  %s1 = inlined_call_operand.vmem [shape: bf16[432,16], index: 1, kind: input, shape index: {}]
  %s2 = inlined_call_operand.vmem [shape: f32[1,16], index: 2, kind: input, shape index: {}]
  %s3 = inlined_call_operand.vmem [shape: bf16[144,16], index: 3, kind: input, shape index: {}]
  %s4 = inlined_call_operand.vmem [shape: f32[1,16], index: 4, kind: input, shape index: {}]
  %s5 = inlined_call_operand.vmem [shape: f32[2,2,4,16], index: 5, kind: output, shape index: {}]
  %s6 = sld [smem:[#allocation0]]
  $region53: #{unet_forward.11} parent=0
    _
  %s8 = ssub.s32 1, %s6
  %s9 = scalar_select 0, %s8, %s6
  loop: start=0, step=1, limit=4
  $region2: #{unet_forward.11} parent=0 // loop_pre_header
    _
  $region3: #{unet_forward.11} parent=0 // loop_header
    %s11 = sphi 0, %s15
    %p12 = scmp.ge.s32.totalorder %s11, 4
    %s21 = sphi 0, %s23
    %s24 = sphi 0, %s21
    %s25 = sphi 0, %s24
    %s41 = sphi 0, %s25
    %s45 = sphi 0, %s45
    %s47 = sphi 0, %s45
    %s48 = sphi 0, %s47
    %s62 = sphi 0, %s48
    %s66 = sphi 0, %s66
    %s68 = sphi 0, %s66
    %s69 = sphi 0, %s68
    %s83 = sphi 0, %s69
    %s87 = sphi 0, %s87
    %s89 = sphi 0, %s87
    %s90 = sphi 0, %s89
    %s104 = sphi 0, %s90
    %s108 = sphi 0, %s108
    %s110 = sphi 0, %s108
    %s111 = sphi 0, %s110
    %s125 = sphi 0, %s111
    %s131 = sphi 0, %s133
    %s134 = sphi 0, %s131
    %s135 = sphi 0, %s134
    %s151 = sphi 0, %s135
  $region4: #{unet_forward.11} parent=0 // loop_header_branch
    %14 = sbr.rel (%p12) target = $region8
  $region5: #{unet_forward.11} parent=0 // loop_body
    %s16 = ssub.s32 %s11, 1
    %s17 = ssub.s32 %s11, 2
    %s18 = sadd.s32 %s11, 1
    %s19 = ssub.s32 %s11, %s18
    %p20 = scmp.eq.s32.totalorder %s19, 0
    %s22 = sadd.s32 %s21, 1
    %s23 = scalar_select %p20, %s21, %s22
    %p26 = pneg %p20
    %p27 = scmp.eq.s32.totalorder %s11, 1
    %p28 = por %p26, %p27
    %p29 = scmp.ne.s32.totalorder %s21, %s24
    %p30 = scmp.eq.s32.totalorder %s11, 0
    %p31 = por %p29, %p30
    %p32 = scmp.ne.s32.totalorder %s21, %s24
    %p33 = scmp.eq.s32.totalorder %s16, 1
    %p34 = por %p32, %p33
    %p35 = scmp.ne.s32.totalorder %s24, %s25
    %p36 = scmp.eq.s32.totalorder %s16, 0
    %p37 = por %p35, %p36
    %p38 = scmp.ne.s32.totalorder %s24, %s25
    %p39 = scmp.eq.s32.totalorder %s17, 1
    %p40 = por %p38, %p39
    %p42 = scmp.ne.s32.totalorder %s25, %s41
    %p43 = scmp.eq.s32.totalorder %s17, 0
    %p44 = por %p42, %p43
    %s46 = sadd.s32 %s45, 1
    %p49 = scmp.eq.s32.totalorder %s11, 1
    %p50 = scmp.ne.s32.totalorder %s45, %s47
    %p51 = scmp.eq.s32.totalorder %s11, 0
    %p52 = por %p50, %p51
    %p53 = scmp.ne.s32.totalorder %s45, %s47
    %p54 = scmp.eq.s32.totalorder %s16, 1
    %p55 = por %p53, %p54
    %p56 = scmp.ne.s32.totalorder %s47, %s48
    %p57 = scmp.eq.s32.totalorder %s16, 0
    %p58 = por %p56, %p57
    %p59 = scmp.ne.s32.totalorder %s47, %s48
    %p60 = scmp.eq.s32.totalorder %s17, 1
    %p61 = por %p59, %p60
    %p63 = scmp.ne.s32.totalorder %s48, %s62
    %p64 = scmp.eq.s32.totalorder %s17, 0
    %p65 = por %p63, %p64
    %s67 = sadd.s32 %s66, 1
    %p70 = scmp.eq.s32.totalorder %s11, 1
    %p71 = scmp.ne.s32.totalorder %s66, %s68
    %p72 = scmp.eq.s32.totalorder %s11, 0
    %p73 = por %p71, %p72
    %p74 = scmp.ne.s32.totalorder %s66, %s68
    %p75 = scmp.eq.s32.totalorder %s16, 1
    %p76 = por %p74, %p75
    %p77 = scmp.ne.s32.totalorder %s68, %s69
    %p78 = scmp.eq.s32.totalorder %s16, 0
    %p79 = por %p77, %p78
    %p80 = scmp.ne.s32.totalorder %s68, %s69
    %p81 = scmp.eq.s32.totalorder %s17, 1
    %p82 = por %p80, %p81
    %p84 = scmp.ne.s32.totalorder %s69, %s83
    %p85 = scmp.eq.s32.totalorder %s17, 0
    %p86 = por %p84, %p85
    %s88 = sadd.s32 %s87, 1
    %p91 = scmp.eq.s32.totalorder %s11, 1
    %p92 = scmp.ne.s32.totalorder %s87, %s89
    %p93 = scmp.eq.s32.totalorder %s11, 0
    %p94 = por %p92, %p93
    %p95 = scmp.ne.s32.totalorder %s87, %s89
    %p96 = scmp.eq.s32.totalorder %s16, 1
    %p97 = por %p95, %p96
    %p98 = scmp.ne.s32.totalorder %s89, %s90
    %p99 = scmp.eq.s32.totalorder %s16, 0
    %p100 = por %p98, %p99
    %p101 = scmp.ne.s32.totalorder %s89, %s90
    %p102 = scmp.eq.s32.totalorder %s17, 1
    %p103 = por %p101, %p102
    %p105 = scmp.ne.s32.totalorder %s90, %s104
    %p106 = scmp.eq.s32.totalorder %s17, 0
    %p107 = por %p105, %p106
    %s109 = sadd.s32 %s108, 1
    %p112 = scmp.eq.s32.totalorder %s11, 1
    %p113 = scmp.ne.s32.totalorder %s108, %s110
    %p114 = scmp.eq.s32.totalorder %s11, 0
    %p115 = por %p113, %p114
    %p116 = scmp.ne.s32.totalorder %s108, %s110
    %p117 = scmp.eq.s32.totalorder %s16, 1
    %p118 = por %p116, %p117
    %p119 = scmp.ne.s32.totalorder %s110, %s111
    %p120 = scmp.eq.s32.totalorder %s16, 0
    %p121 = por %p119, %p120
    %p122 = scmp.ne.s32.totalorder %s110, %s111
    %p123 = scmp.eq.s32.totalorder %s17, 1
    %p124 = por %p122, %p123
    %p126 = scmp.ne.s32.totalorder %s111, %s125
    %p127 = scmp.eq.s32.totalorder %s17, 0
    %p128 = por %p126, %p127
    %s129 = ssub.s32 %s11, %s18
    %p130 = scmp.eq.s32.totalorder %s129, 0
    %s132 = sadd.s32 %s131, 1
    %s133 = scalar_select %p130, %s131, %s132
    %p136 = pneg %p130
    %p137 = scmp.eq.s32.totalorder %s11, 1
    %p138 = por %p136, %p137
    %p139 = scmp.ne.s32.totalorder %s131, %s134
    %p140 = scmp.eq.s32.totalorder %s11, 0
    %p141 = por %p139, %p140
    %p142 = scmp.ne.s32.totalorder %s131, %s134
    %p143 = scmp.eq.s32.totalorder %s16, 1
    %p144 = por %p142, %p143
    %p145 = scmp.ne.s32.totalorder %s134, %s135
    %p146 = scmp.eq.s32.totalorder %s16, 0
    %p147 = por %p145, %p146
    %p148 = scmp.ne.s32.totalorder %s134, %s135
    %p149 = scmp.eq.s32.totalorder %s17, 1
    %p150 = por %p148, %p149
    %p152 = scmp.ne.s32.totalorder %s135, %s151
    %p153 = scmp.eq.s32.totalorder %s17, 0
    %p154 = por %p152, %p153
    %p155 = scmp.le.s32.totalorder 1, %s11
    %p156 = scmp.lt.s32.totalorder %s11, 3
    %p157 = pnand %p155, %p156
    %p158 = pneg %p157
    // Predicated region
    $region9: #{unet_forward.11} parent=5 // pred_check
      _
    $region10: #{unet_forward.11} parent=5 // pred_check_branch
      %160 = sbr.rel (%p157) target = $region12
    $region11: #{unet_forward.11} parent=5 // pred_region
      %s161 = ssub.s32 %s11, 1
      // Predicated region
      $region13: #{unet_forward.11} parent=11 // pred_check
        %p162 = pneg %p58
      $region14: #{unet_forward.11} parent=11 // pred_check_branch
        %164 = sbr.rel (%p162) target = $region16
      $region15: #{unet_forward.11} parent=11 // pred_region
        _
      $region16: #{unet_forward.11} parent=11 // pred_fallthru
        _
      // Predicated region
      $region17: #{unet_forward.11} parent=11 // pred_check
        %p165 = pneg %p79
      $region18: #{unet_forward.11} parent=11 // pred_check_branch
        %167 = sbr.rel (%p165) target = $region20
      $region19: #{unet_forward.11} parent=11 // pred_region
        _
      $region20: #{unet_forward.11} parent=11 // pred_fallthru
        _
      // Predicated region
      $region21: #{unet_forward.11} parent=11 // pred_check
        %p168 = pneg %p100
      $region22: #{unet_forward.11} parent=11 // pred_check_branch
        %170 = sbr.rel (%p168) target = $region24
      $region23: #{unet_forward.11} parent=11 // pred_region
        _
      $region24: #{unet_forward.11} parent=11 // pred_fallthru
        _
      // Predicated region
      $region25: #{unet_forward.11} parent=11 // pred_check
        %p171 = pneg %p121
      $region26: #{unet_forward.11} parent=11 // pred_check_branch
        %173 = sbr.rel (%p171) target = $region28
      $region27: #{unet_forward.11} parent=11 // pred_region
        _
      $region28: #{unet_forward.11} parent=11 // pred_fallthru
        _
    $region12: #{unet_forward.11} parent=5 // pred_fallthru
      _
    %p174 = scmp.lt.s32.totalorder %s11, 2
    // Predicated region
    $region29: #{unet_forward.11} parent=5 // pred_check
      %p175 = pneg %p174
    $region30: #{unet_forward.11} parent=5 // pred_check_branch
      %177 = sbr.rel (%p175) target = $region32
    $region31: #{unet_forward.11} parent=5 // pred_region
      // Predicated region
      $region33: #{unet_forward.11} parent=31 // pred_check
        %p178 = pneg %p31
      $region34: #{unet_forward.11} parent=31 // pred_check_branch
        %180 = sbr.rel (%p178) target = $region36
      $region35: #{unet_forward.11} parent=31 // pred_region
        %p181 = scmp.lt.s32.totalorder %s11, 1
        %s182 = scalar_select %p181, %s11, 1
        %s183 = smul.addr %s182, 4
        %s184 = smul.addr %s183, 4
        %s185 = scalar_lea.vmem %s0, %s184
      $region36: #{unet_forward.11} parent=31 // pred_fallthru
        _
    $region32: #{unet_forward.11} parent=5 // pred_fallthru
      _
    %p186 = scmp.le.s32.totalorder 1, %s11
    %p187 = scmp.lt.s32.totalorder %s11, 3
    %p188 = pnand %p186, %p187
    %p189 = pneg %p188
    // Predicated region
    $region37: #{unet_forward.11} parent=5 // pred_check
      _
    $region38: #{unet_forward.11} parent=5 // pred_check_branch
      %191 = sbr.rel (%p188) target = $region40
    $region39: #{unet_forward.11} parent=5 // pred_region
      %s192 = ssub.s32 %s11, 1
      %p193 = scmp.lt.s32.totalorder %s16, 1
      %s194 = scalar_select %p193, %s16, 1
      %s195 = smul.addr %s194, 4
      %s196 = smul.addr %s195, 4
      %s197 = scalar_lea.vmem %s0, %s196
      %p198 = pneg %p37
      %p199 = pneg %p34
      %p200 = pneg %p58
      %p201 = pneg %p55
      %p202 = pneg %p79
      %p203 = pneg %p76
      %p204 = pneg %p100
      %p205 = pneg %p97
      %p206 = pneg %p121
      %p207 = pneg %p118
      %p208 = pneg %p147
      %p209 = pneg %p144
      %p210 = scmp.lt.s32.totalorder %s16, 1
      %s211 = scalar_select %p210, %s16, 1
      %s212 = smul.addr %s211, 2
      %s213 = smul.addr %s212, 4
      %s214 = scalar_lea.vmem %s5, %s213
      %p215 = scmp.lt.s32.totalorder %s16, 1
      %s216 = scalar_select %p215, %s16, 1
      %s217 = smul.addr %s216, 4
      %s218 = smul.addr %s217, 4
      %s219 = scalar_lea.vmem %s0, %s218
      %p220 = scmp.lt.s32.totalorder %s16, 1
      %s221 = scalar_select %p220, %s16, 1
      %s222 = smul.addr %s221, 2
      %s223 = smul.addr %s222, 4
      %s224 = scalar_lea.vmem %s5, %s223
      %vm226 = vcmask 390144
      %227 = vst.msk [vmem:[#allocation2] sm:$0x3f] %vm226, 0.0
      %228 = vst.msk [vmem:[#allocation2 + $0x8] sm:$0x3f] %vm226, 0.0
      %229 = vst.msk [vmem:[#allocation2 + $0x10] sm:$0x3f] %vm226, 0.0
      %230 = vst.msk [vmem:[#allocation2 + $0x18] sm:$0x3f] %vm226, 0.0
      %231 = vst.msk [vmem:[#allocation2 + $0x20] sm:$0x3f] %vm226, 0.0
      %232 = vst.msk [vmem:[#allocation2 + $0x28] sm:$0x3f] %vm226, 0.0
      %v233 = vld [vmem:[%s219] sm:$0xf]
      %v234 = vld [vmem:[%s219 + $0x4] sm:$0xf]
      %v235 = vld [vmem:[%s219 + $0x8] sm:$0xf]
      %v236 = vld [vmem:[%s219 + $0xc] sm:$0xf]
      %s237 = scalar_lea.vmem [#allocation2], 8
      %vm238 = vcmask 388096
      %239 = vst.msk [vmem:[%s237 + $0x1] sm:$0xf] %vm238, %v233
      %240 = vst.msk [vmem:[%s237 + $0x9] sm:$0xf] %vm238, %v234
      %241 = vst.msk [vmem:[%s237 + $0x11] sm:$0xf] %vm238, %v235
      %242 = vst.msk [vmem:[%s237 + $0x19] sm:$0xf] %vm238, %v236
      %v243 = vld [vmem:[#allocation2] sm:$0xf]
      %v244 = vld [vmem:[#allocation2 + $0x8] sm:$0xf]
      %v245 = vld [vmem:[#allocation2 + $0x10] sm:$0xf]
      %v246 = vld [vmem:[#allocation2 + $0x18] sm:$0xf]
      %v247 = vld [vmem:[#allocation2 + $0x1] sm:$0xf]
      %v248 = vld [vmem:[#allocation2 + $0x9] sm:$0xf]
      %v249 = vld [vmem:[#allocation2 + $0x11] sm:$0xf]
      %v250 = vld [vmem:[#allocation2 + $0x19] sm:$0xf]
      %v251 = vld [vmem:[#allocation2 + $0x2] sm:$0xf]
      %v252 = vld [vmem:[#allocation2 + $0xa] sm:$0xf]
      %v253 = vld [vmem:[#allocation2 + $0x12] sm:$0xf]
      %v254 = vld [vmem:[#allocation2 + $0x1a] sm:$0xf]
      %v255 = vld [vmem:[%s237] sm:$0xf]
      %v256 = vld [vmem:[%s237 + $0x8] sm:$0xf]
      %v257 = vld [vmem:[%s237 + $0x10] sm:$0xf]
      %v258 = vld [vmem:[%s237 + $0x18] sm:$0xf]
      %v259 = vld [vmem:[%s237 + $0x1] sm:$0xf]
      %v260 = vld [vmem:[%s237 + $0x9] sm:$0xf]
      %v261 = vld [vmem:[%s237 + $0x11] sm:$0xf]
      %v262 = vld [vmem:[%s237 + $0x19] sm:$0xf]
      %v263 = vld [vmem:[%s237 + $0x2] sm:$0xf]
      %v264 = vld [vmem:[%s237 + $0xa] sm:$0xf]
      %v265 = vld [vmem:[%s237 + $0x12] sm:$0xf]
      %v266 = vld [vmem:[%s237 + $0x1a] sm:$0xf]
      %s267 = scalar_lea.vmem [#allocation2], 16
      %v268 = vld [vmem:[%s267] sm:$0xf]
      %v269 = vld [vmem:[%s267 + $0x8] sm:$0xf]
      %v270 = vld [vmem:[%s267 + $0x10] sm:$0xf]
      %v271 = vld [vmem:[%s267 + $0x18] sm:$0xf]
      %v272 = vld [vmem:[%s267 + $0x1] sm:$0xf]
      %v273 = vld [vmem:[%s267 + $0x9] sm:$0xf]
      %v274 = vld [vmem:[%s267 + $0x11] sm:$0xf]
      %v275 = vld [vmem:[%s267 + $0x19] sm:$0xf]
      %v276 = vld [vmem:[%s267 + $0x2] sm:$0xf]
      %v277 = vld [vmem:[%s267 + $0xa] sm:$0xf]
      %v278 = vld [vmem:[%s267 + $0x12] sm:$0xf]
      %v279 = vld [vmem:[%s267 + $0x1a] sm:$0xf]
      %284 = vrot.lane.b32.xlu0 %v247, 48
      %v285 = vpop.permute.xlu0 %284
      %286 = vrot.lane.b32.xlu0 %v248, 48
      %v287 = vpop.permute.xlu0 %286
      %288 = vrot.lane.b32.xlu0 %v249, 48
      %v289 = vpop.permute.xlu0 %288
      %290 = vrot.lane.b32.xlu0 %v250, 48
      %v291 = vpop.permute.xlu0 %290
      %300 = vrot.lane.b32.xlu0 %v251, 96
      %v301 = vpop.permute.xlu0 %300
      %302 = vrot.lane.b32.xlu0 %v252, 96
      %v303 = vpop.permute.xlu0 %302
      %304 = vrot.lane.b32.xlu0 %v253, 96
      %v305 = vpop.permute.xlu0 %304
      %306 = vrot.lane.b32.xlu0 %v254, 96
      %v307 = vpop.permute.xlu0 %306
      %316 = vrot.lane.b32.xlu0 %v255, 16
      %v317 = vpop.permute.xlu0 %316
      %318 = vrot.lane.b32.xlu0 %v256, 16
      %v319 = vpop.permute.xlu0 %318
      %320 = vrot.lane.b32.xlu0 %v257, 16
      %v321 = vpop.permute.xlu0 %320
      %322 = vrot.lane.b32.xlu0 %v258, 16
      %v323 = vpop.permute.xlu0 %322
      %332 = vrot.lane.b32.xlu0 %v259, 64
      %v333 = vpop.permute.xlu0 %332
      %334 = vrot.lane.b32.xlu0 %v260, 64
      %v335 = vpop.permute.xlu0 %334
      %336 = vrot.lane.b32.xlu0 %v261, 64
      %v337 = vpop.permute.xlu0 %336
      %338 = vrot.lane.b32.xlu0 %v262, 64
      %v339 = vpop.permute.xlu0 %338
      %348 = vrot.lane.b32.xlu0 %v263, 112
      %v349 = vpop.permute.xlu0 %348
      %350 = vrot.lane.b32.xlu0 %v264, 112
      %v351 = vpop.permute.xlu0 %350
      %352 = vrot.lane.b32.xlu0 %v265, 112
      %v353 = vpop.permute.xlu0 %352
      %354 = vrot.lane.b32.xlu0 %v266, 112
      %v355 = vpop.permute.xlu0 %354
      %364 = vrot.lane.b32.xlu0 %v268, 32
      %v365 = vpop.permute.xlu0 %364
      %366 = vrot.lane.b32.xlu0 %v269, 32
      %v367 = vpop.permute.xlu0 %366
      %368 = vrot.lane.b32.xlu0 %v270, 32
      %v369 = vpop.permute.xlu0 %368
      %370 = vrot.lane.b32.xlu0 %v271, 32
      %v371 = vpop.permute.xlu0 %370
      %380 = vrot.lane.b32.xlu0 %v272, 80
      %v381 = vpop.permute.xlu0 %380
      %382 = vrot.lane.b32.xlu0 %v273, 80
      %v383 = vpop.permute.xlu0 %382
      %384 = vrot.lane.b32.xlu0 %v274, 80
      %v385 = vpop.permute.xlu0 %384
      %386 = vrot.lane.b32.xlu0 %v275, 80
      %v387 = vpop.permute.xlu0 %386
      %vm392 = vcmask 392192
      %v393 = vsel %vm392, %v243, %v285
      %v394 = vsel %vm392, %v244, %v287
      %v395 = vsel %vm392, %v245, %v289
      %v396 = vsel %vm392, %v246, %v291
      %vm397 = vcmask 785408
      %v398 = vsel %vm397, %v393, %v301
      %v399 = vsel %vm397, %v394, %v303
      %v400 = vsel %vm397, %v395, %v305
      %v401 = vsel %vm397, %v396, %v307
      %vm402 = vcmask 130048
      %v403 = vsel %vm402, %v301, %v317
      %v404 = vsel %vm402, %v303, %v319
      %v405 = vsel %vm402, %v305, %v321
      %v406 = vsel %vm402, %v307, %v323
      %vm407 = vcmask 523264
      %v408 = vsel %vm407, %v403, %v333
      %v409 = vsel %vm407, %v404, %v335
      %v410 = vsel %vm407, %v405, %v337
      %v411 = vsel %vm407, %v406, %v339
      %vm412 = vcmask 916480
      %v413 = vsel %vm412, %v408, %v349
      %v414 = vsel %vm412, %v409, %v351
      %v415 = vsel %vm412, %v410, %v353
      %v416 = vsel %vm412, %v411, %v355
      %vm417 = vcmask 261120
      %v418 = vsel %vm417, %v349, %v365
      %v419 = vsel %vm417, %v351, %v367
      %v420 = vsel %vm417, %v353, %v369
      %v421 = vsel %vm417, %v355, %v371
      %vm422 = vcmask 654336
      %v423 = vsel %vm422, %v418, %v381
      %v424 = vsel %vm422, %v419, %v383
      %v425 = vsel %vm422, %v420, %v385
      %v426 = vsel %vm422, %v421, %v387
      %v443 = vrot.slane %v413, 4
      %v444 = vrot.slane %v276, 4
      %v445 = vrot.slane %v414, 4
      %v446 = vrot.slane %v277, 4
      %v447 = vrot.slane %v415, 4
      %v448 = vrot.slane %v278, 4
      %v449 = vrot.slane %v416, 4
      %v450 = vrot.slane %v279, 4
      %vm451 = vcmask 1043456
      %v452 = vsel %vm451, %v398, %v443
      %v453 = vsel %vm451, %v423, %v444
      %v454 = vsel %vm451, %v399, %v445
      %v455 = vsel %vm451, %v424, %v446
      %v456 = vsel %vm451, %v400, %v447
      %v457 = vsel %vm451, %v425, %v448
      %v458 = vsel %vm451, %v401, %v449
      %v459 = vsel %vm451, %v426, %v450
      %460 = vst [vmem:[#allocation1] ss:$2 sm:$0xff] %v452
      %s461 = scalar_lea.vmem [#allocation1], 1
      %462 = vst [vmem:[%s461] ss:$2 sm:$0xff] %v454
      %s463 = scalar_lea.vmem [#allocation1], 16
      %464 = vst [vmem:[%s463] ss:$2 sm:$0xff] %v453
      %s465 = scalar_lea.vmem [#allocation1], 17
      %466 = vst [vmem:[%s465] ss:$2 sm:$0xff] %v455
      %s467 = scalar_lea.vmem [#allocation1], 32
      %468 = vst [vmem:[%s467] ss:$2 sm:$0xff] %v456
      %s469 = scalar_lea.vmem [#allocation1], 33
      %470 = vst [vmem:[%s469] ss:$2 sm:$0xff] %v458
      %s471 = scalar_lea.vmem [#allocation1], 48
      %472 = vst [vmem:[%s471] ss:$2 sm:$0xff] %v457
      %s473 = scalar_lea.vmem [#allocation1], 49
      %474 = vst [vmem:[%s473] ss:$2 sm:$0xff] %v459
      %v475 = vld.sshfl [vmem:[#allocation1] sm:$0xff pattern:$0x75316420]
      %v476 = vld.sshfl [vmem:[#allocation1 + $0x8] sm:$0xff pattern:$0x75316420]
      %v477 = vld.sshfl [vmem:[#allocation1 + $0x10] sm:$0xff pattern:$0x75316420]
      %v478 = vld.sshfl [vmem:[#allocation1 + $0x18] sm:$0xff pattern:$0x75316420]
      %v479 = vld.sshfl [vmem:[#allocation1 + $0x20] sm:$0xff pattern:$0x75316420]
      %v480 = vld.sshfl [vmem:[#allocation1 + $0x28] sm:$0xff pattern:$0x75316420]
      %v481 = vld.sshfl [vmem:[#allocation1 + $0x30] sm:$0xff pattern:$0x75316420]
      %v482 = vld.sshfl [vmem:[#allocation1 + $0x38] sm:$0xff pattern:$0x75316420]
      %v491 = vpack.c.bf16 %v479, %v475
      %v492 = vpack.c.bf16 %v480, %v476
      %v493 = vpack.c.bf16 %v481, %v477
      %v494 = vpack.c.bf16 %v482, %v478
      %v495 = vld [vmem:[%s1] sm:$0xf]
      %v496 = vld [vmem:[%s1 + $0x4] sm:$0xf]
      %v497 = vld [vmem:[%s1 + $0x8] sm:$0xf]
      %v498 = vld [vmem:[%s1 + $0xc] sm:$0xf]
      %v499 = vld [vmem:[%s1 + $0x10] sm:$0xf]
      %v500 = vld [vmem:[%s1 + $0x14] sm:$0xf]
      %v501 = vld [vmem:[%s1 + $0x18] sm:$0xf]
      %v502 = vld [vmem:[%s1 + $0x1c] sm:$0xf]
      %v503 = vld [vmem:[%s1 + $0x20] sm:$0xf]
      %v504 = vld [vmem:[%s1 + $0x24] sm:$0xf]
      %v505 = vld [vmem:[%s1 + $0x28] sm:$0xf]
      %v506 = vld [vmem:[%s1 + $0x2c] sm:$0xf]
      %v507 = vld [vmem:[%s1 + $0x30] sm:$0xf]
      %v508 = vld [vmem:[%s1 + $0x34] sm:$0xf]
      %v509 = vld [vmem:[%s1 + $0x38] sm:$0xf]
      %v510 = vld [vmem:[%s1 + $0x3c] sm:$0xf]
      %v511 = vld [vmem:[%s1 + $0x40] sm:$0xf]
      %v512 = vld [vmem:[%s1 + $0x44] sm:$0xf]
      %v513 = vld [vmem:[%s1 + $0x48] sm:$0xf]
      %v514 = vld [vmem:[%s1 + $0x4c] sm:$0xf]
      %v515 = vld [vmem:[%s1 + $0x50] sm:$0xf]
      %v516 = vld [vmem:[%s1 + $0x54] sm:$0xf]
      %v517 = vld [vmem:[%s1 + $0x58] sm:$0xf]
      %v518 = vld [vmem:[%s1 + $0x5c] sm:$0xf]
      %v519 = vld [vmem:[%s1 + $0x60] sm:$0xf]
      %v520 = vld [vmem:[%s1 + $0x64] sm:$0xf]
      %v521 = vld [vmem:[%s1 + $0x68] sm:$0xf]
      %v522 = vld [vmem:[%s1 + $0x6c] sm:$0xf]
      %v523 = vld [vmem:[%s1 + $0x70] sm:$0xf]
      %v524 = vld [vmem:[%s1 + $0x74] sm:$0xf]
      %v525 = vld [vmem:[%s1 + $0x78] sm:$0xf]
      %v526 = vld [vmem:[%s1 + $0x7c] sm:$0xf]
      %v527 = vld [vmem:[%s1 + $0x80] sm:$0xf]
      %v528 = vld [vmem:[%s1 + $0x84] sm:$0xf]
      %v529 = vld [vmem:[%s1 + $0x88] sm:$0xf]
      %v530 = vld [vmem:[%s1 + $0x8c] sm:$0xf]
      %v531 = vld [vmem:[%s1 + $0x90] sm:$0xf]
      %v532 = vld [vmem:[%s1 + $0x94] sm:$0xf]
      %v533 = vld [vmem:[%s1 + $0x98] sm:$0xf]
      %v534 = vld [vmem:[%s1 + $0x9c] sm:$0xf]
      %v535 = vld [vmem:[%s1 + $0xa0] sm:$0xf]
      %v536 = vld [vmem:[%s1 + $0xa4] sm:$0xf]
      %v537 = vld [vmem:[%s1 + $0xa8] sm:$0xf]
      %v538 = vld [vmem:[%s1 + $0xac] sm:$0xf]
      %v539 = vld [vmem:[%s1 + $0xb0] sm:$0xf]
      %v540 = vld [vmem:[%s1 + $0xb4] sm:$0xf]
      %v541 = vld [vmem:[%s1 + $0xb8] sm:$0xf]
      %v542 = vld [vmem:[%s1 + $0xbc] sm:$0xf]
      %v543 = vld [vmem:[%s1 + $0xc0] sm:$0xf]
      %v544 = vld [vmem:[%s1 + $0xc4] sm:$0xf]
      %v545 = vld [vmem:[%s1 + $0xc8] sm:$0xf]
      %v546 = vld [vmem:[%s1 + $0xcc] sm:$0xf]
      %v547 = vld [vmem:[%s1 + $0xd0] sm:$0xf]
      %v548 = vld [vmem:[%s1 + $0xd4] sm:$0xf]
      %v549 = vld [vmem:[%s2] sm:$0x1]
      %v551 = vperm.slane %v549, 0
      %v607 = vunpack.c.l.b16 %v495
      %v608 = vunpack.c.l.b16 %v496
      %v609 = vunpack.c.l.b16 %v497
      %v610 = vunpack.c.l.b16 %v498
      %v611 = vunpack.c.l.b16 %v499
      %v612 = vunpack.c.l.b16 %v500
      %v613 = vunpack.c.l.b16 %v501
      %v614 = vunpack.c.l.b16 %v502
      %v615 = vunpack.c.l.b16 %v503
      %v616 = vunpack.c.l.b16 %v504
      %v617 = vunpack.c.l.b16 %v505
      %v618 = vunpack.c.l.b16 %v506
      %v619 = vunpack.c.l.b16 %v507
      %v620 = vunpack.c.l.b16 %v508
      %v621 = vunpack.c.l.b16 %v509
      %v622 = vunpack.c.l.b16 %v510
      %v623 = vunpack.c.l.b16 %v511
      %v624 = vunpack.c.l.b16 %v512
      %v625 = vunpack.c.l.b16 %v513
      %v626 = vunpack.c.l.b16 %v514
      %v627 = vunpack.c.l.b16 %v515
      %v628 = vunpack.c.l.b16 %v516
      %v629 = vunpack.c.l.b16 %v517
      %v630 = vunpack.c.l.b16 %v518
      %v631 = vunpack.c.l.b16 %v519
      %v632 = vunpack.c.l.b16 %v520
      %v633 = vunpack.c.l.b16 %v521
      %v634 = vunpack.c.l.b16 %v522
      %v635 = vunpack.c.l.b16 %v523
      %v636 = vunpack.c.l.b16 %v524
      %v637 = vunpack.c.l.b16 %v525
      %v638 = vunpack.c.l.b16 %v526
      %v639 = vunpack.c.l.b16 %v527
      %v640 = vunpack.c.l.b16 %v528
      %v641 = vunpack.c.l.b16 %v529
      %v642 = vunpack.c.l.b16 %v530
      %v643 = vunpack.c.l.b16 %v531
      %v644 = vunpack.c.l.b16 %v532
      %v645 = vunpack.c.l.b16 %v533
      %v646 = vunpack.c.l.b16 %v534
      %v647 = vunpack.c.l.b16 %v535
      %v648 = vunpack.c.l.b16 %v536
      %v649 = vunpack.c.l.b16 %v537
      %v650 = vunpack.c.l.b16 %v538
      %v651 = vunpack.c.l.b16 %v539
      %v652 = vunpack.c.l.b16 %v540
      %v653 = vunpack.c.l.b16 %v541
      %v654 = vunpack.c.l.b16 %v542
      %v655 = vunpack.c.l.b16 %v543
      %v656 = vunpack.c.l.b16 %v544
      %v657 = vunpack.c.l.b16 %v545
      %v658 = vunpack.c.l.b16 %v546
      %v659 = vunpack.c.l.b16 %v547
      %v660 = vunpack.c.l.b16 %v548
      %v661 = vpack.c.b16 %v608, %v607
      %v662 = vpack.c.b16 %v610, %v609
      %v663 = vpack.c.b16 %v612, %v611
      %v664 = vpack.c.b16 %v614, %v613
      %v665 = vpack.c.b16 %v616, %v615
      %v666 = vpack.c.b16 %v618, %v617
      %v667 = vpack.c.b16 %v620, %v619
      %v668 = vpack.c.b16 %v622, %v621
      %v669 = vpack.c.b16 %v624, %v623
      %v670 = vpack.c.b16 %v626, %v625
      %v671 = vpack.c.b16 %v628, %v627
      %v672 = vpack.c.b16 %v630, %v629
      %v673 = vpack.c.b16 %v632, %v631
      %v674 = vpack.c.b16 %v634, %v633
      %v675 = vpack.c.b16 %v636, %v635
      %v676 = vpack.c.b16 %v638, %v637
      %v677 = vpack.c.b16 %v640, %v639
      %v678 = vpack.c.b16 %v642, %v641
      %v679 = vpack.c.b16 %v644, %v643
      %v680 = vpack.c.b16 %v646, %v645
      %v681 = vpack.c.b16 %v648, %v647
      %v682 = vpack.c.b16 %v650, %v649
      %v683 = vpack.c.b16 %v652, %v651
      %v684 = vpack.c.b16 %v654, %v653
      %v685 = vpack.c.b16 %v656, %v655
      %v686 = vpack.c.b16 %v658, %v657
      %v687 = vpack.c.b16 %v660, %v659
      %v716 = vsel %vm392, %v494, 0
      %718 = vmatpush.bf16.msra.mxu0 %v668
      %719 = vmatpush.bf16.msra.mxu0 %v667
      %720 = vmatpush.bf16.msra.mxu0 %v666
      %721 = vmatpush.bf16.msra.mxu0 %v665
      %722 = vmatpush.bf16.msra.mxu0 %v664
      %723 = vmatpush.bf16.msra.mxu0 %v663
      %724 = vmatpush.bf16.msra.mxu0 %v662
      %725 = vmatpush.bf16.msra.mxu0 %v661
      %726 = vmatmul.bf16.gmra.mxu0 %v491
      %v727 = vpop.f32.mrf.mxu0
      %v728 = vadd.f32 %v551, %v727
      %v729 = vpop.f32.mrf.mxu0
      %v730 = vadd.f32 %v551, %v729
      %731 = vdwg.mxu0
      %732 = vmatpush.bf16.msra.mxu0 %v676
      %733 = vmatpush.bf16.msra.mxu0 %v675
      %734 = vmatpush.bf16.msra.mxu0 %v674
      %735 = vmatpush.bf16.msra.mxu0 %v673
      %736 = vmatpush.bf16.msra.mxu0 %v672
      %737 = vmatpush.bf16.msra.mxu0 %v671
      %738 = vmatpush.bf16.msra.mxu0 %v670
      %739 = vmatpush.bf16.msra.mxu0 %v669
      %740 = vmatmul.bf16.gmra.mxu0 %v492
      %v741 = vpop.f32.mrf.mxu0
      %v742 = vadd.f32 %v728, %v741
      %v743 = vpop.f32.mrf.mxu0
      %v744 = vadd.f32 %v730, %v743
      %745 = vdwg.mxu0
      %746 = vmatpush.bf16.msra.mxu0 %v684
      %747 = vmatpush.bf16.msra.mxu0 %v683
      %748 = vmatpush.bf16.msra.mxu0 %v682
      %749 = vmatpush.bf16.msra.mxu0 %v681
      %750 = vmatpush.bf16.msra.mxu0 %v680
      %751 = vmatpush.bf16.msra.mxu0 %v679
      %752 = vmatpush.bf16.msra.mxu0 %v678
      %753 = vmatpush.bf16.msra.mxu0 %v677
      %754 = vmatmul.bf16.gmra.mxu0 %v493
      %v755 = vpop.f32.mrf.mxu0
      %v756 = vadd.f32 %v742, %v755
      %v757 = vpop.f32.mrf.mxu0
      %v758 = vadd.f32 %v744, %v757
      %759 = vdwg.mxu0
      %760 = vmatpush.bf16.msra.mxu0 0
      %761 = vmatpush.bf16.msra.mxu0 0
      %762 = vmatpush.bf16.msra.mxu0 0
      %763 = vmatpush.bf16.msra.mxu0 0
      %764 = vmatpush.bf16.msra.mxu0 0
      %765 = vmatpush.bf16.msra.mxu0 %v687
      %766 = vmatpush.bf16.msra.mxu0 %v686
      %767 = vmatpush.bf16.msra.mxu0 %v685
      %768 = vmatmul.bf16.gmra.mxu0 %v716
      %v769 = vpop.f32.mrf.mxu0
      %v770 = vadd.f32 %v756, %v769
      %v771 = vpop.f32.mrf.mxu0
      %v772 = vadd.f32 %v758, %v771
      %773 = vdwg.mxu0
      %v774 = vmax.f32 %v770, 0.0
      %v775 = vmax.f32 %v772, 0.0
      %vm776 = vcmask 128000
      %777 = vst.msk [vmem:[#allocation3] sm:$0x3f] %vm776, 0.0
      %778 = vst.msk [vmem:[#allocation3 + $0x8] sm:$0x3f] %vm776, 0.0
      %779 = vst.msk [vmem:[#allocation3 + $0x10] sm:$0x3f] %vm776, 0.0
      %780 = vst.msk [vmem:[#allocation3 + $0x18] sm:$0x3f] %vm776, 0.0
      %781 = vst.msk [vmem:[#allocation3 + $0x20] sm:$0x3f] %vm776, 0.0
      %782 = vst.msk [vmem:[#allocation3 + $0x28] sm:$0x3f] %vm776, 0.0
      %v785 = vrot.slane %v774, 4
      %v786 = vrot.slane %v775, 4
      %s789 = scalar_lea.vmem [#allocation3], 8
      %vm790 = vcmask 125952
      %791 = vst.msk [vmem:[%s789 + $0x1] sm:$0xf] %vm790, %v774
      %792 = vst.msk [vmem:[%s789 + $0x9] sm:$0xf] %vm790, %v785
      %793 = vst.msk [vmem:[%s789 + $0x11] sm:$0xf] %vm790, %v775
      %794 = vst.msk [vmem:[%s789 + $0x19] sm:$0xf] %vm790, %v786
      %v795 = vld [vmem:[#allocation3] sm:$0xf]
      %v796 = vld [vmem:[#allocation3 + $0x8] sm:$0xf]
      %v797 = vld [vmem:[#allocation3 + $0x10] sm:$0xf]
      %v798 = vld [vmem:[#allocation3 + $0x18] sm:$0xf]
      %v799 = vld [vmem:[#allocation3 + $0x1] sm:$0xf]
      %v800 = vld [vmem:[#allocation3 + $0x9] sm:$0xf]
      %v801 = vld [vmem:[#allocation3 + $0x11] sm:$0xf]
      %v802 = vld [vmem:[#allocation3 + $0x19] sm:$0xf]
      %v803 = vld [vmem:[#allocation3 + $0x2] sm:$0xf]
      %v804 = vld [vmem:[#allocation3 + $0xa] sm:$0xf]
      %v805 = vld [vmem:[#allocation3 + $0x12] sm:$0xf]
      %v806 = vld [vmem:[#allocation3 + $0x1a] sm:$0xf]
      %v807 = vld [vmem:[%s789] sm:$0xf]
      %v808 = vld [vmem:[%s789 + $0x8] sm:$0xf]
      %v809 = vld [vmem:[%s789 + $0x10] sm:$0xf]
      %v810 = vld [vmem:[%s789 + $0x18] sm:$0xf]
      %v811 = vld [vmem:[%s789 + $0x1] sm:$0xf]
      %v812 = vld [vmem:[%s789 + $0x9] sm:$0xf]
      %v813 = vld [vmem:[%s789 + $0x11] sm:$0xf]
      %v814 = vld [vmem:[%s789 + $0x19] sm:$0xf]
      %v815 = vld [vmem:[%s789 + $0x2] sm:$0xf]
      %v816 = vld [vmem:[%s789 + $0xa] sm:$0xf]
      %v817 = vld [vmem:[%s789 + $0x12] sm:$0xf]
      %v818 = vld [vmem:[%s789 + $0x1a] sm:$0xf]
      %s819 = scalar_lea.vmem [#allocation3], 16
      %v820 = vld [vmem:[%s819] sm:$0xf]
      %v821 = vld [vmem:[%s819 + $0x8] sm:$0xf]
      %v822 = vld [vmem:[%s819 + $0x10] sm:$0xf]
      %v823 = vld [vmem:[%s819 + $0x18] sm:$0xf]
      %v824 = vld [vmem:[%s819 + $0x1] sm:$0xf]
      %v825 = vld [vmem:[%s819 + $0x9] sm:$0xf]
      %v826 = vld [vmem:[%s819 + $0x11] sm:$0xf]
      %v827 = vld [vmem:[%s819 + $0x19] sm:$0xf]
      %v828 = vld [vmem:[%s819 + $0x2] sm:$0xf]
      %v829 = vld [vmem:[%s819 + $0xa] sm:$0xf]
      %v830 = vld [vmem:[%s819 + $0x12] sm:$0xf]
      %v831 = vld [vmem:[%s819 + $0x1a] sm:$0xf]
      %836 = vrot.lane.b32.xlu0 %v799, 16
      %v837 = vpop.permute.xlu0 %836
      %838 = vrot.lane.b32.xlu0 %v800, 16
      %v839 = vpop.permute.xlu0 %838
      %840 = vrot.lane.b32.xlu0 %v801, 16
      %v841 = vpop.permute.xlu0 %840
      %842 = vrot.lane.b32.xlu0 %v802, 16
      %v843 = vpop.permute.xlu0 %842
      %852 = vrot.lane.b32.xlu0 %v803, 32
      %v853 = vpop.permute.xlu0 %852
      %854 = vrot.lane.b32.xlu0 %v804, 32
      %v855 = vpop.permute.xlu0 %854
      %856 = vrot.lane.b32.xlu0 %v805, 32
      %v857 = vpop.permute.xlu0 %856
      %858 = vrot.lane.b32.xlu0 %v806, 32
      %v859 = vpop.permute.xlu0 %858
      %868 = vrot.lane.b32.xlu0 %v807, 48
      %v869 = vpop.permute.xlu0 %868
      %870 = vrot.lane.b32.xlu0 %v808, 48
      %v871 = vpop.permute.xlu0 %870
      %872 = vrot.lane.b32.xlu0 %v809, 48
      %v873 = vpop.permute.xlu0 %872
      %874 = vrot.lane.b32.xlu0 %v810, 48
      %v875 = vpop.permute.xlu0 %874
      %884 = vrot.lane.b32.xlu0 %v811, 64
      %v885 = vpop.permute.xlu0 %884
      %886 = vrot.lane.b32.xlu0 %v812, 64
      %v887 = vpop.permute.xlu0 %886
      %888 = vrot.lane.b32.xlu0 %v813, 64
      %v889 = vpop.permute.xlu0 %888
      %890 = vrot.lane.b32.xlu0 %v814, 64
      %v891 = vpop.permute.xlu0 %890
      %900 = vrot.lane.b32.xlu0 %v815, 80
      %v901 = vpop.permute.xlu0 %900
      %902 = vrot.lane.b32.xlu0 %v816, 80
      %v903 = vpop.permute.xlu0 %902
      %904 = vrot.lane.b32.xlu0 %v817, 80
      %v905 = vpop.permute.xlu0 %904
      %906 = vrot.lane.b32.xlu0 %v818, 80
      %v907 = vpop.permute.xlu0 %906
      %916 = vrot.lane.b32.xlu0 %v820, 96
      %v917 = vpop.permute.xlu0 %916
      %918 = vrot.lane.b32.xlu0 %v821, 96
      %v919 = vpop.permute.xlu0 %918
      %920 = vrot.lane.b32.xlu0 %v822, 96
      %v921 = vpop.permute.xlu0 %920
      %922 = vrot.lane.b32.xlu0 %v823, 96
      %v923 = vpop.permute.xlu0 %922
      %932 = vrot.lane.b32.xlu0 %v824, 112
      %v933 = vpop.permute.xlu0 %932
      %934 = vrot.lane.b32.xlu0 %v825, 112
      %v935 = vpop.permute.xlu0 %934
      %936 = vrot.lane.b32.xlu0 %v826, 112
      %v937 = vpop.permute.xlu0 %936
      %938 = vrot.lane.b32.xlu0 %v827, 112
      %v939 = vpop.permute.xlu0 %938
      %v944 = vsel %vm402, %v795, %v837
      %v945 = vsel %vm402, %v796, %v839
      %v946 = vsel %vm402, %v797, %v841
      %v947 = vsel %vm402, %v798, %v843
      %v948 = vsel %vm417, %v944, %v853
      %v949 = vsel %vm417, %v945, %v855
      %v950 = vsel %vm417, %v946, %v857
      %v951 = vsel %vm417, %v947, %v859
      %v952 = vsel %vm392, %v948, %v869
      %v953 = vsel %vm392, %v949, %v871
      %v954 = vsel %vm392, %v950, %v873
      %v955 = vsel %vm392, %v951, %v875
      %v956 = vsel %vm407, %v952, %v885
      %v957 = vsel %vm407, %v953, %v887
      %v958 = vsel %vm407, %v954, %v889
      %v959 = vsel %vm407, %v955, %v891
      %v960 = vsel %vm422, %v956, %v901
      %v961 = vsel %vm422, %v957, %v903
      %v962 = vsel %vm422, %v958, %v905
      %v963 = vsel %vm422, %v959, %v907
      %v964 = vsel %vm397, %v960, %v917
      %v965 = vsel %vm397, %v961, %v919
      %v966 = vsel %vm397, %v962, %v921
      %v967 = vsel %vm397, %v963, %v923
      %v968 = vsel %vm412, %v964, %v933
      %v969 = vsel %vm412, %v965, %v935
      %v970 = vsel %vm412, %v966, %v937
      %v971 = vsel %vm412, %v967, %v939
      %v980 = vrot.slane %v828, 4
      %v981 = vrot.slane %v829, 4
      %v982 = vrot.slane %v830, 4
      %v983 = vrot.slane %v831, 4
      %v984 = vsel %vm451, %v968, %v980
      %v985 = vsel %vm451, %v969, %v981
      %v986 = vsel %vm451, %v970, %v982
      %v987 = vsel %vm451, %v971, %v983
      %988 = vst [vmem:[#allocation1] ss:$2 sm:$0xff] %v984
      %s989 = scalar_lea.vmem [#allocation1], 1
      %990 = vst [vmem:[%s989] ss:$2 sm:$0xff] %v985
      %s991 = scalar_lea.vmem [#allocation1], 16
      %992 = vst [vmem:[%s991] ss:$2 sm:$0xff] %v986
      %s993 = scalar_lea.vmem [#allocation1], 17
      %994 = vst [vmem:[%s993] ss:$2 sm:$0xff] %v987
      %v995 = vld.sshfl [vmem:[#allocation1] sm:$0xff pattern:$0x75316420]
      %v996 = vld.sshfl [vmem:[#allocation1 + $0x8] sm:$0xff pattern:$0x75316420]
      %v997 = vld.sshfl [vmem:[#allocation1 + $0x10] sm:$0xff pattern:$0x75316420]
      %v998 = vld.sshfl [vmem:[#allocation1 + $0x18] sm:$0xff pattern:$0x75316420]
      %v1003 = vpack.c.bf16 %v997, %v995
      %v1004 = vpack.c.bf16 %v998, %v996
      %v1005 = vld [vmem:[%s3] sm:$0xf]
      %v1006 = vld [vmem:[%s3 + $0x4] sm:$0xf]
      %v1007 = vld [vmem:[%s3 + $0x8] sm:$0xf]
      %v1008 = vld [vmem:[%s3 + $0xc] sm:$0xf]
      %v1009 = vld [vmem:[%s3 + $0x10] sm:$0xf]
      %v1010 = vld [vmem:[%s3 + $0x14] sm:$0xf]
      %v1011 = vld [vmem:[%s3 + $0x18] sm:$0xf]
      %v1012 = vld [vmem:[%s3 + $0x1c] sm:$0xf]
      %v1013 = vld [vmem:[%s3 + $0x20] sm:$0xf]
      %v1014 = vld [vmem:[%s3 + $0x24] sm:$0xf]
      %v1015 = vld [vmem:[%s3 + $0x28] sm:$0xf]
      %v1016 = vld [vmem:[%s3 + $0x2c] sm:$0xf]
      %v1017 = vld [vmem:[%s3 + $0x30] sm:$0xf]
      %v1018 = vld [vmem:[%s3 + $0x34] sm:$0xf]
      %v1019 = vld [vmem:[%s3 + $0x38] sm:$0xf]
      %v1020 = vld [vmem:[%s3 + $0x3c] sm:$0xf]
      %v1021 = vld [vmem:[%s3 + $0x40] sm:$0xf]
      %v1022 = vld [vmem:[%s3 + $0x44] sm:$0xf]
      %v1023 = vld [vmem:[%s4] sm:$0x1]
      %v1025 = vperm.slane %v1023, 0
      %v1045 = vunpack.c.l.b16 %v1005
      %v1046 = vunpack.c.l.b16 %v1006
      %v1047 = vunpack.c.l.b16 %v1007
      %v1048 = vunpack.c.l.b16 %v1008
      %v1049 = vunpack.c.l.b16 %v1009
      %v1050 = vunpack.c.l.b16 %v1010
      %v1051 = vunpack.c.l.b16 %v1011
      %v1052 = vunpack.c.l.b16 %v1012
      %v1053 = vunpack.c.l.b16 %v1013
      %v1054 = vunpack.c.l.b16 %v1014
      %v1055 = vunpack.c.l.b16 %v1015
      %v1056 = vunpack.c.l.b16 %v1016
      %v1057 = vunpack.c.l.b16 %v1017
      %v1058 = vunpack.c.l.b16 %v1018
      %v1059 = vunpack.c.l.b16 %v1019
      %v1060 = vunpack.c.l.b16 %v1020
      %v1061 = vunpack.c.l.b16 %v1021
      %v1062 = vunpack.c.l.b16 %v1022
      %v1063 = vpack.c.b16 %v1046, %v1045
      %v1064 = vpack.c.b16 %v1048, %v1047
      %v1065 = vpack.c.b16 %v1050, %v1049
      %v1066 = vpack.c.b16 %v1052, %v1051
      %v1067 = vpack.c.b16 %v1054, %v1053
      %v1068 = vpack.c.b16 %v1056, %v1055
      %v1069 = vpack.c.b16 %v1058, %v1057
      %v1070 = vpack.c.b16 %v1060, %v1059
      %v1071 = vpack.c.b16 %v1062, %v1061
      %v1082 = vsel %vm402, %v1004, 0
      %1084 = vmatpush.bf16.msra.mxu0 %v1070
      %1085 = vmatpush.bf16.msra.mxu0 %v1069
      %1086 = vmatpush.bf16.msra.mxu0 %v1068
      %1087 = vmatpush.bf16.msra.mxu0 %v1067
      %1088 = vmatpush.bf16.msra.mxu0 %v1066
      %1089 = vmatpush.bf16.msra.mxu0 %v1065
      %1090 = vmatpush.bf16.msra.mxu0 %v1064
      %1091 = vmatpush.bf16.msra.mxu0 %v1063
      %1092 = vmatmul.bf16.gmra.mxu0 %v1003
      %v1093 = vpop.f32.mrf.mxu0
      %v1094 = vadd.f32 %v1025, %v1093
      %v1095 = vpop.f32.mrf.mxu0
      %v1096 = vadd.f32 %v1025, %v1095
      %1097 = vdwg.mxu0
      %1098 = vmatpush.bf16.msra.mxu0 0
      %1099 = vmatpush.bf16.msra.mxu0 0
      %1100 = vmatpush.bf16.msra.mxu0 0
      %1101 = vmatpush.bf16.msra.mxu0 0
      %1102 = vmatpush.bf16.msra.mxu0 0
      %1103 = vmatpush.bf16.msra.mxu0 0
      %1104 = vmatpush.bf16.msra.mxu0 0
      %1105 = vmatpush.bf16.msra.mxu0 %v1071
      %1106 = vmatmul.bf16.gmra.mxu0 %v1082
      %v1107 = vpop.f32.mrf.mxu0
      %v1108 = vadd.f32 %v1094, %v1107
      %v1109 = vpop.f32.mrf.mxu0
      %v1110 = vadd.f32 %v1096, %v1109
      %1111 = vdwg.mxu0
      %v1112 = vmax.f32 %v1108, 0.0
      %v1113 = vmax.f32 %v1110, 0.0
      %v1116 = vrot.slane %v1112, 4
      %v1117 = vrot.slane %v1113, 4
      %v1120 = vmax.f32 %v1112, %v1116
      %v1121 = vmax.f32 %v1113, %v1117
      %1122 = vst.msk [vmem:[%s224] sm:$0xf] %vm790, %v1120
      %1123 = vst.msk [vmem:[%s224 + $0x4] sm:$0xf] %vm790, %v1121
      %p1124 = scmp.lt.s32.totalorder %s16, 1
      %s1125 = scalar_select %p1124, %s16, 1
      %s1126 = smul.addr %s1125, 2
      %s1127 = smul.addr %s1126, 4
      %s1128 = scalar_lea.vmem %s5, %s1127
      // Predicated region
      $region41: #{unet_forward.11} parent=39 // pred_check
        %p1129 = pneg %p144
      $region42: #{unet_forward.11} parent=39 // pred_check_branch
        %1131 = sbr.rel (%p1129) target = $region44
      $region43: #{unet_forward.11} parent=39 // pred_region
        _
      $region44: #{unet_forward.11} parent=39 // pred_fallthru
        _
    $region40: #{unet_forward.11} parent=5 // pred_fallthru
      _
    %p1132 = scmp.le.s32.totalorder 2, %s11
    // Predicated region
    $region45: #{unet_forward.11} parent=5 // pred_check
      %p1133 = pneg %p1132
    $region46: #{unet_forward.11} parent=5 // pred_check_branch
      %1135 = sbr.rel (%p1133) target = $region48
    $region47: #{unet_forward.11} parent=5 // pred_region
      %s1136 = ssub.s32 %s11, 2
      // Predicated region
      $region49: #{unet_forward.11} parent=47 // pred_check
        %p1137 = pneg %p150
      $region50: #{unet_forward.11} parent=47 // pred_check_branch
        %1139 = sbr.rel (%p1137) target = $region52
      $region51: #{unet_forward.11} parent=47 // pred_region
        %p1140 = scmp.lt.s32.totalorder %s17, 1
        %s1141 = scalar_select %p1140, %s17, 1
        %s1142 = smul.addr %s1141, 2
        %s1143 = smul.addr %s1142, 4
        %s1144 = scalar_lea.vmem %s5, %s1143
      $region52: #{unet_forward.11} parent=47 // pred_fallthru
        _
    $region48: #{unet_forward.11} parent=5 // pred_fallthru
      _
  $region6: #{unet_forward.11} parent=0 // loop_footer
    %s15 = sadd.s32 1, %s11
  $region7: #{unet_forward.11} parent=0 // loop_footer_branch
    %10 = sbr.rel target = $region3
  $region8: #{unet_forward.11} parent=0 // loop_exit
    _

// kernel: unet_forward.13
$region0: #{unet_forward.13}
  #allocation0 [shape = 'u32[]', space=smem, size = 0x4, offset = 0x4, fixed_abs, tag = 'smem constant byte address 0x4 - core index']
  #allocation1 [shape = 'u32[72,128]{1,0:T(1,128)}', space=vmem, size = 0x9000, scoped, tag = 'internal scratch']
  %s0 = inlined_call_operand.vmem [shape: f32[8,8], index: 0, kind: input, shape index: {}]
  %s1 = inlined_call_operand.vmem [shape: bf16[8,8], index: 1, kind: input, shape index: {}]
  %s2 = inlined_call_operand.vmem [shape: f32[1,8], index: 2, kind: input, shape index: {}]
  %s3 = inlined_call_operand.hbm [shape: f32[8,8], index: 3, kind: output, shape index: {}]
  %s4 = sld [smem:[#allocation0]]
  $region22: #{unet_forward.13} parent=0
    _
  %s6 = ssub.s32 1, %s4
  %s7 = scalar_select 0, %s6, %s4
  $region1: #{unet_forward.13} parent=0
    #allocation2 [shape = 'u8[4096]{0}', space=vmem, size = 0x1000, scoped, tag = 'output window, operand 0, single buffered']
    #allocation3 [shape = 's32[1]{0}', space=sflag, size = 0x4, scoped, tag = 'scoped memory for unet_forward.13']
    %8 = vsyncpa [#allocation3], 0
    // Predicated region
    $region2: #{unet_forward.13} parent=1 // pred_check
      _
    $region3: #{unet_forward.13} parent=1 // pred_check_branch
      %10 = sbr.rel (0) target = $region5
    $region4: #{unet_forward.13} parent=1 // pred_region
      _
    $region5: #{unet_forward.13} parent=1 // pred_fallthru
      _
    // Predicated region
    $region6: #{unet_forward.13} parent=1 // pred_check
      _
    $region7: #{unet_forward.13} parent=1 // pred_check_branch
      %12 = sbr.rel (0) target = $region9
    $region8: #{unet_forward.13} parent=1 // pred_region
      _
    $region9: #{unet_forward.13} parent=1 // pred_fallthru
      _
    // Predicated region
    $region10: #{unet_forward.13} parent=1 // pred_check
      _
    $region11: #{unet_forward.13} parent=1 // pred_check_branch
      %14 = sbr.rel (0) target = $region13
    $region12: #{unet_forward.13} parent=1 // pred_region
      _
    $region13: #{unet_forward.13} parent=1 // pred_fallthru
      _
    %v16 = vld [vmem:[%s0] sm:$0xff]
    %v17 = vpack.c.bf16 %v16, %v16
    %v18 = vld [vmem:[%s1] sm:$0xf]
    %v19 = vld [vmem:[%s2] sm:$0x1]
    %v21 = vperm.slane %v19, 0
    %vm23 = vcmask 64512
    %v25 = vsel %vm23, %v17, 0
    %vm27 = vcmask 1043456
    %v29 = vsel %vm27, %v18, 0
    %31 = vmatpush.bf16.msra.mxu0 0
    %32 = vmatpush.bf16.msra.mxu0 0
    %33 = vmatpush.bf16.msra.mxu0 0
    %34 = vmatpush.bf16.msra.mxu0 0
    %35 = vmatpush.bf16.msra.mxu0 0
    %36 = vmatpush.bf16.msra.mxu0 0
    %37 = vmatpush.bf16.msra.mxu0 0
    %38 = vmatpush.bf16.msra.mxu0 %v29
    %39 = vmatmul.bf16.gmra.mxu0 %v25
    %v40 = vpop.f32.mrf.mxu0
    %v41 = vadd.f32 %v21, %v40
    %v42 = vpop.f32.mrf.mxu0
    %43 = vdwg.mxu0
    %44 = vst.msk [vmem:[#allocation2] sm:$0xff] %vm23, %v41
    // Predicated region
    $region14: #{unet_forward.13} parent=1 // pred_check
      _
    $region15: #{unet_forward.13} parent=1 // pred_check_branch
      %46 = sbr.rel (0) target = $region17
    $region16: #{unet_forward.13} parent=1 // pred_region
      %48 = vsyncadd [#allocation3], 0
      %s50 = sshll.u32 [#allocation2], 4
      %s51 = int_to_ptr.vmem [resolvable:$true] %s50
      %s52 = sshll.u32 %s3, 4
      %s53 = int_to_ptr.hbm [resolvable:$true] %s52
      %55 = dma.vmem_to_hbm [thread:$0]  %s51, 128, %s53, [#allocation3]
    $region17: #{unet_forward.13} parent=1 // pred_fallthru
      _
    // Predicated region
    $region18: #{unet_forward.13} parent=1 // pred_check
      _
    $region19: #{unet_forward.13} parent=1 // pred_check_branch
      %57 = sbr.rel (0) target = $region21
    $region20: #{unet_forward.13} parent=1 // pred_region
      %59 = dma.done [#allocation3], 128
    $region21: #{unet_forward.13} parent=1 // pred_fallthru
      _
    %60 = vsyncpa [#allocation3], 1

// kernel: unet_forward.12
$region0: #{unet_forward.12}
  #allocation0 [shape = 'u32[]', space=smem, size = 0x4, offset = 0x4, fixed_abs, tag = 'smem constant byte address 0x4 - core index']
  #allocation1 [shape = 'u32[72,128]{1,0:T(1,128)}', space=vmem, size = 0x9000, scoped, tag = 'internal scratch']
  #allocation2 [shape = 'f32[6,6,24]{2,1,0:T(8,128)}', space=vmem, size = 0x6000, scoped, tag = 'scratch operand']
  #allocation3 [shape = 'f32[6,6,8]{2,1,0:T(8,128)}', space=vmem, size = 0x6000, scoped, tag = 'scratch operand']
  %s0 = inlined_call_operand.vmem [shape: f32[2,4,4,24], index: 0, kind: input, shape index: {}]
  %s1 = inlined_call_operand.vmem [shape: bf16[216,8], index: 1, kind: input, shape index: {}]
  %s2 = inlined_call_operand.vmem [shape: f32[1,8], index: 2, kind: input, shape index: {}]
  %s3 = inlined_call_operand.vmem [shape: bf16[72,8], index: 3, kind: input, shape index: {}]
  %s4 = inlined_call_operand.vmem [shape: f32[1,8], index: 4, kind: input, shape index: {}]
  %s5 = inlined_call_operand.vmem [shape: f32[2,2,4,8], index: 5, kind: output, shape index: {}]
  %s6 = sld [smem:[#allocation0]]
  $region53: #{unet_forward.12} parent=0
    _
  %s8 = ssub.s32 1, %s6
  %s9 = scalar_select 0, %s8, %s6
  loop: start=0, step=1, limit=4
  $region2: #{unet_forward.12} parent=0 // loop_pre_header
    _
  $region3: #{unet_forward.12} parent=0 // loop_header
    %s11 = sphi 0, %s15
    %p12 = scmp.ge.s32.totalorder %s11, 4
    %s21 = sphi 0, %s23
    %s24 = sphi 0, %s21
    %s25 = sphi 0, %s24
    %s41 = sphi 0, %s25
    %s45 = sphi 0, %s45
    %s47 = sphi 0, %s45
    %s48 = sphi 0, %s47
    %s62 = sphi 0, %s48
    %s66 = sphi 0, %s66
    %s68 = sphi 0, %s66
    %s69 = sphi 0, %s68
    %s83 = sphi 0, %s69
    %s87 = sphi 0, %s87
    %s89 = sphi 0, %s87
    %s90 = sphi 0, %s89
    %s104 = sphi 0, %s90
    %s108 = sphi 0, %s108
    %s110 = sphi 0, %s108
    %s111 = sphi 0, %s110
    %s125 = sphi 0, %s111
    %s131 = sphi 0, %s133
    %s134 = sphi 0, %s131
    %s135 = sphi 0, %s134
    %s151 = sphi 0, %s135
  $region4: #{unet_forward.12} parent=0 // loop_header_branch
    %14 = sbr.rel (%p12) target = $region8
  $region5: #{unet_forward.12} parent=0 // loop_body
    %s16 = ssub.s32 %s11, 1
    %s17 = ssub.s32 %s11, 2
    %s18 = sadd.s32 %s11, 1
    %s19 = ssub.s32 %s11, %s18
    %p20 = scmp.eq.s32.totalorder %s19, 0
    %s22 = sadd.s32 %s21, 1
    %s23 = scalar_select %p20, %s21, %s22
    %p26 = pneg %p20
    %p27 = scmp.eq.s32.totalorder %s11, 1
    %p28 = por %p26, %p27
    %p29 = scmp.ne.s32.totalorder %s21, %s24
    %p30 = scmp.eq.s32.totalorder %s11, 0
    %p31 = por %p29, %p30
    %p32 = scmp.ne.s32.totalorder %s21, %s24
    %p33 = scmp.eq.s32.totalorder %s16, 1
    %p34 = por %p32, %p33
    %p35 = scmp.ne.s32.totalorder %s24, %s25
    %p36 = scmp.eq.s32.totalorder %s16, 0
    %p37 = por %p35, %p36
    %p38 = scmp.ne.s32.totalorder %s24, %s25
    %p39 = scmp.eq.s32.totalorder %s17, 1
    %p40 = por %p38, %p39
    %p42 = scmp.ne.s32.totalorder %s25, %s41
    %p43 = scmp.eq.s32.totalorder %s17, 0
    %p44 = por %p42, %p43
    %s46 = sadd.s32 %s45, 1
    %p49 = scmp.eq.s32.totalorder %s11, 1
    %p50 = scmp.ne.s32.totalorder %s45, %s47
    %p51 = scmp.eq.s32.totalorder %s11, 0
    %p52 = por %p50, %p51
    %p53 = scmp.ne.s32.totalorder %s45, %s47
    %p54 = scmp.eq.s32.totalorder %s16, 1
    %p55 = por %p53, %p54
    %p56 = scmp.ne.s32.totalorder %s47, %s48
    %p57 = scmp.eq.s32.totalorder %s16, 0
    %p58 = por %p56, %p57
    %p59 = scmp.ne.s32.totalorder %s47, %s48
    %p60 = scmp.eq.s32.totalorder %s17, 1
    %p61 = por %p59, %p60
    %p63 = scmp.ne.s32.totalorder %s48, %s62
    %p64 = scmp.eq.s32.totalorder %s17, 0
    %p65 = por %p63, %p64
    %s67 = sadd.s32 %s66, 1
    %p70 = scmp.eq.s32.totalorder %s11, 1
    %p71 = scmp.ne.s32.totalorder %s66, %s68
    %p72 = scmp.eq.s32.totalorder %s11, 0
    %p73 = por %p71, %p72
    %p74 = scmp.ne.s32.totalorder %s66, %s68
    %p75 = scmp.eq.s32.totalorder %s16, 1
    %p76 = por %p74, %p75
    %p77 = scmp.ne.s32.totalorder %s68, %s69
    %p78 = scmp.eq.s32.totalorder %s16, 0
    %p79 = por %p77, %p78
    %p80 = scmp.ne.s32.totalorder %s68, %s69
    %p81 = scmp.eq.s32.totalorder %s17, 1
    %p82 = por %p80, %p81
    %p84 = scmp.ne.s32.totalorder %s69, %s83
    %p85 = scmp.eq.s32.totalorder %s17, 0
    %p86 = por %p84, %p85
    %s88 = sadd.s32 %s87, 1
    %p91 = scmp.eq.s32.totalorder %s11, 1
    %p92 = scmp.ne.s32.totalorder %s87, %s89
    %p93 = scmp.eq.s32.totalorder %s11, 0
    %p94 = por %p92, %p93
    %p95 = scmp.ne.s32.totalorder %s87, %s89
    %p96 = scmp.eq.s32.totalorder %s16, 1
    %p97 = por %p95, %p96
    %p98 = scmp.ne.s32.totalorder %s89, %s90
    %p99 = scmp.eq.s32.totalorder %s16, 0
    %p100 = por %p98, %p99
    %p101 = scmp.ne.s32.totalorder %s89, %s90
    %p102 = scmp.eq.s32.totalorder %s17, 1
    %p103 = por %p101, %p102
    %p105 = scmp.ne.s32.totalorder %s90, %s104
    %p106 = scmp.eq.s32.totalorder %s17, 0
    %p107 = por %p105, %p106
    %s109 = sadd.s32 %s108, 1
    %p112 = scmp.eq.s32.totalorder %s11, 1
    %p113 = scmp.ne.s32.totalorder %s108, %s110
    %p114 = scmp.eq.s32.totalorder %s11, 0
    %p115 = por %p113, %p114
    %p116 = scmp.ne.s32.totalorder %s108, %s110
    %p117 = scmp.eq.s32.totalorder %s16, 1
    %p118 = por %p116, %p117
    %p119 = scmp.ne.s32.totalorder %s110, %s111
    %p120 = scmp.eq.s32.totalorder %s16, 0
    %p121 = por %p119, %p120
    %p122 = scmp.ne.s32.totalorder %s110, %s111
    %p123 = scmp.eq.s32.totalorder %s17, 1
    %p124 = por %p122, %p123
    %p126 = scmp.ne.s32.totalorder %s111, %s125
    %p127 = scmp.eq.s32.totalorder %s17, 0
    %p128 = por %p126, %p127
    %s129 = ssub.s32 %s11, %s18
    %p130 = scmp.eq.s32.totalorder %s129, 0
    %s132 = sadd.s32 %s131, 1
    %s133 = scalar_select %p130, %s131, %s132
    %p136 = pneg %p130
    %p137 = scmp.eq.s32.totalorder %s11, 1
    %p138 = por %p136, %p137
    %p139 = scmp.ne.s32.totalorder %s131, %s134
    %p140 = scmp.eq.s32.totalorder %s11, 0
    %p141 = por %p139, %p140
    %p142 = scmp.ne.s32.totalorder %s131, %s134
    %p143 = scmp.eq.s32.totalorder %s16, 1
    %p144 = por %p142, %p143
    %p145 = scmp.ne.s32.totalorder %s134, %s135
    %p146 = scmp.eq.s32.totalorder %s16, 0
    %p147 = por %p145, %p146
    %p148 = scmp.ne.s32.totalorder %s134, %s135
    %p149 = scmp.eq.s32.totalorder %s17, 1
    %p150 = por %p148, %p149
    %p152 = scmp.ne.s32.totalorder %s135, %s151
    %p153 = scmp.eq.s32.totalorder %s17, 0
    %p154 = por %p152, %p153
    %p155 = scmp.le.s32.totalorder 1, %s11
    %p156 = scmp.lt.s32.totalorder %s11, 3
    %p157 = pnand %p155, %p156
    %p158 = pneg %p157
    // Predicated region
    $region9: #{unet_forward.12} parent=5 // pred_check
      _
    $region10: #{unet_forward.12} parent=5 // pred_check_branch
      %160 = sbr.rel (%p157) target = $region12
    $region11: #{unet_forward.12} parent=5 // pred_region
      %s161 = ssub.s32 %s11, 1
      // Predicated region
      $region13: #{unet_forward.12} parent=11 // pred_check
        %p162 = pneg %p58
      $region14: #{unet_forward.12} parent=11 // pred_check_branch
        %164 = sbr.rel (%p162) target = $region16
      $region15: #{unet_forward.12} parent=11 // pred_region
        _
      $region16: #{unet_forward.12} parent=11 // pred_fallthru
        _
      // Predicated region
      $region17: #{unet_forward.12} parent=11 // pred_check
        %p165 = pneg %p79
      $region18: #{unet_forward.12} parent=11 // pred_check_branch
        %167 = sbr.rel (%p165) target = $region20
      $region19: #{unet_forward.12} parent=11 // pred_region
        _
      $region20: #{unet_forward.12} parent=11 // pred_fallthru
        _
      // Predicated region
      $region21: #{unet_forward.12} parent=11 // pred_check
        %p168 = pneg %p100
      $region22: #{unet_forward.12} parent=11 // pred_check_branch
        %170 = sbr.rel (%p168) target = $region24
      $region23: #{unet_forward.12} parent=11 // pred_region
        _
      $region24: #{unet_forward.12} parent=11 // pred_fallthru
        _
      // Predicated region
      $region25: #{unet_forward.12} parent=11 // pred_check
        %p171 = pneg %p121
      $region26: #{unet_forward.12} parent=11 // pred_check_branch
        %173 = sbr.rel (%p171) target = $region28
      $region27: #{unet_forward.12} parent=11 // pred_region
        _
      $region28: #{unet_forward.12} parent=11 // pred_fallthru
        _
    $region12: #{unet_forward.12} parent=5 // pred_fallthru
      _
    %p174 = scmp.lt.s32.totalorder %s11, 2
    // Predicated region
    $region29: #{unet_forward.12} parent=5 // pred_check
      %p175 = pneg %p174
    $region30: #{unet_forward.12} parent=5 // pred_check_branch
      %177 = sbr.rel (%p175) target = $region32
    $region31: #{unet_forward.12} parent=5 // pred_region
      // Predicated region
      $region33: #{unet_forward.12} parent=31 // pred_check
        %p178 = pneg %p31
      $region34: #{unet_forward.12} parent=31 // pred_check_branch
        %180 = sbr.rel (%p178) target = $region36
      $region35: #{unet_forward.12} parent=31 // pred_region
        %p181 = scmp.lt.s32.totalorder %s11, 1
        %s182 = scalar_select %p181, %s11, 1
        %s183 = smul.addr %s182, 4
        %s184 = smul.addr %s183, 4
        %s185 = scalar_lea.vmem %s0, %s184
      $region36: #{unet_forward.12} parent=31 // pred_fallthru
        _
    $region32: #{unet_forward.12} parent=5 // pred_fallthru
      _
    %p186 = scmp.le.s32.totalorder 1, %s11
    %p187 = scmp.lt.s32.totalorder %s11, 3
    %p188 = pnand %p186, %p187
    %p189 = pneg %p188
    // Predicated region
    $region37: #{unet_forward.12} parent=5 // pred_check
      _
    $region38: #{unet_forward.12} parent=5 // pred_check_branch
      %191 = sbr.rel (%p188) target = $region40
    $region39: #{unet_forward.12} parent=5 // pred_region
      %s192 = ssub.s32 %s11, 1
      %p193 = scmp.lt.s32.totalorder %s16, 1
      %s194 = scalar_select %p193, %s16, 1
      %s195 = smul.addr %s194, 4
      %s196 = smul.addr %s195, 4
      %s197 = scalar_lea.vmem %s0, %s196
      %p198 = pneg %p37
      %p199 = pneg %p34
      %p200 = pneg %p58
      %p201 = pneg %p55
      %p202 = pneg %p79
      %p203 = pneg %p76
      %p204 = pneg %p100
      %p205 = pneg %p97
      %p206 = pneg %p121
      %p207 = pneg %p118
      %p208 = pneg %p147
      %p209 = pneg %p144
      %p210 = scmp.lt.s32.totalorder %s16, 1
      %s211 = scalar_select %p210, %s16, 1
      %s212 = smul.addr %s211, 2
      %s213 = smul.addr %s212, 4
      %s214 = scalar_lea.vmem %s5, %s213
      %p215 = scmp.lt.s32.totalorder %s16, 1
      %s216 = scalar_select %p215, %s16, 1
      %s217 = smul.addr %s216, 4
      %s218 = smul.addr %s217, 4
      %s219 = scalar_lea.vmem %s0, %s218
      %p220 = scmp.lt.s32.totalorder %s16, 1
      %s221 = scalar_select %p220, %s16, 1
      %s222 = smul.addr %s221, 2
      %s223 = smul.addr %s222, 4
      %s224 = scalar_lea.vmem %s5, %s223
      %vm226 = vcmask 193536
      %227 = vst.msk [vmem:[#allocation2] sm:$0x3f] %vm226, 0.0
      %228 = vst.msk [vmem:[#allocation2 + $0x8] sm:$0x3f] %vm226, 0.0
      %229 = vst.msk [vmem:[#allocation2 + $0x10] sm:$0x3f] %vm226, 0.0
      %230 = vst.msk [vmem:[#allocation2 + $0x18] sm:$0x3f] %vm226, 0.0
      %231 = vst.msk [vmem:[#allocation2 + $0x20] sm:$0x3f] %vm226, 0.0
      %232 = vst.msk [vmem:[#allocation2 + $0x28] sm:$0x3f] %vm226, 0.0
      %v233 = vld [vmem:[%s219] sm:$0xf]
      %v234 = vld [vmem:[%s219 + $0x4] sm:$0xf]
      %v235 = vld [vmem:[%s219 + $0x8] sm:$0xf]
      %v236 = vld [vmem:[%s219 + $0xc] sm:$0xf]
      %s237 = scalar_lea.vmem [#allocation2], 8
      %vm238 = vcmask 191488
      %239 = vst.msk [vmem:[%s237 + $0x1] sm:$0xf] %vm238, %v233
      %240 = vst.msk [vmem:[%s237 + $0x9] sm:$0xf] %vm238, %v234
      %241 = vst.msk [vmem:[%s237 + $0x11] sm:$0xf] %vm238, %v235
      %242 = vst.msk [vmem:[%s237 + $0x19] sm:$0xf] %vm238, %v236
      %v243 = vld [vmem:[#allocation2] sm:$0xf]
      %v244 = vld [vmem:[#allocation2 + $0x8] sm:$0xf]
      %v245 = vld [vmem:[#allocation2 + $0x10] sm:$0xf]
      %v246 = vld [vmem:[#allocation2 + $0x18] sm:$0xf]
      %v247 = vld [vmem:[#allocation2 + $0x1] sm:$0xf]
      %v248 = vld [vmem:[#allocation2 + $0x9] sm:$0xf]
      %v249 = vld [vmem:[#allocation2 + $0x11] sm:$0xf]
      %v250 = vld [vmem:[#allocation2 + $0x19] sm:$0xf]
      %v251 = vld [vmem:[#allocation2 + $0x2] sm:$0xf]
      %v252 = vld [vmem:[#allocation2 + $0xa] sm:$0xf]
      %v253 = vld [vmem:[#allocation2 + $0x12] sm:$0xf]
      %v254 = vld [vmem:[#allocation2 + $0x1a] sm:$0xf]
      %v255 = vld [vmem:[%s237] sm:$0xf]
      %v256 = vld [vmem:[%s237 + $0x8] sm:$0xf]
      %v257 = vld [vmem:[%s237 + $0x10] sm:$0xf]
      %v258 = vld [vmem:[%s237 + $0x18] sm:$0xf]
      %v259 = vld [vmem:[%s237 + $0x1] sm:$0xf]
      %v260 = vld [vmem:[%s237 + $0x9] sm:$0xf]
      %v261 = vld [vmem:[%s237 + $0x11] sm:$0xf]
      %v262 = vld [vmem:[%s237 + $0x19] sm:$0xf]
      %v263 = vld [vmem:[%s237 + $0x2] sm:$0xf]
      %v264 = vld [vmem:[%s237 + $0xa] sm:$0xf]
      %v265 = vld [vmem:[%s237 + $0x12] sm:$0xf]
      %v266 = vld [vmem:[%s237 + $0x1a] sm:$0xf]
      %s267 = scalar_lea.vmem [#allocation2], 16
      %v268 = vld [vmem:[%s267] sm:$0xf]
      %v269 = vld [vmem:[%s267 + $0x8] sm:$0xf]
      %v270 = vld [vmem:[%s267 + $0x10] sm:$0xf]
      %v271 = vld [vmem:[%s267 + $0x18] sm:$0xf]
      %v272 = vld [vmem:[%s267 + $0x1] sm:$0xf]
      %v273 = vld [vmem:[%s267 + $0x9] sm:$0xf]
      %v274 = vld [vmem:[%s267 + $0x11] sm:$0xf]
      %v275 = vld [vmem:[%s267 + $0x19] sm:$0xf]
      %v276 = vld [vmem:[%s267 + $0x2] sm:$0xf]
      %v277 = vld [vmem:[%s267 + $0xa] sm:$0xf]
      %v278 = vld [vmem:[%s267 + $0x12] sm:$0xf]
      %v279 = vld [vmem:[%s267 + $0x1a] sm:$0xf]
      %284 = vrot.lane.b32.xlu0 %v247, 24
      %v285 = vpop.permute.xlu0 %284
      %286 = vrot.lane.b32.xlu0 %v248, 24
      %v287 = vpop.permute.xlu0 %286
      %288 = vrot.lane.b32.xlu0 %v249, 24
      %v289 = vpop.permute.xlu0 %288
      %290 = vrot.lane.b32.xlu0 %v250, 24
      %v291 = vpop.permute.xlu0 %290
      %300 = vrot.lane.b32.xlu0 %v251, 48
      %v301 = vpop.permute.xlu0 %300
      %302 = vrot.lane.b32.xlu0 %v252, 48
      %v303 = vpop.permute.xlu0 %302
      %304 = vrot.lane.b32.xlu0 %v253, 48
      %v305 = vpop.permute.xlu0 %304
      %306 = vrot.lane.b32.xlu0 %v254, 48
      %v307 = vpop.permute.xlu0 %306
      %316 = vrot.lane.b32.xlu0 %v255, 72
      %v317 = vpop.permute.xlu0 %316
      %318 = vrot.lane.b32.xlu0 %v256, 72
      %v319 = vpop.permute.xlu0 %318
      %320 = vrot.lane.b32.xlu0 %v257, 72
      %v321 = vpop.permute.xlu0 %320
      %322 = vrot.lane.b32.xlu0 %v258, 72
      %v323 = vpop.permute.xlu0 %322
      %332 = vrot.lane.b32.xlu0 %v259, 96
      %v333 = vpop.permute.xlu0 %332
      %334 = vrot.lane.b32.xlu0 %v260, 96
      %v335 = vpop.permute.xlu0 %334
      %336 = vrot.lane.b32.xlu0 %v261, 96
      %v337 = vpop.permute.xlu0 %336
      %338 = vrot.lane.b32.xlu0 %v262, 96
      %v339 = vpop.permute.xlu0 %338
      %348 = vrot.lane.b32.xlu0 %v263, 120
      %v349 = vpop.permute.xlu0 %348
      %350 = vrot.lane.b32.xlu0 %v264, 120
      %v351 = vpop.permute.xlu0 %350
      %352 = vrot.lane.b32.xlu0 %v265, 120
      %v353 = vpop.permute.xlu0 %352
      %354 = vrot.lane.b32.xlu0 %v266, 120
      %v355 = vpop.permute.xlu0 %354
      %364 = vrot.lane.b32.xlu0 %v268, 16
      %v365 = vpop.permute.xlu0 %364
      %366 = vrot.lane.b32.xlu0 %v269, 16
      %v367 = vpop.permute.xlu0 %366
      %368 = vrot.lane.b32.xlu0 %v270, 16
      %v369 = vpop.permute.xlu0 %368
      %370 = vrot.lane.b32.xlu0 %v271, 16
      %v371 = vpop.permute.xlu0 %370
      %380 = vrot.lane.b32.xlu0 %v272, 40
      %v381 = vpop.permute.xlu0 %380
      %382 = vrot.lane.b32.xlu0 %v273, 40
      %v383 = vpop.permute.xlu0 %382
      %384 = vrot.lane.b32.xlu0 %v274, 40
      %v385 = vpop.permute.xlu0 %384
      %386 = vrot.lane.b32.xlu0 %v275, 40
      %v387 = vpop.permute.xlu0 %386
      %396 = vrot.lane.b32.xlu0 %v276, 64
      %v397 = vpop.permute.xlu0 %396
      %398 = vrot.lane.b32.xlu0 %v277, 64
      %v399 = vpop.permute.xlu0 %398
      %400 = vrot.lane.b32.xlu0 %v278, 64
      %v401 = vpop.permute.xlu0 %400
      %402 = vrot.lane.b32.xlu0 %v279, 64
      %v403 = vpop.permute.xlu0 %402
      %vm408 = vcmask 195584
      %v409 = vsel %vm408, %v243, %v285
      %v410 = vsel %vm408, %v244, %v287
      %v411 = vsel %vm408, %v245, %v289
      %v412 = vsel %vm408, %v246, %v291
      %vm413 = vcmask 392192
      %v414 = vsel %vm413, %v409, %v301
      %v415 = vsel %vm413, %v410, %v303
      %v416 = vsel %vm413, %v411, %v305
      %v417 = vsel %vm413, %v412, %v307
      %vm418 = vcmask 588800
      %v419 = vsel %vm418, %v414, %v317
      %v420 = vsel %vm418, %v415, %v319
      %v421 = vsel %vm418, %v416, %v321
      %v422 = vsel %vm418, %v417, %v323
      %vm423 = vcmask 785408
      %v424 = vsel %vm423, %v419, %v333
      %v425 = vsel %vm423, %v420, %v335
      %v426 = vsel %vm423, %v421, %v337
      %v427 = vsel %vm423, %v422, %v339
      %vm428 = vcmask 982016
      %v429 = vsel %vm428, %v424, %v349
      %v430 = vsel %vm428, %v425, %v351
      %v431 = vsel %vm428, %v426, %v353
      %v432 = vsel %vm428, %v427, %v355
      %vm433 = vcmask 130048
      %v434 = vsel %vm433, %v349, %v365
      %v435 = vsel %vm433, %v351, %v367
      %v436 = vsel %vm433, %v353, %v369
      %v437 = vsel %vm433, %v355, %v371
      %vm438 = vcmask 326656
      %v439 = vsel %vm438, %v434, %v381
      %v440 = vsel %vm438, %v435, %v383
      %v441 = vsel %vm438, %v436, %v385
      %v442 = vsel %vm438, %v437, %v387
      %vm443 = vcmask 523264
      %v444 = vsel %vm443, %v439, %v397
      %v445 = vsel %vm443, %v440, %v399
      %v446 = vsel %vm443, %v441, %v401
      %v447 = vsel %vm443, %v442, %v403
      %v456 = vrot.slane %v444, 4
      %v457 = vrot.slane %v445, 4
      %v458 = vrot.slane %v446, 4
      %v459 = vrot.slane %v447, 4
      %vm460 = vcmask 1043456
      %v461 = vsel %vm460, %v429, %v456
      %v462 = vsel %vm460, %v430, %v457
      %v463 = vsel %vm460, %v431, %v458
      %v464 = vsel %vm460, %v432, %v459
      %465 = vst [vmem:[#allocation1] ss:$2 sm:$0xff] %v461
      %s466 = scalar_lea.vmem [#allocation1], 1
      %467 = vst [vmem:[%s466] ss:$2 sm:$0xff] %v462
      %s468 = scalar_lea.vmem [#allocation1], 16
      %469 = vst [vmem:[%s468] ss:$2 sm:$0xff] %v463
      %s470 = scalar_lea.vmem [#allocation1], 17
      %471 = vst [vmem:[%s470] ss:$2 sm:$0xff] %v464
      %v472 = vld.sshfl [vmem:[#allocation1] sm:$0xff pattern:$0x75316420]
      %v473 = vld.sshfl [vmem:[#allocation1 + $0x8] sm:$0xff pattern:$0x75316420]
      %v474 = vld.sshfl [vmem:[#allocation1 + $0x10] sm:$0xff pattern:$0x75316420]
      %v475 = vld.sshfl [vmem:[#allocation1 + $0x18] sm:$0xff pattern:$0x75316420]
      %v480 = vpack.c.bf16 %v474, %v472
      %v481 = vpack.c.bf16 %v475, %v473
      %v482 = vld [vmem:[%s1] sm:$0xf]
      %v483 = vld [vmem:[%s1 + $0x4] sm:$0xf]
      %v484 = vld [vmem:[%s1 + $0x8] sm:$0xf]
      %v485 = vld [vmem:[%s1 + $0xc] sm:$0xf]
      %v486 = vld [vmem:[%s1 + $0x10] sm:$0xf]
      %v487 = vld [vmem:[%s1 + $0x14] sm:$0xf]
      %v488 = vld [vmem:[%s1 + $0x18] sm:$0xf]
      %v489 = vld [vmem:[%s1 + $0x1c] sm:$0xf]
      %v490 = vld [vmem:[%s1 + $0x20] sm:$0xf]
      %v491 = vld [vmem:[%s1 + $0x24] sm:$0xf]
      %v492 = vld [vmem:[%s1 + $0x28] sm:$0xf]
      %v493 = vld [vmem:[%s1 + $0x2c] sm:$0xf]
      %v494 = vld [vmem:[%s1 + $0x30] sm:$0xf]
      %v495 = vld [vmem:[%s1 + $0x34] sm:$0xf]
      %v496 = vld [vmem:[%s1 + $0x38] sm:$0xf]
      %v497 = vld [vmem:[%s1 + $0x3c] sm:$0xf]
      %v498 = vld [vmem:[%s1 + $0x40] sm:$0xf]
      %v499 = vld [vmem:[%s1 + $0x44] sm:$0xf]
      %v500 = vld [vmem:[%s1 + $0x48] sm:$0xf]
      %v501 = vld [vmem:[%s1 + $0x4c] sm:$0xf]
      %v502 = vld [vmem:[%s1 + $0x50] sm:$0xf]
      %v503 = vld [vmem:[%s1 + $0x54] sm:$0xf]
      %v504 = vld [vmem:[%s1 + $0x58] sm:$0xf]
      %v505 = vld [vmem:[%s1 + $0x5c] sm:$0xf]
      %v506 = vld [vmem:[%s1 + $0x60] sm:$0xf]
      %v507 = vld [vmem:[%s1 + $0x64] sm:$0xf]
      %v508 = vld [vmem:[%s1 + $0x68] sm:$0xf]
      %v509 = vld [vmem:[%s2] sm:$0x1]
      %v511 = vperm.slane %v509, 0
      %v540 = vunpack.c.l.b16 %v482
      %v541 = vunpack.c.l.b16 %v483
      %v542 = vunpack.c.l.b16 %v484
      %v543 = vunpack.c.l.b16 %v485
      %v544 = vunpack.c.l.b16 %v486
      %v545 = vunpack.c.l.b16 %v487
      %v546 = vunpack.c.l.b16 %v488
      %v547 = vunpack.c.l.b16 %v489
      %v548 = vunpack.c.l.b16 %v490
      %v549 = vunpack.c.l.b16 %v491
      %v550 = vunpack.c.l.b16 %v492
      %v551 = vunpack.c.l.b16 %v493
      %v552 = vunpack.c.l.b16 %v494
      %v553 = vunpack.c.l.b16 %v495
      %v554 = vunpack.c.l.b16 %v496
      %v555 = vunpack.c.l.b16 %v497
      %v556 = vunpack.c.l.b16 %v498
      %v557 = vunpack.c.l.b16 %v499
      %v558 = vunpack.c.l.b16 %v500
      %v559 = vunpack.c.l.b16 %v501
      %v560 = vunpack.c.l.b16 %v502
      %v561 = vunpack.c.l.b16 %v503
      %v562 = vunpack.c.l.b16 %v504
      %v563 = vunpack.c.l.b16 %v505
      %v564 = vunpack.c.l.b16 %v506
      %v565 = vunpack.c.l.b16 %v507
      %v566 = vunpack.c.l.b16 %v508
      %v567 = vpack.c.b16 %v541, %v540
      %v568 = vpack.c.b16 %v543, %v542
      %v569 = vpack.c.b16 %v545, %v544
      %v570 = vpack.c.b16 %v547, %v546
      %v571 = vpack.c.b16 %v549, %v548
      %v572 = vpack.c.b16 %v551, %v550
      %v573 = vpack.c.b16 %v553, %v552
      %v574 = vpack.c.b16 %v555, %v554
      %v575 = vpack.c.b16 %v557, %v556
      %v576 = vpack.c.b16 %v559, %v558
      %v577 = vpack.c.b16 %v561, %v560
      %v578 = vpack.c.b16 %v563, %v562
      %v579 = vpack.c.b16 %v565, %v564
      %v580 = vpack.c.b16 %v566, %v566
      %vm594 = vcmask 719872
      %v596 = vsel %vm594, %v481, 0
      %v599 = vsel %vm460, %v580, 0
      %601 = vmatpush.bf16.msra.mxu0 %v574
      %602 = vmatpush.bf16.msra.mxu0 %v573
      %603 = vmatpush.bf16.msra.mxu0 %v572
      %604 = vmatpush.bf16.msra.mxu0 %v571
      %605 = vmatpush.bf16.msra.mxu0 %v570
      %606 = vmatpush.bf16.msra.mxu0 %v569
      %607 = vmatpush.bf16.msra.mxu0 %v568
      %608 = vmatpush.bf16.msra.mxu0 %v567
      %609 = vmatmul.bf16.gmra.mxu0 %v480
      %v610 = vpop.f32.mrf.mxu0
      %v611 = vadd.f32 %v511, %v610
      %v612 = vpop.f32.mrf.mxu0
      %v613 = vadd.f32 %v511, %v612
      %614 = vdwg.mxu0
      %615 = vmatpush.bf16.msra.mxu0 0
      %616 = vmatpush.bf16.msra.mxu0 0
      %617 = vmatpush.bf16.msra.mxu0 %v599
      %618 = vmatpush.bf16.msra.mxu0 %v579
      %619 = vmatpush.bf16.msra.mxu0 %v578
      %620 = vmatpush.bf16.msra.mxu0 %v577
      %621 = vmatpush.bf16.msra.mxu0 %v576
      %622 = vmatpush.bf16.msra.mxu0 %v575
      %623 = vmatmul.bf16.gmra.mxu0 %v596
      %v624 = vpop.f32.mrf.mxu0
      %v625 = vadd.f32 %v611, %v624
      %v626 = vpop.f32.mrf.mxu0
      %v627 = vadd.f32 %v613, %v626
      %628 = vdwg.mxu0
      %v629 = vmax.f32 %v625, 0.0
      %v630 = vmax.f32 %v627, 0.0
      %vm631 = vcmask 62464
      %632 = vst.msk [vmem:[#allocation3] sm:$0x3f] %vm631, 0.0
      %633 = vst.msk [vmem:[#allocation3 + $0x8] sm:$0x3f] %vm631, 0.0
      %634 = vst.msk [vmem:[#allocation3 + $0x10] sm:$0x3f] %vm631, 0.0
      %635 = vst.msk [vmem:[#allocation3 + $0x18] sm:$0x3f] %vm631, 0.0
      %636 = vst.msk [vmem:[#allocation3 + $0x20] sm:$0x3f] %vm631, 0.0
      %637 = vst.msk [vmem:[#allocation3 + $0x28] sm:$0x3f] %vm631, 0.0
      %v640 = vrot.slane %v629, 4
      %v641 = vrot.slane %v630, 4
      %s644 = scalar_lea.vmem [#allocation3], 8
      %vm645 = vcmask 60416
      %646 = vst.msk [vmem:[%s644 + $0x1] sm:$0xf] %vm645, %v629
      %647 = vst.msk [vmem:[%s644 + $0x9] sm:$0xf] %vm645, %v640
      %648 = vst.msk [vmem:[%s644 + $0x11] sm:$0xf] %vm645, %v630
      %649 = vst.msk [vmem:[%s644 + $0x19] sm:$0xf] %vm645, %v641
      %v650 = vld [vmem:[#allocation3] sm:$0xf]
      %v651 = vld [vmem:[#allocation3 + $0x8] sm:$0xf]
      %v652 = vld [vmem:[#allocation3 + $0x10] sm:$0xf]
      %v653 = vld [vmem:[#allocation3 + $0x18] sm:$0xf]
      %v654 = vld [vmem:[#allocation3 + $0x1] sm:$0xf]
      %v655 = vld [vmem:[#allocation3 + $0x9] sm:$0xf]
      %v656 = vld [vmem:[#allocation3 + $0x11] sm:$0xf]
      %v657 = vld [vmem:[#allocation3 + $0x19] sm:$0xf]
      %v658 = vld [vmem:[#allocation3 + $0x2] sm:$0xf]
      %v659 = vld [vmem:[#allocation3 + $0xa] sm:$0xf]
      %v660 = vld [vmem:[#allocation3 + $0x12] sm:$0xf]
      %v661 = vld [vmem:[#allocation3 + $0x1a] sm:$0xf]
      %v662 = vld [vmem:[%s644] sm:$0xf]
      %v663 = vld [vmem:[%s644 + $0x8] sm:$0xf]
      %v664 = vld [vmem:[%s644 + $0x10] sm:$0xf]
      %v665 = vld [vmem:[%s644 + $0x18] sm:$0xf]
      %v666 = vld [vmem:[%s644 + $0x1] sm:$0xf]
      %v667 = vld [vmem:[%s644 + $0x9] sm:$0xf]
      %v668 = vld [vmem:[%s644 + $0x11] sm:$0xf]
      %v669 = vld [vmem:[%s644 + $0x19] sm:$0xf]
      %v670 = vld [vmem:[%s644 + $0x2] sm:$0xf]
      %v671 = vld [vmem:[%s644 + $0xa] sm:$0xf]
      %v672 = vld [vmem:[%s644 + $0x12] sm:$0xf]
      %v673 = vld [vmem:[%s644 + $0x1a] sm:$0xf]
      %s674 = scalar_lea.vmem [#allocation3], 16
      %v675 = vld [vmem:[%s674] sm:$0xf]
      %v676 = vld [vmem:[%s674 + $0x8] sm:$0xf]
      %v677 = vld [vmem:[%s674 + $0x10] sm:$0xf]
      %v678 = vld [vmem:[%s674 + $0x18] sm:$0xf]
      %v679 = vld [vmem:[%s674 + $0x1] sm:$0xf]
      %v680 = vld [vmem:[%s674 + $0x9] sm:$0xf]
      %v681 = vld [vmem:[%s674 + $0x11] sm:$0xf]
      %v682 = vld [vmem:[%s674 + $0x19] sm:$0xf]
      %v683 = vld [vmem:[%s674 + $0x2] sm:$0xf]
      %v684 = vld [vmem:[%s674 + $0xa] sm:$0xf]
      %v685 = vld [vmem:[%s674 + $0x12] sm:$0xf]
      %v686 = vld [vmem:[%s674 + $0x1a] sm:$0xf]
      %691 = vrot.lane.b32.xlu0 %v654, 8
      %v692 = vpop.permute.xlu0 %691
      %693 = vrot.lane.b32.xlu0 %v655, 8
      %v694 = vpop.permute.xlu0 %693
      %695 = vrot.lane.b32.xlu0 %v656, 8
      %v696 = vpop.permute.xlu0 %695
      %697 = vrot.lane.b32.xlu0 %v657, 8
      %v698 = vpop.permute.xlu0 %697
      %707 = vrot.lane.b32.xlu0 %v658, 16
      %v708 = vpop.permute.xlu0 %707
      %709 = vrot.lane.b32.xlu0 %v659, 16
      %v710 = vpop.permute.xlu0 %709
      %711 = vrot.lane.b32.xlu0 %v660, 16
      %v712 = vpop.permute.xlu0 %711
      %713 = vrot.lane.b32.xlu0 %v661, 16
      %v714 = vpop.permute.xlu0 %713
      %723 = vrot.lane.b32.xlu0 %v662, 24
      %v724 = vpop.permute.xlu0 %723
      %725 = vrot.lane.b32.xlu0 %v663, 24
      %v726 = vpop.permute.xlu0 %725
      %727 = vrot.lane.b32.xlu0 %v664, 24
      %v728 = vpop.permute.xlu0 %727
      %729 = vrot.lane.b32.xlu0 %v665, 24
      %v730 = vpop.permute.xlu0 %729
      %739 = vrot.lane.b32.xlu0 %v666, 32
      %v740 = vpop.permute.xlu0 %739
      %741 = vrot.lane.b32.xlu0 %v667, 32
      %v742 = vpop.permute.xlu0 %741
      %743 = vrot.lane.b32.xlu0 %v668, 32
      %v744 = vpop.permute.xlu0 %743
      %745 = vrot.lane.b32.xlu0 %v669, 32
      %v746 = vpop.permute.xlu0 %745
      %755 = vrot.lane.b32.xlu0 %v670, 40
      %v756 = vpop.permute.xlu0 %755
      %757 = vrot.lane.b32.xlu0 %v671, 40
      %v758 = vpop.permute.xlu0 %757
      %759 = vrot.lane.b32.xlu0 %v672, 40
      %v760 = vpop.permute.xlu0 %759
      %761 = vrot.lane.b32.xlu0 %v673, 40
      %v762 = vpop.permute.xlu0 %761
      %771 = vrot.lane.b32.xlu0 %v675, 48
      %v772 = vpop.permute.xlu0 %771
      %773 = vrot.lane.b32.xlu0 %v676, 48
      %v774 = vpop.permute.xlu0 %773
      %775 = vrot.lane.b32.xlu0 %v677, 48
      %v776 = vpop.permute.xlu0 %775
      %777 = vrot.lane.b32.xlu0 %v678, 48
      %v778 = vpop.permute.xlu0 %777
      %787 = vrot.lane.b32.xlu0 %v679, 56
      %v788 = vpop.permute.xlu0 %787
      %789 = vrot.lane.b32.xlu0 %v680, 56
      %v790 = vpop.permute.xlu0 %789
      %791 = vrot.lane.b32.xlu0 %v681, 56
      %v792 = vpop.permute.xlu0 %791
      %793 = vrot.lane.b32.xlu0 %v682, 56
      %v794 = vpop.permute.xlu0 %793
      %803 = vrot.lane.b32.xlu0 %v683, 64
      %v804 = vpop.permute.xlu0 %803
      %805 = vrot.lane.b32.xlu0 %v684, 64
      %v806 = vpop.permute.xlu0 %805
      %807 = vrot.lane.b32.xlu0 %v685, 64
      %v808 = vpop.permute.xlu0 %807
      %809 = vrot.lane.b32.xlu0 %v686, 64
      %v810 = vpop.permute.xlu0 %809
      %vm815 = vcmask 64512
      %v816 = vsel %vm815, %v650, %v692
      %v817 = vsel %vm815, %v651, %v694
      %v818 = vsel %vm815, %v652, %v696
      %v819 = vsel %vm815, %v653, %v698
      %v820 = vsel %vm433, %v816, %v708
      %v821 = vsel %vm433, %v817, %v710
      %v822 = vsel %vm433, %v818, %v712
      %v823 = vsel %vm433, %v819, %v714
      %v824 = vsel %vm408, %v820, %v724
      %v825 = vsel %vm408, %v821, %v726
      %v826 = vsel %vm408, %v822, %v728
      %v827 = vsel %vm408, %v823, %v730
      %vm828 = vcmask 261120
      %v829 = vsel %vm828, %v824, %v740
      %v830 = vsel %vm828, %v825, %v742
      %v831 = vsel %vm828, %v826, %v744
      %v832 = vsel %vm828, %v827, %v746
      %v833 = vsel %vm438, %v829, %v756
      %v834 = vsel %vm438, %v830, %v758
      %v835 = vsel %vm438, %v831, %v760
      %v836 = vsel %vm438, %v832, %v762
      %v837 = vsel %vm413, %v833, %v772
      %v838 = vsel %vm413, %v834, %v774
      %v839 = vsel %vm413, %v835, %v776
      %v840 = vsel %vm413, %v836, %v778
      %vm841 = vcmask 457728
      %v842 = vsel %vm841, %v837, %v788
      %v843 = vsel %vm841, %v838, %v790
      %v844 = vsel %vm841, %v839, %v792
      %v845 = vsel %vm841, %v840, %v794
      %v846 = vsel %vm443, %v842, %v804
      %v847 = vsel %vm443, %v843, %v806
      %v848 = vsel %vm443, %v844, %v808
      %v849 = vsel %vm443, %v845, %v810
      %854 = vst [vmem:[#allocation1] ss:$2 sm:$0xff] %v846
      %s855 = scalar_lea.vmem [#allocation1], 1
      %856 = vst [vmem:[%s855] ss:$2 sm:$0xff] %v847
      %s857 = scalar_lea.vmem [#allocation1], 16
      %858 = vst [vmem:[%s857] ss:$2 sm:$0xff] %v848
      %s859 = scalar_lea.vmem [#allocation1], 17
      %860 = vst [vmem:[%s859] ss:$2 sm:$0xff] %v849
      %v861 = vld.sshfl [vmem:[#allocation1] sm:$0xff pattern:$0x75316420]
      %v862 = vld.sshfl [vmem:[#allocation1 + $0x10] sm:$0xff pattern:$0x75316420]
      %v865 = vpack.c.bf16 %v862, %v861
      %v866 = vld [vmem:[%s3] sm:$0xf]
      %v867 = vld [vmem:[%s3 + $0x4] sm:$0xf]
      %v868 = vld [vmem:[%s3 + $0x8] sm:$0xf]
      %v869 = vld [vmem:[%s3 + $0xc] sm:$0xf]
      %v870 = vld [vmem:[%s3 + $0x10] sm:$0xf]
      %v871 = vld [vmem:[%s3 + $0x14] sm:$0xf]
      %v872 = vld [vmem:[%s3 + $0x18] sm:$0xf]
      %v873 = vld [vmem:[%s3 + $0x1c] sm:$0xf]
      %v874 = vld [vmem:[%s3 + $0x20] sm:$0xf]
      %v875 = vld [vmem:[%s4] sm:$0x1]
      %v877 = vperm.slane %v875, 0
      %v888 = vunpack.c.l.b16 %v866
      %v889 = vunpack.c.l.b16 %v867
      %v890 = vunpack.c.l.b16 %v868
      %v891 = vunpack.c.l.b16 %v869
      %v892 = vunpack.c.l.b16 %v870
      %v893 = vunpack.c.l.b16 %v871
      %v894 = vunpack.c.l.b16 %v872
      %v895 = vunpack.c.l.b16 %v873
      %v896 = vunpack.c.l.b16 %v874
      %v897 = vpack.c.b16 %v889, %v888
      %v898 = vpack.c.b16 %v891, %v890
      %v899 = vpack.c.b16 %v893, %v892
      %v900 = vpack.c.b16 %v895, %v894
      %v901 = vpack.c.b16 %v896, %v896
      %v907 = vsel %vm418, %v865, 0
      %v910 = vsel %vm460, %v901, 0
      %912 = vmatpush.bf16.msra.mxu0 0
      %913 = vmatpush.bf16.msra.mxu0 0
      %914 = vmatpush.bf16.msra.mxu0 0
      %915 = vmatpush.bf16.msra.mxu0 %v910
      %916 = vmatpush.bf16.msra.mxu0 %v900
      %917 = vmatpush.bf16.msra.mxu0 %v899
      %918 = vmatpush.bf16.msra.mxu0 %v898
      %919 = vmatpush.bf16.msra.mxu0 %v897
      %920 = vmatmul.bf16.gmra.mxu0 %v907
      %v921 = vpop.f32.mrf.mxu0
      %v922 = vadd.f32 %v877, %v921
      %v923 = vpop.f32.mrf.mxu0
      %v924 = vadd.f32 %v877, %v923
      %925 = vdwg.mxu0
      %v926 = vmax.f32 %v922, 0.0
      %v927 = vmax.f32 %v924, 0.0
      %v930 = vrot.slane %v926, 4
      %v931 = vrot.slane %v927, 4
      %v934 = vmax.f32 %v926, %v930
      %v935 = vmax.f32 %v927, %v931
      %936 = vst.msk [vmem:[%s224] sm:$0xf] %vm645, %v934
      %937 = vst.msk [vmem:[%s224 + $0x4] sm:$0xf] %vm645, %v935
      %p938 = scmp.lt.s32.totalorder %s16, 1
      %s939 = scalar_select %p938, %s16, 1
      %s940 = smul.addr %s939, 2
      %s941 = smul.addr %s940, 4
      %s942 = scalar_lea.vmem %s5, %s941
      // Predicated region
      $region41: #{unet_forward.12} parent=39 // pred_check
        %p943 = pneg %p144
      $region42: #{unet_forward.12} parent=39 // pred_check_branch
        %945 = sbr.rel (%p943) target = $region44
      $region43: #{unet_forward.12} parent=39 // pred_region
        _
      $region44: #{unet_forward.12} parent=39 // pred_fallthru
        _
    $region40: #{unet_forward.12} parent=5 // pred_fallthru
      _
    %p946 = scmp.le.s32.totalorder 2, %s11
    // Predicated region
    $region45: #{unet_forward.12} parent=5 // pred_check
      %p947 = pneg %p946
    $region46: #{unet_forward.12} parent=5 // pred_check_branch
      %949 = sbr.rel (%p947) target = $region48
    $region47: #{unet_forward.12} parent=5 // pred_region
      %s950 = ssub.s32 %s11, 2
      // Predicated region
      $region49: #{unet_forward.12} parent=47 // pred_check
        %p951 = pneg %p150
      $region50: #{unet_forward.12} parent=47 // pred_check_branch
        %953 = sbr.rel (%p951) target = $region52
      $region51: #{unet_forward.12} parent=47 // pred_region
        %p954 = scmp.lt.s32.totalorder %s17, 1
        %s955 = scalar_select %p954, %s17, 1
        %s956 = smul.addr %s955, 2
        %s957 = smul.addr %s956, 4
        %s958 = scalar_lea.vmem %s5, %s957
      $region52: #{unet_forward.12} parent=47 // pred_fallthru
        _
    $region48: #{unet_forward.12} parent=5 // pred_fallthru
      _
  $region6: #{unet_forward.12} parent=0 // loop_footer
    %s15 = sadd.s32 1, %s11
  $region7: #{unet_forward.12} parent=0 // loop_footer_branch
    %10 = sbr.rel target = $region3
  $region8: #{unet_forward.12} parent=0 // loop_exit
    _

</llo_original>
